<compile_context>
chip_gen: v6e
topology: v6e:2x2x1
jax: 0.10.0
libtpu: 0.0.40
codegen_flags: <defaults>
</compile_context>

<pallas_src>
import functools

import numpy as np
import jax
import jax.numpy as jnp
from jax.experimental import pallas as pl
from jax.experimental.pallas import tpu as pltpu


# ----------------------------- Pallas kernels ------------------------------ #

def conv_pool_kernel(x_ref, m_ref, b_ref, o_ref, acc_scr, hp_scr, *, H, W, C_out):
    """Fused 3x3/pad=1 conv (as 3 Toeplitz matmuls) + bias + ReLU + 2x2 maxpool.

    x_ref : (H+2, (W+2)*C_in)   padded NHWC rows, (w, c) packed into lanes
    m_ref : (3, (W+2)*C_in, W*C_out)  block-Toeplitz weights (cols: [even w | odd w])
    b_ref : (1, W*C_out)        per-channel bias tiled over w
    o_ref : (H//2, (W//2)*C_out)  pooled output, natural (h, w, c) order
    """
    half = (W // 2) * C_out

    # conv: one matmul per kernel row (kh), accumulated in f32 VMEM scratch.
    acc_scr[...] = jnp.dot(x_ref[0:H, :], m_ref[0],
                           preferred_element_type=jnp.float32)
    acc_scr[...] += jnp.dot(x_ref[1:H + 1, :], m_ref[1],
                            preferred_element_type=jnp.float32)
    acc_scr[...] += jnp.dot(x_ref[2:H + 2, :], m_ref[2],
                            preferred_element_type=jnp.float32)

    y = jnp.maximum(acc_scr[...] + b_ref[...], 0.0)          # (H, W*C_out)

    # horizontal 2x pool: columns are ordered [even w | odd w] -> max of halves.
    hp_scr[...] = jnp.maximum(y[:, :half], y[:, half:])      # (H, (W//2)*C_out)

    # vertical 2x pool: max of adjacent rows (statically unrolled, tiny).
    for i in range(H // 2):
        o_ref[i:i + 1, :] = jnp.maximum(hp_scr[2 * i:2 * i + 1, :],
                                        hp_scr[2 * i + 1:2 * i + 2, :])


def fc_stack_kernel(x_ref, w1_ref, b1_ref, w2_ref, b2_ref, w3_ref, b3_ref,
                    o_ref, acc_ref):
    """Fused fc1(+ReLU)+fc2(+ReLU)+fc3; grid axis streams fc1's weight over K."""
    k = pl.program_id(0)

    @pl.when(k == 0)
    def _():
        acc_ref[...] = jnp.zeros_like(acc_ref)

    acc_ref[...] += jnp.dot(x_ref[...], w1_ref[...],
                            preferred_element_type=jnp.float32)

    @pl.when(k == pl.num_programs(0) - 1)
    def _():
        h1 = jnp.maximum(acc_ref[...] + b1_ref[...], 0.0)                # (B, 512)
        h2 = jnp.maximum(
            jnp.dot(h1, w2_ref[...], preferred_element_type=jnp.float32)
            + b2_ref[...], 0.0)                                          # (B, 128)
        o_ref[...] = (jnp.dot(h2, w3_ref[...],
                              preferred_element_type=jnp.float32)
                      + b3_ref[...])                                     # (B, 10)


# ------------------------------ kernel wrappers ----------------------------- #

def conv_relu_pool(x_pad_nhwc, m, b_tiled, *, C_out):
    """x_pad_nhwc: (B, H+2, W+2, C_in) spatially zero-padded NHWC activation."""
    B, Hp, Wp, C_in = x_pad_nhwc.shape
    H, W = Hp - 2, Wp - 2
    Ho, Wo = H // 2, W // 2
    x2d = x_pad_nhwc.reshape(B, Hp, Wp * C_in)          # free reshape (row-major)

    kernel = functools.partial(conv_pool_kernel, H=H, W=W, C_out=C_out)
    return pl.pallas_call(
        kernel,
        out_shape=jax.ShapeDtypeStruct((B, Ho, Wo * C_out), jnp.float32),
        grid=(B,),
        in_specs=[
            pl.BlockSpec((None, Hp, Wp * C_in), lambda bi: (bi, 0, 0)),
            pl.BlockSpec((3, Wp * C_in, W * C_out), lambda bi: (0, 0, 0)),
            pl.BlockSpec((1, W * C_out), lambda bi: (0, 0)),
        ],
        out_specs=pl.BlockSpec((None, Ho, Wo * C_out), lambda bi: (bi, 0, 0)),
        scratch_shapes=[
            pltpu.VMEM((H, W * C_out), jnp.float32),      # conv accumulator
            pltpu.VMEM((H, Wo * C_out), jnp.float32),     # horizontally pooled rows
        ],
        compiler_params=pltpu.CompilerParams(
            dimension_semantics=("parallel",),
            vmem_limit_bytes=32 << 20,
        ),
    )(x2d, m, b_tiled)


def fc_stack(x_flat, w1, b1, w2, b2, w3, b3):
    B, K = x_flat.shape
    TK = 1024
    assert K % TK == 0
    N1, N2, N3 = w1.shape[1], w2.shape[1], w3.shape[1]
    return pl.pallas_call(
        fc_stack_kernel,
        out_shape=jax.ShapeDtypeStruct((B, N3), jnp.float32),
        grid=(K // TK,),
        in_specs=[
            pl.BlockSpec((B, TK), lambda k: (0, k)),
            pl.BlockSpec((TK, N1), lambda k: (k, 0)),
            pl.BlockSpec((1, N1), lambda k: (0, 0)),
            pl.BlockSpec((N1, N2), lambda k: (0, 0)),
            pl.BlockSpec((1, N2), lambda k: (0, 0)),
            pl.BlockSpec((N2, N3), lambda k: (0, 0)),
            pl.BlockSpec((1, N3), lambda k: (0, 0)),
        ],
        out_specs=pl.BlockSpec((B, N3), lambda k: (0, 0)),
        scratch_shapes=[pltpu.VMEM((B, N1), jnp.float32)],
        compiler_params=pltpu.CompilerParams(
            dimension_semantics=("arbitrary",),
            vmem_limit_bytes=32 << 20,
        ),
    )(x_flat, w1, b1, w2, b2, w3, b3)


# --------------------------- param preparation ------------------------------ #

def _toeplitz_conv_weight(conv_w, W):
    """PyTorch (C_out, C_in, 3, 3) conv weight -> (3, (W+2)*C_in, W*C_out)
    block-Toeplitz matrices.  Output columns are ordered [even w | odd w] so the
    2x2 maxpool reduces to a lane-halves max followed by an adjacent-row max."""
    w_np = np.asarray(conv_w, dtype=np.float32)
    C_out, C_in, _, _ = w_np.shape
    Wo = W // 2
    M = np.zeros((3, (W + 2) * C_in, W * C_out), np.float32)
    for w in range(W):
        p = (w // 2) if (w % 2 == 0) else (Wo + w // 2)
        oc = p * C_out
        for kw in range(3):
            wp = w + kw                                   # padded column index
            for kh in range(3):
                M[kh, wp * C_in:(wp + 1) * C_in, oc:oc + C_out] = w_np[:, :, kh, kw].T
    return jnp.asarray(M)


def prepare_params(params):
    """One-time conversion of PyTorch-layout params into kernel-ready layouts."""
    kp = {}
    kp["conv1_m"] = _toeplitz_conv_weight(params["conv1_w"], 32)
    kp["conv1_b"] = jnp.tile(params["conv1_b"], 32)[None, :]        # (1, 32*32)
    kp["conv2_m"] = _toeplitz_conv_weight(params["conv2_w"], 16)
    kp["conv2_b"] = jnp.tile(params["conv2_b"], 16)[None, :]        # (1, 16*64)
    # fc1: bake the NCHW flatten (c,h,w) -> NHWC flatten (h,w,c) into the weight.
    kp["fc1_w"] = (params["fc1_w"].reshape(512, 64, 8, 8)
                   .transpose(2, 3, 1, 0).reshape(8 * 8 * 64, 512))
    kp["fc1_b"] = params["fc1_b"][None, :]
    kp["fc2_w"] = params["fc2_w"].T
    kp["fc2_b"] = params["fc2_b"][None, :]
    kp["fc3_w"] = params["fc3_w"].T
    kp["fc3_b"] = params["fc3_b"][None, :]
    return kp


# -------------------------------- forward ----------------------------------- #

def cnn_forward(x_nchw, kp):
    x = jnp.transpose(x_nchw, (0, 2, 3, 1)).astype(jnp.float32)     # NCHW -> NHWC
    B = x.shape[0]

    # conv1 (3->32, 3x3, pad 1) + ReLU + 2x2 maxpool
    xp = jnp.pad(x, ((0, 0), (1, 1), (1, 1), (0, 0)))               # (B,34,34,3)
    y = conv_relu_pool(xp, kp["conv1_m"], kp["conv1_b"], C_out=32)  # (B,16,16*32)

    # conv2 (32->64, 3x3, pad 1) + ReLU + 2x2 maxpool
    y = y.reshape(B, 16, 16, 32)
    yp = jnp.pad(y, ((0, 0), (1, 1), (1, 1), (0, 0)))               # (B,18,18,32)
    y = conv_relu_pool(yp, kp["conv2_m"], kp["conv2_b"], C_out=64)  # (B,8,8*64)

    # flatten (permutation already baked into fc1_w) + fused fc stack
    y = y.reshape(B, 8 * 8 * 64)
    return fc_stack(y, kp["fc1_w"], kp["fc1_b"], kp["fc2_w"], kp["fc2_b"],
                    kp["fc3_w"], kp["fc3_b"])                        # (B, 10)


# ------------------------------ reference ----------------------------------- #

def cnn_reference(x_nchw, params):
    """Pure-JAX reference matching the PyTorch module."""
    hi = jax.lax.Precision.HIGHEST
    x = jnp.transpose(x_nchw, (0, 2, 3, 1)).astype(jnp.float32)

    def conv(h, w, b):
        y = jax.lax.conv_general_dilated(
            h, jnp.transpose(w, (2, 3, 1, 0)), (1, 1), ((1, 1), (1, 1)),
            dimension_numbers=("NHWC", "HWIO", "NHWC"), precision=hi)
        return jnp.maximum(y + b, 0.0)

    def pool(h):
        return jax.lax.reduce_window(h, -jnp.inf, jax.lax.max,
                                     (1, 2, 2, 1), (1, 2, 2, 1), "VALID")

    y = pool(conv(x, params["conv1_w"], params["conv1_b"]))
    y = pool(conv(y, params["conv2_w"], params["conv2_b"]))
    y = jnp.transpose(y, (0, 3, 1, 2)).reshape(x.shape[0], -1)       # NCHW flatten
    y = jnp.maximum(jnp.dot(y, params["fc1_w"].T, precision=hi) + params["fc1_b"], 0.0)
    y = jnp.maximum(jnp.dot(y, params["fc2_w"].T, precision=hi) + params["fc2_b"], 0.0)
    return jnp.dot(y, params["fc3_w"].T, precision=hi) + params["fc3_b"]


def init_params(key):
    ks = jax.random.split(key, 10)

    def w(k, shape, fan_in):
        return jax.random.normal(k, shape, jnp.float32) / jnp.sqrt(float(fan_in))

    def b(k, n):
        return jax.random.uniform(k, (n,), jnp.float32, -0.3, 0.3)

    return {
        # PyTorch layouts: conv (C_out, C_in, KH, KW), linear (out, in)
        "conv1_w": w(ks[0], (32, 3, 3, 3), 27),    "conv1_b": b(ks[1], 32),
        "conv2_w": w(ks[2], (64, 32, 3, 3), 288),  "conv2_b": b(ks[3], 64),
        "fc1_w": w(ks[4], (512, 64 * 8 * 8), 64 * 8 * 8), "fc1_b": b(ks[5], 512),
        "fc2_w": w(ks[6], (128, 512), 512),        "fc2_b": b(ks[7], 128),
        "fc3_w": w(ks[8], (10, 128), 128),         "fc3_b": b(ks[9], 10),
    }


if __name__ == "__main__":
    key = jax.random.PRNGKey(0)
    k_x, k_p = jax.random.split(key)
    # 32x32 spatial / 3 channels are required by the module (fc1 expects 64*8*8)
    x = jax.random.normal(k_x, (2, 3, 32, 32), jnp.float32)
    params = init_params(k_p)
    kparams = prepare_params(params)          # one-time layout prep (host side)

    out = jax.block_until_ready(jax.jit(cnn_forward)(x, kparams))
    assert out.shape == (2, 10) and out.dtype == jnp.float32

    ref = jax.block_until_ready(cnn_reference(x, params))
    assert bool(jnp.allclose(out, ref, rtol=1e-1, atol=1e-1)), \
        float(jnp.max(jnp.abs(out - ref)))
    print("KERNEL_OK")
</pallas_src>

<mosaic_0001>
module attributes {stable_mosaic.version = 11 : i64} {
  func.func @conv_pool_kernel(%arg0: i32, %arg1: memref<1x34x102xf32, #tpu.memory_space<vmem>>, %arg2: memref<3x102x1024xf32, #tpu.memory_space<vmem>>, %arg3: memref<1x1024xf32, #tpu.memory_space<vmem>>, %arg4: memref<1x16x512xf32, #tpu.memory_space<vmem>>, %arg5: memref<32x1024xf32, #tpu.memory_space<vmem>>, %arg6: memref<32x512xf32, #tpu.memory_space<vmem>>) attributes {dimension_semantics = [#tpu.dimension_semantics<parallel>], iteration_bounds = array<i64: 2>, scalar_prefetch = 0 : i64, scratch_operands = 2 : i64, tpu.core_type = #tpu.core_type<tc>, window_params = [{transform_indices = @transform_0, window_bounds = array<i64: 1, 34, 102>}, {pipeline_mode = #tpu.pipeline_mode<synchronous>, transform_indices = @transform_1, window_bounds = array<i64: 3, 102, 1024>}, {pipeline_mode = #tpu.pipeline_mode<synchronous>, transform_indices = @transform_2, window_bounds = array<i64: 1, 1024>}, {transform_indices = @transform_3, window_bounds = array<i64: 1, 16, 512>}]} {
    %c0 = arith.constant 0 : index
    %c0_0 = arith.constant 0 : index
    %c0_1 = arith.constant 0 : index
    %0 = vector.load %arg1[%c0, %c0_0, %c0_1] : memref<1x34x102xf32, #tpu.memory_space<vmem>>, vector<1x32x102xf32>
    %1 = vector.shape_cast %0 : vector<1x32x102xf32> to vector<32x102xf32>
    %c0_2 = arith.constant 0 : index
    %c0_3 = arith.constant 0 : index
    %c0_4 = arith.constant 0 : index
    %2 = vector.load %arg2[%c0_2, %c0_3, %c0_4] : memref<3x102x1024xf32, #tpu.memory_space<vmem>>, vector<1x102x1024xf32>
    %3 = vector.shape_cast %2 : vector<1x102x1024xf32> to vector<102x1024xf32>
    %cst = arith.constant dense<0.000000e+00> : vector<32x1024xf32>
    %4 = tpu.matmul %1, %3, %cst {dimension_numbers = #tpu.dot_dimension_numbers<[1], [0], [0], [1], [0, 0, 1, 1], [], []>} : vector<32x102xf32>, vector<102x1024xf32>, vector<32x1024xf32> -> vector<32x1024xf32>
    %c0_5 = arith.constant 0 : index
    %c0_6 = arith.constant 0 : index
    %5 = vector.load %arg5[%c0_5, %c0_6] : memref<32x1024xf32, #tpu.memory_space<vmem>>, vector<32x1024xf32>
    tpu.vector_store %arg5[%c0_5, %c0_6], %4 {strides = array<i32>} : memref<32x1024xf32, #tpu.memory_space<vmem>>, vector<32x1024xf32>,
    %c0_7 = arith.constant 0 : index
    %c0_8 = arith.constant 0 : index
    %6 = vector.load %arg5[%c0_7, %c0_8] : memref<32x1024xf32, #tpu.memory_space<vmem>>, vector<32x1024xf32>
    %c0_9 = arith.constant 0 : index
    %c1 = arith.constant 1 : index
    %c0_10 = arith.constant 0 : index
    %7 = vector.load %arg1[%c0_9, %c1, %c0_10] : memref<1x34x102xf32, #tpu.memory_space<vmem>>, vector<1x32x102xf32>
    %8 = vector.shape_cast %7 : vector<1x32x102xf32> to vector<32x102xf32>
    %c1_11 = arith.constant 1 : index
    %c0_12 = arith.constant 0 : index
    %c0_13 = arith.constant 0 : index
    %9 = vector.load %arg2[%c1_11, %c0_12, %c0_13] : memref<3x102x1024xf32, #tpu.memory_space<vmem>>, vector<1x102x1024xf32>
    %10 = vector.shape_cast %9 : vector<1x102x1024xf32> to vector<102x1024xf32>
    %cst_14 = arith.constant dense<0.000000e+00> : vector<32x1024xf32>
    %11 = tpu.matmul %8, %10, %cst_14 {dimension_numbers = #tpu.dot_dimension_numbers<[1], [0], [0], [1], [0, 0, 1, 1], [], []>} : vector<32x102xf32>, vector<102x1024xf32>, vector<32x1024xf32> -> vector<32x1024xf32>
    %12 = arith.addf %6, %11 : vector<32x1024xf32>
    %c0_15 = arith.constant 0 : index
    %c0_16 = arith.constant 0 : index
    %13 = vector.load %arg5[%c0_15, %c0_16] : memref<32x1024xf32, #tpu.memory_space<vmem>>, vector<32x1024xf32>
    tpu.vector_store %arg5[%c0_15, %c0_16], %12 {strides = array<i32>} : memref<32x1024xf32, #tpu.memory_space<vmem>>, vector<32x1024xf32>,
    %c0_17 = arith.constant 0 : index
    %c0_18 = arith.constant 0 : index
    %14 = vector.load %arg5[%c0_17, %c0_18] : memref<32x1024xf32, #tpu.memory_space<vmem>>, vector<32x1024xf32>
    %c0_19 = arith.constant 0 : index
    %c2 = arith.constant 2 : index
    %c0_20 = arith.constant 0 : index
    %15 = vector.load %arg1[%c0_19, %c2, %c0_20] : memref<1x34x102xf32, #tpu.memory_space<vmem>>, vector<1x32x102xf32>
    %16 = vector.shape_cast %15 : vector<1x32x102xf32> to vector<32x102xf32>
    %c2_21 = arith.constant 2 : index
    %c0_22 = arith.constant 0 : index
    %c0_23 = arith.constant 0 : index
    %17 = vector.load %arg2[%c2_21, %c0_22, %c0_23] : memref<3x102x1024xf32, #tpu.memory_space<vmem>>, vector<1x102x1024xf32>
    %18 = vector.shape_cast %17 : vector<1x102x1024xf32> to vector<102x1024xf32>
    %cst_24 = arith.constant dense<0.000000e+00> : vector<32x1024xf32>
    %19 = tpu.matmul %16, %18, %cst_24 {dimension_numbers = #tpu.dot_dimension_numbers<[1], [0], [0], [1], [0, 0, 1, 1], [], []>} : vector<32x102xf32>, vector<102x1024xf32>, vector<32x1024xf32> -> vector<32x1024xf32>
    %20 = arith.addf %14, %19 : vector<32x1024xf32>
    %c0_25 = arith.constant 0 : index
    %c0_26 = arith.constant 0 : index
    %21 = vector.load %arg5[%c0_25, %c0_26] : memref<32x1024xf32, #tpu.memory_space<vmem>>, vector<32x1024xf32>
    tpu.vector_store %arg5[%c0_25, %c0_26], %20 {strides = array<i32>} : memref<32x1024xf32, #tpu.memory_space<vmem>>, vector<32x1024xf32>,
    %c0_27 = arith.constant 0 : index
    %c0_28 = arith.constant 0 : index
    %22 = vector.load %arg5[%c0_27, %c0_28] : memref<32x1024xf32, #tpu.memory_space<vmem>>, vector<32x1024xf32>
    %c0_29 = arith.constant 0 : index
    %c0_30 = arith.constant 0 : index
    %23 = vector.load %arg3[%c0_29, %c0_30] : memref<1x1024xf32, #tpu.memory_space<vmem>>, vector<1x1024xf32>
    %24 = vector.broadcast %23 : vector<1x1024xf32> to vector<32x1024xf32>
    %25 = arith.addf %22, %24 : vector<32x1024xf32>
    %cst_31 = arith.constant 0.000000e+00 : f32
    %26 = vector.broadcast %cst_31 : f32 to vector<32x1024xf32>
    %27 = arith.maximumf %25, %26 : vector<32x1024xf32>
    %28 = vector.extract_strided_slice %27 {offsets = [0, 0], sizes = [32, 512], strides = [1, 1]} : vector<32x1024xf32> to vector<32x512xf32>
    %29 = vector.extract_strided_slice %27 {offsets = [0, 512], sizes = [32, 512], strides = [1, 1]} : vector<32x1024xf32> to vector<32x512xf32>
    %30 = arith.maximumf %28, %29 : vector<32x512xf32>
    %c0_32 = arith.constant 0 : index
    %c0_33 = arith.constant 0 : index
    %31 = vector.load %arg6[%c0_32, %c0_33] : memref<32x512xf32, #tpu.memory_space<vmem>>, vector<32x512xf32>
    tpu.vector_store %arg6[%c0_32, %c0_33], %30 {strides = array<i32>} : memref<32x512xf32, #tpu.memory_space<vmem>>, vector<32x512xf32>,
    %c0_34 = arith.constant 0 : index
    %c0_35 = arith.constant 0 : index
    %32 = vector.load %arg6[%c0_34, %c0_35] : memref<32x512xf32, #tpu.memory_space<vmem>>, vector<1x512xf32>
    %c1_36 = arith.constant 1 : index
    %c0_37 = arith.constant 0 : index
    %33 = vector.load %arg6[%c1_36, %c0_37] : memref<32x512xf32, #tpu.memory_space<vmem>>, vector<1x512xf32>
    %34 = arith.maximumf %32, %33 : vector<1x512xf32>
    %c0_38 = arith.constant 0 : index
    %c0_39 = arith.constant 0 : index
    %c0_40 = arith.constant 0 : index
    %35 = vector.load %arg4[%c0_38, %c0_39, %c0_40] : memref<1x16x512xf32, #tpu.memory_space<vmem>>, vector<1x1x512xf32>
    %36 = vector.shape_cast %35 : vector<1x1x512xf32> to vector<1x512xf32>
    %37 = vector.shape_cast %34 : vector<1x512xf32> to vector<1x1x512xf32>
    tpu.vector_store %arg4[%c0_38, %c0_39, %c0_40], %37 {strides = array<i32>} : memref<1x16x512xf32, #tpu.memory_space<vmem>>, vector<1x1x512xf32>,
    %c2_41 = arith.constant 2 : index
    %c0_42 = arith.constant 0 : index
    %38 = vector.load %arg6[%c2_41, %c0_42] : memref<32x512xf32, #tpu.memory_space<vmem>>, vector<1x512xf32>
    %c3 = arith.constant 3 : index
    %c0_43 = arith.constant 0 : index
    %39 = vector.load %arg6[%c3, %c0_43] : memref<32x512xf32, #tpu.memory_space<vmem>>, vector<1x512xf32>
    %40 = arith.maximumf %38, %39 : vector<1x512xf32>
    %c0_44 = arith.constant 0 : index
    %c1_45 = arith.constant 1 : index
    %c0_46 = arith.constant 0 : index
    %41 = vector.load %arg4[%c0_44, %c1_45, %c0_46] : memref<1x16x512xf32, #tpu.memory_space<vmem>>, vector<1x1x512xf32>
    %42 = vector.shape_cast %41 : vector<1x1x512xf32> to vector<1x512xf32>
    %43 = vector.shape_cast %40 : vector<1x512xf32> to vector<1x1x512xf32>
    tpu.vector_store %arg4[%c0_44, %c1_45, %c0_46], %43 {strides = array<i32>} : memref<1x16x512xf32, #tpu.memory_space<vmem>>, vector<1x1x512xf32>,
    %c4 = arith.constant 4 : index
    %c0_47 = arith.constant 0 : index
    %44 = vector.load %arg6[%c4, %c0_47] : memref<32x512xf32, #tpu.memory_space<vmem>>, vector<1x512xf32>
    %c5 = arith.constant 5 : index
    %c0_48 = arith.constant 0 : index
    %45 = vector.load %arg6[%c5, %c0_48] : memref<32x512xf32, #tpu.memory_space<vmem>>, vector<1x512xf32>
    %46 = arith.maximumf %44, %45 : vector<1x512xf32>
    %c0_49 = arith.constant 0 : index
    %c2_50 = arith.constant 2 : index
    %c0_51 = arith.constant 0 : index
    %47 = vector.load %arg4[%c0_49, %c2_50, %c0_51] : memref<1x16x512xf32, #tpu.memory_space<vmem>>, vector<1x1x512xf32>
    %48 = vector.shape_cast %47 : vector<1x1x512xf32> to vector<1x512xf32>
    %49 = vector.shape_cast %46 : vector<1x512xf32> to vector<1x1x512xf32>
    tpu.vector_store %arg4[%c0_49, %c2_50, %c0_51], %49 {strides = array<i32>} : memref<1x16x512xf32, #tpu.memory_space<vmem>>, vector<1x1x512xf32>,
    %c6 = arith.constant 6 : index
    %c0_52 = arith.constant 0 : index
    %50 = vector.load %arg6[%c6, %c0_52] : memref<32x512xf32, #tpu.memory_space<vmem>>, vector<1x512xf32>
    %c7 = arith.constant 7 : index
    %c0_53 = arith.constant 0 : index
    %51 = vector.load %arg6[%c7, %c0_53] : memref<32x512xf32, #tpu.memory_space<vmem>>, vector<1x512xf32>
    %52 = arith.maximumf %50, %51 : vector<1x512xf32>
    %c0_54 = arith.constant 0 : index
    %c3_55 = arith.constant 3 : index
    %c0_56 = arith.constant 0 : index
    %53 = vector.load %arg4[%c0_54, %c3_55, %c0_56] : memref<1x16x512xf32, #tpu.memory_space<vmem>>, vector<1x1x512xf32>
    %54 = vector.shape_cast %53 : vector<1x1x512xf32> to vector<1x512xf32>
    %55 = vector.shape_cast %52 : vector<1x512xf32> to vector<1x1x512xf32>
    tpu.vector_store %arg4[%c0_54, %c3_55, %c0_56], %55 {strides = array<i32>} : memref<1x16x512xf32, #tpu.memory_space<vmem>>, vector<1x1x512xf32>,
    %c8 = arith.constant 8 : index
    %c0_57 = arith.constant 0 : index
    %56 = vector.load %arg6[%c8, %c0_57] : memref<32x512xf32, #tpu.memory_space<vmem>>, vector<1x512xf32>
    %c9 = arith.constant 9 : index
    %c0_58 = arith.constant 0 : index
    %57 = vector.load %arg6[%c9, %c0_58] : memref<32x512xf32, #tpu.memory_space<vmem>>, vector<1x512xf32>
    %58 = arith.maximumf %56, %57 : vector<1x512xf32>
    %c0_59 = arith.constant 0 : index
    %c4_60 = arith.constant 4 : index
    %c0_61 = arith.constant 0 : index
    %59 = vector.load %arg4[%c0_59, %c4_60, %c0_61] : memref<1x16x512xf32, #tpu.memory_space<vmem>>, vector<1x1x512xf32>
    %60 = vector.shape_cast %59 : vector<1x1x512xf32> to vector<1x512xf32>
    %61 = vector.shape_cast %58 : vector<1x512xf32> to vector<1x1x512xf32>
    tpu.vector_store %arg4[%c0_59, %c4_60, %c0_61], %61 {strides = array<i32>} : memref<1x16x512xf32, #tpu.memory_space<vmem>>, vector<1x1x512xf32>,
    %c10 = arith.constant 10 : index
    %c0_62 = arith.constant 0 : index
    %62 = vector.load %arg6[%c10, %c0_62] : memref<32x512xf32, #tpu.memory_space<vmem>>, vector<1x512xf32>
    %c11 = arith.constant 11 : index
    %c0_63 = arith.constant 0 : index
    %63 = vector.load %arg6[%c11, %c0_63] : memref<32x512xf32, #tpu.memory_space<vmem>>, vector<1x512xf32>
    %64 = arith.maximumf %62, %63 : vector<1x512xf32>
    %c0_64 = arith.constant 0 : index
    %c5_65 = arith.constant 5 : index
    %c0_66 = arith.constant 0 : index
    %65 = vector.load %arg4[%c0_64, %c5_65, %c0_66] : memref<1x16x512xf32, #tpu.memory_space<vmem>>, vector<1x1x512xf32>
    %66 = vector.shape_cast %65 : vector<1x1x512xf32> to vector<1x512xf32>
    %67 = vector.shape_cast %64 : vector<1x512xf32> to vector<1x1x512xf32>
    tpu.vector_store %arg4[%c0_64, %c5_65, %c0_66], %67 {strides = array<i32>} : memref<1x16x512xf32, #tpu.memory_space<vmem>>, vector<1x1x512xf32>,
    %c12 = arith.constant 12 : index
    %c0_67 = arith.constant 0 : index
    %68 = vector.load %arg6[%c12, %c0_67] : memref<32x512xf32, #tpu.memory_space<vmem>>, vector<1x512xf32>
    %c13 = arith.constant 13 : index
    %c0_68 = arith.constant 0 : index
    %69 = vector.load %arg6[%c13, %c0_68] : memref<32x512xf32, #tpu.memory_space<vmem>>, vector<1x512xf32>
    %70 = arith.maximumf %68, %69 : vector<1x512xf32>
    %c0_69 = arith.constant 0 : index
    %c6_70 = arith.constant 6 : index
    %c0_71 = arith.constant 0 : index
    %71 = vector.load %arg4[%c0_69, %c6_70, %c0_71] : memref<1x16x512xf32, #tpu.memory_space<vmem>>, vector<1x1x512xf32>
    %72 = vector.shape_cast %71 : vector<1x1x512xf32> to vector<1x512xf32>
    %73 = vector.shape_cast %70 : vector<1x512xf32> to vector<1x1x512xf32>
    tpu.vector_store %arg4[%c0_69, %c6_70, %c0_71], %73 {strides = array<i32>} : memref<1x16x512xf32, #tpu.memory_space<vmem>>, vector<1x1x512xf32>,
    %c14 = arith.constant 14 : index
    %c0_72 = arith.constant 0 : index
    %74 = vector.load %arg6[%c14, %c0_72] : memref<32x512xf32, #tpu.memory_space<vmem>>, vector<1x512xf32>
    %c15 = arith.constant 15 : index
    %c0_73 = arith.constant 0 : index
    %75 = vector.load %arg6[%c15, %c0_73] : memref<32x512xf32, #tpu.memory_space<vmem>>, vector<1x512xf32>
    %76 = arith.maximumf %74, %75 : vector<1x512xf32>
    %c0_74 = arith.constant 0 : index
    %c7_75 = arith.constant 7 : index
    %c0_76 = arith.constant 0 : index
    %77 = vector.load %arg4[%c0_74, %c7_75, %c0_76] : memref<1x16x512xf32, #tpu.memory_space<vmem>>, vector<1x1x512xf32>
    %78 = vector.shape_cast %77 : vector<1x1x512xf32> to vector<1x512xf32>
    %79 = vector.shape_cast %76 : vector<1x512xf32> to vector<1x1x512xf32>
    tpu.vector_store %arg4[%c0_74, %c7_75, %c0_76], %79 {strides = array<i32>} : memref<1x16x512xf32, #tpu.memory_space<vmem>>, vector<1x1x512xf32>,
    %c16 = arith.constant 16 : index
    %c0_77 = arith.constant 0 : index
    %80 = vector.load %arg6[%c16, %c0_77] : memref<32x512xf32, #tpu.memory_space<vmem>>, vector<1x512xf32>
    %c17 = arith.constant 17 : index
    %c0_78 = arith.constant 0 : index
    %81 = vector.load %arg6[%c17, %c0_78] : memref<32x512xf32, #tpu.memory_space<vmem>>, vector<1x512xf32>
    %82 = arith.maximumf %80, %81 : vector<1x512xf32>
    %c0_79 = arith.constant 0 : index
    %c8_80 = arith.constant 8 : index
    %c0_81 = arith.constant 0 : index
    %83 = vector.load %arg4[%c0_79, %c8_80, %c0_81] : memref<1x16x512xf32, #tpu.memory_space<vmem>>, vector<1x1x512xf32>
    %84 = vector.shape_cast %83 : vector<1x1x512xf32> to vector<1x512xf32>
    %85 = vector.shape_cast %82 : vector<1x512xf32> to vector<1x1x512xf32>
    tpu.vector_store %arg4[%c0_79, %c8_80, %c0_81], %85 {strides = array<i32>} : memref<1x16x512xf32, #tpu.memory_space<vmem>>, vector<1x1x512xf32>,
    %c18 = arith.constant 18 : index
    %c0_82 = arith.constant 0 : index
    %86 = vector.load %arg6[%c18, %c0_82] : memref<32x512xf32, #tpu.memory_space<vmem>>, vector<1x512xf32>
    %c19 = arith.constant 19 : index
    %c0_83 = arith.constant 0 : index
    %87 = vector.load %arg6[%c19, %c0_83] : memref<32x512xf32, #tpu.memory_space<vmem>>, vector<1x512xf32>
    %88 = arith.maximumf %86, %87 : vector<1x512xf32>
    %c0_84 = arith.constant 0 : index
    %c9_85 = arith.constant 9 : index
    %c0_86 = arith.constant 0 : index
    %89 = vector.load %arg4[%c0_84, %c9_85, %c0_86] : memref<1x16x512xf32, #tpu.memory_space<vmem>>, vector<1x1x512xf32>
    %90 = vector.shape_cast %89 : vector<1x1x512xf32> to vector<1x512xf32>
    %91 = vector.shape_cast %88 : vector<1x512xf32> to vector<1x1x512xf32>
    tpu.vector_store %arg4[%c0_84, %c9_85, %c0_86], %91 {strides = array<i32>} : memref<1x16x512xf32, #tpu.memory_space<vmem>>, vector<1x1x512xf32>,
    %c20 = arith.constant 20 : index
    %c0_87 = arith.constant 0 : index
    %92 = vector.load %arg6[%c20, %c0_87] : memref<32x512xf32, #tpu.memory_space<vmem>>, vector<1x512xf32>
    %c21 = arith.constant 21 : index
    %c0_88 = arith.constant 0 : index
    %93 = vector.load %arg6[%c21, %c0_88] : memref<32x512xf32, #tpu.memory_space<vmem>>, vector<1x512xf32>
    %94 = arith.maximumf %92, %93 : vector<1x512xf32>
    %c0_89 = arith.constant 0 : index
    %c10_90 = arith.constant 10 : index
    %c0_91 = arith.constant 0 : index
    %95 = vector.load %arg4[%c0_89, %c10_90, %c0_91] : memref<1x16x512xf32, #tpu.memory_space<vmem>>, vector<1x1x512xf32>
    %96 = vector.shape_cast %95 : vector<1x1x512xf32> to vector<1x512xf32>
    %97 = vector.shape_cast %94 : vector<1x512xf32> to vector<1x1x512xf32>
    tpu.vector_store %arg4[%c0_89, %c10_90, %c0_91], %97 {strides = array<i32>} : memref<1x16x512xf32, #tpu.memory_space<vmem>>, vector<1x1x512xf32>,
    %c22 = arith.constant 22 : index
    %c0_92 = arith.constant 0 : index
    %98 = vector.load %arg6[%c22, %c0_92] : memref<32x512xf32, #tpu.memory_space<vmem>>, vector<1x512xf32>
    %c23 = arith.constant 23 : index
    %c0_93 = arith.constant 0 : index
    %99 = vector.load %arg6[%c23, %c0_93] : memref<32x512xf32, #tpu.memory_space<vmem>>, vector<1x512xf32>
    %100 = arith.maximumf %98, %99 : vector<1x512xf32>
    %c0_94 = arith.constant 0 : index
    %c11_95 = arith.constant 11 : index
    %c0_96 = arith.constant 0 : index
    %101 = vector.load %arg4[%c0_94, %c11_95, %c0_96] : memref<1x16x512xf32, #tpu.memory_space<vmem>>, vector<1x1x512xf32>
    %102 = vector.shape_cast %101 : vector<1x1x512xf32> to vector<1x512xf32>
    %103 = vector.shape_cast %100 : vector<1x512xf32> to vector<1x1x512xf32>
    tpu.vector_store %arg4[%c0_94, %c11_95, %c0_96], %103 {strides = array<i32>} : memref<1x16x512xf32, #tpu.memory_space<vmem>>, vector<1x1x512xf32>,
    %c24 = arith.constant 24 : index
    %c0_97 = arith.constant 0 : index
    %104 = vector.load %arg6[%c24, %c0_97] : memref<32x512xf32, #tpu.memory_space<vmem>>, vector<1x512xf32>
    %c25 = arith.constant 25 : index
    %c0_98 = arith.constant 0 : index
    %105 = vector.load %arg6[%c25, %c0_98] : memref<32x512xf32, #tpu.memory_space<vmem>>, vector<1x512xf32>
    %106 = arith.maximumf %104, %105 : vector<1x512xf32>
    %c0_99 = arith.constant 0 : index
    %c12_100 = arith.constant 12 : index
    %c0_101 = arith.constant 0 : index
    %107 = vector.load %arg4[%c0_99, %c12_100, %c0_101] : memref<1x16x512xf32, #tpu.memory_space<vmem>>, vector<1x1x512xf32>
    %108 = vector.shape_cast %107 : vector<1x1x512xf32> to vector<1x512xf32>
    %109 = vector.shape_cast %106 : vector<1x512xf32> to vector<1x1x512xf32>
    tpu.vector_store %arg4[%c0_99, %c12_100, %c0_101], %109 {strides = array<i32>} : memref<1x16x512xf32, #tpu.memory_space<vmem>>, vector<1x1x512xf32>,
    %c26 = arith.constant 26 : index
    %c0_102 = arith.constant 0 : index
    %110 = vector.load %arg6[%c26, %c0_102] : memref<32x512xf32, #tpu.memory_space<vmem>>, vector<1x512xf32>
    %c27 = arith.constant 27 : index
    %c0_103 = arith.constant 0 : index
    %111 = vector.load %arg6[%c27, %c0_103] : memref<32x512xf32, #tpu.memory_space<vmem>>, vector<1x512xf32>
    %112 = arith.maximumf %110, %111 : vector<1x512xf32>
    %c0_104 = arith.constant 0 : index
    %c13_105 = arith.constant 13 : index
    %c0_106 = arith.constant 0 : index
    %113 = vector.load %arg4[%c0_104, %c13_105, %c0_106] : memref<1x16x512xf32, #tpu.memory_space<vmem>>, vector<1x1x512xf32>
    %114 = vector.shape_cast %113 : vector<1x1x512xf32> to vector<1x512xf32>
    %115 = vector.shape_cast %112 : vector<1x512xf32> to vector<1x1x512xf32>
    tpu.vector_store %arg4[%c0_104, %c13_105, %c0_106], %115 {strides = array<i32>} : memref<1x16x512xf32, #tpu.memory_space<vmem>>, vector<1x1x512xf32>,
    %c28 = arith.constant 28 : index
    %c0_107 = arith.constant 0 : index
    %116 = vector.load %arg6[%c28, %c0_107] : memref<32x512xf32, #tpu.memory_space<vmem>>, vector<1x512xf32>
    %c29 = arith.constant 29 : index
    %c0_108 = arith.constant 0 : index
    %117 = vector.load %arg6[%c29, %c0_108] : memref<32x512xf32, #tpu.memory_space<vmem>>, vector<1x512xf32>
    %118 = arith.maximumf %116, %117 : vector<1x512xf32>
    %c0_109 = arith.constant 0 : index
    %c14_110 = arith.constant 14 : index
    %c0_111 = arith.constant 0 : index
    %119 = vector.load %arg4[%c0_109, %c14_110, %c0_111] : memref<1x16x512xf32, #tpu.memory_space<vmem>>, vector<1x1x512xf32>
    %120 = vector.shape_cast %119 : vector<1x1x512xf32> to vector<1x512xf32>
    %121 = vector.shape_cast %118 : vector<1x512xf32> to vector<1x1x512xf32>
    tpu.vector_store %arg4[%c0_109, %c14_110, %c0_111], %121 {strides = array<i32>} : memref<1x16x512xf32, #tpu.memory_space<vmem>>, vector<1x1x512xf32>,
    %c30 = arith.constant 30 : index
    %c0_112 = arith.constant 0 : index
    %122 = vector.load %arg6[%c30, %c0_112] : memref<32x512xf32, #tpu.memory_space<vmem>>, vector<1x512xf32>
    %c31 = arith.constant 31 : index
    %c0_113 = arith.constant 0 : index
    %123 = vector.load %arg6[%c31, %c0_113] : memref<32x512xf32, #tpu.memory_space<vmem>>, vector<1x512xf32>
    %124 = arith.maximumf %122, %123 : vector<1x512xf32>
    %c0_114 = arith.constant 0 : index
    %c15_115 = arith.constant 15 : index
    %c0_116 = arith.constant 0 : index
    %125 = vector.load %arg4[%c0_114, %c15_115, %c0_116] : memref<1x16x512xf32, #tpu.memory_space<vmem>>, vector<1x1x512xf32>
    %126 = vector.shape_cast %125 : vector<1x1x512xf32> to vector<1x512xf32>
    %127 = vector.shape_cast %124 : vector<1x512xf32> to vector<1x1x512xf32>
    tpu.vector_store %arg4[%c0_114, %c15_115, %c0_116], %127 {strides = array<i32>} : memref<1x16x512xf32, #tpu.memory_space<vmem>>, vector<1x1x512xf32>,
    return
  }
  func.func @transform_0(%arg0: i32) -> (i32, i32, i32) {
    %c0_i32 = arith.constant 0 : i32
    %c0_i32_0 = arith.constant 0 : i32
    %c0_i32_1 = arith.constant 0 : i32
    return %arg0, %c0_i32, %c0_i32_0 : i32, i32, i32
  }
  func.func @transform_1(%arg0: i32) -> (i32, i32, i32) {
    %c0_i32 = arith.constant 0 : i32
    %c0_i32_0 = arith.constant 0 : i32
    %c0_i32_1 = arith.constant 0 : i32
    %c0_i32_2 = arith.constant 0 : i32
    return %c0_i32, %c0_i32_0, %c0_i32_1 : i32, i32, i32
  }
  func.func @transform_2(%arg0: i32) -> (i32, i32) {
    %c0_i32 = arith.constant 0 : i32
    %c0_i32_0 = arith.constant 0 : i32
    %c0_i32_1 = arith.constant 0 : i32
    return %c0_i32, %c0_i32_0 : i32, i32
  }
  func.func @transform_3(%arg0: i32) -> (i32, i32, i32) {
    %c0_i32 = arith.constant 0 : i32
    %c0_i32_0 = arith.constant 0 : i32
    %c0_i32_1 = arith.constant 0 : i32
    return %arg0, %c0_i32, %c0_i32_0 : i32, i32, i32
  }
}

module attributes {stable_mosaic.version = 11 : i64} {
  func.func @conv_pool_kernel(%arg0: i32, %arg1: memref<1x18x576xf32, #tpu.memory_space<vmem>>, %arg2: memref<3x576x1024xf32, #tpu.memory_space<vmem>>, %arg3: memref<1x1024xf32, #tpu.memory_space<vmem>>, %arg4: memref<1x8x512xf32, #tpu.memory_space<vmem>>, %arg5: memref<16x1024xf32, #tpu.memory_space<vmem>>, %arg6: memref<16x512xf32, #tpu.memory_space<vmem>>) attributes {dimension_semantics = [#tpu.dimension_semantics<parallel>], iteration_bounds = array<i64: 2>, scalar_prefetch = 0 : i64, scratch_operands = 2 : i64, tpu.core_type = #tpu.core_type<tc>, window_params = [{transform_indices = @transform_0, window_bounds = array<i64: 1, 18, 576>}, {pipeline_mode = #tpu.pipeline_mode<synchronous>, transform_indices = @transform_1, window_bounds = array<i64: 3, 576, 1024>}, {pipeline_mode = #tpu.pipeline_mode<synchronous>, transform_indices = @transform_2, window_bounds = array<i64: 1, 1024>}, {transform_indices = @transform_3, window_bounds = array<i64: 1, 8, 512>}]} {
    %c0 = arith.constant 0 : index
    %c0_0 = arith.constant 0 : index
    %c0_1 = arith.constant 0 : index
    %0 = vector.load %arg1[%c0, %c0_0, %c0_1] : memref<1x18x576xf32, #tpu.memory_space<vmem>>, vector<1x16x576xf32>
    %1 = vector.shape_cast %0 : vector<1x16x576xf32> to vector<16x576xf32>
    %c0_2 = arith.constant 0 : index
    %c0_3 = arith.constant 0 : index
    %c0_4 = arith.constant 0 : index
    %2 = vector.load %arg2[%c0_2, %c0_3, %c0_4] : memref<3x576x1024xf32, #tpu.memory_space<vmem>>, vector<1x576x1024xf32>
    %3 = vector.shape_cast %2 : vector<1x576x1024xf32> to vector<576x1024xf32>
    %cst = arith.constant dense<0.000000e+00> : vector<16x1024xf32>
    %4 = tpu.matmul %1, %3, %cst {dimension_numbers = #tpu.dot_dimension_numbers<[1], [0], [0], [1], [0, 0, 1, 1], [], []>} : vector<16x576xf32>, vector<576x1024xf32>, vector<16x1024xf32> -> vector<16x1024xf32>
    %c0_5 = arith.constant 0 : index
    %c0_6 = arith.constant 0 : index
    %5 = vector.load %arg5[%c0_5, %c0_6] : memref<16x1024xf32, #tpu.memory_space<vmem>>, vector<16x1024xf32>
    tpu.vector_store %arg5[%c0_5, %c0_6], %4 {strides = array<i32>} : memref<16x1024xf32, #tpu.memory_space<vmem>>, vector<16x1024xf32>,
    %c0_7 = arith.constant 0 : index
    %c0_8 = arith.constant 0 : index
    %6 = vector.load %arg5[%c0_7, %c0_8] : memref<16x1024xf32, #tpu.memory_space<vmem>>, vector<16x1024xf32>
    %c0_9 = arith.constant 0 : index
    %c1 = arith.constant 1 : index
    %c0_10 = arith.constant 0 : index
    %7 = vector.load %arg1[%c0_9, %c1, %c0_10] : memref<1x18x576xf32, #tpu.memory_space<vmem>>, vector<1x16x576xf32>
    %8 = vector.shape_cast %7 : vector<1x16x576xf32> to vector<16x576xf32>
    %c1_11 = arith.constant 1 : index
    %c0_12 = arith.constant 0 : index
    %c0_13 = arith.constant 0 : index
    %9 = vector.load %arg2[%c1_11, %c0_12, %c0_13] : memref<3x576x1024xf32, #tpu.memory_space<vmem>>, vector<1x576x1024xf32>
    %10 = vector.shape_cast %9 : vector<1x576x1024xf32> to vector<576x1024xf32>
    %cst_14 = arith.constant dense<0.000000e+00> : vector<16x1024xf32>
    %11 = tpu.matmul %8, %10, %cst_14 {dimension_numbers = #tpu.dot_dimension_numbers<[1], [0], [0], [1], [0, 0, 1, 1], [], []>} : vector<16x576xf32>, vector<576x1024xf32>, vector<16x1024xf32> -> vector<16x1024xf32>
    %12 = arith.addf %6, %11 : vector<16x1024xf32>
    %c0_15 = arith.constant 0 : index
    %c0_16 = arith.constant 0 : index
    %13 = vector.load %arg5[%c0_15, %c0_16] : memref<16x1024xf32, #tpu.memory_space<vmem>>, vector<16x1024xf32>
    tpu.vector_store %arg5[%c0_15, %c0_16], %12 {strides = array<i32>} : memref<16x1024xf32, #tpu.memory_space<vmem>>, vector<16x1024xf32>,
    %c0_17 = arith.constant 0 : index
    %c0_18 = arith.constant 0 : index
    %14 = vector.load %arg5[%c0_17, %c0_18] : memref<16x1024xf32, #tpu.memory_space<vmem>>, vector<16x1024xf32>
    %c0_19 = arith.constant 0 : index
    %c2 = arith.constant 2 : index
    %c0_20 = arith.constant 0 : index
    %15 = vector.load %arg1[%c0_19, %c2, %c0_20] : memref<1x18x576xf32, #tpu.memory_space<vmem>>, vector<1x16x576xf32>
    %16 = vector.shape_cast %15 : vector<1x16x576xf32> to vector<16x576xf32>
    %c2_21 = arith.constant 2 : index
    %c0_22 = arith.constant 0 : index
    %c0_23 = arith.constant 0 : index
    %17 = vector.load %arg2[%c2_21, %c0_22, %c0_23] : memref<3x576x1024xf32, #tpu.memory_space<vmem>>, vector<1x576x1024xf32>
    %18 = vector.shape_cast %17 : vector<1x576x1024xf32> to vector<576x1024xf32>
    %cst_24 = arith.constant dense<0.000000e+00> : vector<16x1024xf32>
    %19 = tpu.matmul %16, %18, %cst_24 {dimension_numbers = #tpu.dot_dimension_numbers<[1], [0], [0], [1], [0, 0, 1, 1], [], []>} : vector<16x576xf32>, vector<576x1024xf32>, vector<16x1024xf32> -> vector<16x1024xf32>
    %20 = arith.addf %14, %19 : vector<16x1024xf32>
    %c0_25 = arith.constant 0 : index
    %c0_26 = arith.constant 0 : index
    %21 = vector.load %arg5[%c0_25, %c0_26] : memref<16x1024xf32, #tpu.memory_space<vmem>>, vector<16x1024xf32>
    tpu.vector_store %arg5[%c0_25, %c0_26], %20 {strides = array<i32>} : memref<16x1024xf32, #tpu.memory_space<vmem>>, vector<16x1024xf32>,
    %c0_27 = arith.constant 0 : index
    %c0_28 = arith.constant 0 : index
    %22 = vector.load %arg5[%c0_27, %c0_28] : memref<16x1024xf32, #tpu.memory_space<vmem>>, vector<16x1024xf32>
    %c0_29 = arith.constant 0 : index
    %c0_30 = arith.constant 0 : index
    %23 = vector.load %arg3[%c0_29, %c0_30] : memref<1x1024xf32, #tpu.memory_space<vmem>>, vector<1x1024xf32>
    %24 = vector.broadcast %23 : vector<1x1024xf32> to vector<16x1024xf32>
    %25 = arith.addf %22, %24 : vector<16x1024xf32>
    %cst_31 = arith.constant 0.000000e+00 : f32
    %26 = vector.broadcast %cst_31 : f32 to vector<16x1024xf32>
    %27 = arith.maximumf %25, %26 : vector<16x1024xf32>
    %28 = vector.extract_strided_slice %27 {offsets = [0, 0], sizes = [16, 512], strides = [1, 1]} : vector<16x1024xf32> to vector<16x512xf32>
    %29 = vector.extract_strided_slice %27 {offsets = [0, 512], sizes = [16, 512], strides = [1, 1]} : vector<16x1024xf32> to vector<16x512xf32>
    %30 = arith.maximumf %28, %29 : vector<16x512xf32>
    %c0_32 = arith.constant 0 : index
    %c0_33 = arith.constant 0 : index
    %31 = vector.load %arg6[%c0_32, %c0_33] : memref<16x512xf32, #tpu.memory_space<vmem>>, vector<16x512xf32>
    tpu.vector_store %arg6[%c0_32, %c0_33], %30 {strides = array<i32>} : memref<16x512xf32, #tpu.memory_space<vmem>>, vector<16x512xf32>,
    %c0_34 = arith.constant 0 : index
    %c0_35 = arith.constant 0 : index
    %32 = vector.load %arg6[%c0_34, %c0_35] : memref<16x512xf32, #tpu.memory_space<vmem>>, vector<1x512xf32>
    %c1_36 = arith.constant 1 : index
    %c0_37 = arith.constant 0 : index
    %33 = vector.load %arg6[%c1_36, %c0_37] : memref<16x512xf32, #tpu.memory_space<vmem>>, vector<1x512xf32>
    %34 = arith.maximumf %32, %33 : vector<1x512xf32>
    %c0_38 = arith.constant 0 : index
    %c0_39 = arith.constant 0 : index
    %c0_40 = arith.constant 0 : index
    %35 = vector.load %arg4[%c0_38, %c0_39, %c0_40] : memref<1x8x512xf32, #tpu.memory_space<vmem>>, vector<1x1x512xf32>
    %36 = vector.shape_cast %35 : vector<1x1x512xf32> to vector<1x512xf32>
    %37 = vector.shape_cast %34 : vector<1x512xf32> to vector<1x1x512xf32>
    tpu.vector_store %arg4[%c0_38, %c0_39, %c0_40], %37 {strides = array<i32>} : memref<1x8x512xf32, #tpu.memory_space<vmem>>, vector<1x1x512xf32>,
    %c2_41 = arith.constant 2 : index
    %c0_42 = arith.constant 0 : index
    %38 = vector.load %arg6[%c2_41, %c0_42] : memref<16x512xf32, #tpu.memory_space<vmem>>, vector<1x512xf32>
    %c3 = arith.constant 3 : index
    %c0_43 = arith.constant 0 : index
    %39 = vector.load %arg6[%c3, %c0_43] : memref<16x512xf32, #tpu.memory_space<vmem>>, vector<1x512xf32>
    %40 = arith.maximumf %38, %39 : vector<1x512xf32>
    %c0_44 = arith.constant 0 : index
    %c1_45 = arith.constant 1 : index
    %c0_46 = arith.constant 0 : index
    %41 = vector.load %arg4[%c0_44, %c1_45, %c0_46] : memref<1x8x512xf32, #tpu.memory_space<vmem>>, vector<1x1x512xf32>
    %42 = vector.shape_cast %41 : vector<1x1x512xf32> to vector<1x512xf32>
    %43 = vector.shape_cast %40 : vector<1x512xf32> to vector<1x1x512xf32>
    tpu.vector_store %arg4[%c0_44, %c1_45, %c0_46], %43 {strides = array<i32>} : memref<1x8x512xf32, #tpu.memory_space<vmem>>, vector<1x1x512xf32>,
    %c4 = arith.constant 4 : index
    %c0_47 = arith.constant 0 : index
    %44 = vector.load %arg6[%c4, %c0_47] : memref<16x512xf32, #tpu.memory_space<vmem>>, vector<1x512xf32>
    %c5 = arith.constant 5 : index
    %c0_48 = arith.constant 0 : index
    %45 = vector.load %arg6[%c5, %c0_48] : memref<16x512xf32, #tpu.memory_space<vmem>>, vector<1x512xf32>
    %46 = arith.maximumf %44, %45 : vector<1x512xf32>
    %c0_49 = arith.constant 0 : index
    %c2_50 = arith.constant 2 : index
    %c0_51 = arith.constant 0 : index
    %47 = vector.load %arg4[%c0_49, %c2_50, %c0_51] : memref<1x8x512xf32, #tpu.memory_space<vmem>>, vector<1x1x512xf32>
    %48 = vector.shape_cast %47 : vector<1x1x512xf32> to vector<1x512xf32>
    %49 = vector.shape_cast %46 : vector<1x512xf32> to vector<1x1x512xf32>
    tpu.vector_store %arg4[%c0_49, %c2_50, %c0_51], %49 {strides = array<i32>} : memref<1x8x512xf32, #tpu.memory_space<vmem>>, vector<1x1x512xf32>,
    %c6 = arith.constant 6 : index
    %c0_52 = arith.constant 0 : index
    %50 = vector.load %arg6[%c6, %c0_52] : memref<16x512xf32, #tpu.memory_space<vmem>>, vector<1x512xf32>
    %c7 = arith.constant 7 : index
    %c0_53 = arith.constant 0 : index
    %51 = vector.load %arg6[%c7, %c0_53] : memref<16x512xf32, #tpu.memory_space<vmem>>, vector<1x512xf32>
    %52 = arith.maximumf %50, %51 : vector<1x512xf32>
    %c0_54 = arith.constant 0 : index
    %c3_55 = arith.constant 3 : index
    %c0_56 = arith.constant 0 : index
    %53 = vector.load %arg4[%c0_54, %c3_55, %c0_56] : memref<1x8x512xf32, #tpu.memory_space<vmem>>, vector<1x1x512xf32>
    %54 = vector.shape_cast %53 : vector<1x1x512xf32> to vector<1x512xf32>
    %55 = vector.shape_cast %52 : vector<1x512xf32> to vector<1x1x512xf32>
    tpu.vector_store %arg4[%c0_54, %c3_55, %c0_56], %55 {strides = array<i32>} : memref<1x8x512xf32, #tpu.memory_space<vmem>>, vector<1x1x512xf32>,
    %c8 = arith.constant 8 : index
    %c0_57 = arith.constant 0 : index
    %56 = vector.load %arg6[%c8, %c0_57] : memref<16x512xf32, #tpu.memory_space<vmem>>, vector<1x512xf32>
    %c9 = arith.constant 9 : index
    %c0_58 = arith.constant 0 : index
    %57 = vector.load %arg6[%c9, %c0_58] : memref<16x512xf32, #tpu.memory_space<vmem>>, vector<1x512xf32>
    %58 = arith.maximumf %56, %57 : vector<1x512xf32>
    %c0_59 = arith.constant 0 : index
    %c4_60 = arith.constant 4 : index
    %c0_61 = arith.constant 0 : index
    %59 = vector.load %arg4[%c0_59, %c4_60, %c0_61] : memref<1x8x512xf32, #tpu.memory_space<vmem>>, vector<1x1x512xf32>
    %60 = vector.shape_cast %59 : vector<1x1x512xf32> to vector<1x512xf32>
    %61 = vector.shape_cast %58 : vector<1x512xf32> to vector<1x1x512xf32>
    tpu.vector_store %arg4[%c0_59, %c4_60, %c0_61], %61 {strides = array<i32>} : memref<1x8x512xf32, #tpu.memory_space<vmem>>, vector<1x1x512xf32>,
    %c10 = arith.constant 10 : index
    %c0_62 = arith.constant 0 : index
    %62 = vector.load %arg6[%c10, %c0_62] : memref<16x512xf32, #tpu.memory_space<vmem>>, vector<1x512xf32>
    %c11 = arith.constant 11 : index
    %c0_63 = arith.constant 0 : index
    %63 = vector.load %arg6[%c11, %c0_63] : memref<16x512xf32, #tpu.memory_space<vmem>>, vector<1x512xf32>
    %64 = arith.maximumf %62, %63 : vector<1x512xf32>
    %c0_64 = arith.constant 0 : index
    %c5_65 = arith.constant 5 : index
    %c0_66 = arith.constant 0 : index
    %65 = vector.load %arg4[%c0_64, %c5_65, %c0_66] : memref<1x8x512xf32, #tpu.memory_space<vmem>>, vector<1x1x512xf32>
    %66 = vector.shape_cast %65 : vector<1x1x512xf32> to vector<1x512xf32>
    %67 = vector.shape_cast %64 : vector<1x512xf32> to vector<1x1x512xf32>
    tpu.vector_store %arg4[%c0_64, %c5_65, %c0_66], %67 {strides = array<i32>} : memref<1x8x512xf32, #tpu.memory_space<vmem>>, vector<1x1x512xf32>,
    %c12 = arith.constant 12 : index
    %c0_67 = arith.constant 0 : index
    %68 = vector.load %arg6[%c12, %c0_67] : memref<16x512xf32, #tpu.memory_space<vmem>>, vector<1x512xf32>
    %c13 = arith.constant 13 : index
    %c0_68 = arith.constant 0 : index
    %69 = vector.load %arg6[%c13, %c0_68] : memref<16x512xf32, #tpu.memory_space<vmem>>, vector<1x512xf32>
    %70 = arith.maximumf %68, %69 : vector<1x512xf32>
    %c0_69 = arith.constant 0 : index
    %c6_70 = arith.constant 6 : index
    %c0_71 = arith.constant 0 : index
    %71 = vector.load %arg4[%c0_69, %c6_70, %c0_71] : memref<1x8x512xf32, #tpu.memory_space<vmem>>, vector<1x1x512xf32>
    %72 = vector.shape_cast %71 : vector<1x1x512xf32> to vector<1x512xf32>
    %73 = vector.shape_cast %70 : vector<1x512xf32> to vector<1x1x512xf32>
    tpu.vector_store %arg4[%c0_69, %c6_70, %c0_71], %73 {strides = array<i32>} : memref<1x8x512xf32, #tpu.memory_space<vmem>>, vector<1x1x512xf32>,
    %c14 = arith.constant 14 : index
    %c0_72 = arith.constant 0 : index
    %74 = vector.load %arg6[%c14, %c0_72] : memref<16x512xf32, #tpu.memory_space<vmem>>, vector<1x512xf32>
    %c15 = arith.constant 15 : index
    %c0_73 = arith.constant 0 : index
    %75 = vector.load %arg6[%c15, %c0_73] : memref<16x512xf32, #tpu.memory_space<vmem>>, vector<1x512xf32>
    %76 = arith.maximumf %74, %75 : vector<1x512xf32>
    %c0_74 = arith.constant 0 : index
    %c7_75 = arith.constant 7 : index
    %c0_76 = arith.constant 0 : index
    %77 = vector.load %arg4[%c0_74, %c7_75, %c0_76] : memref<1x8x512xf32, #tpu.memory_space<vmem>>, vector<1x1x512xf32>
    %78 = vector.shape_cast %77 : vector<1x1x512xf32> to vector<1x512xf32>
    %79 = vector.shape_cast %76 : vector<1x512xf32> to vector<1x1x512xf32>
    tpu.vector_store %arg4[%c0_74, %c7_75, %c0_76], %79 {strides = array<i32>} : memref<1x8x512xf32, #tpu.memory_space<vmem>>, vector<1x1x512xf32>,
    return
  }
  func.func @transform_0(%arg0: i32) -> (i32, i32, i32) {
    %c0_i32 = arith.constant 0 : i32
    %c0_i32_0 = arith.constant 0 : i32
    %c0_i32_1 = arith.constant 0 : i32
    return %arg0, %c0_i32, %c0_i32_0 : i32, i32, i32
  }
  func.func @transform_1(%arg0: i32) -> (i32, i32, i32) {
    %c0_i32 = arith.constant 0 : i32
    %c0_i32_0 = arith.constant 0 : i32
    %c0_i32_1 = arith.constant 0 : i32
    %c0_i32_2 = arith.constant 0 : i32
    return %c0_i32, %c0_i32_0, %c0_i32_1 : i32, i32, i32
  }
  func.func @transform_2(%arg0: i32) -> (i32, i32) {
    %c0_i32 = arith.constant 0 : i32
    %c0_i32_0 = arith.constant 0 : i32
    %c0_i32_1 = arith.constant 0 : i32
    return %c0_i32, %c0_i32_0 : i32, i32
  }
  func.func @transform_3(%arg0: i32) -> (i32, i32, i32) {
    %c0_i32 = arith.constant 0 : i32
    %c0_i32_0 = arith.constant 0 : i32
    %c0_i32_1 = arith.constant 0 : i32
    return %arg0, %c0_i32, %c0_i32_0 : i32, i32, i32
  }
}

module attributes {stable_mosaic.version = 11 : i64} {
  func.func @fc_stack_kernel(%arg0: i32, %arg1: memref<2x1024xf32, #tpu.memory_space<vmem>>, %arg2: memref<1024x512xf32, #tpu.memory_space<vmem>>, %arg3: memref<1x512xf32, #tpu.memory_space<vmem>>, %arg4: memref<512x128xf32, #tpu.memory_space<vmem>>, %arg5: memref<1x128xf32, #tpu.memory_space<vmem>>, %arg6: memref<128x10xf32, #tpu.memory_space<vmem>>, %arg7: memref<1x10xf32, #tpu.memory_space<vmem>>, %arg8: memref<2x10xf32, #tpu.memory_space<vmem>>, %arg9: memref<2x512xf32, #tpu.memory_space<vmem>>) attributes {dimension_semantics = [#tpu.dimension_semantics<arbitrary>], iteration_bounds = array<i64: 4>, scalar_prefetch = 0 : i64, scratch_operands = 1 : i64, tpu.core_type = #tpu.core_type<tc>, window_params = [{transform_indices = @transform_0, window_bounds = array<i64: 2, 1024>}, {transform_indices = @transform_1, window_bounds = array<i64: 1024, 512>}, {pipeline_mode = #tpu.pipeline_mode<synchronous>, transform_indices = @transform_2, window_bounds = array<i64: 1, 512>}, {pipeline_mode = #tpu.pipeline_mode<synchronous>, transform_indices = @transform_3, window_bounds = array<i64: 512, 128>}, {pipeline_mode = #tpu.pipeline_mode<synchronous>, transform_indices = @transform_4, window_bounds = array<i64: 1, 128>}, {pipeline_mode = #tpu.pipeline_mode<synchronous>, transform_indices = @transform_5, window_bounds = array<i64: 128, 10>}, {pipeline_mode = #tpu.pipeline_mode<synchronous>, transform_indices = @transform_6, window_bounds = array<i64: 1, 10>}, {pipeline_mode = #tpu.pipeline_mode<synchronous>, transform_indices = @transform_7, window_bounds = array<i64: 2, 10>}]} {
    %c0_i32 = arith.constant 0 : i32
    %0 = arith.cmpi eq, %arg0, %c0_i32 : i32
    %1 = arith.extui %0 : i1 to i32
    %c0_i32_0 = arith.constant 0 : i32
    %2 = arith.cmpi ne, %1, %c0_i32_0 : i32
    scf.if %2 {
      %cst_9 = arith.constant 0.000000e+00 : f32
      %12 = vector.broadcast %cst_9 : f32 to vector<2x512xf32>
      %c0_10 = arith.constant 0 : index
      %c0_11 = arith.constant 0 : index
      %13 = vector.load %arg9[%c0_10, %c0_11] : memref<2x512xf32, #tpu.memory_space<vmem>>, vector<2x512xf32>
      tpu.vector_store %arg9[%c0_10, %c0_11], %12 {strides = array<i32>} : memref<2x512xf32, #tpu.memory_space<vmem>>, vector<2x512xf32>,
    } else {
    }
    %c0 = arith.constant 0 : index
    %c0_1 = arith.constant 0 : index
    %3 = vector.load %arg9[%c0, %c0_1] : memref<2x512xf32, #tpu.memory_space<vmem>>, vector<2x512xf32>
    %c0_2 = arith.constant 0 : index
    %c0_3 = arith.constant 0 : index
    %4 = vector.load %arg1[%c0_2, %c0_3] : memref<2x1024xf32, #tpu.memory_space<vmem>>, vector<2x1024xf32>
    %c0_4 = arith.constant 0 : index
    %c0_5 = arith.constant 0 : index
    %5 = vector.load %arg2[%c0_4, %c0_5] : memref<1024x512xf32, #tpu.memory_space<vmem>>, vector<1024x512xf32>
    %cst = arith.constant dense<0.000000e+00> : vector<2x512xf32>
    %6 = tpu.matmul %4, %5, %cst {dimension_numbers = #tpu.dot_dimension_numbers<[1], [0], [0], [1], [0, 0, 1, 1], [], []>} : vector<2x1024xf32>, vector<1024x512xf32>, vector<2x512xf32> -> vector<2x512xf32>
    %7 = arith.addf %3, %6 : vector<2x512xf32>
    %c0_6 = arith.constant 0 : index
    %c0_7 = arith.constant 0 : index
    %8 = vector.load %arg9[%c0_6, %c0_7] : memref<2x512xf32, #tpu.memory_space<vmem>>, vector<2x512xf32>
    tpu.vector_store %arg9[%c0_6, %c0_7], %7 {strides = array<i32>} : memref<2x512xf32, #tpu.memory_space<vmem>>, vector<2x512xf32>,
    %c3_i32 = arith.constant 3 : i32
    %9 = arith.cmpi eq, %arg0, %c3_i32 : i32
    %10 = arith.extui %9 : i1 to i32
    %c0_i32_8 = arith.constant 0 : i32
    %11 = arith.cmpi ne, %10, %c0_i32_8 : i32
    scf.if %11 {
      %c0_9 = arith.constant 0 : index
      %c0_10 = arith.constant 0 : index
      %12 = vector.load %arg9[%c0_9, %c0_10] : memref<2x512xf32, #tpu.memory_space<vmem>>, vector<2x512xf32>
      %c0_11 = arith.constant 0 : index
      %c0_12 = arith.constant 0 : index
      %13 = vector.load %arg3[%c0_11, %c0_12] : memref<1x512xf32, #tpu.memory_space<vmem>>, vector<1x512xf32>
      %14 = vector.broadcast %13 : vector<1x512xf32> to vector<2x512xf32>
      %15 = arith.addf %12, %14 : vector<2x512xf32>
      %cst_13 = arith.constant 0.000000e+00 : f32
      %16 = vector.broadcast %cst_13 : f32 to vector<2x512xf32>
      %17 = arith.maximumf %15, %16 : vector<2x512xf32>
      %c0_14 = arith.constant 0 : index
      %c0_15 = arith.constant 0 : index
      %18 = vector.load %arg4[%c0_14, %c0_15] : memref<512x128xf32, #tpu.memory_space<vmem>>, vector<512x128xf32>
      %cst_16 = arith.constant dense<0.000000e+00> : vector<2x128xf32>
      %19 = tpu.matmul %17, %18, %cst_16 {dimension_numbers = #tpu.dot_dimension_numbers<[1], [0], [0], [1], [0, 0, 1, 1], [], []>} : vector<2x512xf32>, vector<512x128xf32>, vector<2x128xf32> -> vector<2x128xf32>
      %c0_17 = arith.constant 0 : index
      %c0_18 = arith.constant 0 : index
      %20 = vector.load %arg5[%c0_17, %c0_18] : memref<1x128xf32, #tpu.memory_space<vmem>>, vector<1x128xf32>
      %21 = vector.broadcast %20 : vector<1x128xf32> to vector<2x128xf32>
      %22 = arith.addf %19, %21 : vector<2x128xf32>
      %cst_19 = arith.constant 0.000000e+00 : f32
      %23 = vector.broadcast %cst_19 : f32 to vector<2x128xf32>
      %24 = arith.maximumf %22, %23 : vector<2x128xf32>
      %c0_20 = arith.constant 0 : index
      %c0_21 = arith.constant 0 : index
      %25 = vector.load %arg6[%c0_20, %c0_21] : memref<128x10xf32, #tpu.memory_space<vmem>>, vector<128x10xf32>
      %cst_22 = arith.constant dense<0.000000e+00> : vector<2x10xf32>
      %26 = tpu.matmul %24, %25, %cst_22 {dimension_numbers = #tpu.dot_dimension_numbers<[1], [0], [0], [1], [0, 0, 1, 1], [], []>} : vector<2x128xf32>, vector<128x10xf32>, vector<2x10xf32> -> vector<2x10xf32>
      %c0_23 = arith.constant 0 : index
      %c0_24 = arith.constant 0 : index
      %27 = vector.load %arg7[%c0_23, %c0_24] : memref<1x10xf32, #tpu.memory_space<vmem>>, vector<1x10xf32>
      %28 = vector.broadcast %27 : vector<1x10xf32> to vector<2x10xf32>
      %29 = arith.addf %26, %28 : vector<2x10xf32>
      %c0_25 = arith.constant 0 : index
      %c0_26 = arith.constant 0 : index
      %30 = vector.load %arg8[%c0_25, %c0_26] : memref<2x10xf32, #tpu.memory_space<vmem>>, vector<2x10xf32>
      tpu.vector_store %arg8[%c0_25, %c0_26], %29 {strides = array<i32>} : memref<2x10xf32, #tpu.memory_space<vmem>>, vector<2x10xf32>,
    } else {
    }
    return
  }
  func.func @transform_0(%arg0: i32) -> (i32, i32) {
    %c0_i32 = arith.constant 0 : i32
    %c0_i32_0 = arith.constant 0 : i32
    return %c0_i32, %arg0 : i32, i32
  }
  func.func @transform_1(%arg0: i32) -> (i32, i32) {
    %c0_i32 = arith.constant 0 : i32
    %c0_i32_0 = arith.constant 0 : i32
    return %arg0, %c0_i32 : i32, i32
  }
  func.func @transform_2(%arg0: i32) -> (i32, i32) {
    %c0_i32 = arith.constant 0 : i32
    %c0_i32_0 = arith.constant 0 : i32
    %c0_i32_1 = arith.constant 0 : i32
    return %c0_i32, %c0_i32_0 : i32, i32
  }
  func.func @transform_3(%arg0: i32) -> (i32, i32) {
    %c0_i32 = arith.constant 0 : i32
    %c0_i32_0 = arith.constant 0 : i32
    %c0_i32_1 = arith.constant 0 : i32
    return %c0_i32, %c0_i32_0 : i32, i32
  }
  func.func @transform_4(%arg0: i32) -> (i32, i32) {
    %c0_i32 = arith.constant 0 : i32
    %c0_i32_0 = arith.constant 0 : i32
    %c0_i32_1 = arith.constant 0 : i32
    return %c0_i32, %c0_i32_0 : i32, i32
  }
  func.func @transform_5(%arg0: i32) -> (i32, i32) {
    %c0_i32 = arith.constant 0 : i32
    %c0_i32_0 = arith.constant 0 : i32
    %c0_i32_1 = arith.constant 0 : i32
    return %c0_i32, %c0_i32_0 : i32, i32
  }
  func.func @transform_6(%arg0: i32) -> (i32, i32) {
    %c0_i32 = arith.constant 0 : i32
    %c0_i32_0 = arith.constant 0 : i32
    %c0_i32_1 = arith.constant 0 : i32
    return %c0_i32, %c0_i32_0 : i32, i32
  }
  func.func @transform_7(%arg0: i32) -> (i32, i32) {
    %c0_i32 = arith.constant 0 : i32
    %c0_i32_0 = arith.constant 0 : i32
    %c0_i32_1 = arith.constant 0 : i32
    return %c0_i32, %c0_i32_0 : i32, i32
  }
}

</mosaic_0001>

<llo_original>
// kernel: cnn_forward.3
$region0: #{cnn_forward.3}
  #allocation0 [shape = 'u32[]', space=smem, size = 0x4, offset = 0x4, fixed_abs, tag = 'smem constant byte address 0x4 - core index']
  #allocation1 [shape = 'u32[144,128]{1,0:T(1,128)}', space=vmem, size = 0x12000, scoped, tag = 'internal scratch']
  #allocation2 [shape = 'f32[32,1024]{1,0:T(8,128)}', space=vmem, size = 0x20000, scoped, tag = 'scratch operand']
  #allocation3 [shape = 'f32[32,512]{1,0:T(8,128)}', space=vmem, size = 0x10000, scoped, tag = 'scratch operand']
  %s0 = inlined_call_operand.vmem [shape: f32[2,34,102], index: 0, kind: input, shape index: {}]
  %s1 = inlined_call_operand.hbm [shape: f32[3,102,1024], index: 1, kind: input, shape index: {}]
  %s2 = inlined_call_operand.hbm [shape: f32[1,1024], index: 2, kind: input, shape index: {}]
  %s3 = inlined_call_operand.vmem [shape: f32[2,16,512], index: 3, kind: output, shape index: {}]
  %s4 = sld [smem:[#allocation0]]
  $region53: #{cnn_forward.3} parent=0
    _
  %s6 = ssub.s32 1, %s4
  %s7 = scalar_select 0, %s6, %s4
  $region1: #{cnn_forward.3} parent=0
    #allocation4 [shape = 'u8[1277952]{0}', space=vmem, size = 0x138000, scoped, tag = 'input window, operand 1, single buffered']
    #allocation5 [shape = 's32[2]{0}', space=sflag, size = 0x8, scoped, tag = 'scoped memory for cnn_forward.3']
    #allocation6 [shape = 'u8[4096]{0}', space=vmem, size = 0x1000, scoped, tag = 'input window, operand 2, single buffered']
    #allocation7 [shape = 's32[1]{0}', space=sflag, size = 0x4, scoped, tag = 'scoped memory for cnn_forward.3']
    %8 = vsyncpa [#allocation5], 0
    %9 = vsyncpa [#allocation7], 0
    loop: start=0, step=1, limit=4
    $region2: #{cnn_forward.3} parent=1 // loop_pre_header
      _
    $region3: #{cnn_forward.3} parent=1 // loop_header
      %s11 = sphi 0, %s15
      %p12 = scmp.ge.s32.totalorder %s11, 4
      %s21 = sphi 0, %s23
      %s24 = sphi 0, %s21
      %s25 = sphi 0, %s24
      %s41 = sphi 0, %s25
      %s45 = sphi 0, %s45
      %s47 = sphi 0, %s45
      %s48 = sphi 0, %s47
      %s62 = sphi 0, %s48
      %s66 = sphi 0, %s66
      %s68 = sphi 0, %s66
      %s69 = sphi 0, %s68
      %s83 = sphi 0, %s69
      %s89 = sphi 0, %s91
      %s92 = sphi 0, %s89
      %s93 = sphi 0, %s92
      %s109 = sphi 0, %s93
    $region4: #{cnn_forward.3} parent=1 // loop_header_branch
      %14 = sbr.rel (%p12) target = $region8
    $region5: #{cnn_forward.3} parent=1 // loop_body
      %s16 = ssub.s32 %s11, 1
      %s17 = ssub.s32 %s11, 2
      %s18 = sadd.s32 %s11, 1
      %s19 = ssub.s32 %s11, %s18
      %p20 = scmp.eq.s32.totalorder %s19, 0
      %s22 = sadd.s32 %s21, 1
      %s23 = scalar_select %p20, %s21, %s22
      %p26 = pneg %p20
      %p27 = scmp.eq.s32.totalorder %s11, 1
      %p28 = por %p26, %p27
      %p29 = scmp.ne.s32.totalorder %s21, %s24
      %p30 = scmp.eq.s32.totalorder %s11, 0
      %p31 = por %p29, %p30
      %p32 = scmp.ne.s32.totalorder %s21, %s24
      %p33 = scmp.eq.s32.totalorder %s16, 1
      %p34 = por %p32, %p33
      %p35 = scmp.ne.s32.totalorder %s24, %s25
      %p36 = scmp.eq.s32.totalorder %s16, 0
      %p37 = por %p35, %p36
      %p38 = scmp.ne.s32.totalorder %s24, %s25
      %p39 = scmp.eq.s32.totalorder %s17, 1
      %p40 = por %p38, %p39
      %p42 = scmp.ne.s32.totalorder %s25, %s41
      %p43 = scmp.eq.s32.totalorder %s17, 0
      %p44 = por %p42, %p43
      %s46 = sadd.s32 %s45, 1
      %p49 = scmp.eq.s32.totalorder %s11, 1
      %p50 = scmp.ne.s32.totalorder %s45, %s47
      %p51 = scmp.eq.s32.totalorder %s11, 0
      %p52 = por %p50, %p51
      %p53 = scmp.ne.s32.totalorder %s45, %s47
      %p54 = scmp.eq.s32.totalorder %s16, 1
      %p55 = por %p53, %p54
      %p56 = scmp.ne.s32.totalorder %s47, %s48
      %p57 = scmp.eq.s32.totalorder %s16, 0
      %p58 = por %p56, %p57
      %p59 = scmp.ne.s32.totalorder %s47, %s48
      %p60 = scmp.eq.s32.totalorder %s17, 1
      %p61 = por %p59, %p60
      %p63 = scmp.ne.s32.totalorder %s48, %s62
      %p64 = scmp.eq.s32.totalorder %s17, 0
      %p65 = por %p63, %p64
      %s67 = sadd.s32 %s66, 1
      %p70 = scmp.eq.s32.totalorder %s11, 1
      %p71 = scmp.ne.s32.totalorder %s66, %s68
      %p72 = scmp.eq.s32.totalorder %s11, 0
      %p73 = por %p71, %p72
      %p74 = scmp.ne.s32.totalorder %s66, %s68
      %p75 = scmp.eq.s32.totalorder %s16, 1
      %p76 = por %p74, %p75
      %p77 = scmp.ne.s32.totalorder %s68, %s69
      %p78 = scmp.eq.s32.totalorder %s16, 0
      %p79 = por %p77, %p78
      %p80 = scmp.ne.s32.totalorder %s68, %s69
      %p81 = scmp.eq.s32.totalorder %s17, 1
      %p82 = por %p80, %p81
      %p84 = scmp.ne.s32.totalorder %s69, %s83
      %p85 = scmp.eq.s32.totalorder %s17, 0
      %p86 = por %p84, %p85
      %s87 = ssub.s32 %s11, %s18
      %p88 = scmp.eq.s32.totalorder %s87, 0
      %s90 = sadd.s32 %s89, 1
      %s91 = scalar_select %p88, %s89, %s90
      %p94 = pneg %p88
      %p95 = scmp.eq.s32.totalorder %s11, 1
      %p96 = por %p94, %p95
      %p97 = scmp.ne.s32.totalorder %s89, %s92
      %p98 = scmp.eq.s32.totalorder %s11, 0
      %p99 = por %p97, %p98
      %p100 = scmp.ne.s32.totalorder %s89, %s92
      %p101 = scmp.eq.s32.totalorder %s16, 1
      %p102 = por %p100, %p101
      %p103 = scmp.ne.s32.totalorder %s92, %s93
      %p104 = scmp.eq.s32.totalorder %s16, 0
      %p105 = por %p103, %p104
      %p106 = scmp.ne.s32.totalorder %s92, %s93
      %p107 = scmp.eq.s32.totalorder %s17, 1
      %p108 = por %p106, %p107
      %p110 = scmp.ne.s32.totalorder %s93, %s109
      %p111 = scmp.eq.s32.totalorder %s17, 0
      %p112 = por %p110, %p111
      %p113 = scmp.le.s32.totalorder 1, %s11
      %p114 = scmp.lt.s32.totalorder %s11, 3
      %p115 = pnand %p113, %p114
      %p116 = pneg %p115
      // Predicated region
      $region9: #{cnn_forward.3} parent=5 // pred_check
        _
      $region10: #{cnn_forward.3} parent=5 // pred_check_branch
        %118 = sbr.rel (%p115) target = $region12
      $region11: #{cnn_forward.3} parent=5 // pred_region
        %s119 = ssub.s32 %s11, 1
        // Predicated region
        $region13: #{cnn_forward.3} parent=11 // pred_check
          %p120 = pneg %p58
        $region14: #{cnn_forward.3} parent=11 // pred_check_branch
          %122 = sbr.rel (%p120) target = $region16
        $region15: #{cnn_forward.3} parent=11 // pred_region
          %s124 = ssub.s32 39936, 39936
          %125 = vsyncadd [#allocation5], %s124
          %s126 = sshll.u32 [#allocation4], 4
          %s127 = int_to_ptr.vmem [resolvable:$true] %s126
          %132 = dma.hbm_to_vmem [thread:$0]  %s1, 39936, %s127, [#allocation5], 1024, 1024, 64
        $region16: #{cnn_forward.3} parent=11 // pred_fallthru
          _
        // Predicated region
        $region17: #{cnn_forward.3} parent=11 // pred_check
          %p133 = pneg %p79
        $region18: #{cnn_forward.3} parent=11 // pred_check_branch
          %135 = sbr.rel (%p133) target = $region20
        $region19: #{cnn_forward.3} parent=11 // pred_region
          %s137 = ssub.s32 128, 128
          %138 = vsyncadd [#allocation7], %s137
          %s140 = sshll.u32 [#allocation6], 4
          %s141 = int_to_ptr.vmem [resolvable:$true] %s140
          %143 = dma.hbm_to_vmem [thread:$0]  %s2, 128, %s141, [#allocation7]
        $region20: #{cnn_forward.3} parent=11 // pred_fallthru
          _
      $region12: #{cnn_forward.3} parent=5 // pred_fallthru
        _
      %p144 = scmp.lt.s32.totalorder %s11, 2
      // Predicated region
      $region21: #{cnn_forward.3} parent=5 // pred_check
        %p145 = pneg %p144
      $region22: #{cnn_forward.3} parent=5 // pred_check_branch
        %147 = sbr.rel (%p145) target = $region24
      $region23: #{cnn_forward.3} parent=5 // pred_region
        // Predicated region
        $region25: #{cnn_forward.3} parent=23 // pred_check
          %p148 = pneg %p31
        $region26: #{cnn_forward.3} parent=23 // pred_check_branch
          %150 = sbr.rel (%p148) target = $region28
        $region27: #{cnn_forward.3} parent=23 // pred_region
          %p151 = scmp.lt.s32.totalorder %s11, 1
          %s152 = scalar_select %p151, %s11, 1
          %s153 = smul.addr %s152, 5
          %s154 = smul.addr %s153, 8
          %s155 = scalar_lea.vmem %s0, %s154
        $region28: #{cnn_forward.3} parent=23 // pred_fallthru
          _
      $region24: #{cnn_forward.3} parent=5 // pred_fallthru
        _
      %p156 = scmp.le.s32.totalorder 1, %s11
      %p157 = scmp.lt.s32.totalorder %s11, 3
      %p158 = pnand %p156, %p157
      %p159 = pneg %p158
      // Predicated region
      $region29: #{cnn_forward.3} parent=5 // pred_check
        _
      $region30: #{cnn_forward.3} parent=5 // pred_check_branch
        %161 = sbr.rel (%p158) target = $region32
      $region31: #{cnn_forward.3} parent=5 // pred_region
        %s162 = ssub.s32 %s11, 1
        // Predicated region
        $region33: #{cnn_forward.3} parent=31 // pred_check
          %p163 = pneg %p58
        $region34: #{cnn_forward.3} parent=31 // pred_check_branch
          %165 = sbr.rel (%p163) target = $region36
        $region35: #{cnn_forward.3} parent=31 // pred_region
          %166 = dma.done [#allocation5], 39936
        $region36: #{cnn_forward.3} parent=31 // pred_fallthru
          _
        // Predicated region
        $region37: #{cnn_forward.3} parent=31 // pred_check
          %p167 = pneg %p79
        $region38: #{cnn_forward.3} parent=31 // pred_check_branch
          %169 = sbr.rel (%p167) target = $region40
        $region39: #{cnn_forward.3} parent=31 // pred_region
          %170 = dma.done [#allocation7], 128
        $region40: #{cnn_forward.3} parent=31 // pred_fallthru
          _
        %p171 = scmp.lt.s32.totalorder %s16, 1
        %s172 = scalar_select %p171, %s16, 1
        %s173 = smul.addr %s172, 5
        %s174 = smul.addr %s173, 8
        %s175 = scalar_lea.vmem %s0, %s174
        %p176 = pneg %p37
        %p177 = pneg %p34
        %p178 = pneg %p58
        %p179 = pneg %p55
        %p180 = pneg %p79
        %p181 = pneg %p76
        %p182 = pneg %p105
        %p183 = pneg %p102
        %p184 = scmp.lt.s32.totalorder %s16, 1
        %s185 = scalar_select %p184, %s16, 1
        %s186 = smul.addr %s185, 8
        %s187 = smul.addr %s186, 8
        %s188 = scalar_lea.vmem %s3, %s187
        %p189 = scmp.lt.s32.totalorder %s16, 1
        %s190 = scalar_select %p189, %s16, 1
        %s191 = smul.addr %s190, 5
        %s192 = smul.addr %s191, 8
        %s193 = scalar_lea.vmem %s0, %s192
        %p194 = scmp.lt.s32.totalorder %s16, 1
        %s195 = scalar_select %p194, %s16, 1
        %s196 = smul.addr %s195, 8
        %s197 = smul.addr %s196, 8
        %s198 = scalar_lea.vmem %s3, %s197
        %v199 = vld [vmem:[%s193] sm:$0xff]
        %v200 = vld [vmem:[%s193 + $0x8] sm:$0xff]
        %v201 = vld [vmem:[%s193 + $0x10] sm:$0xff]
        %v202 = vld [vmem:[%s193 + $0x18] sm:$0xff]
        %v203 = vld [vmem:[#allocation4] sm:$0xff]
        %v204 = vld [vmem:[#allocation4 + $0x8] sm:$0xff]
        %v205 = vld [vmem:[#allocation4 + $0x10] sm:$0xff]
        %v206 = vld [vmem:[#allocation4 + $0x18] sm:$0xff]
        %v207 = vld [vmem:[#allocation4 + $0x20] sm:$0xff]
        %v208 = vld [vmem:[#allocation4 + $0x28] sm:$0xff]
        %v209 = vld [vmem:[#allocation4 + $0x30] sm:$0xff]
        %v210 = vld [vmem:[#allocation4 + $0x38] sm:$0xff]
        %v211 = vld [vmem:[#allocation4 + $0x40] sm:$0xff]
        %v212 = vld [vmem:[#allocation4 + $0x48] sm:$0xff]
        %v213 = vld [vmem:[#allocation4 + $0x50] sm:$0xff]
        %v214 = vld [vmem:[#allocation4 + $0x58] sm:$0xff]
        %v215 = vld [vmem:[#allocation4 + $0x60] sm:$0xff]
        %v216 = vld [vmem:[#allocation4 + $0x68] sm:$0xff]
        %v217 = vld [vmem:[#allocation4 + $0x70] sm:$0xff]
        %v218 = vld [vmem:[#allocation4 + $0x78] sm:$0xff]
        %v219 = vld [vmem:[#allocation4 + $0x80] sm:$0xff]
        %v220 = vld [vmem:[#allocation4 + $0x88] sm:$0xff]
        %v221 = vld [vmem:[#allocation4 + $0x90] sm:$0xff]
        %v222 = vld [vmem:[#allocation4 + $0x98] sm:$0xff]
        %v223 = vld [vmem:[#allocation4 + $0xa0] sm:$0xff]
        %v224 = vld [vmem:[#allocation4 + $0xa8] sm:$0xff]
        %v225 = vld [vmem:[#allocation4 + $0xb0] sm:$0xff]
        %v226 = vld [vmem:[#allocation4 + $0xb8] sm:$0xff]
        %v227 = vld [vmem:[#allocation4 + $0xc0] sm:$0xff]
        %v228 = vld [vmem:[#allocation4 + $0xc8] sm:$0xff]
        %v229 = vld [vmem:[#allocation4 + $0xd0] sm:$0xff]
        %v230 = vld [vmem:[#allocation4 + $0xd8] sm:$0xff]
        %v231 = vld [vmem:[#allocation4 + $0xe0] sm:$0xff]
        %v232 = vld [vmem:[#allocation4 + $0xe8] sm:$0xff]
        %v233 = vld [vmem:[#allocation4 + $0xf0] sm:$0xff]
        %v234 = vld [vmem:[#allocation4 + $0xf8] sm:$0xff]
        %v235 = vld [vmem:[#allocation4 + $0x100] sm:$0xff]
        %v236 = vld [vmem:[#allocation4 + $0x108] sm:$0xff]
        %v237 = vld [vmem:[#allocation4 + $0x110] sm:$0xff]
        %v238 = vld [vmem:[#allocation4 + $0x118] sm:$0xff]
        %v239 = vld [vmem:[#allocation4 + $0x120] sm:$0xff]
        %v240 = vld [vmem:[#allocation4 + $0x128] sm:$0xff]
        %v241 = vld [vmem:[#allocation4 + $0x130] sm:$0xff]
        %v242 = vld [vmem:[#allocation4 + $0x138] sm:$0xff]
        %v243 = vld [vmem:[#allocation4 + $0x140] sm:$0xff]
        %v244 = vld [vmem:[#allocation4 + $0x148] sm:$0xff]
        %v245 = vld [vmem:[#allocation4 + $0x150] sm:$0xff]
        %v246 = vld [vmem:[#allocation4 + $0x158] sm:$0xff]
        %v247 = vld [vmem:[#allocation4 + $0x160] sm:$0xff]
        %v248 = vld [vmem:[#allocation4 + $0x168] sm:$0xff]
        %v249 = vld [vmem:[#allocation4 + $0x170] sm:$0xff]
        %v250 = vld [vmem:[#allocation4 + $0x178] sm:$0xff]
        %v251 = vld [vmem:[#allocation4 + $0x180] sm:$0xff]
        %v252 = vld [vmem:[#allocation4 + $0x188] sm:$0xff]
        %v253 = vld [vmem:[#allocation4 + $0x190] sm:$0xff]
        %v254 = vld [vmem:[#allocation4 + $0x198] sm:$0xff]
        %v255 = vld [vmem:[#allocation4 + $0x1a0] sm:$0xff]
        %v256 = vld [vmem:[#allocation4 + $0x1a8] sm:$0xff]
        %v257 = vld [vmem:[#allocation4 + $0x1b0] sm:$0xff]
        %v258 = vld [vmem:[#allocation4 + $0x1b8] sm:$0xff]
        %v259 = vld [vmem:[#allocation4 + $0x1c0] sm:$0xff]
        %v260 = vld [vmem:[#allocation4 + $0x1c8] sm:$0xff]
        %v261 = vld [vmem:[#allocation4 + $0x1d0] sm:$0xff]
        %v262 = vld [vmem:[#allocation4 + $0x1d8] sm:$0xff]
        %v263 = vld [vmem:[#allocation4 + $0x1e0] sm:$0xff]
        %v264 = vld [vmem:[#allocation4 + $0x1e8] sm:$0xff]
        %v265 = vld [vmem:[#allocation4 + $0x1f0] sm:$0xff]
        %v266 = vld [vmem:[#allocation4 + $0x1f8] sm:$0xff]
        %v267 = vld [vmem:[#allocation4 + $0x200] sm:$0xff]
        %v268 = vld [vmem:[#allocation4 + $0x208] sm:$0xff]
        %v269 = vld [vmem:[#allocation4 + $0x210] sm:$0xff]
        %v270 = vld [vmem:[#allocation4 + $0x218] sm:$0xff]
        %v271 = vld [vmem:[#allocation4 + $0x220] sm:$0xff]
        %v272 = vld [vmem:[#allocation4 + $0x228] sm:$0xff]
        %v273 = vld [vmem:[#allocation4 + $0x230] sm:$0xff]
        %v274 = vld [vmem:[#allocation4 + $0x238] sm:$0xff]
        %v275 = vld [vmem:[#allocation4 + $0x240] sm:$0xff]
        %v276 = vld [vmem:[#allocation4 + $0x248] sm:$0xff]
        %v277 = vld [vmem:[#allocation4 + $0x250] sm:$0xff]
        %v278 = vld [vmem:[#allocation4 + $0x258] sm:$0xff]
        %v279 = vld [vmem:[#allocation4 + $0x260] sm:$0xff]
        %v280 = vld [vmem:[#allocation4 + $0x268] sm:$0xff]
        %v281 = vld [vmem:[#allocation4 + $0x270] sm:$0xff]
        %v282 = vld [vmem:[#allocation4 + $0x278] sm:$0xff]
        %v283 = vld [vmem:[#allocation4 + $0x280] sm:$0xff]
        %v284 = vld [vmem:[#allocation4 + $0x288] sm:$0xff]
        %v285 = vld [vmem:[#allocation4 + $0x290] sm:$0xff]
        %v286 = vld [vmem:[#allocation4 + $0x298] sm:$0xff]
        %v287 = vld [vmem:[#allocation4 + $0x2a0] sm:$0xff]
        %v288 = vld [vmem:[#allocation4 + $0x2a8] sm:$0xff]
        %v289 = vld [vmem:[#allocation4 + $0x2b0] sm:$0xff]
        %v290 = vld [vmem:[#allocation4 + $0x2b8] sm:$0xff]
        %v291 = vld [vmem:[#allocation4 + $0x2c0] sm:$0xff]
        %v292 = vld [vmem:[#allocation4 + $0x2c8] sm:$0xff]
        %v293 = vld [vmem:[#allocation4 + $0x2d0] sm:$0xff]
        %v294 = vld [vmem:[#allocation4 + $0x2d8] sm:$0xff]
        %v295 = vld [vmem:[#allocation4 + $0x2e0] sm:$0xff]
        %v296 = vld [vmem:[#allocation4 + $0x2e8] sm:$0xff]
        %v297 = vld [vmem:[#allocation4 + $0x2f0] sm:$0xff]
        %v298 = vld [vmem:[#allocation4 + $0x2f8] sm:$0xff]
        %v299 = vld [vmem:[#allocation4 + $0x300] sm:$0x3f]
        %v300 = vld [vmem:[#allocation4 + $0x308] sm:$0x3f]
        %v301 = vld [vmem:[#allocation4 + $0x310] sm:$0x3f]
        %v302 = vld [vmem:[#allocation4 + $0x318] sm:$0x3f]
        %v303 = vld [vmem:[#allocation4 + $0x320] sm:$0x3f]
        %v304 = vld [vmem:[#allocation4 + $0x328] sm:$0x3f]
        %v305 = vld [vmem:[#allocation4 + $0x330] sm:$0x3f]
        %v306 = vld [vmem:[#allocation4 + $0x338] sm:$0x3f]
        %vm307 = vcmask 834560
        %v309 = vsel %vm307, %v199, 0
        %v312 = vsel %vm307, %v200, 0
        %v315 = vsel %vm307, %v201, 0
        %v318 = vsel %vm307, %v202, 0
        %vm320 = vcmask 1045504
        %v322 = vsel %vm320, %v299, 0
        %v325 = vsel %vm320, %v300, 0
        %v328 = vsel %vm320, %v301, 0
        %v331 = vsel %vm320, %v302, 0
        %v334 = vsel %vm320, %v303, 0
        %v337 = vsel %vm320, %v304, 0
        %v340 = vsel %vm320, %v305, 0
        %v343 = vsel %vm320, %v306, 0
        %345 = vmatprep.subr.mxu0 0.0
        %346 = vmatpush1.msra.mxu0 0.0
        %347 = vmatprep.subr.mxu0 0.0
        %348 = vmatpush1.msra.mxu0 0.0
        %349 = vmatprep.subr.mxu0 0.0
        %350 = vmatpush1.msra.mxu0 0.0
        %351 = vmatprep.subr.mxu0 %v325
        %352 = vmatpush1.msra.mxu0 %v322
        %353 = vmatprep.subr.mxu0 %v292
        %354 = vmatpush1.msra.mxu0 %v291
        %355 = vmatprep.subr.mxu0 %v284
        %356 = vmatpush1.msra.mxu0 %v283
        %357 = vmatprep.subr.mxu0 %v276
        %358 = vmatpush1.msra.mxu0 %v275
        %359 = vmatprep.subr.mxu0 %v268
        %360 = vmatpush1.msra.mxu0 %v267
        %361 = vmatprep.subr.mxu0 %v260
        %362 = vmatpush1.msra.mxu0 %v259
        %363 = vmatprep.subr.mxu0 %v252
        %364 = vmatpush1.msra.mxu0 %v251
        %365 = vmatprep.subr.mxu0 %v244
        %366 = vmatpush1.msra.mxu0 %v243
        %367 = vmatprep.subr.mxu0 %v236
        %368 = vmatpush1.msra.mxu0 %v235
        %369 = vmatprep.subr.mxu0 %v228
        %370 = vmatpush1.msra.mxu0 %v227
        %371 = vmatprep.subr.mxu0 %v220
        %372 = vmatpush1.msra.mxu0 %v219
        %373 = vmatprep.subr.mxu0 %v212
        %374 = vmatpush1.msra.mxu0 %v211
        %375 = vmatprep.subr.mxu0 %v204
        %376 = vmatpush1.msra.mxu0 %v203
        %377 = vmatprep.subr.mxu0 0.0
        %378 = vmatpush2.msra.mxu0 0.0
        %379 = vmatprep.subr.mxu0 0.0
        %380 = vmatpush2.msra.mxu0 0.0
        %381 = vmatprep.subr.mxu0 0.0
        %382 = vmatpush2.msra.mxu0 0.0
        %383 = vmatprep.subr.mxu0 0.0
        %384 = vmatpush2.msra.mxu0 0.0
        %385 = vmatprep.subr.mxu0 0.0
        %386 = vmatpush2.msra.mxu0 0.0
        %387 = vmatprep.subr.mxu0 0.0
        %388 = vmatpush2.msra.mxu0 0.0
        %389 = vmatprep.subr.mxu0 0.0
        %390 = vmatpush2.msra.mxu0 0.0
        %391 = vmatprep.subr.mxu0 0.0
        %392 = vmatpush2.msra.mxu0 0.0
        %393 = vmatprep.subr.mxu0 0.0
        %394 = vmatpush2.msra.mxu0 0.0
        %395 = vmatprep.subr.mxu0 0.0
        %396 = vmatpush2.msra.mxu0 0.0
        %397 = vmatprep.subr.mxu0 0.0
        %398 = vmatpush2.msra.mxu0 0.0
        %399 = vmatprep.subr.mxu0 0.0
        %400 = vmatpush2.msra.mxu0 0.0
        %401 = vmatprep.subr.mxu0 0.0
        %402 = vmatpush2.msra.mxu0 0.0
        %403 = vmatprep.subr.mxu0 0.0
        %404 = vmatpush2.msra.mxu0 0.0
        %405 = vmatprep.subr.mxu0 0.0
        %406 = vmatpush2.msra.mxu0 0.0
        %407 = vmatprep.subr.mxu0 0.0
        %408 = vmatpush2.msra.mxu0 0.0
        %409 = vmatprep.mubr.f32.mxu0 0.0
        %410 = vmatmul.mubr.f32.gmra.mxu0 %v309
        %v411 = vpop.f32.mrf.mxu0
        %v412 = vadd.f32 0.0, %v411
        %v413 = vpop.f32.mrf.mxu0
        %v414 = vadd.f32 0.0, %v413
        %415 = vmatprep.mubr.f32.mxu0 0.0
        %416 = vmatmul.mubr.f32.gmra.mxu0 %v312
        %v417 = vpop.f32.mrf.mxu0
        %v418 = vadd.f32 0.0, %v417
        %v419 = vpop.f32.mrf.mxu0
        %v420 = vadd.f32 0.0, %v419
        %421 = vmatprep.mubr.f32.mxu0 0.0
        %422 = vmatmul.mubr.f32.gmra.mxu0 %v315
        %v423 = vpop.f32.mrf.mxu0
        %v424 = vadd.f32 0.0, %v423
        %v425 = vpop.f32.mrf.mxu0
        %v426 = vadd.f32 0.0, %v425
        %427 = vmatprep.mubr.f32.mxu0 0.0
        %428 = vmatmul.mubr.f32.gmra.mxu0 %v318
        %v429 = vpop.f32.mrf.mxu0
        %v430 = vadd.f32 0.0, %v429
        %v431 = vpop.f32.mrf.mxu0
        %v432 = vadd.f32 0.0, %v431
        %433 = vdwg.mxu0
        %434 = vmatprep.subr.mxu0 0.0
        %435 = vmatpush1.msra.mxu0 0.0
        %436 = vmatprep.subr.mxu0 0.0
        %437 = vmatpush1.msra.mxu0 0.0
        %438 = vmatprep.subr.mxu0 0.0
        %439 = vmatpush1.msra.mxu0 0.0
        %440 = vmatprep.subr.mxu0 %v331
        %441 = vmatpush1.msra.mxu0 %v328
        %442 = vmatprep.subr.mxu0 %v294
        %443 = vmatpush1.msra.mxu0 %v293
        %444 = vmatprep.subr.mxu0 %v286
        %445 = vmatpush1.msra.mxu0 %v285
        %446 = vmatprep.subr.mxu0 %v278
        %447 = vmatpush1.msra.mxu0 %v277
        %448 = vmatprep.subr.mxu0 %v270
        %449 = vmatpush1.msra.mxu0 %v269
        %450 = vmatprep.subr.mxu0 %v262
        %451 = vmatpush1.msra.mxu0 %v261
        %452 = vmatprep.subr.mxu0 %v254
        %453 = vmatpush1.msra.mxu0 %v253
        %454 = vmatprep.subr.mxu0 %v246
        %455 = vmatpush1.msra.mxu0 %v245
        %456 = vmatprep.subr.mxu0 %v238
        %457 = vmatpush1.msra.mxu0 %v237
        %458 = vmatprep.subr.mxu0 %v230
        %459 = vmatpush1.msra.mxu0 %v229
        %460 = vmatprep.subr.mxu0 %v222
        %461 = vmatpush1.msra.mxu0 %v221
        %462 = vmatprep.subr.mxu0 %v214
        %463 = vmatpush1.msra.mxu0 %v213
        %464 = vmatprep.subr.mxu0 %v206
        %465 = vmatpush1.msra.mxu0 %v205
        %466 = vmatprep.subr.mxu0 0.0
        %467 = vmatpush2.msra.mxu0 0.0
        %468 = vmatprep.subr.mxu0 0.0
        %469 = vmatpush2.msra.mxu0 0.0
        %470 = vmatprep.subr.mxu0 0.0
        %471 = vmatpush2.msra.mxu0 0.0
        %472 = vmatprep.subr.mxu0 0.0
        %473 = vmatpush2.msra.mxu0 0.0
        %474 = vmatprep.subr.mxu0 0.0
        %475 = vmatpush2.msra.mxu0 0.0
        %476 = vmatprep.subr.mxu0 0.0
        %477 = vmatpush2.msra.mxu0 0.0
        %478 = vmatprep.subr.mxu0 0.0
        %479 = vmatpush2.msra.mxu0 0.0
        %480 = vmatprep.subr.mxu0 0.0
        %481 = vmatpush2.msra.mxu0 0.0
        %482 = vmatprep.subr.mxu0 0.0
        %483 = vmatpush2.msra.mxu0 0.0
        %484 = vmatprep.subr.mxu0 0.0
        %485 = vmatpush2.msra.mxu0 0.0
        %486 = vmatprep.subr.mxu0 0.0
        %487 = vmatpush2.msra.mxu0 0.0
        %488 = vmatprep.subr.mxu0 0.0
        %489 = vmatpush2.msra.mxu0 0.0
        %490 = vmatprep.subr.mxu0 0.0
        %491 = vmatpush2.msra.mxu0 0.0
        %492 = vmatprep.subr.mxu0 0.0
        %493 = vmatpush2.msra.mxu0 0.0
        %494 = vmatprep.subr.mxu0 0.0
        %495 = vmatpush2.msra.mxu0 0.0
        %496 = vmatprep.subr.mxu0 0.0
        %497 = vmatpush2.msra.mxu0 0.0
        %498 = vmatprep.mubr.f32.mxu0 0.0
        %499 = vmatmul.mubr.f32.gmra.mxu0 %v309
        %v500 = vpop.f32.mrf.mxu0
        %v501 = vadd.f32 0.0, %v500
        %v502 = vpop.f32.mrf.mxu0
        %v503 = vadd.f32 0.0, %v502
        %504 = vmatprep.mubr.f32.mxu0 0.0
        %505 = vmatmul.mubr.f32.gmra.mxu0 %v312
        %v506 = vpop.f32.mrf.mxu0
        %v507 = vadd.f32 0.0, %v506
        %v508 = vpop.f32.mrf.mxu0
        %v509 = vadd.f32 0.0, %v508
        %510 = vmatprep.mubr.f32.mxu0 0.0
        %511 = vmatmul.mubr.f32.gmra.mxu0 %v315
        %v512 = vpop.f32.mrf.mxu0
        %v513 = vadd.f32 0.0, %v512
        %v514 = vpop.f32.mrf.mxu0
        %v515 = vadd.f32 0.0, %v514
        %516 = vmatprep.mubr.f32.mxu0 0.0
        %517 = vmatmul.mubr.f32.gmra.mxu0 %v318
        %v518 = vpop.f32.mrf.mxu0
        %v519 = vadd.f32 0.0, %v518
        %v520 = vpop.f32.mrf.mxu0
        %v521 = vadd.f32 0.0, %v520
        %522 = vdwg.mxu0
        %523 = vmatprep.subr.mxu0 0.0
        %524 = vmatpush1.msra.mxu0 0.0
        %525 = vmatprep.subr.mxu0 0.0
        %526 = vmatpush1.msra.mxu0 0.0
        %527 = vmatprep.subr.mxu0 0.0
        %528 = vmatpush1.msra.mxu0 0.0
        %529 = vmatprep.subr.mxu0 %v337
        %530 = vmatpush1.msra.mxu0 %v334
        %531 = vmatprep.subr.mxu0 %v296
        %532 = vmatpush1.msra.mxu0 %v295
        %533 = vmatprep.subr.mxu0 %v288
        %534 = vmatpush1.msra.mxu0 %v287
        %535 = vmatprep.subr.mxu0 %v280
        %536 = vmatpush1.msra.mxu0 %v279
        %537 = vmatprep.subr.mxu0 %v272
        %538 = vmatpush1.msra.mxu0 %v271
        %539 = vmatprep.subr.mxu0 %v264
        %540 = vmatpush1.msra.mxu0 %v263
        %541 = vmatprep.subr.mxu0 %v256
        %542 = vmatpush1.msra.mxu0 %v255
        %543 = vmatprep.subr.mxu0 %v248
        %544 = vmatpush1.msra.mxu0 %v247
        %545 = vmatprep.subr.mxu0 %v240
        %546 = vmatpush1.msra.mxu0 %v239
        %547 = vmatprep.subr.mxu0 %v232
        %548 = vmatpush1.msra.mxu0 %v231
        %549 = vmatprep.subr.mxu0 %v224
        %550 = vmatpush1.msra.mxu0 %v223
        %551 = vmatprep.subr.mxu0 %v216
        %552 = vmatpush1.msra.mxu0 %v215
        %553 = vmatprep.subr.mxu0 %v208
        %554 = vmatpush1.msra.mxu0 %v207
        %555 = vmatprep.subr.mxu0 0.0
        %556 = vmatpush2.msra.mxu0 0.0
        %557 = vmatprep.subr.mxu0 0.0
        %558 = vmatpush2.msra.mxu0 0.0
        %559 = vmatprep.subr.mxu0 0.0
        %560 = vmatpush2.msra.mxu0 0.0
        %561 = vmatprep.subr.mxu0 0.0
        %562 = vmatpush2.msra.mxu0 0.0
        %563 = vmatprep.subr.mxu0 0.0
        %564 = vmatpush2.msra.mxu0 0.0
        %565 = vmatprep.subr.mxu0 0.0
        %566 = vmatpush2.msra.mxu0 0.0
        %567 = vmatprep.subr.mxu0 0.0
        %568 = vmatpush2.msra.mxu0 0.0
        %569 = vmatprep.subr.mxu0 0.0
        %570 = vmatpush2.msra.mxu0 0.0
        %571 = vmatprep.subr.mxu0 0.0
        %572 = vmatpush2.msra.mxu0 0.0
        %573 = vmatprep.subr.mxu0 0.0
        %574 = vmatpush2.msra.mxu0 0.0
        %575 = vmatprep.subr.mxu0 0.0
        %576 = vmatpush2.msra.mxu0 0.0
        %577 = vmatprep.subr.mxu0 0.0
        %578 = vmatpush2.msra.mxu0 0.0
        %579 = vmatprep.subr.mxu0 0.0
        %580 = vmatpush2.msra.mxu0 0.0
        %581 = vmatprep.subr.mxu0 0.0
        %582 = vmatpush2.msra.mxu0 0.0
        %583 = vmatprep.subr.mxu0 0.0
        %584 = vmatpush2.msra.mxu0 0.0
        %585 = vmatprep.subr.mxu0 0.0
        %586 = vmatpush2.msra.mxu0 0.0
        %587 = vmatprep.mubr.f32.mxu0 0.0
        %588 = vmatmul.mubr.f32.gmra.mxu0 %v309
        %v589 = vpop.f32.mrf.mxu0
        %v590 = vadd.f32 0.0, %v589
        %v591 = vpop.f32.mrf.mxu0
        %v592 = vadd.f32 0.0, %v591
        %593 = vmatprep.mubr.f32.mxu0 0.0
        %594 = vmatmul.mubr.f32.gmra.mxu0 %v312
        %v595 = vpop.f32.mrf.mxu0
        %v596 = vadd.f32 0.0, %v595
        %v597 = vpop.f32.mrf.mxu0
        %v598 = vadd.f32 0.0, %v597
        %599 = vmatprep.mubr.f32.mxu0 0.0
        %600 = vmatmul.mubr.f32.gmra.mxu0 %v315
        %v601 = vpop.f32.mrf.mxu0
        %v602 = vadd.f32 0.0, %v601
        %v603 = vpop.f32.mrf.mxu0
        %v604 = vadd.f32 0.0, %v603
        %605 = vmatprep.mubr.f32.mxu0 0.0
        %606 = vmatmul.mubr.f32.gmra.mxu0 %v318
        %v607 = vpop.f32.mrf.mxu0
        %v608 = vadd.f32 0.0, %v607
        %v609 = vpop.f32.mrf.mxu0
        %v610 = vadd.f32 0.0, %v609
        %611 = vdwg.mxu0
        %612 = vmatprep.subr.mxu0 0.0
        %613 = vmatpush1.msra.mxu0 0.0
        %614 = vmatprep.subr.mxu0 0.0
        %615 = vmatpush1.msra.mxu0 0.0
        %616 = vmatprep.subr.mxu0 0.0
        %617 = vmatpush1.msra.mxu0 0.0
        %618 = vmatprep.subr.mxu0 %v343
        %619 = vmatpush1.msra.mxu0 %v340
        %620 = vmatprep.subr.mxu0 %v298
        %621 = vmatpush1.msra.mxu0 %v297
        %622 = vmatprep.subr.mxu0 %v290
        %623 = vmatpush1.msra.mxu0 %v289
        %624 = vmatprep.subr.mxu0 %v282
        %625 = vmatpush1.msra.mxu0 %v281
        %626 = vmatprep.subr.mxu0 %v274
        %627 = vmatpush1.msra.mxu0 %v273
        %628 = vmatprep.subr.mxu0 %v266
        %629 = vmatpush1.msra.mxu0 %v265
        %630 = vmatprep.subr.mxu0 %v258
        %631 = vmatpush1.msra.mxu0 %v257
        %632 = vmatprep.subr.mxu0 %v250
        %633 = vmatpush1.msra.mxu0 %v249
        %634 = vmatprep.subr.mxu0 %v242
        %635 = vmatpush1.msra.mxu0 %v241
        %636 = vmatprep.subr.mxu0 %v234
        %637 = vmatpush1.msra.mxu0 %v233
        %638 = vmatprep.subr.mxu0 %v226
        %639 = vmatpush1.msra.mxu0 %v225
        %640 = vmatprep.subr.mxu0 %v218
        %641 = vmatpush1.msra.mxu0 %v217
        %642 = vmatprep.subr.mxu0 %v210
        %643 = vmatpush1.msra.mxu0 %v209
        %644 = vmatprep.subr.mxu0 0.0
        %645 = vmatpush2.msra.mxu0 0.0
        %646 = vmatprep.subr.mxu0 0.0
        %647 = vmatpush2.msra.mxu0 0.0
        %648 = vmatprep.subr.mxu0 0.0
        %649 = vmatpush2.msra.mxu0 0.0
        %650 = vmatprep.subr.mxu0 0.0
        %651 = vmatpush2.msra.mxu0 0.0
        %652 = vmatprep.subr.mxu0 0.0
        %653 = vmatpush2.msra.mxu0 0.0
        %654 = vmatprep.subr.mxu0 0.0
        %655 = vmatpush2.msra.mxu0 0.0
        %656 = vmatprep.subr.mxu0 0.0
        %657 = vmatpush2.msra.mxu0 0.0
        %658 = vmatprep.subr.mxu0 0.0
        %659 = vmatpush2.msra.mxu0 0.0
        %660 = vmatprep.subr.mxu0 0.0
        %661 = vmatpush2.msra.mxu0 0.0
        %662 = vmatprep.subr.mxu0 0.0
        %663 = vmatpush2.msra.mxu0 0.0
        %664 = vmatprep.subr.mxu0 0.0
        %665 = vmatpush2.msra.mxu0 0.0
        %666 = vmatprep.subr.mxu0 0.0
        %667 = vmatpush2.msra.mxu0 0.0
        %668 = vmatprep.subr.mxu0 0.0
        %669 = vmatpush2.msra.mxu0 0.0
        %670 = vmatprep.subr.mxu0 0.0
        %671 = vmatpush2.msra.mxu0 0.0
        %672 = vmatprep.subr.mxu0 0.0
        %673 = vmatpush2.msra.mxu0 0.0
        %674 = vmatprep.subr.mxu0 0.0
        %675 = vmatpush2.msra.mxu0 0.0
        %676 = vmatprep.mubr.f32.mxu0 0.0
        %677 = vmatmul.mubr.f32.gmra.mxu0 %v309
        %v678 = vpop.f32.mrf.mxu0
        %v679 = vadd.f32 0.0, %v678
        %v680 = vpop.f32.mrf.mxu0
        %v681 = vadd.f32 0.0, %v680
        %682 = vmatprep.mubr.f32.mxu0 0.0
        %683 = vmatmul.mubr.f32.gmra.mxu0 %v312
        %v684 = vpop.f32.mrf.mxu0
        %v685 = vadd.f32 0.0, %v684
        %v686 = vpop.f32.mrf.mxu0
        %v687 = vadd.f32 0.0, %v686
        %688 = vmatprep.mubr.f32.mxu0 0.0
        %689 = vmatmul.mubr.f32.gmra.mxu0 %v315
        %v690 = vpop.f32.mrf.mxu0
        %v691 = vadd.f32 0.0, %v690
        %v692 = vpop.f32.mrf.mxu0
        %v693 = vadd.f32 0.0, %v692
        %694 = vmatprep.mubr.f32.mxu0 0.0
        %695 = vmatmul.mubr.f32.gmra.mxu0 %v318
        %v696 = vpop.f32.mrf.mxu0
        %v697 = vadd.f32 0.0, %v696
        %v698 = vpop.f32.mrf.mxu0
        %v699 = vadd.f32 0.0, %v698
        %700 = vdwg.mxu0
        %701 = vst [vmem:[#allocation2] sm:$0xff] %v412
        %702 = vst [vmem:[#allocation2 + $0x8] sm:$0xff] %v414
        %703 = vst [vmem:[#allocation2 + $0x10] sm:$0xff] %v501
        %704 = vst [vmem:[#allocation2 + $0x18] sm:$0xff] %v503
        %705 = vst [vmem:[#allocation2 + $0x20] sm:$0xff] %v590
        %706 = vst [vmem:[#allocation2 + $0x28] sm:$0xff] %v592
        %707 = vst [vmem:[#allocation2 + $0x30] sm:$0xff] %v679
        %708 = vst [vmem:[#allocation2 + $0x38] sm:$0xff] %v681
        %709 = vst [vmem:[#allocation2 + $0x40] sm:$0xff] %v418
        %710 = vst [vmem:[#allocation2 + $0x48] sm:$0xff] %v420
        %711 = vst [vmem:[#allocation2 + $0x50] sm:$0xff] %v507
        %712 = vst [vmem:[#allocation2 + $0x58] sm:$0xff] %v509
        %713 = vst [vmem:[#allocation2 + $0x60] sm:$0xff] %v596
        %714 = vst [vmem:[#allocation2 + $0x68] sm:$0xff] %v598
        %715 = vst [vmem:[#allocation2 + $0x70] sm:$0xff] %v685
        %716 = vst [vmem:[#allocation2 + $0x78] sm:$0xff] %v687
        %717 = vst [vmem:[#allocation2 + $0x80] sm:$0xff] %v424
        %718 = vst [vmem:[#allocation2 + $0x88] sm:$0xff] %v426
        %719 = vst [vmem:[#allocation2 + $0x90] sm:$0xff] %v513
        %720 = vst [vmem:[#allocation2 + $0x98] sm:$0xff] %v515
        %721 = vst [vmem:[#allocation2 + $0xa0] sm:$0xff] %v602
        %722 = vst [vmem:[#allocation2 + $0xa8] sm:$0xff] %v604
        %723 = vst [vmem:[#allocation2 + $0xb0] sm:$0xff] %v691
        %724 = vst [vmem:[#allocation2 + $0xb8] sm:$0xff] %v693
        %725 = vst [vmem:[#allocation2 + $0xc0] sm:$0xff] %v430
        %726 = vst [vmem:[#allocation2 + $0xc8] sm:$0xff] %v432
        %727 = vst [vmem:[#allocation2 + $0xd0] sm:$0xff] %v519
        %728 = vst [vmem:[#allocation2 + $0xd8] sm:$0xff] %v521
        %729 = vst [vmem:[#allocation2 + $0xe0] sm:$0xff] %v608
        %730 = vst [vmem:[#allocation2 + $0xe8] sm:$0xff] %v610
        %731 = vst [vmem:[#allocation2 + $0xf0] sm:$0xff] %v697
        %732 = vst [vmem:[#allocation2 + $0xf8] sm:$0xff] %v699
        %v733 = vld [vmem:[#allocation2] sm:$0xff]
        %v734 = vld [vmem:[#allocation2 + $0x8] sm:$0xff]
        %v735 = vld [vmem:[#allocation2 + $0x10] sm:$0xff]
        %v736 = vld [vmem:[#allocation2 + $0x18] sm:$0xff]
        %v737 = vld [vmem:[#allocation2 + $0x20] sm:$0xff]
        %v738 = vld [vmem:[#allocation2 + $0x28] sm:$0xff]
        %v739 = vld [vmem:[#allocation2 + $0x30] sm:$0xff]
        %v740 = vld [vmem:[#allocation2 + $0x38] sm:$0xff]
        %v741 = vld [vmem:[#allocation2 + $0x40] sm:$0xff]
        %v742 = vld [vmem:[#allocation2 + $0x48] sm:$0xff]
        %v743 = vld [vmem:[#allocation2 + $0x50] sm:$0xff]
        %v744 = vld [vmem:[#allocation2 + $0x58] sm:$0xff]
        %v745 = vld [vmem:[#allocation2 + $0x60] sm:$0xff]
        %v746 = vld [vmem:[#allocation2 + $0x68] sm:$0xff]
        %v747 = vld [vmem:[#allocation2 + $0x70] sm:$0xff]
        %v748 = vld [vmem:[#allocation2 + $0x78] sm:$0xff]
        %v749 = vld [vmem:[#allocation2 + $0x80] sm:$0xff]
        %v750 = vld [vmem:[#allocation2 + $0x88] sm:$0xff]
        %v751 = vld [vmem:[#allocation2 + $0x90] sm:$0xff]
        %v752 = vld [vmem:[#allocation2 + $0x98] sm:$0xff]
        %v753 = vld [vmem:[#allocation2 + $0xa0] sm:$0xff]
        %v754 = vld [vmem:[#allocation2 + $0xa8] sm:$0xff]
        %v755 = vld [vmem:[#allocation2 + $0xb0] sm:$0xff]
        %v756 = vld [vmem:[#allocation2 + $0xb8] sm:$0xff]
        %v757 = vld [vmem:[#allocation2 + $0xc0] sm:$0xff]
        %v758 = vld [vmem:[#allocation2 + $0xc8] sm:$0xff]
        %v759 = vld [vmem:[#allocation2 + $0xd0] sm:$0xff]
        %v760 = vld [vmem:[#allocation2 + $0xd8] sm:$0xff]
        %v761 = vld [vmem:[#allocation2 + $0xe0] sm:$0xff]
        %v762 = vld [vmem:[#allocation2 + $0xe8] sm:$0xff]
        %v763 = vld [vmem:[#allocation2 + $0xf0] sm:$0xff]
        %v764 = vld [vmem:[#allocation2 + $0xf8] sm:$0xff]
        %v765 = vld [vmem:[%s193 + $0x1] sm:$0xff]
        %v766 = vld [vmem:[%s193 + $0x9] sm:$0xff]
        %v767 = vld [vmem:[%s193 + $0x11] sm:$0xff]
        %v768 = vld [vmem:[%s193 + $0x19] sm:$0xff]
        %s769 = scalar_lea.vmem [#allocation4], 832
        %v770 = vld [vmem:[%s769] sm:$0xff]
        %v771 = vld [vmem:[%s769 + $0x8] sm:$0xff]
        %v772 = vld [vmem:[%s769 + $0x10] sm:$0xff]
        %v773 = vld [vmem:[%s769 + $0x18] sm:$0xff]
        %v774 = vld [vmem:[%s769 + $0x20] sm:$0xff]
        %v775 = vld [vmem:[%s769 + $0x28] sm:$0xff]
        %v776 = vld [vmem:[%s769 + $0x30] sm:$0xff]
        %v777 = vld [vmem:[%s769 + $0x38] sm:$0xff]
        %v778 = vld [vmem:[%s769 + $0x40] sm:$0xff]
        %v779 = vld [vmem:[%s769 + $0x48] sm:$0xff]
        %v780 = vld [vmem:[%s769 + $0x50] sm:$0xff]
        %v781 = vld [vmem:[%s769 + $0x58] sm:$0xff]
        %v782 = vld [vmem:[%s769 + $0x60] sm:$0xff]
        %v783 = vld [vmem:[%s769 + $0x68] sm:$0xff]
        %v784 = vld [vmem:[%s769 + $0x70] sm:$0xff]
        %v785 = vld [vmem:[%s769 + $0x78] sm:$0xff]
        %v786 = vld [vmem:[%s769 + $0x80] sm:$0xff]
        %v787 = vld [vmem:[%s769 + $0x88] sm:$0xff]
        %v788 = vld [vmem:[%s769 + $0x90] sm:$0xff]
        %v789 = vld [vmem:[%s769 + $0x98] sm:$0xff]
        %v790 = vld [vmem:[%s769 + $0xa0] sm:$0xff]
        %v791 = vld [vmem:[%s769 + $0xa8] sm:$0xff]
        %v792 = vld [vmem:[%s769 + $0xb0] sm:$0xff]
        %v793 = vld [vmem:[%s769 + $0xb8] sm:$0xff]
        %v794 = vld [vmem:[%s769 + $0xc0] sm:$0xff]
        %v795 = vld [vmem:[%s769 + $0xc8] sm:$0xff]
        %v796 = vld [vmem:[%s769 + $0xd0] sm:$0xff]
        %v797 = vld [vmem:[%s769 + $0xd8] sm:$0xff]
        %v798 = vld [vmem:[%s769 + $0xe0] sm:$0xff]
        %v799 = vld [vmem:[%s769 + $0xe8] sm:$0xff]
        %v800 = vld [vmem:[%s769 + $0xf0] sm:$0xff]
        %v801 = vld [vmem:[%s769 + $0xf8] sm:$0xff]
        %v802 = vld [vmem:[%s769 + $0x100] sm:$0xff]
        %v803 = vld [vmem:[%s769 + $0x108] sm:$0xff]
        %v804 = vld [vmem:[%s769 + $0x110] sm:$0xff]
        %v805 = vld [vmem:[%s769 + $0x118] sm:$0xff]
        %v806 = vld [vmem:[%s769 + $0x120] sm:$0xff]
        %v807 = vld [vmem:[%s769 + $0x128] sm:$0xff]
        %v808 = vld [vmem:[%s769 + $0x130] sm:$0xff]
        %v809 = vld [vmem:[%s769 + $0x138] sm:$0xff]
        %v810 = vld [vmem:[%s769 + $0x140] sm:$0xff]
        %v811 = vld [vmem:[%s769 + $0x148] sm:$0xff]
        %v812 = vld [vmem:[%s769 + $0x150] sm:$0xff]
        %v813 = vld [vmem:[%s769 + $0x158] sm:$0xff]
        %v814 = vld [vmem:[%s769 + $0x160] sm:$0xff]
        %v815 = vld [vmem:[%s769 + $0x168] sm:$0xff]
        %v816 = vld [vmem:[%s769 + $0x170] sm:$0xff]
        %v817 = vld [vmem:[%s769 + $0x178] sm:$0xff]
        %v818 = vld [vmem:[%s769 + $0x180] sm:$0xff]
        %v819 = vld [vmem:[%s769 + $0x188] sm:$0xff]
        %v820 = vld [vmem:[%s769 + $0x190] sm:$0xff]
        %v821 = vld [vmem:[%s769 + $0x198] sm:$0xff]
        %v822 = vld [vmem:[%s769 + $0x1a0] sm:$0xff]
        %v823 = vld [vmem:[%s769 + $0x1a8] sm:$0xff]
        %v824 = vld [vmem:[%s769 + $0x1b0] sm:$0xff]
        %v825 = vld [vmem:[%s769 + $0x1b8] sm:$0xff]
        %v826 = vld [vmem:[%s769 + $0x1c0] sm:$0xff]
        %v827 = vld [vmem:[%s769 + $0x1c8] sm:$0xff]
        %v828 = vld [vmem:[%s769 + $0x1d0] sm:$0xff]
        %v829 = vld [vmem:[%s769 + $0x1d8] sm:$0xff]
        %v830 = vld [vmem:[%s769 + $0x1e0] sm:$0xff]
        %v831 = vld [vmem:[%s769 + $0x1e8] sm:$0xff]
        %v832 = vld [vmem:[%s769 + $0x1f0] sm:$0xff]
        %v833 = vld [vmem:[%s769 + $0x1f8] sm:$0xff]
        %v834 = vld [vmem:[%s769 + $0x200] sm:$0xff]
        %v835 = vld [vmem:[%s769 + $0x208] sm:$0xff]
        %v836 = vld [vmem:[%s769 + $0x210] sm:$0xff]
        %v837 = vld [vmem:[%s769 + $0x218] sm:$0xff]
        %v838 = vld [vmem:[%s769 + $0x220] sm:$0xff]
        %v839 = vld [vmem:[%s769 + $0x228] sm:$0xff]
        %v840 = vld [vmem:[%s769 + $0x230] sm:$0xff]
        %v841 = vld [vmem:[%s769 + $0x238] sm:$0xff]
        %v842 = vld [vmem:[%s769 + $0x240] sm:$0xff]
        %v843 = vld [vmem:[%s769 + $0x248] sm:$0xff]
        %v844 = vld [vmem:[%s769 + $0x250] sm:$0xff]
        %v845 = vld [vmem:[%s769 + $0x258] sm:$0xff]
        %v846 = vld [vmem:[%s769 + $0x260] sm:$0xff]
        %v847 = vld [vmem:[%s769 + $0x268] sm:$0xff]
        %v848 = vld [vmem:[%s769 + $0x270] sm:$0xff]
        %v849 = vld [vmem:[%s769 + $0x278] sm:$0xff]
        %v850 = vld [vmem:[%s769 + $0x280] sm:$0xff]
        %v851 = vld [vmem:[%s769 + $0x288] sm:$0xff]
        %v852 = vld [vmem:[%s769 + $0x290] sm:$0xff]
        %v853 = vld [vmem:[%s769 + $0x298] sm:$0xff]
        %v854 = vld [vmem:[%s769 + $0x2a0] sm:$0xff]
        %v855 = vld [vmem:[%s769 + $0x2a8] sm:$0xff]
        %v856 = vld [vmem:[%s769 + $0x2b0] sm:$0xff]
        %v857 = vld [vmem:[%s769 + $0x2b8] sm:$0xff]
        %v858 = vld [vmem:[%s769 + $0x2c0] sm:$0xff]
        %v859 = vld [vmem:[%s769 + $0x2c8] sm:$0xff]
        %v860 = vld [vmem:[%s769 + $0x2d0] sm:$0xff]
        %v861 = vld [vmem:[%s769 + $0x2d8] sm:$0xff]
        %v862 = vld [vmem:[%s769 + $0x2e0] sm:$0xff]
        %v863 = vld [vmem:[%s769 + $0x2e8] sm:$0xff]
        %v864 = vld [vmem:[%s769 + $0x2f0] sm:$0xff]
        %v865 = vld [vmem:[%s769 + $0x2f8] sm:$0xff]
        %v866 = vld [vmem:[%s769 + $0x300] sm:$0x3f]
        %v867 = vld [vmem:[%s769 + $0x308] sm:$0x3f]
        %v868 = vld [vmem:[%s769 + $0x310] sm:$0x3f]
        %v869 = vld [vmem:[%s769 + $0x318] sm:$0x3f]
        %v870 = vld [vmem:[%s769 + $0x320] sm:$0x3f]
        %v871 = vld [vmem:[%s769 + $0x328] sm:$0x3f]
        %v872 = vld [vmem:[%s769 + $0x330] sm:$0x3f]
        %v873 = vld [vmem:[%s769 + $0x338] sm:$0x3f]
        %v875 = vsel %vm307, %v765, 0
        %v878 = vsel %vm307, %v766, 0
        %v881 = vsel %vm307, %v767, 0
        %v884 = vsel %vm307, %v768, 0
        %v887 = vsel %vm320, %v866, 0
        %v890 = vsel %vm320, %v867, 0
        %v893 = vsel %vm320, %v868, 0
        %v896 = vsel %vm320, %v869, 0
        %v899 = vsel %vm320, %v870, 0
        %v902 = vsel %vm320, %v871, 0
        %v905 = vsel %vm320, %v872, 0
        %v908 = vsel %vm320, %v873, 0
        %910 = vmatprep.subr.mxu0 0.0
        %911 = vmatpush1.msra.mxu0 0.0
        %912 = vmatprep.subr.mxu0 0.0
        %913 = vmatpush1.msra.mxu0 0.0
        %914 = vmatprep.subr.mxu0 0.0
        %915 = vmatpush1.msra.mxu0 0.0
        %916 = vmatprep.subr.mxu0 %v890
        %917 = vmatpush1.msra.mxu0 %v887
        %918 = vmatprep.subr.mxu0 %v859
        %919 = vmatpush1.msra.mxu0 %v858
        %920 = vmatprep.subr.mxu0 %v851
        %921 = vmatpush1.msra.mxu0 %v850
        %922 = vmatprep.subr.mxu0 %v843
        %923 = vmatpush1.msra.mxu0 %v842
        %924 = vmatprep.subr.mxu0 %v835
        %925 = vmatpush1.msra.mxu0 %v834
        %926 = vmatprep.subr.mxu0 %v827
        %927 = vmatpush1.msra.mxu0 %v826
        %928 = vmatprep.subr.mxu0 %v819
        %929 = vmatpush1.msra.mxu0 %v818
        %930 = vmatprep.subr.mxu0 %v811
        %931 = vmatpush1.msra.mxu0 %v810
        %932 = vmatprep.subr.mxu0 %v803
        %933 = vmatpush1.msra.mxu0 %v802
        %934 = vmatprep.subr.mxu0 %v795
        %935 = vmatpush1.msra.mxu0 %v794
        %936 = vmatprep.subr.mxu0 %v787
        %937 = vmatpush1.msra.mxu0 %v786
        %938 = vmatprep.subr.mxu0 %v779
        %939 = vmatpush1.msra.mxu0 %v778
        %940 = vmatprep.subr.mxu0 %v771
        %941 = vmatpush1.msra.mxu0 %v770
        %942 = vmatprep.subr.mxu0 0.0
        %943 = vmatpush2.msra.mxu0 0.0
        %944 = vmatprep.subr.mxu0 0.0
        %945 = vmatpush2.msra.mxu0 0.0
        %946 = vmatprep.subr.mxu0 0.0
        %947 = vmatpush2.msra.mxu0 0.0
        %948 = vmatprep.subr.mxu0 0.0
        %949 = vmatpush2.msra.mxu0 0.0
        %950 = vmatprep.subr.mxu0 0.0
        %951 = vmatpush2.msra.mxu0 0.0
        %952 = vmatprep.subr.mxu0 0.0
        %953 = vmatpush2.msra.mxu0 0.0
        %954 = vmatprep.subr.mxu0 0.0
        %955 = vmatpush2.msra.mxu0 0.0
        %956 = vmatprep.subr.mxu0 0.0
        %957 = vmatpush2.msra.mxu0 0.0
        %958 = vmatprep.subr.mxu0 0.0
        %959 = vmatpush2.msra.mxu0 0.0
        %960 = vmatprep.subr.mxu0 0.0
        %961 = vmatpush2.msra.mxu0 0.0
        %962 = vmatprep.subr.mxu0 0.0
        %963 = vmatpush2.msra.mxu0 0.0
        %964 = vmatprep.subr.mxu0 0.0
        %965 = vmatpush2.msra.mxu0 0.0
        %966 = vmatprep.subr.mxu0 0.0
        %967 = vmatpush2.msra.mxu0 0.0
        %968 = vmatprep.subr.mxu0 0.0
        %969 = vmatpush2.msra.mxu0 0.0
        %970 = vmatprep.subr.mxu0 0.0
        %971 = vmatpush2.msra.mxu0 0.0
        %972 = vmatprep.subr.mxu0 0.0
        %973 = vmatpush2.msra.mxu0 0.0
        %974 = vmatprep.mubr.f32.mxu0 0.0
        %975 = vmatmul.mubr.f32.gmra.mxu0 %v875
        %v976 = vpop.f32.mrf.mxu0
        %v977 = vadd.f32 0.0, %v976
        %v978 = vpop.f32.mrf.mxu0
        %v979 = vadd.f32 0.0, %v978
        %980 = vmatprep.mubr.f32.mxu0 0.0
        %981 = vmatmul.mubr.f32.gmra.mxu0 %v878
        %v982 = vpop.f32.mrf.mxu0
        %v983 = vadd.f32 0.0, %v982
        %v984 = vpop.f32.mrf.mxu0
        %v985 = vadd.f32 0.0, %v984
        %986 = vmatprep.mubr.f32.mxu0 0.0
        %987 = vmatmul.mubr.f32.gmra.mxu0 %v881
        %v988 = vpop.f32.mrf.mxu0
        %v989 = vadd.f32 0.0, %v988
        %v990 = vpop.f32.mrf.mxu0
        %v991 = vadd.f32 0.0, %v990
        %992 = vmatprep.mubr.f32.mxu0 0.0
        %993 = vmatmul.mubr.f32.gmra.mxu0 %v884
        %v994 = vpop.f32.mrf.mxu0
        %v995 = vadd.f32 0.0, %v994
        %v996 = vpop.f32.mrf.mxu0
        %v997 = vadd.f32 0.0, %v996
        %998 = vdwg.mxu0
        %999 = vmatprep.subr.mxu0 0.0
        %1000 = vmatpush1.msra.mxu0 0.0
        %1001 = vmatprep.subr.mxu0 0.0
        %1002 = vmatpush1.msra.mxu0 0.0
        %1003 = vmatprep.subr.mxu0 0.0
        %1004 = vmatpush1.msra.mxu0 0.0
        %1005 = vmatprep.subr.mxu0 %v896
        %1006 = vmatpush1.msra.mxu0 %v893
        %1007 = vmatprep.subr.mxu0 %v861
        %1008 = vmatpush1.msra.mxu0 %v860
        %1009 = vmatprep.subr.mxu0 %v853
        %1010 = vmatpush1.msra.mxu0 %v852
        %1011 = vmatprep.subr.mxu0 %v845
        %1012 = vmatpush1.msra.mxu0 %v844
        %1013 = vmatprep.subr.mxu0 %v837
        %1014 = vmatpush1.msra.mxu0 %v836
        %1015 = vmatprep.subr.mxu0 %v829
        %1016 = vmatpush1.msra.mxu0 %v828
        %1017 = vmatprep.subr.mxu0 %v821
        %1018 = vmatpush1.msra.mxu0 %v820
        %1019 = vmatprep.subr.mxu0 %v813
        %1020 = vmatpush1.msra.mxu0 %v812
        %1021 = vmatprep.subr.mxu0 %v805
        %1022 = vmatpush1.msra.mxu0 %v804
        %1023 = vmatprep.subr.mxu0 %v797
        %1024 = vmatpush1.msra.mxu0 %v796
        %1025 = vmatprep.subr.mxu0 %v789
        %1026 = vmatpush1.msra.mxu0 %v788
        %1027 = vmatprep.subr.mxu0 %v781
        %1028 = vmatpush1.msra.mxu0 %v780
        %1029 = vmatprep.subr.mxu0 %v773
        %1030 = vmatpush1.msra.mxu0 %v772
        %1031 = vmatprep.subr.mxu0 0.0
        %1032 = vmatpush2.msra.mxu0 0.0
        %1033 = vmatprep.subr.mxu0 0.0
        %1034 = vmatpush2.msra.mxu0 0.0
        %1035 = vmatprep.subr.mxu0 0.0
        %1036 = vmatpush2.msra.mxu0 0.0
        %1037 = vmatprep.subr.mxu0 0.0
        %1038 = vmatpush2.msra.mxu0 0.0
        %1039 = vmatprep.subr.mxu0 0.0
        %1040 = vmatpush2.msra.mxu0 0.0
        %1041 = vmatprep.subr.mxu0 0.0
        %1042 = vmatpush2.msra.mxu0 0.0
        %1043 = vmatprep.subr.mxu0 0.0
        %1044 = vmatpush2.msra.mxu0 0.0
        %1045 = vmatprep.subr.mxu0 0.0
        %1046 = vmatpush2.msra.mxu0 0.0
        %1047 = vmatprep.subr.mxu0 0.0
        %1048 = vmatpush2.msra.mxu0 0.0
        %1049 = vmatprep.subr.mxu0 0.0
        %1050 = vmatpush2.msra.mxu0 0.0
        %1051 = vmatprep.subr.mxu0 0.0
        %1052 = vmatpush2.msra.mxu0 0.0
        %1053 = vmatprep.subr.mxu0 0.0
        %1054 = vmatpush2.msra.mxu0 0.0
        %1055 = vmatprep.subr.mxu0 0.0
        %1056 = vmatpush2.msra.mxu0 0.0
        %1057 = vmatprep.subr.mxu0 0.0
        %1058 = vmatpush2.msra.mxu0 0.0
        %1059 = vmatprep.subr.mxu0 0.0
        %1060 = vmatpush2.msra.mxu0 0.0
        %1061 = vmatprep.subr.mxu0 0.0
        %1062 = vmatpush2.msra.mxu0 0.0
        %1063 = vmatprep.mubr.f32.mxu0 0.0
        %1064 = vmatmul.mubr.f32.gmra.mxu0 %v875
        %v1065 = vpop.f32.mrf.mxu0
        %v1066 = vadd.f32 0.0, %v1065
        %v1067 = vpop.f32.mrf.mxu0
        %v1068 = vadd.f32 0.0, %v1067
        %1069 = vmatprep.mubr.f32.mxu0 0.0
        %1070 = vmatmul.mubr.f32.gmra.mxu0 %v878
        %v1071 = vpop.f32.mrf.mxu0
        %v1072 = vadd.f32 0.0, %v1071
        %v1073 = vpop.f32.mrf.mxu0
        %v1074 = vadd.f32 0.0, %v1073
        %1075 = vmatprep.mubr.f32.mxu0 0.0
        %1076 = vmatmul.mubr.f32.gmra.mxu0 %v881
        %v1077 = vpop.f32.mrf.mxu0
        %v1078 = vadd.f32 0.0, %v1077
        %v1079 = vpop.f32.mrf.mxu0
        %v1080 = vadd.f32 0.0, %v1079
        %1081 = vmatprep.mubr.f32.mxu0 0.0
        %1082 = vmatmul.mubr.f32.gmra.mxu0 %v884
        %v1083 = vpop.f32.mrf.mxu0
        %v1084 = vadd.f32 0.0, %v1083
        %v1085 = vpop.f32.mrf.mxu0
        %v1086 = vadd.f32 0.0, %v1085
        %1087 = vdwg.mxu0
        %1088 = vmatprep.subr.mxu0 0.0
        %1089 = vmatpush1.msra.mxu0 0.0
        %1090 = vmatprep.subr.mxu0 0.0
        %1091 = vmatpush1.msra.mxu0 0.0
        %1092 = vmatprep.subr.mxu0 0.0
        %1093 = vmatpush1.msra.mxu0 0.0
        %1094 = vmatprep.subr.mxu0 %v902
        %1095 = vmatpush1.msra.mxu0 %v899
        %1096 = vmatprep.subr.mxu0 %v863
        %1097 = vmatpush1.msra.mxu0 %v862
        %1098 = vmatprep.subr.mxu0 %v855
        %1099 = vmatpush1.msra.mxu0 %v854
        %1100 = vmatprep.subr.mxu0 %v847
        %1101 = vmatpush1.msra.mxu0 %v846
        %1102 = vmatprep.subr.mxu0 %v839
        %1103 = vmatpush1.msra.mxu0 %v838
        %1104 = vmatprep.subr.mxu0 %v831
        %1105 = vmatpush1.msra.mxu0 %v830
        %1106 = vmatprep.subr.mxu0 %v823
        %1107 = vmatpush1.msra.mxu0 %v822
        %1108 = vmatprep.subr.mxu0 %v815
        %1109 = vmatpush1.msra.mxu0 %v814
        %1110 = vmatprep.subr.mxu0 %v807
        %1111 = vmatpush1.msra.mxu0 %v806
        %1112 = vmatprep.subr.mxu0 %v799
        %1113 = vmatpush1.msra.mxu0 %v798
        %1114 = vmatprep.subr.mxu0 %v791
        %1115 = vmatpush1.msra.mxu0 %v790
        %1116 = vmatprep.subr.mxu0 %v783
        %1117 = vmatpush1.msra.mxu0 %v782
        %1118 = vmatprep.subr.mxu0 %v775
        %1119 = vmatpush1.msra.mxu0 %v774
        %1120 = vmatprep.subr.mxu0 0.0
        %1121 = vmatpush2.msra.mxu0 0.0
        %1122 = vmatprep.subr.mxu0 0.0
        %1123 = vmatpush2.msra.mxu0 0.0
        %1124 = vmatprep.subr.mxu0 0.0
        %1125 = vmatpush2.msra.mxu0 0.0
        %1126 = vmatprep.subr.mxu0 0.0
        %1127 = vmatpush2.msra.mxu0 0.0
        %1128 = vmatprep.subr.mxu0 0.0
        %1129 = vmatpush2.msra.mxu0 0.0
        %1130 = vmatprep.subr.mxu0 0.0
        %1131 = vmatpush2.msra.mxu0 0.0
        %1132 = vmatprep.subr.mxu0 0.0
        %1133 = vmatpush2.msra.mxu0 0.0
        %1134 = vmatprep.subr.mxu0 0.0
        %1135 = vmatpush2.msra.mxu0 0.0
        %1136 = vmatprep.subr.mxu0 0.0
        %1137 = vmatpush2.msra.mxu0 0.0
        %1138 = vmatprep.subr.mxu0 0.0
        %1139 = vmatpush2.msra.mxu0 0.0
        %1140 = vmatprep.subr.mxu0 0.0
        %1141 = vmatpush2.msra.mxu0 0.0
        %1142 = vmatprep.subr.mxu0 0.0
        %1143 = vmatpush2.msra.mxu0 0.0
        %1144 = vmatprep.subr.mxu0 0.0
        %1145 = vmatpush2.msra.mxu0 0.0
        %1146 = vmatprep.subr.mxu0 0.0
        %1147 = vmatpush2.msra.mxu0 0.0
        %1148 = vmatprep.subr.mxu0 0.0
        %1149 = vmatpush2.msra.mxu0 0.0
        %1150 = vmatprep.subr.mxu0 0.0
        %1151 = vmatpush2.msra.mxu0 0.0
        %1152 = vmatprep.mubr.f32.mxu0 0.0
        %1153 = vmatmul.mubr.f32.gmra.mxu0 %v875
        %v1154 = vpop.f32.mrf.mxu0
        %v1155 = vadd.f32 0.0, %v1154
        %v1156 = vpop.f32.mrf.mxu0
        %v1157 = vadd.f32 0.0, %v1156
        %1158 = vmatprep.mubr.f32.mxu0 0.0
        %1159 = vmatmul.mubr.f32.gmra.mxu0 %v878
        %v1160 = vpop.f32.mrf.mxu0
        %v1161 = vadd.f32 0.0, %v1160
        %v1162 = vpop.f32.mrf.mxu0
        %v1163 = vadd.f32 0.0, %v1162
        %1164 = vmatprep.mubr.f32.mxu0 0.0
        %1165 = vmatmul.mubr.f32.gmra.mxu0 %v881
        %v1166 = vpop.f32.mrf.mxu0
        %v1167 = vadd.f32 0.0, %v1166
        %v1168 = vpop.f32.mrf.mxu0
        %v1169 = vadd.f32 0.0, %v1168
        %1170 = vmatprep.mubr.f32.mxu0 0.0
        %1171 = vmatmul.mubr.f32.gmra.mxu0 %v884
        %v1172 = vpop.f32.mrf.mxu0
        %v1173 = vadd.f32 0.0, %v1172
        %v1174 = vpop.f32.mrf.mxu0
        %v1175 = vadd.f32 0.0, %v1174
        %1176 = vdwg.mxu0
        %1177 = vmatprep.subr.mxu0 0.0
        %1178 = vmatpush1.msra.mxu0 0.0
        %1179 = vmatprep.subr.mxu0 0.0
        %1180 = vmatpush1.msra.mxu0 0.0
        %1181 = vmatprep.subr.mxu0 0.0
        %1182 = vmatpush1.msra.mxu0 0.0
        %1183 = vmatprep.subr.mxu0 %v908
        %1184 = vmatpush1.msra.mxu0 %v905
        %1185 = vmatprep.subr.mxu0 %v865
        %1186 = vmatpush1.msra.mxu0 %v864
        %1187 = vmatprep.subr.mxu0 %v857
        %1188 = vmatpush1.msra.mxu0 %v856
        %1189 = vmatprep.subr.mxu0 %v849
        %1190 = vmatpush1.msra.mxu0 %v848
        %1191 = vmatprep.subr.mxu0 %v841
        %1192 = vmatpush1.msra.mxu0 %v840
        %1193 = vmatprep.subr.mxu0 %v833
        %1194 = vmatpush1.msra.mxu0 %v832
        %1195 = vmatprep.subr.mxu0 %v825
        %1196 = vmatpush1.msra.mxu0 %v824
        %1197 = vmatprep.subr.mxu0 %v817
        %1198 = vmatpush1.msra.mxu0 %v816
        %1199 = vmatprep.subr.mxu0 %v809
        %1200 = vmatpush1.msra.mxu0 %v808
        %1201 = vmatprep.subr.mxu0 %v801
        %1202 = vmatpush1.msra.mxu0 %v800
        %1203 = vmatprep.subr.mxu0 %v793
        %1204 = vmatpush1.msra.mxu0 %v792
        %1205 = vmatprep.subr.mxu0 %v785
        %1206 = vmatpush1.msra.mxu0 %v784
        %1207 = vmatprep.subr.mxu0 %v777
        %1208 = vmatpush1.msra.mxu0 %v776
        %1209 = vmatprep.subr.mxu0 0.0
        %1210 = vmatpush2.msra.mxu0 0.0
        %1211 = vmatprep.subr.mxu0 0.0
        %1212 = vmatpush2.msra.mxu0 0.0
        %1213 = vmatprep.subr.mxu0 0.0
        %1214 = vmatpush2.msra.mxu0 0.0
        %1215 = vmatprep.subr.mxu0 0.0
        %1216 = vmatpush2.msra.mxu0 0.0
        %1217 = vmatprep.subr.mxu0 0.0
        %1218 = vmatpush2.msra.mxu0 0.0
        %1219 = vmatprep.subr.mxu0 0.0
        %1220 = vmatpush2.msra.mxu0 0.0
        %1221 = vmatprep.subr.mxu0 0.0
        %1222 = vmatpush2.msra.mxu0 0.0
        %1223 = vmatprep.subr.mxu0 0.0
        %1224 = vmatpush2.msra.mxu0 0.0
        %1225 = vmatprep.subr.mxu0 0.0
        %1226 = vmatpush2.msra.mxu0 0.0
        %1227 = vmatprep.subr.mxu0 0.0
        %1228 = vmatpush2.msra.mxu0 0.0
        %1229 = vmatprep.subr.mxu0 0.0
        %1230 = vmatpush2.msra.mxu0 0.0
        %1231 = vmatprep.subr.mxu0 0.0
        %1232 = vmatpush2.msra.mxu0 0.0
        %1233 = vmatprep.subr.mxu0 0.0
        %1234 = vmatpush2.msra.mxu0 0.0
        %1235 = vmatprep.subr.mxu0 0.0
        %1236 = vmatpush2.msra.mxu0 0.0
        %1237 = vmatprep.subr.mxu0 0.0
        %1238 = vmatpush2.msra.mxu0 0.0
        %1239 = vmatprep.subr.mxu0 0.0
        %1240 = vmatpush2.msra.mxu0 0.0
        %1241 = vmatprep.mubr.f32.mxu0 0.0
        %1242 = vmatmul.mubr.f32.gmra.mxu0 %v875
        %v1243 = vpop.f32.mrf.mxu0
        %v1244 = vadd.f32 0.0, %v1243
        %v1245 = vpop.f32.mrf.mxu0
        %v1246 = vadd.f32 0.0, %v1245
        %1247 = vmatprep.mubr.f32.mxu0 0.0
        %1248 = vmatmul.mubr.f32.gmra.mxu0 %v878
        %v1249 = vpop.f32.mrf.mxu0
        %v1250 = vadd.f32 0.0, %v1249
        %v1251 = vpop.f32.mrf.mxu0
        %v1252 = vadd.f32 0.0, %v1251
        %1253 = vmatprep.mubr.f32.mxu0 0.0
        %1254 = vmatmul.mubr.f32.gmra.mxu0 %v881
        %v1255 = vpop.f32.mrf.mxu0
        %v1256 = vadd.f32 0.0, %v1255
        %v1257 = vpop.f32.mrf.mxu0
        %v1258 = vadd.f32 0.0, %v1257
        %1259 = vmatprep.mubr.f32.mxu0 0.0
        %1260 = vmatmul.mubr.f32.gmra.mxu0 %v884
        %v1261 = vpop.f32.mrf.mxu0
        %v1262 = vadd.f32 0.0, %v1261
        %v1263 = vpop.f32.mrf.mxu0
        %v1264 = vadd.f32 0.0, %v1263
        %1265 = vdwg.mxu0
        %v1266 = vadd.f32 %v733, %v977
        %v1267 = vadd.f32 %v734, %v979
        %v1268 = vadd.f32 %v735, %v1066
        %v1269 = vadd.f32 %v736, %v1068
        %v1270 = vadd.f32 %v737, %v1155
        %v1271 = vadd.f32 %v738, %v1157
        %v1272 = vadd.f32 %v739, %v1244
        %v1273 = vadd.f32 %v740, %v1246
        %v1274 = vadd.f32 %v741, %v983
        %v1275 = vadd.f32 %v742, %v985
        %v1276 = vadd.f32 %v743, %v1072
        %v1277 = vadd.f32 %v744, %v1074
        %v1278 = vadd.f32 %v745, %v1161
        %v1279 = vadd.f32 %v746, %v1163
        %v1280 = vadd.f32 %v747, %v1250
        %v1281 = vadd.f32 %v748, %v1252
        %v1282 = vadd.f32 %v749, %v989
        %v1283 = vadd.f32 %v750, %v991
        %v1284 = vadd.f32 %v751, %v1078
        %v1285 = vadd.f32 %v752, %v1080
        %v1286 = vadd.f32 %v753, %v1167
        %v1287 = vadd.f32 %v754, %v1169
        %v1288 = vadd.f32 %v755, %v1256
        %v1289 = vadd.f32 %v756, %v1258
        %v1290 = vadd.f32 %v757, %v995
        %v1291 = vadd.f32 %v758, %v997
        %v1292 = vadd.f32 %v759, %v1084
        %v1293 = vadd.f32 %v760, %v1086
        %v1294 = vadd.f32 %v761, %v1173
        %v1295 = vadd.f32 %v762, %v1175
        %v1296 = vadd.f32 %v763, %v1262
        %v1297 = vadd.f32 %v764, %v1264
        %1298 = vst [vmem:[#allocation2] sm:$0xff] %v1266
        %1299 = vst [vmem:[#allocation2 + $0x8] sm:$0xff] %v1267
        %1300 = vst [vmem:[#allocation2 + $0x10] sm:$0xff] %v1268
        %1301 = vst [vmem:[#allocation2 + $0x18] sm:$0xff] %v1269
        %1302 = vst [vmem:[#allocation2 + $0x20] sm:$0xff] %v1270
        %1303 = vst [vmem:[#allocation2 + $0x28] sm:$0xff] %v1271
        %1304 = vst [vmem:[#allocation2 + $0x30] sm:$0xff] %v1272
        %1305 = vst [vmem:[#allocation2 + $0x38] sm:$0xff] %v1273
        %1306 = vst [vmem:[#allocation2 + $0x40] sm:$0xff] %v1274
        %1307 = vst [vmem:[#allocation2 + $0x48] sm:$0xff] %v1275
        %1308 = vst [vmem:[#allocation2 + $0x50] sm:$0xff] %v1276
        %1309 = vst [vmem:[#allocation2 + $0x58] sm:$0xff] %v1277
        %1310 = vst [vmem:[#allocation2 + $0x60] sm:$0xff] %v1278
        %1311 = vst [vmem:[#allocation2 + $0x68] sm:$0xff] %v1279
        %1312 = vst [vmem:[#allocation2 + $0x70] sm:$0xff] %v1280
        %1313 = vst [vmem:[#allocation2 + $0x78] sm:$0xff] %v1281
        %1314 = vst [vmem:[#allocation2 + $0x80] sm:$0xff] %v1282
        %1315 = vst [vmem:[#allocation2 + $0x88] sm:$0xff] %v1283
        %1316 = vst [vmem:[#allocation2 + $0x90] sm:$0xff] %v1284
        %1317 = vst [vmem:[#allocation2 + $0x98] sm:$0xff] %v1285
        %1318 = vst [vmem:[#allocation2 + $0xa0] sm:$0xff] %v1286
        %1319 = vst [vmem:[#allocation2 + $0xa8] sm:$0xff] %v1287
        %1320 = vst [vmem:[#allocation2 + $0xb0] sm:$0xff] %v1288
        %1321 = vst [vmem:[#allocation2 + $0xb8] sm:$0xff] %v1289
        %1322 = vst [vmem:[#allocation2 + $0xc0] sm:$0xff] %v1290
        %1323 = vst [vmem:[#allocation2 + $0xc8] sm:$0xff] %v1291
        %1324 = vst [vmem:[#allocation2 + $0xd0] sm:$0xff] %v1292
        %1325 = vst [vmem:[#allocation2 + $0xd8] sm:$0xff] %v1293
        %1326 = vst [vmem:[#allocation2 + $0xe0] sm:$0xff] %v1294
        %1327 = vst [vmem:[#allocation2 + $0xe8] sm:$0xff] %v1295
        %1328 = vst [vmem:[#allocation2 + $0xf0] sm:$0xff] %v1296
        %1329 = vst [vmem:[#allocation2 + $0xf8] sm:$0xff] %v1297
        %v1330 = vld [vmem:[#allocation2] sm:$0xff]
        %v1331 = vld [vmem:[#allocation2 + $0x8] sm:$0xff]
        %v1332 = vld [vmem:[#allocation2 + $0x10] sm:$0xff]
        %v1333 = vld [vmem:[#allocation2 + $0x18] sm:$0xff]
        %v1334 = vld [vmem:[#allocation2 + $0x20] sm:$0xff]
        %v1335 = vld [vmem:[#allocation2 + $0x28] sm:$0xff]
        %v1336 = vld [vmem:[#allocation2 + $0x30] sm:$0xff]
        %v1337 = vld [vmem:[#allocation2 + $0x38] sm:$0xff]
        %v1338 = vld [vmem:[#allocation2 + $0x40] sm:$0xff]
        %v1339 = vld [vmem:[#allocation2 + $0x48] sm:$0xff]
        %v1340 = vld [vmem:[#allocation2 + $0x50] sm:$0xff]
        %v1341 = vld [vmem:[#allocation2 + $0x58] sm:$0xff]
        %v1342 = vld [vmem:[#allocation2 + $0x60] sm:$0xff]
        %v1343 = vld [vmem:[#allocation2 + $0x68] sm:$0xff]
        %v1344 = vld [vmem:[#allocation2 + $0x70] sm:$0xff]
        %v1345 = vld [vmem:[#allocation2 + $0x78] sm:$0xff]
        %v1346 = vld [vmem:[#allocation2 + $0x80] sm:$0xff]
        %v1347 = vld [vmem:[#allocation2 + $0x88] sm:$0xff]
        %v1348 = vld [vmem:[#allocation2 + $0x90] sm:$0xff]
        %v1349 = vld [vmem:[#allocation2 + $0x98] sm:$0xff]
        %v1350 = vld [vmem:[#allocation2 + $0xa0] sm:$0xff]
        %v1351 = vld [vmem:[#allocation2 + $0xa8] sm:$0xff]
        %v1352 = vld [vmem:[#allocation2 + $0xb0] sm:$0xff]
        %v1353 = vld [vmem:[#allocation2 + $0xb8] sm:$0xff]
        %v1354 = vld [vmem:[#allocation2 + $0xc0] sm:$0xff]
        %v1355 = vld [vmem:[#allocation2 + $0xc8] sm:$0xff]
        %v1356 = vld [vmem:[#allocation2 + $0xd0] sm:$0xff]
        %v1357 = vld [vmem:[#allocation2 + $0xd8] sm:$0xff]
        %v1358 = vld [vmem:[#allocation2 + $0xe0] sm:$0xff]
        %v1359 = vld [vmem:[#allocation2 + $0xe8] sm:$0xff]
        %v1360 = vld [vmem:[#allocation2 + $0xf0] sm:$0xff]
        %v1361 = vld [vmem:[#allocation2 + $0xf8] sm:$0xff]
        %v1362 = vld [vmem:[%s193 + $0x2] sm:$0xff]
        %v1363 = vld [vmem:[%s193 + $0xa] sm:$0xff]
        %v1364 = vld [vmem:[%s193 + $0x12] sm:$0xff]
        %v1365 = vld [vmem:[%s193 + $0x1a] sm:$0xff]
        %s1366 = scalar_lea.vmem [#allocation4], 1664
        %v1367 = vld [vmem:[%s1366] sm:$0xff]
        %v1368 = vld [vmem:[%s1366 + $0x8] sm:$0xff]
        %v1369 = vld [vmem:[%s1366 + $0x10] sm:$0xff]
        %v1370 = vld [vmem:[%s1366 + $0x18] sm:$0xff]
        %v1371 = vld [vmem:[%s1366 + $0x20] sm:$0xff]
        %v1372 = vld [vmem:[%s1366 + $0x28] sm:$0xff]
        %v1373 = vld [vmem:[%s1366 + $0x30] sm:$0xff]
        %v1374 = vld [vmem:[%s1366 + $0x38] sm:$0xff]
        %v1375 = vld [vmem:[%s1366 + $0x40] sm:$0xff]
        %v1376 = vld [vmem:[%s1366 + $0x48] sm:$0xff]
        %v1377 = vld [vmem:[%s1366 + $0x50] sm:$0xff]
        %v1378 = vld [vmem:[%s1366 + $0x58] sm:$0xff]
        %v1379 = vld [vmem:[%s1366 + $0x60] sm:$0xff]
        %v1380 = vld [vmem:[%s1366 + $0x68] sm:$0xff]
        %v1381 = vld [vmem:[%s1366 + $0x70] sm:$0xff]
        %v1382 = vld [vmem:[%s1366 + $0x78] sm:$0xff]
        %v1383 = vld [vmem:[%s1366 + $0x80] sm:$0xff]
        %v1384 = vld [vmem:[%s1366 + $0x88] sm:$0xff]
        %v1385 = vld [vmem:[%s1366 + $0x90] sm:$0xff]
        %v1386 = vld [vmem:[%s1366 + $0x98] sm:$0xff]
        %v1387 = vld [vmem:[%s1366 + $0xa0] sm:$0xff]
        %v1388 = vld [vmem:[%s1366 + $0xa8] sm:$0xff]
        %v1389 = vld [vmem:[%s1366 + $0xb0] sm:$0xff]
        %v1390 = vld [vmem:[%s1366 + $0xb8] sm:$0xff]
        %v1391 = vld [vmem:[%s1366 + $0xc0] sm:$0xff]
        %v1392 = vld [vmem:[%s1366 + $0xc8] sm:$0xff]
        %v1393 = vld [vmem:[%s1366 + $0xd0] sm:$0xff]
        %v1394 = vld [vmem:[%s1366 + $0xd8] sm:$0xff]
        %v1395 = vld [vmem:[%s1366 + $0xe0] sm:$0xff]
        %v1396 = vld [vmem:[%s1366 + $0xe8] sm:$0xff]
        %v1397 = vld [vmem:[%s1366 + $0xf0] sm:$0xff]
        %v1398 = vld [vmem:[%s1366 + $0xf8] sm:$0xff]
        %v1399 = vld [vmem:[%s1366 + $0x100] sm:$0xff]
        %v1400 = vld [vmem:[%s1366 + $0x108] sm:$0xff]
        %v1401 = vld [vmem:[%s1366 + $0x110] sm:$0xff]
        %v1402 = vld [vmem:[%s1366 + $0x118] sm:$0xff]
        %v1403 = vld [vmem:[%s1366 + $0x120] sm:$0xff]
        %v1404 = vld [vmem:[%s1366 + $0x128] sm:$0xff]
        %v1405 = vld [vmem:[%s1366 + $0x130] sm:$0xff]
        %v1406 = vld [vmem:[%s1366 + $0x138] sm:$0xff]
        %v1407 = vld [vmem:[%s1366 + $0x140] sm:$0xff]
        %v1408 = vld [vmem:[%s1366 + $0x148] sm:$0xff]
        %v1409 = vld [vmem:[%s1366 + $0x150] sm:$0xff]
        %v1410 = vld [vmem:[%s1366 + $0x158] sm:$0xff]
        %v1411 = vld [vmem:[%s1366 + $0x160] sm:$0xff]
        %v1412 = vld [vmem:[%s1366 + $0x168] sm:$0xff]
        %v1413 = vld [vmem:[%s1366 + $0x170] sm:$0xff]
        %v1414 = vld [vmem:[%s1366 + $0x178] sm:$0xff]
        %v1415 = vld [vmem:[%s1366 + $0x180] sm:$0xff]
        %v1416 = vld [vmem:[%s1366 + $0x188] sm:$0xff]
        %v1417 = vld [vmem:[%s1366 + $0x190] sm:$0xff]
        %v1418 = vld [vmem:[%s1366 + $0x198] sm:$0xff]
        %v1419 = vld [vmem:[%s1366 + $0x1a0] sm:$0xff]
        %v1420 = vld [vmem:[%s1366 + $0x1a8] sm:$0xff]
        %v1421 = vld [vmem:[%s1366 + $0x1b0] sm:$0xff]
        %v1422 = vld [vmem:[%s1366 + $0x1b8] sm:$0xff]
        %v1423 = vld [vmem:[%s1366 + $0x1c0] sm:$0xff]
        %v1424 = vld [vmem:[%s1366 + $0x1c8] sm:$0xff]
        %v1425 = vld [vmem:[%s1366 + $0x1d0] sm:$0xff]
        %v1426 = vld [vmem:[%s1366 + $0x1d8] sm:$0xff]
        %v1427 = vld [vmem:[%s1366 + $0x1e0] sm:$0xff]
        %v1428 = vld [vmem:[%s1366 + $0x1e8] sm:$0xff]
        %v1429 = vld [vmem:[%s1366 + $0x1f0] sm:$0xff]
        %v1430 = vld [vmem:[%s1366 + $0x1f8] sm:$0xff]
        %v1431 = vld [vmem:[%s1366 + $0x200] sm:$0xff]
        %v1432 = vld [vmem:[%s1366 + $0x208] sm:$0xff]
        %v1433 = vld [vmem:[%s1366 + $0x210] sm:$0xff]
        %v1434 = vld [vmem:[%s1366 + $0x218] sm:$0xff]
        %v1435 = vld [vmem:[%s1366 + $0x220] sm:$0xff]
        %v1436 = vld [vmem:[%s1366 + $0x228] sm:$0xff]
        %v1437 = vld [vmem:[%s1366 + $0x230] sm:$0xff]
        %v1438 = vld [vmem:[%s1366 + $0x238] sm:$0xff]
        %v1439 = vld [vmem:[%s1366 + $0x240] sm:$0xff]
        %v1440 = vld [vmem:[%s1366 + $0x248] sm:$0xff]
        %v1441 = vld [vmem:[%s1366 + $0x250] sm:$0xff]
        %v1442 = vld [vmem:[%s1366 + $0x258] sm:$0xff]
        %v1443 = vld [vmem:[%s1366 + $0x260] sm:$0xff]
        %v1444 = vld [vmem:[%s1366 + $0x268] sm:$0xff]
        %v1445 = vld [vmem:[%s1366 + $0x270] sm:$0xff]
        %v1446 = vld [vmem:[%s1366 + $0x278] sm:$0xff]
        %v1447 = vld [vmem:[%s1366 + $0x280] sm:$0xff]
        %v1448 = vld [vmem:[%s1366 + $0x288] sm:$0xff]
        %v1449 = vld [vmem:[%s1366 + $0x290] sm:$0xff]
        %v1450 = vld [vmem:[%s1366 + $0x298] sm:$0xff]
        %v1451 = vld [vmem:[%s1366 + $0x2a0] sm:$0xff]
        %v1452 = vld [vmem:[%s1366 + $0x2a8] sm:$0xff]
        %v1453 = vld [vmem:[%s1366 + $0x2b0] sm:$0xff]
        %v1454 = vld [vmem:[%s1366 + $0x2b8] sm:$0xff]
        %v1455 = vld [vmem:[%s1366 + $0x2c0] sm:$0xff]
        %v1456 = vld [vmem:[%s1366 + $0x2c8] sm:$0xff]
        %v1457 = vld [vmem:[%s1366 + $0x2d0] sm:$0xff]
        %v1458 = vld [vmem:[%s1366 + $0x2d8] sm:$0xff]
        %v1459 = vld [vmem:[%s1366 + $0x2e0] sm:$0xff]
        %v1460 = vld [vmem:[%s1366 + $0x2e8] sm:$0xff]
        %v1461 = vld [vmem:[%s1366 + $0x2f0] sm:$0xff]
        %v1462 = vld [vmem:[%s1366 + $0x2f8] sm:$0xff]
        %v1463 = vld [vmem:[%s1366 + $0x300] sm:$0x3f]
        %v1464 = vld [vmem:[%s1366 + $0x308] sm:$0x3f]
        %v1465 = vld [vmem:[%s1366 + $0x310] sm:$0x3f]
        %v1466 = vld [vmem:[%s1366 + $0x318] sm:$0x3f]
        %v1467 = vld [vmem:[%s1366 + $0x320] sm:$0x3f]
        %v1468 = vld [vmem:[%s1366 + $0x328] sm:$0x3f]
        %v1469 = vld [vmem:[%s1366 + $0x330] sm:$0x3f]
        %v1470 = vld [vmem:[%s1366 + $0x338] sm:$0x3f]
        %v1472 = vsel %vm307, %v1362, 0
        %v1475 = vsel %vm307, %v1363, 0
        %v1478 = vsel %vm307, %v1364, 0
        %v1481 = vsel %vm307, %v1365, 0
        %v1484 = vsel %vm320, %v1463, 0
        %v1487 = vsel %vm320, %v1464, 0
        %v1490 = vsel %vm320, %v1465, 0
        %v1493 = vsel %vm320, %v1466, 0
        %v1496 = vsel %vm320, %v1467, 0
        %v1499 = vsel %vm320, %v1468, 0
        %v1502 = vsel %vm320, %v1469, 0
        %v1505 = vsel %vm320, %v1470, 0
        %1507 = vmatprep.subr.mxu0 0.0
        %1508 = vmatpush1.msra.mxu0 0.0
        %1509 = vmatprep.subr.mxu0 0.0
        %1510 = vmatpush1.msra.mxu0 0.0
        %1511 = vmatprep.subr.mxu0 0.0
        %1512 = vmatpush1.msra.mxu0 0.0
        %1513 = vmatprep.subr.mxu0 %v1487
        %1514 = vmatpush1.msra.mxu0 %v1484
        %1515 = vmatprep.subr.mxu0 %v1456
        %1516 = vmatpush1.msra.mxu0 %v1455
        %1517 = vmatprep.subr.mxu0 %v1448
        %1518 = vmatpush1.msra.mxu0 %v1447
        %1519 = vmatprep.subr.mxu0 %v1440
        %1520 = vmatpush1.msra.mxu0 %v1439
        %1521 = vmatprep.subr.mxu0 %v1432
        %1522 = vmatpush1.msra.mxu0 %v1431
        %1523 = vmatprep.subr.mxu0 %v1424
        %1524 = vmatpush1.msra.mxu0 %v1423
        %1525 = vmatprep.subr.mxu0 %v1416
        %1526 = vmatpush1.msra.mxu0 %v1415
        %1527 = vmatprep.subr.mxu0 %v1408
        %1528 = vmatpush1.msra.mxu0 %v1407
        %1529 = vmatprep.subr.mxu0 %v1400
        %1530 = vmatpush1.msra.mxu0 %v1399
        %1531 = vmatprep.subr.mxu0 %v1392
        %1532 = vmatpush1.msra.mxu0 %v1391
        %1533 = vmatprep.subr.mxu0 %v1384
        %1534 = vmatpush1.msra.mxu0 %v1383
        %1535 = vmatprep.subr.mxu0 %v1376
        %1536 = vmatpush1.msra.mxu0 %v1375
        %1537 = vmatprep.subr.mxu0 %v1368
        %1538 = vmatpush1.msra.mxu0 %v1367
        %1539 = vmatprep.subr.mxu0 0.0
        %1540 = vmatpush2.msra.mxu0 0.0
        %1541 = vmatprep.subr.mxu0 0.0
        %1542 = vmatpush2.msra.mxu0 0.0
        %1543 = vmatprep.subr.mxu0 0.0
        %1544 = vmatpush2.msra.mxu0 0.0
        %1545 = vmatprep.subr.mxu0 0.0
        %1546 = vmatpush2.msra.mxu0 0.0
        %1547 = vmatprep.subr.mxu0 0.0
        %1548 = vmatpush2.msra.mxu0 0.0
        %1549 = vmatprep.subr.mxu0 0.0
        %1550 = vmatpush2.msra.mxu0 0.0
        %1551 = vmatprep.subr.mxu0 0.0
        %1552 = vmatpush2.msra.mxu0 0.0
        %1553 = vmatprep.subr.mxu0 0.0
        %1554 = vmatpush2.msra.mxu0 0.0
        %1555 = vmatprep.subr.mxu0 0.0
        %1556 = vmatpush2.msra.mxu0 0.0
        %1557 = vmatprep.subr.mxu0 0.0
        %1558 = vmatpush2.msra.mxu0 0.0
        %1559 = vmatprep.subr.mxu0 0.0
        %1560 = vmatpush2.msra.mxu0 0.0
        %1561 = vmatprep.subr.mxu0 0.0
        %1562 = vmatpush2.msra.mxu0 0.0
        %1563 = vmatprep.subr.mxu0 0.0
        %1564 = vmatpush2.msra.mxu0 0.0
        %1565 = vmatprep.subr.mxu0 0.0
        %1566 = vmatpush2.msra.mxu0 0.0
        %1567 = vmatprep.subr.mxu0 0.0
        %1568 = vmatpush2.msra.mxu0 0.0
        %1569 = vmatprep.subr.mxu0 0.0
        %1570 = vmatpush2.msra.mxu0 0.0
        %1571 = vmatprep.mubr.f32.mxu0 0.0
        %1572 = vmatmul.mubr.f32.gmra.mxu0 %v1472
        %v1573 = vpop.f32.mrf.mxu0
        %v1574 = vadd.f32 0.0, %v1573
        %v1575 = vpop.f32.mrf.mxu0
        %v1576 = vadd.f32 0.0, %v1575
        %1577 = vmatprep.mubr.f32.mxu0 0.0
        %1578 = vmatmul.mubr.f32.gmra.mxu0 %v1475
        %v1579 = vpop.f32.mrf.mxu0
        %v1580 = vadd.f32 0.0, %v1579
        %v1581 = vpop.f32.mrf.mxu0
        %v1582 = vadd.f32 0.0, %v1581
        %1583 = vmatprep.mubr.f32.mxu0 0.0
        %1584 = vmatmul.mubr.f32.gmra.mxu0 %v1478
        %v1585 = vpop.f32.mrf.mxu0
        %v1586 = vadd.f32 0.0, %v1585
        %v1587 = vpop.f32.mrf.mxu0
        %v1588 = vadd.f32 0.0, %v1587
        %1589 = vmatprep.mubr.f32.mxu0 0.0
        %1590 = vmatmul.mubr.f32.gmra.mxu0 %v1481
        %v1591 = vpop.f32.mrf.mxu0
        %v1592 = vadd.f32 0.0, %v1591
        %v1593 = vpop.f32.mrf.mxu0
        %v1594 = vadd.f32 0.0, %v1593
        %1595 = vdwg.mxu0
        %1596 = vmatprep.subr.mxu0 0.0
        %1597 = vmatpush1.msra.mxu0 0.0
        %1598 = vmatprep.subr.mxu0 0.0
        %1599 = vmatpush1.msra.mxu0 0.0
        %1600 = vmatprep.subr.mxu0 0.0
        %1601 = vmatpush1.msra.mxu0 0.0
        %1602 = vmatprep.subr.mxu0 %v1493
        %1603 = vmatpush1.msra.mxu0 %v1490
        %1604 = vmatprep.subr.mxu0 %v1458
        %1605 = vmatpush1.msra.mxu0 %v1457
        %1606 = vmatprep.subr.mxu0 %v1450
        %1607 = vmatpush1.msra.mxu0 %v1449
        %1608 = vmatprep.subr.mxu0 %v1442
        %1609 = vmatpush1.msra.mxu0 %v1441
        %1610 = vmatprep.subr.mxu0 %v1434
        %1611 = vmatpush1.msra.mxu0 %v1433
        %1612 = vmatprep.subr.mxu0 %v1426
        %1613 = vmatpush1.msra.mxu0 %v1425
        %1614 = vmatprep.subr.mxu0 %v1418
        %1615 = vmatpush1.msra.mxu0 %v1417
        %1616 = vmatprep.subr.mxu0 %v1410
        %1617 = vmatpush1.msra.mxu0 %v1409
        %1618 = vmatprep.subr.mxu0 %v1402
        %1619 = vmatpush1.msra.mxu0 %v1401
        %1620 = vmatprep.subr.mxu0 %v1394
        %1621 = vmatpush1.msra.mxu0 %v1393
        %1622 = vmatprep.subr.mxu0 %v1386
        %1623 = vmatpush1.msra.mxu0 %v1385
        %1624 = vmatprep.subr.mxu0 %v1378
        %1625 = vmatpush1.msra.mxu0 %v1377
        %1626 = vmatprep.subr.mxu0 %v1370
        %1627 = vmatpush1.msra.mxu0 %v1369
        %1628 = vmatprep.subr.mxu0 0.0
        %1629 = vmatpush2.msra.mxu0 0.0
        %1630 = vmatprep.subr.mxu0 0.0
        %1631 = vmatpush2.msra.mxu0 0.0
        %1632 = vmatprep.subr.mxu0 0.0
        %1633 = vmatpush2.msra.mxu0 0.0
        %1634 = vmatprep.subr.mxu0 0.0
        %1635 = vmatpush2.msra.mxu0 0.0
        %1636 = vmatprep.subr.mxu0 0.0
        %1637 = vmatpush2.msra.mxu0 0.0
        %1638 = vmatprep.subr.mxu0 0.0
        %1639 = vmatpush2.msra.mxu0 0.0
        %1640 = vmatprep.subr.mxu0 0.0
        %1641 = vmatpush2.msra.mxu0 0.0
        %1642 = vmatprep.subr.mxu0 0.0
        %1643 = vmatpush2.msra.mxu0 0.0
        %1644 = vmatprep.subr.mxu0 0.0
        %1645 = vmatpush2.msra.mxu0 0.0
        %1646 = vmatprep.subr.mxu0 0.0
        %1647 = vmatpush2.msra.mxu0 0.0
        %1648 = vmatprep.subr.mxu0 0.0
        %1649 = vmatpush2.msra.mxu0 0.0
        %1650 = vmatprep.subr.mxu0 0.0
        %1651 = vmatpush2.msra.mxu0 0.0
        %1652 = vmatprep.subr.mxu0 0.0
        %1653 = vmatpush2.msra.mxu0 0.0
        %1654 = vmatprep.subr.mxu0 0.0
        %1655 = vmatpush2.msra.mxu0 0.0
        %1656 = vmatprep.subr.mxu0 0.0
        %1657 = vmatpush2.msra.mxu0 0.0
        %1658 = vmatprep.subr.mxu0 0.0
        %1659 = vmatpush2.msra.mxu0 0.0
        %1660 = vmatprep.mubr.f32.mxu0 0.0
        %1661 = vmatmul.mubr.f32.gmra.mxu0 %v1472
        %v1662 = vpop.f32.mrf.mxu0
        %v1663 = vadd.f32 0.0, %v1662
        %v1664 = vpop.f32.mrf.mxu0
        %v1665 = vadd.f32 0.0, %v1664
        %1666 = vmatprep.mubr.f32.mxu0 0.0
        %1667 = vmatmul.mubr.f32.gmra.mxu0 %v1475
        %v1668 = vpop.f32.mrf.mxu0
        %v1669 = vadd.f32 0.0, %v1668
        %v1670 = vpop.f32.mrf.mxu0
        %v1671 = vadd.f32 0.0, %v1670
        %1672 = vmatprep.mubr.f32.mxu0 0.0
        %1673 = vmatmul.mubr.f32.gmra.mxu0 %v1478
        %v1674 = vpop.f32.mrf.mxu0
        %v1675 = vadd.f32 0.0, %v1674
        %v1676 = vpop.f32.mrf.mxu0
        %v1677 = vadd.f32 0.0, %v1676
        %1678 = vmatprep.mubr.f32.mxu0 0.0
        %1679 = vmatmul.mubr.f32.gmra.mxu0 %v1481
        %v1680 = vpop.f32.mrf.mxu0
        %v1681 = vadd.f32 0.0, %v1680
        %v1682 = vpop.f32.mrf.mxu0
        %v1683 = vadd.f32 0.0, %v1682
        %1684 = vdwg.mxu0
        %1685 = vmatprep.subr.mxu0 0.0
        %1686 = vmatpush1.msra.mxu0 0.0
        %1687 = vmatprep.subr.mxu0 0.0
        %1688 = vmatpush1.msra.mxu0 0.0
        %1689 = vmatprep.subr.mxu0 0.0
        %1690 = vmatpush1.msra.mxu0 0.0
        %1691 = vmatprep.subr.mxu0 %v1499
        %1692 = vmatpush1.msra.mxu0 %v1496
        %1693 = vmatprep.subr.mxu0 %v1460
        %1694 = vmatpush1.msra.mxu0 %v1459
        %1695 = vmatprep.subr.mxu0 %v1452
        %1696 = vmatpush1.msra.mxu0 %v1451
        %1697 = vmatprep.subr.mxu0 %v1444
        %1698 = vmatpush1.msra.mxu0 %v1443
        %1699 = vmatprep.subr.mxu0 %v1436
        %1700 = vmatpush1.msra.mxu0 %v1435
        %1701 = vmatprep.subr.mxu0 %v1428
        %1702 = vmatpush1.msra.mxu0 %v1427
        %1703 = vmatprep.subr.mxu0 %v1420
        %1704 = vmatpush1.msra.mxu0 %v1419
        %1705 = vmatprep.subr.mxu0 %v1412
        %1706 = vmatpush1.msra.mxu0 %v1411
        %1707 = vmatprep.subr.mxu0 %v1404
        %1708 = vmatpush1.msra.mxu0 %v1403
        %1709 = vmatprep.subr.mxu0 %v1396
        %1710 = vmatpush1.msra.mxu0 %v1395
        %1711 = vmatprep.subr.mxu0 %v1388
        %1712 = vmatpush1.msra.mxu0 %v1387
        %1713 = vmatprep.subr.mxu0 %v1380
        %1714 = vmatpush1.msra.mxu0 %v1379
        %1715 = vmatprep.subr.mxu0 %v1372
        %1716 = vmatpush1.msra.mxu0 %v1371
        %1717 = vmatprep.subr.mxu0 0.0
        %1718 = vmatpush2.msra.mxu0 0.0
        %1719 = vmatprep.subr.mxu0 0.0
        %1720 = vmatpush2.msra.mxu0 0.0
        %1721 = vmatprep.subr.mxu0 0.0
        %1722 = vmatpush2.msra.mxu0 0.0
        %1723 = vmatprep.subr.mxu0 0.0
        %1724 = vmatpush2.msra.mxu0 0.0
        %1725 = vmatprep.subr.mxu0 0.0
        %1726 = vmatpush2.msra.mxu0 0.0
        %1727 = vmatprep.subr.mxu0 0.0
        %1728 = vmatpush2.msra.mxu0 0.0
        %1729 = vmatprep.subr.mxu0 0.0
        %1730 = vmatpush2.msra.mxu0 0.0
        %1731 = vmatprep.subr.mxu0 0.0
        %1732 = vmatpush2.msra.mxu0 0.0
        %1733 = vmatprep.subr.mxu0 0.0
        %1734 = vmatpush2.msra.mxu0 0.0
        %1735 = vmatprep.subr.mxu0 0.0
        %1736 = vmatpush2.msra.mxu0 0.0
        %1737 = vmatprep.subr.mxu0 0.0
        %1738 = vmatpush2.msra.mxu0 0.0
        %1739 = vmatprep.subr.mxu0 0.0
        %1740 = vmatpush2.msra.mxu0 0.0
        %1741 = vmatprep.subr.mxu0 0.0
        %1742 = vmatpush2.msra.mxu0 0.0
        %1743 = vmatprep.subr.mxu0 0.0
        %1744 = vmatpush2.msra.mxu0 0.0
        %1745 = vmatprep.subr.mxu0 0.0
        %1746 = vmatpush2.msra.mxu0 0.0
        %1747 = vmatprep.subr.mxu0 0.0
        %1748 = vmatpush2.msra.mxu0 0.0
        %1749 = vmatprep.mubr.f32.mxu0 0.0
        %1750 = vmatmul.mubr.f32.gmra.mxu0 %v1472
        %v1751 = vpop.f32.mrf.mxu0
        %v1752 = vadd.f32 0.0, %v1751
        %v1753 = vpop.f32.mrf.mxu0
        %v1754 = vadd.f32 0.0, %v1753
        %1755 = vmatprep.mubr.f32.mxu0 0.0
        %1756 = vmatmul.mubr.f32.gmra.mxu0 %v1475
        %v1757 = vpop.f32.mrf.mxu0
        %v1758 = vadd.f32 0.0, %v1757
        %v1759 = vpop.f32.mrf.mxu0
        %v1760 = vadd.f32 0.0, %v1759
        %1761 = vmatprep.mubr.f32.mxu0 0.0
        %1762 = vmatmul.mubr.f32.gmra.mxu0 %v1478
        %v1763 = vpop.f32.mrf.mxu0
        %v1764 = vadd.f32 0.0, %v1763
        %v1765 = vpop.f32.mrf.mxu0
        %v1766 = vadd.f32 0.0, %v1765
        %1767 = vmatprep.mubr.f32.mxu0 0.0
        %1768 = vmatmul.mubr.f32.gmra.mxu0 %v1481
        %v1769 = vpop.f32.mrf.mxu0
        %v1770 = vadd.f32 0.0, %v1769
        %v1771 = vpop.f32.mrf.mxu0
        %v1772 = vadd.f32 0.0, %v1771
        %1773 = vdwg.mxu0
        %1774 = vmatprep.subr.mxu0 0.0
        %1775 = vmatpush1.msra.mxu0 0.0
        %1776 = vmatprep.subr.mxu0 0.0
        %1777 = vmatpush1.msra.mxu0 0.0
        %1778 = vmatprep.subr.mxu0 0.0
        %1779 = vmatpush1.msra.mxu0 0.0
        %1780 = vmatprep.subr.mxu0 %v1505
        %1781 = vmatpush1.msra.mxu0 %v1502
        %1782 = vmatprep.subr.mxu0 %v1462
        %1783 = vmatpush1.msra.mxu0 %v1461
        %1784 = vmatprep.subr.mxu0 %v1454
        %1785 = vmatpush1.msra.mxu0 %v1453
        %1786 = vmatprep.subr.mxu0 %v1446
        %1787 = vmatpush1.msra.mxu0 %v1445
        %1788 = vmatprep.subr.mxu0 %v1438
        %1789 = vmatpush1.msra.mxu0 %v1437
        %1790 = vmatprep.subr.mxu0 %v1430
        %1791 = vmatpush1.msra.mxu0 %v1429
        %1792 = vmatprep.subr.mxu0 %v1422
        %1793 = vmatpush1.msra.mxu0 %v1421
        %1794 = vmatprep.subr.mxu0 %v1414
        %1795 = vmatpush1.msra.mxu0 %v1413
        %1796 = vmatprep.subr.mxu0 %v1406
        %1797 = vmatpush1.msra.mxu0 %v1405
        %1798 = vmatprep.subr.mxu0 %v1398
        %1799 = vmatpush1.msra.mxu0 %v1397
        %1800 = vmatprep.subr.mxu0 %v1390
        %1801 = vmatpush1.msra.mxu0 %v1389
        %1802 = vmatprep.subr.mxu0 %v1382
        %1803 = vmatpush1.msra.mxu0 %v1381
        %1804 = vmatprep.subr.mxu0 %v1374
        %1805 = vmatpush1.msra.mxu0 %v1373
        %1806 = vmatprep.subr.mxu0 0.0
        %1807 = vmatpush2.msra.mxu0 0.0
        %1808 = vmatprep.subr.mxu0 0.0
        %1809 = vmatpush2.msra.mxu0 0.0
        %1810 = vmatprep.subr.mxu0 0.0
        %1811 = vmatpush2.msra.mxu0 0.0
        %1812 = vmatprep.subr.mxu0 0.0
        %1813 = vmatpush2.msra.mxu0 0.0
        %1814 = vmatprep.subr.mxu0 0.0
        %1815 = vmatpush2.msra.mxu0 0.0
        %1816 = vmatprep.subr.mxu0 0.0
        %1817 = vmatpush2.msra.mxu0 0.0
        %1818 = vmatprep.subr.mxu0 0.0
        %1819 = vmatpush2.msra.mxu0 0.0
        %1820 = vmatprep.subr.mxu0 0.0
        %1821 = vmatpush2.msra.mxu0 0.0
        %1822 = vmatprep.subr.mxu0 0.0
        %1823 = vmatpush2.msra.mxu0 0.0
        %1824 = vmatprep.subr.mxu0 0.0
        %1825 = vmatpush2.msra.mxu0 0.0
        %1826 = vmatprep.subr.mxu0 0.0
        %1827 = vmatpush2.msra.mxu0 0.0
        %1828 = vmatprep.subr.mxu0 0.0
        %1829 = vmatpush2.msra.mxu0 0.0
        %1830 = vmatprep.subr.mxu0 0.0
        %1831 = vmatpush2.msra.mxu0 0.0
        %1832 = vmatprep.subr.mxu0 0.0
        %1833 = vmatpush2.msra.mxu0 0.0
        %1834 = vmatprep.subr.mxu0 0.0
        %1835 = vmatpush2.msra.mxu0 0.0
        %1836 = vmatprep.subr.mxu0 0.0
        %1837 = vmatpush2.msra.mxu0 0.0
        %1838 = vmatprep.mubr.f32.mxu0 0.0
        %1839 = vmatmul.mubr.f32.gmra.mxu0 %v1472
        %v1840 = vpop.f32.mrf.mxu0
        %v1841 = vadd.f32 0.0, %v1840
        %v1842 = vpop.f32.mrf.mxu0
        %v1843 = vadd.f32 0.0, %v1842
        %1844 = vmatprep.mubr.f32.mxu0 0.0
        %1845 = vmatmul.mubr.f32.gmra.mxu0 %v1475
        %v1846 = vpop.f32.mrf.mxu0
        %v1847 = vadd.f32 0.0, %v1846
        %v1848 = vpop.f32.mrf.mxu0
        %v1849 = vadd.f32 0.0, %v1848
        %1850 = vmatprep.mubr.f32.mxu0 0.0
        %1851 = vmatmul.mubr.f32.gmra.mxu0 %v1478
        %v1852 = vpop.f32.mrf.mxu0
        %v1853 = vadd.f32 0.0, %v1852
        %v1854 = vpop.f32.mrf.mxu0
        %v1855 = vadd.f32 0.0, %v1854
        %1856 = vmatprep.mubr.f32.mxu0 0.0
        %1857 = vmatmul.mubr.f32.gmra.mxu0 %v1481
        %v1858 = vpop.f32.mrf.mxu0
        %v1859 = vadd.f32 0.0, %v1858
        %v1860 = vpop.f32.mrf.mxu0
        %v1861 = vadd.f32 0.0, %v1860
        %1862 = vdwg.mxu0
        %v1863 = vadd.f32 %v1330, %v1574
        %v1864 = vadd.f32 %v1331, %v1576
        %v1865 = vadd.f32 %v1332, %v1663
        %v1866 = vadd.f32 %v1333, %v1665
        %v1867 = vadd.f32 %v1334, %v1752
        %v1868 = vadd.f32 %v1335, %v1754
        %v1869 = vadd.f32 %v1336, %v1841
        %v1870 = vadd.f32 %v1337, %v1843
        %v1871 = vadd.f32 %v1338, %v1580
        %v1872 = vadd.f32 %v1339, %v1582
        %v1873 = vadd.f32 %v1340, %v1669
        %v1874 = vadd.f32 %v1341, %v1671
        %v1875 = vadd.f32 %v1342, %v1758
        %v1876 = vadd.f32 %v1343, %v1760
        %v1877 = vadd.f32 %v1344, %v1847
        %v1878 = vadd.f32 %v1345, %v1849
        %v1879 = vadd.f32 %v1346, %v1586
        %v1880 = vadd.f32 %v1347, %v1588
        %v1881 = vadd.f32 %v1348, %v1675
        %v1882 = vadd.f32 %v1349, %v1677
        %v1883 = vadd.f32 %v1350, %v1764
        %v1884 = vadd.f32 %v1351, %v1766
        %v1885 = vadd.f32 %v1352, %v1853
        %v1886 = vadd.f32 %v1353, %v1855
        %v1887 = vadd.f32 %v1354, %v1592
        %v1888 = vadd.f32 %v1355, %v1594
        %v1889 = vadd.f32 %v1356, %v1681
        %v1890 = vadd.f32 %v1357, %v1683
        %v1891 = vadd.f32 %v1358, %v1770
        %v1892 = vadd.f32 %v1359, %v1772
        %v1893 = vadd.f32 %v1360, %v1859
        %v1894 = vadd.f32 %v1361, %v1861
        %1895 = vst [vmem:[#allocation2] sm:$0xff] %v1863
        %1896 = vst [vmem:[#allocation2 + $0x8] sm:$0xff] %v1864
        %1897 = vst [vmem:[#allocation2 + $0x10] sm:$0xff] %v1865
        %1898 = vst [vmem:[#allocation2 + $0x18] sm:$0xff] %v1866
        %1899 = vst [vmem:[#allocation2 + $0x20] sm:$0xff] %v1867
        %1900 = vst [vmem:[#allocation2 + $0x28] sm:$0xff] %v1868
        %1901 = vst [vmem:[#allocation2 + $0x30] sm:$0xff] %v1869
        %1902 = vst [vmem:[#allocation2 + $0x38] sm:$0xff] %v1870
        %1903 = vst [vmem:[#allocation2 + $0x40] sm:$0xff] %v1871
        %1904 = vst [vmem:[#allocation2 + $0x48] sm:$0xff] %v1872
        %1905 = vst [vmem:[#allocation2 + $0x50] sm:$0xff] %v1873
        %1906 = vst [vmem:[#allocation2 + $0x58] sm:$0xff] %v1874
        %1907 = vst [vmem:[#allocation2 + $0x60] sm:$0xff] %v1875
        %1908 = vst [vmem:[#allocation2 + $0x68] sm:$0xff] %v1876
        %1909 = vst [vmem:[#allocation2 + $0x70] sm:$0xff] %v1877
        %1910 = vst [vmem:[#allocation2 + $0x78] sm:$0xff] %v1878
        %1911 = vst [vmem:[#allocation2 + $0x80] sm:$0xff] %v1879
        %1912 = vst [vmem:[#allocation2 + $0x88] sm:$0xff] %v1880
        %1913 = vst [vmem:[#allocation2 + $0x90] sm:$0xff] %v1881
        %1914 = vst [vmem:[#allocation2 + $0x98] sm:$0xff] %v1882
        %1915 = vst [vmem:[#allocation2 + $0xa0] sm:$0xff] %v1883
        %1916 = vst [vmem:[#allocation2 + $0xa8] sm:$0xff] %v1884
        %1917 = vst [vmem:[#allocation2 + $0xb0] sm:$0xff] %v1885
        %1918 = vst [vmem:[#allocation2 + $0xb8] sm:$0xff] %v1886
        %1919 = vst [vmem:[#allocation2 + $0xc0] sm:$0xff] %v1887
        %1920 = vst [vmem:[#allocation2 + $0xc8] sm:$0xff] %v1888
        %1921 = vst [vmem:[#allocation2 + $0xd0] sm:$0xff] %v1889
        %1922 = vst [vmem:[#allocation2 + $0xd8] sm:$0xff] %v1890
        %1923 = vst [vmem:[#allocation2 + $0xe0] sm:$0xff] %v1891
        %1924 = vst [vmem:[#allocation2 + $0xe8] sm:$0xff] %v1892
        %1925 = vst [vmem:[#allocation2 + $0xf0] sm:$0xff] %v1893
        %1926 = vst [vmem:[#allocation2 + $0xf8] sm:$0xff] %v1894
        %v1927 = vld [vmem:[#allocation2] sm:$0xff]
        %v1928 = vld [vmem:[#allocation2 + $0x8] sm:$0xff]
        %v1929 = vld [vmem:[#allocation2 + $0x10] sm:$0xff]
        %v1930 = vld [vmem:[#allocation2 + $0x18] sm:$0xff]
        %v1931 = vld [vmem:[#allocation2 + $0x20] sm:$0xff]
        %v1932 = vld [vmem:[#allocation2 + $0x28] sm:$0xff]
        %v1933 = vld [vmem:[#allocation2 + $0x30] sm:$0xff]
        %v1934 = vld [vmem:[#allocation2 + $0x38] sm:$0xff]
        %v1935 = vld [vmem:[#allocation2 + $0x40] sm:$0xff]
        %v1936 = vld [vmem:[#allocation2 + $0x48] sm:$0xff]
        %v1937 = vld [vmem:[#allocation2 + $0x50] sm:$0xff]
        %v1938 = vld [vmem:[#allocation2 + $0x58] sm:$0xff]
        %v1939 = vld [vmem:[#allocation2 + $0x60] sm:$0xff]
        %v1940 = vld [vmem:[#allocation2 + $0x68] sm:$0xff]
        %v1941 = vld [vmem:[#allocation2 + $0x70] sm:$0xff]
        %v1942 = vld [vmem:[#allocation2 + $0x78] sm:$0xff]
        %v1943 = vld [vmem:[#allocation2 + $0x80] sm:$0xff]
        %v1944 = vld [vmem:[#allocation2 + $0x88] sm:$0xff]
        %v1945 = vld [vmem:[#allocation2 + $0x90] sm:$0xff]
        %v1946 = vld [vmem:[#allocation2 + $0x98] sm:$0xff]
        %v1947 = vld [vmem:[#allocation2 + $0xa0] sm:$0xff]
        %v1948 = vld [vmem:[#allocation2 + $0xa8] sm:$0xff]
        %v1949 = vld [vmem:[#allocation2 + $0xb0] sm:$0xff]
        %v1950 = vld [vmem:[#allocation2 + $0xb8] sm:$0xff]
        %v1951 = vld [vmem:[#allocation2 + $0xc0] sm:$0xff]
        %v1952 = vld [vmem:[#allocation2 + $0xc8] sm:$0xff]
        %v1953 = vld [vmem:[#allocation2 + $0xd0] sm:$0xff]
        %v1954 = vld [vmem:[#allocation2 + $0xd8] sm:$0xff]
        %v1955 = vld [vmem:[#allocation2 + $0xe0] sm:$0xff]
        %v1956 = vld [vmem:[#allocation2 + $0xe8] sm:$0xff]
        %v1957 = vld [vmem:[#allocation2 + $0xf0] sm:$0xff]
        %v1958 = vld [vmem:[#allocation2 + $0xf8] sm:$0xff]
        %v1959 = vld [vmem:[#allocation6] sm:$0xff]
        %v1961 = vlaneseq
        %v1962 = vshrl.u32 %v1961, 7
        %v1963 = vsub.s32 0, %v1962
        %v1964 = vrot.slane %v1959, %v1963
        %v1965 = vlaneseq
        %v1966 = vshrl.u32 %v1965, 7
        %v1967 = vsub.s32 1, %v1966
        %v1968 = vrot.slane %v1959, %v1967
        %v1969 = vlaneseq
        %v1970 = vshrl.u32 %v1969, 7
        %v1971 = vsub.s32 2, %v1970
        %v1972 = vrot.slane %v1959, %v1971
        %v1973 = vlaneseq
        %v1974 = vshrl.u32 %v1973, 7
        %v1975 = vsub.s32 3, %v1974
        %v1976 = vrot.slane %v1959, %v1975
        %v1977 = vlaneseq
        %v1978 = vshrl.u32 %v1977, 7
        %v1979 = vsub.s32 4, %v1978
        %v1980 = vrot.slane %v1959, %v1979
        %v1981 = vlaneseq
        %v1982 = vshrl.u32 %v1981, 7
        %v1983 = vsub.s32 5, %v1982
        %v1984 = vrot.slane %v1959, %v1983
        %v1985 = vlaneseq
        %v1986 = vshrl.u32 %v1985, 7
        %v1987 = vsub.s32 6, %v1986
        %v1988 = vrot.slane %v1959, %v1987
        %v1989 = vlaneseq
        %v1990 = vshrl.u32 %v1989, 7
        %v1991 = vsub.s32 7, %v1990
        %v1992 = vrot.slane %v1959, %v1991
        %v2001 = vadd.f32 %v1927, %v1964
        %v2002 = vadd.f32 %v1928, %v1968
        %v2003 = vadd.f32 %v1929, %v1972
        %v2004 = vadd.f32 %v1930, %v1976
        %v2005 = vadd.f32 %v1931, %v1980
        %v2006 = vadd.f32 %v1932, %v1984
        %v2007 = vadd.f32 %v1933, %v1988
        %v2008 = vadd.f32 %v1934, %v1992
        %v2009 = vadd.f32 %v1935, %v1964
        %v2010 = vadd.f32 %v1936, %v1968
        %v2011 = vadd.f32 %v1937, %v1972
        %v2012 = vadd.f32 %v1938, %v1976
        %v2013 = vadd.f32 %v1939, %v1980
        %v2014 = vadd.f32 %v1940, %v1984
        %v2015 = vadd.f32 %v1941, %v1988
        %v2016 = vadd.f32 %v1942, %v1992
        %v2017 = vadd.f32 %v1943, %v1964
        %v2018 = vadd.f32 %v1944, %v1968
        %v2019 = vadd.f32 %v1945, %v1972
        %v2020 = vadd.f32 %v1946, %v1976
        %v2021 = vadd.f32 %v1947, %v1980
        %v2022 = vadd.f32 %v1948, %v1984
        %v2023 = vadd.f32 %v1949, %v1988
        %v2024 = vadd.f32 %v1950, %v1992
        %v2025 = vadd.f32 %v1951, %v1964
        %v2026 = vadd.f32 %v1952, %v1968
        %v2027 = vadd.f32 %v1953, %v1972
        %v2028 = vadd.f32 %v1954, %v1976
        %v2029 = vadd.f32 %v1955, %v1980
        %v2030 = vadd.f32 %v1956, %v1984
        %v2031 = vadd.f32 %v1957, %v1988
        %v2032 = vadd.f32 %v1958, %v1992
        %v2033 = vmax.f32 %v2001, 0.0
        %v2034 = vmax.f32 %v2002, 0.0
        %v2035 = vmax.f32 %v2003, 0.0
        %v2036 = vmax.f32 %v2004, 0.0
        %v2037 = vmax.f32 %v2005, 0.0
        %v2038 = vmax.f32 %v2006, 0.0
        %v2039 = vmax.f32 %v2007, 0.0
        %v2040 = vmax.f32 %v2008, 0.0
        %v2041 = vmax.f32 %v2009, 0.0
        %v2042 = vmax.f32 %v2010, 0.0
        %v2043 = vmax.f32 %v2011, 0.0
        %v2044 = vmax.f32 %v2012, 0.0
        %v2045 = vmax.f32 %v2013, 0.0
        %v2046 = vmax.f32 %v2014, 0.0
        %v2047 = vmax.f32 %v2015, 0.0
        %v2048 = vmax.f32 %v2016, 0.0
        %v2049 = vmax.f32 %v2017, 0.0
        %v2050 = vmax.f32 %v2018, 0.0
        %v2051 = vmax.f32 %v2019, 0.0
        %v2052 = vmax.f32 %v2020, 0.0
        %v2053 = vmax.f32 %v2021, 0.0
        %v2054 = vmax.f32 %v2022, 0.0
        %v2055 = vmax.f32 %v2023, 0.0
        %v2056 = vmax.f32 %v2024, 0.0
        %v2057 = vmax.f32 %v2025, 0.0
        %v2058 = vmax.f32 %v2026, 0.0
        %v2059 = vmax.f32 %v2027, 0.0
        %v2060 = vmax.f32 %v2028, 0.0
        %v2061 = vmax.f32 %v2029, 0.0
        %v2062 = vmax.f32 %v2030, 0.0
        %v2063 = vmax.f32 %v2031, 0.0
        %v2064 = vmax.f32 %v2032, 0.0
        %v2065 = vmax.f32 %v2033, %v2037
        %v2066 = vmax.f32 %v2034, %v2038
        %v2067 = vmax.f32 %v2035, %v2039
        %v2068 = vmax.f32 %v2036, %v2040
        %v2069 = vmax.f32 %v2041, %v2045
        %v2070 = vmax.f32 %v2042, %v2046
        %v2071 = vmax.f32 %v2043, %v2047
        %v2072 = vmax.f32 %v2044, %v2048
        %v2073 = vmax.f32 %v2049, %v2053
        %v2074 = vmax.f32 %v2050, %v2054
        %v2075 = vmax.f32 %v2051, %v2055
        %v2076 = vmax.f32 %v2052, %v2056
        %v2077 = vmax.f32 %v2057, %v2061
        %v2078 = vmax.f32 %v2058, %v2062
        %v2079 = vmax.f32 %v2059, %v2063
        %v2080 = vmax.f32 %v2060, %v2064
        %2081 = vst [vmem:[#allocation3] sm:$0xff] %v2065
        %2082 = vst [vmem:[#allocation3 + $0x8] sm:$0xff] %v2066
        %2083 = vst [vmem:[#allocation3 + $0x10] sm:$0xff] %v2067
        %2084 = vst [vmem:[#allocation3 + $0x18] sm:$0xff] %v2068
        %2085 = vst [vmem:[#allocation3 + $0x20] sm:$0xff] %v2069
        %2086 = vst [vmem:[#allocation3 + $0x28] sm:$0xff] %v2070
        %2087 = vst [vmem:[#allocation3 + $0x30] sm:$0xff] %v2071
        %2088 = vst [vmem:[#allocation3 + $0x38] sm:$0xff] %v2072
        %2089 = vst [vmem:[#allocation3 + $0x40] sm:$0xff] %v2073
        %2090 = vst [vmem:[#allocation3 + $0x48] sm:$0xff] %v2074
        %2091 = vst [vmem:[#allocation3 + $0x50] sm:$0xff] %v2075
        %2092 = vst [vmem:[#allocation3 + $0x58] sm:$0xff] %v2076
        %2093 = vst [vmem:[#allocation3 + $0x60] sm:$0xff] %v2077
        %2094 = vst [vmem:[#allocation3 + $0x68] sm:$0xff] %v2078
        %2095 = vst [vmem:[#allocation3 + $0x70] sm:$0xff] %v2079
        %2096 = vst [vmem:[#allocation3 + $0x78] sm:$0xff] %v2080
        %v2097 = vld [vmem:[#allocation3] ss:$8 sm:$0xf]
        %s2098 = scalar_lea.vmem [#allocation3], 1
        %v2099 = vld [vmem:[%s2098] ss:$8 sm:$0xf]
        %v2100 = vmax.f32 %v2097, %v2099
        %v2101 = vlaneseq
        %vm2102 = vcmp.ge.s32.totalorder %v2101, 0
        %vm2103 = vcmp.lt.s32.totalorder %v2101, 512
        %vm2104 = vmand %vm2102, %vm2103
        %2105 = vst.msk [vmem:[%s198] ss:$8 sm:$0xf] %vm2104, %v2100
        %2106 = vst.msk [vmem:[%s198] ss:$8 sm:$0x0] %vm2104, %v2100
        %s2107 = scalar_lea.vmem [#allocation3], 2
        %v2108 = vld [vmem:[%s2107] ss:$8 sm:$0xf]
        %s2109 = scalar_lea.vmem [#allocation3], 3
        %v2110 = vld [vmem:[%s2109] ss:$8 sm:$0xf]
        %v2111 = vmax.f32 %v2108, %v2110
        %s2112 = scalar_lea.vmem %s198, 1
        %2113 = vst.msk [vmem:[%s2112] ss:$8 sm:$0xf] %vm2104, %v2111
        %2114 = vst.msk [vmem:[%s2112] ss:$8 sm:$0x0] %vm2104, %v2111
        %s2115 = scalar_lea.vmem [#allocation3], 4
        %v2116 = vld [vmem:[%s2115] ss:$8 sm:$0xf]
        %s2117 = scalar_lea.vmem [#allocation3], 5
        %v2118 = vld [vmem:[%s2117] ss:$8 sm:$0xf]
        %v2119 = vmax.f32 %v2116, %v2118
        %s2120 = scalar_lea.vmem %s198, 2
        %2121 = vst.msk [vmem:[%s2120] ss:$8 sm:$0xf] %vm2104, %v2119
        %2122 = vst.msk [vmem:[%s2120] ss:$8 sm:$0x0] %vm2104, %v2119
        %s2123 = scalar_lea.vmem [#allocation3], 6
        %v2124 = vld [vmem:[%s2123] ss:$8 sm:$0xf]
        %s2125 = scalar_lea.vmem [#allocation3], 7
        %v2126 = vld [vmem:[%s2125] ss:$8 sm:$0xf]
        %v2127 = vmax.f32 %v2124, %v2126
        %s2128 = scalar_lea.vmem %s198, 3
        %2129 = vst.msk [vmem:[%s2128] ss:$8 sm:$0xf] %vm2104, %v2127
        %2130 = vst.msk [vmem:[%s2128] ss:$8 sm:$0x0] %vm2104, %v2127
        %s2131 = scalar_lea.vmem [#allocation3], 32
        %v2132 = vld [vmem:[%s2131] ss:$8 sm:$0xf]
        %s2133 = scalar_lea.vmem [#allocation3], 33
        %v2134 = vld [vmem:[%s2133] ss:$8 sm:$0xf]
        %v2135 = vmax.f32 %v2132, %v2134
        %s2136 = scalar_lea.vmem %s198, 4
        %2137 = vst.msk [vmem:[%s2136] ss:$8 sm:$0xf] %vm2104, %v2135
        %2138 = vst.msk [vmem:[%s2136] ss:$8 sm:$0x0] %vm2104, %v2135
        %s2139 = scalar_lea.vmem [#allocation3], 34
        %v2140 = vld [vmem:[%s2139] ss:$8 sm:$0xf]
        %s2141 = scalar_lea.vmem [#allocation3], 35
        %v2142 = vld [vmem:[%s2141] ss:$8 sm:$0xf]
        %v2143 = vmax.f32 %v2140, %v2142
        %s2144 = scalar_lea.vmem %s198, 5
        %2145 = vst.msk [vmem:[%s2144] ss:$8 sm:$0xf] %vm2104, %v2143
        %2146 = vst.msk [vmem:[%s2144] ss:$8 sm:$0x0] %vm2104, %v2143
        %s2147 = scalar_lea.vmem [#allocation3], 36
        %v2148 = vld [vmem:[%s2147] ss:$8 sm:$0xf]
        %s2149 = scalar_lea.vmem [#allocation3], 37
        %v2150 = vld [vmem:[%s2149] ss:$8 sm:$0xf]
        %v2151 = vmax.f32 %v2148, %v2150
        %s2152 = scalar_lea.vmem %s198, 6
        %2153 = vst.msk [vmem:[%s2152] ss:$8 sm:$0xf] %vm2104, %v2151
        %2154 = vst.msk [vmem:[%s2152] ss:$8 sm:$0x0] %vm2104, %v2151
        %s2155 = scalar_lea.vmem [#allocation3], 38
        %v2156 = vld [vmem:[%s2155] ss:$8 sm:$0xf]
        %s2157 = scalar_lea.vmem [#allocation3], 39
        %v2158 = vld [vmem:[%s2157] ss:$8 sm:$0xf]
        %v2159 = vmax.f32 %v2156, %v2158
        %s2160 = scalar_lea.vmem %s198, 7
        %2161 = vst.msk [vmem:[%s2160] ss:$8 sm:$0xf] %vm2104, %v2159
        %2162 = vst.msk [vmem:[%s2160] ss:$8 sm:$0x0] %vm2104, %v2159
        %s2163 = scalar_lea.vmem [#allocation3], 64
        %v2164 = vld [vmem:[%s2163] ss:$8 sm:$0xf]
        %s2165 = scalar_lea.vmem [#allocation3], 65
        %v2166 = vld [vmem:[%s2165] ss:$8 sm:$0xf]
        %v2167 = vmax.f32 %v2164, %v2166
        %s2168 = scalar_lea.vmem %s198, 32
        %2169 = vst.msk [vmem:[%s2168] ss:$8 sm:$0xf] %vm2104, %v2167
        %2170 = vst.msk [vmem:[%s2168] ss:$8 sm:$0x0] %vm2104, %v2167
        %s2171 = scalar_lea.vmem [#allocation3], 66
        %v2172 = vld [vmem:[%s2171] ss:$8 sm:$0xf]
        %s2173 = scalar_lea.vmem [#allocation3], 67
        %v2174 = vld [vmem:[%s2173] ss:$8 sm:$0xf]
        %v2175 = vmax.f32 %v2172, %v2174
        %s2176 = scalar_lea.vmem %s198, 33
        %2177 = vst.msk [vmem:[%s2176] ss:$8 sm:$0xf] %vm2104, %v2175
        %2178 = vst.msk [vmem:[%s2176] ss:$8 sm:$0x0] %vm2104, %v2175
        %s2179 = scalar_lea.vmem [#allocation3], 68
        %v2180 = vld [vmem:[%s2179] ss:$8 sm:$0xf]
        %s2181 = scalar_lea.vmem [#allocation3], 69
        %v2182 = vld [vmem:[%s2181] ss:$8 sm:$0xf]
        %v2183 = vmax.f32 %v2180, %v2182
        %s2184 = scalar_lea.vmem %s198, 34
        %2185 = vst.msk [vmem:[%s2184] ss:$8 sm:$0xf] %vm2104, %v2183
        %2186 = vst.msk [vmem:[%s2184] ss:$8 sm:$0x0] %vm2104, %v2183
        %s2187 = scalar_lea.vmem [#allocation3], 70
        %v2188 = vld [vmem:[%s2187] ss:$8 sm:$0xf]
        %s2189 = scalar_lea.vmem [#allocation3], 71
        %v2190 = vld [vmem:[%s2189] ss:$8 sm:$0xf]
        %v2191 = vmax.f32 %v2188, %v2190
        %s2192 = scalar_lea.vmem %s198, 35
        %2193 = vst.msk [vmem:[%s2192] ss:$8 sm:$0xf] %vm2104, %v2191
        %2194 = vst.msk [vmem:[%s2192] ss:$8 sm:$0x0] %vm2104, %v2191
        %s2195 = scalar_lea.vmem [#allocation3], 96
        %v2196 = vld [vmem:[%s2195] ss:$8 sm:$0xf]
        %s2197 = scalar_lea.vmem [#allocation3], 97
        %v2198 = vld [vmem:[%s2197] ss:$8 sm:$0xf]
        %v2199 = vmax.f32 %v2196, %v2198
        %s2200 = scalar_lea.vmem %s198, 36
        %2201 = vst.msk [vmem:[%s2200] ss:$8 sm:$0xf] %vm2104, %v2199
        %2202 = vst.msk [vmem:[%s2200] ss:$8 sm:$0x0] %vm2104, %v2199
        %s2203 = scalar_lea.vmem [#allocation3], 98
        %v2204 = vld [vmem:[%s2203] ss:$8 sm:$0xf]
        %s2205 = scalar_lea.vmem [#allocation3], 99
        %v2206 = vld [vmem:[%s2205] ss:$8 sm:$0xf]
        %v2207 = vmax.f32 %v2204, %v2206
        %s2208 = scalar_lea.vmem %s198, 37
        %2209 = vst.msk [vmem:[%s2208] ss:$8 sm:$0xf] %vm2104, %v2207
        %2210 = vst.msk [vmem:[%s2208] ss:$8 sm:$0x0] %vm2104, %v2207
        %s2211 = scalar_lea.vmem [#allocation3], 100
        %v2212 = vld [vmem:[%s2211] ss:$8 sm:$0xf]
        %s2213 = scalar_lea.vmem [#allocation3], 101
        %v2214 = vld [vmem:[%s2213] ss:$8 sm:$0xf]
        %v2215 = vmax.f32 %v2212, %v2214
        %s2216 = scalar_lea.vmem %s198, 38
        %2217 = vst.msk [vmem:[%s2216] ss:$8 sm:$0xf] %vm2104, %v2215
        %2218 = vst.msk [vmem:[%s2216] ss:$8 sm:$0x0] %vm2104, %v2215
        %s2219 = scalar_lea.vmem [#allocation3], 102
        %v2220 = vld [vmem:[%s2219] ss:$8 sm:$0xf]
        %s2221 = scalar_lea.vmem [#allocation3], 103
        %v2222 = vld [vmem:[%s2221] ss:$8 sm:$0xf]
        %v2223 = vmax.f32 %v2220, %v2222
        %s2224 = scalar_lea.vmem %s198, 39
        %2225 = vst.msk [vmem:[%s2224] ss:$8 sm:$0xf] %vm2104, %v2223
        %2226 = vst.msk [vmem:[%s2224] ss:$8 sm:$0x0] %vm2104, %v2223
        %p2227 = scmp.lt.s32.totalorder %s16, 1
        %s2228 = scalar_select %p2227, %s16, 1
        %s2229 = smul.addr %s2228, 8
        %s2230 = smul.addr %s2229, 8
        %s2231 = scalar_lea.vmem %s3, %s2230
        // Predicated region
        $region41: #{cnn_forward.3} parent=31 // pred_check
          %p2232 = pneg %p102
        $region42: #{cnn_forward.3} parent=31 // pred_check_branch
          %2234 = sbr.rel (%p2232) target = $region44
        $region43: #{cnn_forward.3} parent=31 // pred_region
          _
        $region44: #{cnn_forward.3} parent=31 // pred_fallthru
          _
      $region32: #{cnn_forward.3} parent=5 // pred_fallthru
        _
      %p2235 = scmp.le.s32.totalorder 2, %s11
      // Predicated region
      $region45: #{cnn_forward.3} parent=5 // pred_check
        %p2236 = pneg %p2235
      $region46: #{cnn_forward.3} parent=5 // pred_check_branch
        %2238 = sbr.rel (%p2236) target = $region48
      $region47: #{cnn_forward.3} parent=5 // pred_region
        %s2239 = ssub.s32 %s11, 2
        // Predicated region
        $region49: #{cnn_forward.3} parent=47 // pred_check
          %p2240 = pneg %p108
        $region50: #{cnn_forward.3} parent=47 // pred_check_branch
          %2242 = sbr.rel (%p2240) target = $region52
        $region51: #{cnn_forward.3} parent=47 // pred_region
          %p2243 = scmp.lt.s32.totalorder %s17, 1
          %s2244 = scalar_select %p2243, %s17, 1
          %s2245 = smul.addr %s2244, 8
          %s2246 = smul.addr %s2245, 8
          %s2247 = scalar_lea.vmem %s3, %s2246
        $region52: #{cnn_forward.3} parent=47 // pred_fallthru
          _
      $region48: #{cnn_forward.3} parent=5 // pred_fallthru
        _
    $region6: #{cnn_forward.3} parent=1 // loop_footer
      %s15 = sadd.s32 1, %s11
    $region7: #{cnn_forward.3} parent=1 // loop_footer_branch
      %10 = sbr.rel target = $region3
    $region8: #{cnn_forward.3} parent=1 // loop_exit
      _
    %2248 = vsyncpa [#allocation5], 1
    %s2249 = scalar_lea.sflag [#allocation5], 1
    %2250 = vsyncpa %s2249, 1
    %2251 = vsyncpa [#allocation7], 1

// kernel: cnn_forward.5
$region0: #{cnn_forward.5}
  #allocation0 [shape = 'u32[]', space=smem, size = 0x4, offset = 0x4, fixed_abs, tag = 'smem constant byte address 0x4 - core index']
  #allocation1 [shape = 'u32[144,128]{1,0:T(1,128)}', space=vmem, size = 0x12000, scoped, tag = 'internal scratch']
  #allocation2 [shape = 'f32[2,512]{1,0:T(2,128)}', space=vmem, size = 0x1000, scoped, tag = 'scratch operand']
  %s0 = inlined_call_operand.vmem [shape: f32[2,4096], index: 0, kind: input, shape index: {}]
  %s1 = inlined_call_operand.vmem [shape: f32[4096,512], index: 1, kind: input, shape index: {}]
  %s2 = inlined_call_operand.vmem [shape: f32[1,512], index: 2, kind: input, shape index: {}]
  %s3 = inlined_call_operand.vmem [shape: f32[512,128], index: 3, kind: input, shape index: {}]
  %s4 = inlined_call_operand.vmem [shape: f32[1,128], index: 4, kind: input, shape index: {}]
  %s5 = inlined_call_operand.vmem [shape: f32[128,10], index: 5, kind: input, shape index: {}]
  %s6 = inlined_call_operand.vmem [shape: f32[1,10], index: 6, kind: input, shape index: {}]
  %s7 = inlined_call_operand.hbm [shape: f32[2,10], index: 7, kind: output, shape index: {}]
  %s8 = sld [smem:[#allocation0]]
  $region69: #{cnn_forward.5} parent=0
    _
  %s10 = ssub.s32 1, %s8
  %s11 = scalar_select 0, %s10, %s8
  $region1: #{cnn_forward.5} parent=0
    #allocation3 [shape = 'u8[1024]{0}', space=vmem, size = 0x400, scoped, tag = 'output window, operand 0, single buffered']
    #allocation4 [shape = 's32[2]{0}', space=sflag, size = 0x8, scoped, tag = 'scoped memory for cnn_forward.5']
    %12 = vsyncpa [#allocation4], 0
    loop: start=0, step=1, limit=6
    $region2: #{cnn_forward.5} parent=1 // loop_pre_header
      _
    $region3: #{cnn_forward.5} parent=1 // loop_header
      %s14 = sphi 0, %s18
      %p15 = scmp.ge.s32.totalorder %s14, 6
      %s24 = sphi 0, %s26
      %s27 = sphi 0, %s24
      %s28 = sphi 0, %s27
      %s44 = sphi 0, %s28
      %s50 = sphi 0, %s52
      %s53 = sphi 0, %s50
      %s54 = sphi 0, %s53
      %s70 = sphi 0, %s54
      %s74 = sphi 0, %s74
      %s76 = sphi 0, %s74
      %s77 = sphi 0, %s76
      %s91 = sphi 0, %s77
      %s95 = sphi 0, %s95
      %s97 = sphi 0, %s95
      %s98 = sphi 0, %s97
      %s112 = sphi 0, %s98
      %s116 = sphi 0, %s116
      %s118 = sphi 0, %s116
      %s119 = sphi 0, %s118
      %s133 = sphi 0, %s119
      %s137 = sphi 0, %s137
      %s139 = sphi 0, %s137
      %s140 = sphi 0, %s139
      %s154 = sphi 0, %s140
      %s158 = sphi 0, %s158
      %s160 = sphi 0, %s158
      %s161 = sphi 0, %s160
      %s175 = sphi 0, %s161
      %s179 = sphi 0, %s179
      %s181 = sphi 0, %s179
      %s182 = sphi 0, %s181
      %s196 = sphi 0, %s182
    $region4: #{cnn_forward.5} parent=1 // loop_header_branch
      %17 = sbr.rel (%p15) target = $region8
    $region5: #{cnn_forward.5} parent=1 // loop_body
      %s19 = ssub.s32 %s14, 1
      %s20 = ssub.s32 %s14, 2
      %s21 = sadd.s32 %s14, 1
      %s22 = ssub.s32 %s14, %s21
      %p23 = scmp.eq.s32.totalorder %s22, 0
      %s25 = sadd.s32 %s24, 1
      %s26 = scalar_select %p23, %s24, %s25
      %p29 = pneg %p23
      %p30 = scmp.eq.s32.totalorder %s14, 3
      %p31 = por %p29, %p30
      %p32 = scmp.ne.s32.totalorder %s24, %s27
      %p33 = scmp.eq.s32.totalorder %s14, 0
      %p34 = por %p32, %p33
      %p35 = scmp.ne.s32.totalorder %s24, %s27
      %p36 = scmp.eq.s32.totalorder %s19, 3
      %p37 = por %p35, %p36
      %p38 = scmp.ne.s32.totalorder %s27, %s28
      %p39 = scmp.eq.s32.totalorder %s19, 0
      %p40 = por %p38, %p39
      %p41 = scmp.ne.s32.totalorder %s27, %s28
      %p42 = scmp.eq.s32.totalorder %s20, 3
      %p43 = por %p41, %p42
      %p45 = scmp.ne.s32.totalorder %s28, %s44
      %p46 = scmp.eq.s32.totalorder %s20, 0
      %p47 = por %p45, %p46
      %s48 = ssub.s32 %s14, %s21
      %p49 = scmp.eq.s32.totalorder %s48, 0
      %s51 = sadd.s32 %s50, 1
      %s52 = scalar_select %p49, %s50, %s51
      %p55 = pneg %p49
      %p56 = scmp.eq.s32.totalorder %s14, 3
      %p57 = por %p55, %p56
      %p58 = scmp.ne.s32.totalorder %s50, %s53
      %p59 = scmp.eq.s32.totalorder %s14, 0
      %p60 = por %p58, %p59
      %p61 = scmp.ne.s32.totalorder %s50, %s53
      %p62 = scmp.eq.s32.totalorder %s19, 3
      %p63 = por %p61, %p62
      %p64 = scmp.ne.s32.totalorder %s53, %s54
      %p65 = scmp.eq.s32.totalorder %s19, 0
      %p66 = por %p64, %p65
      %p67 = scmp.ne.s32.totalorder %s53, %s54
      %p68 = scmp.eq.s32.totalorder %s20, 3
      %p69 = por %p67, %p68
      %p71 = scmp.ne.s32.totalorder %s54, %s70
      %p72 = scmp.eq.s32.totalorder %s20, 0
      %p73 = por %p71, %p72
      %s75 = sadd.s32 %s74, 1
      %p78 = scmp.eq.s32.totalorder %s14, 3
      %p79 = scmp.ne.s32.totalorder %s74, %s76
      %p80 = scmp.eq.s32.totalorder %s14, 0
      %p81 = por %p79, %p80
      %p82 = scmp.ne.s32.totalorder %s74, %s76
      %p83 = scmp.eq.s32.totalorder %s19, 3
      %p84 = por %p82, %p83
      %p85 = scmp.ne.s32.totalorder %s76, %s77
      %p86 = scmp.eq.s32.totalorder %s19, 0
      %p87 = por %p85, %p86
      %p88 = scmp.ne.s32.totalorder %s76, %s77
      %p89 = scmp.eq.s32.totalorder %s20, 3
      %p90 = por %p88, %p89
      %p92 = scmp.ne.s32.totalorder %s77, %s91
      %p93 = scmp.eq.s32.totalorder %s20, 0
      %p94 = por %p92, %p93
      %s96 = sadd.s32 %s95, 1
      %p99 = scmp.eq.s32.totalorder %s14, 3
      %p100 = scmp.ne.s32.totalorder %s95, %s97
      %p101 = scmp.eq.s32.totalorder %s14, 0
      %p102 = por %p100, %p101
      %p103 = scmp.ne.s32.totalorder %s95, %s97
      %p104 = scmp.eq.s32.totalorder %s19, 3
      %p105 = por %p103, %p104
      %p106 = scmp.ne.s32.totalorder %s97, %s98
      %p107 = scmp.eq.s32.totalorder %s19, 0
      %p108 = por %p106, %p107
      %p109 = scmp.ne.s32.totalorder %s97, %s98
      %p110 = scmp.eq.s32.totalorder %s20, 3
      %p111 = por %p109, %p110
      %p113 = scmp.ne.s32.totalorder %s98, %s112
      %p114 = scmp.eq.s32.totalorder %s20, 0
      %p115 = por %p113, %p114
      %s117 = sadd.s32 %s116, 1
      %p120 = scmp.eq.s32.totalorder %s14, 3
      %p121 = scmp.ne.s32.totalorder %s116, %s118
      %p122 = scmp.eq.s32.totalorder %s14, 0
      %p123 = por %p121, %p122
      %p124 = scmp.ne.s32.totalorder %s116, %s118
      %p125 = scmp.eq.s32.totalorder %s19, 3
      %p126 = por %p124, %p125
      %p127 = scmp.ne.s32.totalorder %s118, %s119
      %p128 = scmp.eq.s32.totalorder %s19, 0
      %p129 = por %p127, %p128
      %p130 = scmp.ne.s32.totalorder %s118, %s119
      %p131 = scmp.eq.s32.totalorder %s20, 3
      %p132 = por %p130, %p131
      %p134 = scmp.ne.s32.totalorder %s119, %s133
      %p135 = scmp.eq.s32.totalorder %s20, 0
      %p136 = por %p134, %p135
      %s138 = sadd.s32 %s137, 1
      %p141 = scmp.eq.s32.totalorder %s14, 3
      %p142 = scmp.ne.s32.totalorder %s137, %s139
      %p143 = scmp.eq.s32.totalorder %s14, 0
      %p144 = por %p142, %p143
      %p145 = scmp.ne.s32.totalorder %s137, %s139
      %p146 = scmp.eq.s32.totalorder %s19, 3
      %p147 = por %p145, %p146
      %p148 = scmp.ne.s32.totalorder %s139, %s140
      %p149 = scmp.eq.s32.totalorder %s19, 0
      %p150 = por %p148, %p149
      %p151 = scmp.ne.s32.totalorder %s139, %s140
      %p152 = scmp.eq.s32.totalorder %s20, 3
      %p153 = por %p151, %p152
      %p155 = scmp.ne.s32.totalorder %s140, %s154
      %p156 = scmp.eq.s32.totalorder %s20, 0
      %p157 = por %p155, %p156
      %s159 = sadd.s32 %s158, 1
      %p162 = scmp.eq.s32.totalorder %s14, 3
      %p163 = scmp.ne.s32.totalorder %s158, %s160
      %p164 = scmp.eq.s32.totalorder %s14, 0
      %p165 = por %p163, %p164
      %p166 = scmp.ne.s32.totalorder %s158, %s160
      %p167 = scmp.eq.s32.totalorder %s19, 3
      %p168 = por %p166, %p167
      %p169 = scmp.ne.s32.totalorder %s160, %s161
      %p170 = scmp.eq.s32.totalorder %s19, 0
      %p171 = por %p169, %p170
      %p172 = scmp.ne.s32.totalorder %s160, %s161
      %p173 = scmp.eq.s32.totalorder %s20, 3
      %p174 = por %p172, %p173
      %p176 = scmp.ne.s32.totalorder %s161, %s175
      %p177 = scmp.eq.s32.totalorder %s20, 0
      %p178 = por %p176, %p177
      %s180 = sadd.s32 %s179, 1
      %p183 = scmp.eq.s32.totalorder %s14, 3
      %p184 = scmp.ne.s32.totalorder %s179, %s181
      %p185 = scmp.eq.s32.totalorder %s14, 0
      %p186 = por %p184, %p185
      %p187 = scmp.ne.s32.totalorder %s179, %s181
      %p188 = scmp.eq.s32.totalorder %s19, 3
      %p189 = por %p187, %p188
      %p190 = scmp.ne.s32.totalorder %s181, %s182
      %p191 = scmp.eq.s32.totalorder %s19, 0
      %p192 = por %p190, %p191
      %p193 = scmp.ne.s32.totalorder %s181, %s182
      %p194 = scmp.eq.s32.totalorder %s20, 3
      %p195 = por %p193, %p194
      %p197 = scmp.ne.s32.totalorder %s182, %s196
      %p198 = scmp.eq.s32.totalorder %s20, 0
      %p199 = por %p197, %p198
      %p200 = scmp.le.s32.totalorder 1, %s14
      %p201 = scmp.lt.s32.totalorder %s14, 5
      %p202 = pnand %p200, %p201
      %p203 = pneg %p202
      // Predicated region
      $region9: #{cnn_forward.5} parent=5 // pred_check
        _
      $region10: #{cnn_forward.5} parent=5 // pred_check_branch
        %205 = sbr.rel (%p202) target = $region12
      $region11: #{cnn_forward.5} parent=5 // pred_region
        %s206 = ssub.s32 %s14, 1
        // Predicated region
        $region13: #{cnn_forward.5} parent=11 // pred_check
          %p207 = pneg %p87
        $region14: #{cnn_forward.5} parent=11 // pred_check_branch
          %209 = sbr.rel (%p207) target = $region16
        $region15: #{cnn_forward.5} parent=11 // pred_region
          _
        $region16: #{cnn_forward.5} parent=11 // pred_fallthru
          _
        // Predicated region
        $region17: #{cnn_forward.5} parent=11 // pred_check
          %p210 = pneg %p108
        $region18: #{cnn_forward.5} parent=11 // pred_check_branch
          %212 = sbr.rel (%p210) target = $region20
        $region19: #{cnn_forward.5} parent=11 // pred_region
          _
        $region20: #{cnn_forward.5} parent=11 // pred_fallthru
          _
        // Predicated region
        $region21: #{cnn_forward.5} parent=11 // pred_check
          %p213 = pneg %p129
        $region22: #{cnn_forward.5} parent=11 // pred_check_branch
          %215 = sbr.rel (%p213) target = $region24
        $region23: #{cnn_forward.5} parent=11 // pred_region
          _
        $region24: #{cnn_forward.5} parent=11 // pred_fallthru
          _
        // Predicated region
        $region25: #{cnn_forward.5} parent=11 // pred_check
          %p216 = pneg %p150
        $region26: #{cnn_forward.5} parent=11 // pred_check_branch
          %218 = sbr.rel (%p216) target = $region28
        $region27: #{cnn_forward.5} parent=11 // pred_region
          _
        $region28: #{cnn_forward.5} parent=11 // pred_fallthru
          _
        // Predicated region
        $region29: #{cnn_forward.5} parent=11 // pred_check
          %p219 = pneg %p171
        $region30: #{cnn_forward.5} parent=11 // pred_check_branch
          %221 = sbr.rel (%p219) target = $region32
        $region31: #{cnn_forward.5} parent=11 // pred_region
          _
        $region32: #{cnn_forward.5} parent=11 // pred_fallthru
          _
      $region12: #{cnn_forward.5} parent=5 // pred_fallthru
        _
      %p222 = scmp.lt.s32.totalorder %s14, 4
      // Predicated region
      $region33: #{cnn_forward.5} parent=5 // pred_check
        %p223 = pneg %p222
      $region34: #{cnn_forward.5} parent=5 // pred_check_branch
        %225 = sbr.rel (%p223) target = $region36
      $region35: #{cnn_forward.5} parent=5 // pred_region
        // Predicated region
        $region37: #{cnn_forward.5} parent=35 // pred_check
          %p226 = pneg %p34
        $region38: #{cnn_forward.5} parent=35 // pred_check_branch
          %228 = sbr.rel (%p226) target = $region40
        $region39: #{cnn_forward.5} parent=35 // pred_region
          %s229 = smul.u32 8, %s14
          %p230 = scmp.lt.s32.totalorder %s229, 31
          %s231 = scalar_select %p230, %s229, 31
          %s232 = smul.addr %s231, 2
          %s233 = scalar_lea.vmem %s0, %s232
          %s234 = smul.u32 8, %s14
        $region40: #{cnn_forward.5} parent=35 // pred_fallthru
          _
        // Predicated region
        $region41: #{cnn_forward.5} parent=35 // pred_check
          %p235 = pneg %p60
        $region42: #{cnn_forward.5} parent=35 // pred_check_branch
          %237 = sbr.rel (%p235) target = $region44
        $region43: #{cnn_forward.5} parent=35 // pred_region
          %s238 = smul.u32 128, %s14
          %p239 = scmp.lt.s32.totalorder %s238, 511
          %s240 = scalar_select %p239, %s238, 511
          %s241 = smul.addr %s240, 4
          %s242 = smul.addr %s241, 8
          %s243 = scalar_lea.vmem %s1, %s242
          %s244 = smul.u32 128, %s14
        $region44: #{cnn_forward.5} parent=35 // pred_fallthru
          _
      $region36: #{cnn_forward.5} parent=5 // pred_fallthru
        _
      %p245 = scmp.le.s32.totalorder 1, %s14
      %p246 = scmp.lt.s32.totalorder %s14, 5
      %p247 = pnand %p245, %p246
      %p248 = pneg %p247
      // Predicated region
      $region45: #{cnn_forward.5} parent=5 // pred_check
        _
      $region46: #{cnn_forward.5} parent=5 // pred_check_branch
        %250 = sbr.rel (%p247) target = $region48
      $region47: #{cnn_forward.5} parent=5 // pred_region
        %s251 = ssub.s32 %s14, 1
        %s252 = smul.u32 8, %s19
        %p253 = scmp.lt.s32.totalorder %s252, 31
        %s254 = scalar_select %p253, %s252, 31
        %s255 = smul.addr %s254, 2
        %s256 = scalar_lea.vmem %s0, %s255
        %p257 = pneg %p40
        %p258 = pneg %p37
        %s259 = smul.u32 128, %s19
        %p260 = scmp.lt.s32.totalorder %s259, 511
        %s261 = scalar_select %p260, %s259, 511
        %s262 = smul.addr %s261, 4
        %s263 = smul.addr %s262, 8
        %s264 = scalar_lea.vmem %s1, %s263
        %p265 = pneg %p66
        %p266 = pneg %p63
        %p267 = pneg %p87
        %p268 = pneg %p84
        %p269 = pneg %p108
        %p270 = pneg %p105
        %p271 = pneg %p129
        %p272 = pneg %p126
        %p273 = pneg %p150
        %p274 = pneg %p147
        %p275 = pneg %p171
        %p276 = pneg %p168
        %p277 = pneg %p192
        %p278 = pneg %p189
        %s279 = smul.u32 8, %s19
        %p280 = scmp.lt.s32.totalorder %s279, 31
        %s281 = scalar_select %p280, %s279, 31
        %s282 = smul.addr %s281, 2
        %s283 = scalar_lea.vmem %s0, %s282
        %s284 = smul.u32 8, %s19
        %s285 = smul.u32 128, %s19
        %p286 = scmp.lt.s32.totalorder %s285, 511
        %s287 = scalar_select %p286, %s285, 511
        %s288 = smul.addr %s287, 4
        %s289 = smul.addr %s288, 8
        %s290 = scalar_lea.vmem %s1, %s289
        %s291 = smul.u32 128, %s19
        %p292 = scmp.eq.s32.totalorder %s19, 0
        // Predicated region
        $region49: #{cnn_forward.5} parent=47 // pred_check
          %p293 = pneg %p292
        $region50: #{cnn_forward.5} parent=47 // pred_check_branch
          %295 = sbr.rel (%p293) target = $region52
        $region51: #{cnn_forward.5} parent=47 // pred_region
          %296 = vst [vmem:[#allocation2] sm:$0xff] 0.0
        $region52: #{cnn_forward.5} parent=47 // pred_fallthru
          _
        %v297 = vld [vmem:[#allocation2] sm:$0xff]
        %v298 = vld [vmem:[%s283] sm:$0xff]
        %v299 = vld [vmem:[%s283 + $0x8] sm:$0xff]
        %v300 = vld [vmem:[%s290] sm:$0xff]
        %v301 = vld [vmem:[%s290 + $0x8] sm:$0xff]
        %v302 = vld [vmem:[%s290 + $0x10] sm:$0xff]
        %v303 = vld [vmem:[%s290 + $0x18] sm:$0xff]
        %v304 = vld [vmem:[%s290 + $0x20] sm:$0xff]
        %v305 = vld [vmem:[%s290 + $0x28] sm:$0xff]
        %v306 = vld [vmem:[%s290 + $0x30] sm:$0xff]
        %v307 = vld [vmem:[%s290 + $0x38] sm:$0xff]
        %v308 = vld [vmem:[%s290 + $0x40] sm:$0xff]
        %v309 = vld [vmem:[%s290 + $0x48] sm:$0xff]
        %v310 = vld [vmem:[%s290 + $0x50] sm:$0xff]
        %v311 = vld [vmem:[%s290 + $0x58] sm:$0xff]
        %v312 = vld [vmem:[%s290 + $0x60] sm:$0xff]
        %v313 = vld [vmem:[%s290 + $0x68] sm:$0xff]
        %v314 = vld [vmem:[%s290 + $0x70] sm:$0xff]
        %v315 = vld [vmem:[%s290 + $0x78] sm:$0xff]
        %v316 = vld [vmem:[%s290 + $0x80] sm:$0xff]
        %v317 = vld [vmem:[%s290 + $0x88] sm:$0xff]
        %v318 = vld [vmem:[%s290 + $0x90] sm:$0xff]
        %v319 = vld [vmem:[%s290 + $0x98] sm:$0xff]
        %v320 = vld [vmem:[%s290 + $0xa0] sm:$0xff]
        %v321 = vld [vmem:[%s290 + $0xa8] sm:$0xff]
        %v322 = vld [vmem:[%s290 + $0xb0] sm:$0xff]
        %v323 = vld [vmem:[%s290 + $0xb8] sm:$0xff]
        %v324 = vld [vmem:[%s290 + $0xc0] sm:$0xff]
        %v325 = vld [vmem:[%s290 + $0xc8] sm:$0xff]
        %v326 = vld [vmem:[%s290 + $0xd0] sm:$0xff]
        %v327 = vld [vmem:[%s290 + $0xd8] sm:$0xff]
        %v328 = vld [vmem:[%s290 + $0xe0] sm:$0xff]
        %v329 = vld [vmem:[%s290 + $0xe8] sm:$0xff]
        %v330 = vld [vmem:[%s290 + $0xf0] sm:$0xff]
        %v331 = vld [vmem:[%s290 + $0xf8] sm:$0xff]
        %v332 = vld [vmem:[%s290 + $0x100] sm:$0xff]
        %v333 = vld [vmem:[%s290 + $0x108] sm:$0xff]
        %v334 = vld [vmem:[%s290 + $0x110] sm:$0xff]
        %v335 = vld [vmem:[%s290 + $0x118] sm:$0xff]
        %v336 = vld [vmem:[%s290 + $0x120] sm:$0xff]
        %v337 = vld [vmem:[%s290 + $0x128] sm:$0xff]
        %v338 = vld [vmem:[%s290 + $0x130] sm:$0xff]
        %v339 = vld [vmem:[%s290 + $0x138] sm:$0xff]
        %v340 = vld [vmem:[%s290 + $0x140] sm:$0xff]
        %v341 = vld [vmem:[%s290 + $0x148] sm:$0xff]
        %v342 = vld [vmem:[%s290 + $0x150] sm:$0xff]
        %v343 = vld [vmem:[%s290 + $0x158] sm:$0xff]
        %v344 = vld [vmem:[%s290 + $0x160] sm:$0xff]
        %v345 = vld [vmem:[%s290 + $0x168] sm:$0xff]
        %v346 = vld [vmem:[%s290 + $0x170] sm:$0xff]
        %v347 = vld [vmem:[%s290 + $0x178] sm:$0xff]
        %v348 = vld [vmem:[%s290 + $0x180] sm:$0xff]
        %v349 = vld [vmem:[%s290 + $0x188] sm:$0xff]
        %v350 = vld [vmem:[%s290 + $0x190] sm:$0xff]
        %v351 = vld [vmem:[%s290 + $0x198] sm:$0xff]
        %v352 = vld [vmem:[%s290 + $0x1a0] sm:$0xff]
        %v353 = vld [vmem:[%s290 + $0x1a8] sm:$0xff]
        %v354 = vld [vmem:[%s290 + $0x1b0] sm:$0xff]
        %v355 = vld [vmem:[%s290 + $0x1b8] sm:$0xff]
        %v356 = vld [vmem:[%s290 + $0x1c0] sm:$0xff]
        %v357 = vld [vmem:[%s290 + $0x1c8] sm:$0xff]
        %v358 = vld [vmem:[%s290 + $0x1d0] sm:$0xff]
        %v359 = vld [vmem:[%s290 + $0x1d8] sm:$0xff]
        %v360 = vld [vmem:[%s290 + $0x1e0] sm:$0xff]
        %v361 = vld [vmem:[%s290 + $0x1e8] sm:$0xff]
        %v362 = vld [vmem:[%s290 + $0x1f0] sm:$0xff]
        %v363 = vld [vmem:[%s290 + $0x1f8] sm:$0xff]
        %v364 = vld [vmem:[%s290 + $0x200] sm:$0xff]
        %v365 = vld [vmem:[%s290 + $0x208] sm:$0xff]
        %v366 = vld [vmem:[%s290 + $0x210] sm:$0xff]
        %v367 = vld [vmem:[%s290 + $0x218] sm:$0xff]
        %v368 = vld [vmem:[%s290 + $0x220] sm:$0xff]
        %v369 = vld [vmem:[%s290 + $0x228] sm:$0xff]
        %v370 = vld [vmem:[%s290 + $0x230] sm:$0xff]
        %v371 = vld [vmem:[%s290 + $0x238] sm:$0xff]
        %v372 = vld [vmem:[%s290 + $0x240] sm:$0xff]
        %v373 = vld [vmem:[%s290 + $0x248] sm:$0xff]
        %v374 = vld [vmem:[%s290 + $0x250] sm:$0xff]
        %v375 = vld [vmem:[%s290 + $0x258] sm:$0xff]
        %v376 = vld [vmem:[%s290 + $0x260] sm:$0xff]
        %v377 = vld [vmem:[%s290 + $0x268] sm:$0xff]
        %v378 = vld [vmem:[%s290 + $0x270] sm:$0xff]
        %v379 = vld [vmem:[%s290 + $0x278] sm:$0xff]
        %v380 = vld [vmem:[%s290 + $0x280] sm:$0xff]
        %v381 = vld [vmem:[%s290 + $0x288] sm:$0xff]
        %v382 = vld [vmem:[%s290 + $0x290] sm:$0xff]
        %v383 = vld [vmem:[%s290 + $0x298] sm:$0xff]
        %v384 = vld [vmem:[%s290 + $0x2a0] sm:$0xff]
        %v385 = vld [vmem:[%s290 + $0x2a8] sm:$0xff]
        %v386 = vld [vmem:[%s290 + $0x2b0] sm:$0xff]
        %v387 = vld [vmem:[%s290 + $0x2b8] sm:$0xff]
        %v388 = vld [vmem:[%s290 + $0x2c0] sm:$0xff]
        %v389 = vld [vmem:[%s290 + $0x2c8] sm:$0xff]
        %v390 = vld [vmem:[%s290 + $0x2d0] sm:$0xff]
        %v391 = vld [vmem:[%s290 + $0x2d8] sm:$0xff]
        %v392 = vld [vmem:[%s290 + $0x2e0] sm:$0xff]
        %v393 = vld [vmem:[%s290 + $0x2e8] sm:$0xff]
        %v394 = vld [vmem:[%s290 + $0x2f0] sm:$0xff]
        %v395 = vld [vmem:[%s290 + $0x2f8] sm:$0xff]
        %v396 = vld [vmem:[%s290 + $0x300] sm:$0xff]
        %v397 = vld [vmem:[%s290 + $0x308] sm:$0xff]
        %v398 = vld [vmem:[%s290 + $0x310] sm:$0xff]
        %v399 = vld [vmem:[%s290 + $0x318] sm:$0xff]
        %v400 = vld [vmem:[%s290 + $0x320] sm:$0xff]
        %v401 = vld [vmem:[%s290 + $0x328] sm:$0xff]
        %v402 = vld [vmem:[%s290 + $0x330] sm:$0xff]
        %v403 = vld [vmem:[%s290 + $0x338] sm:$0xff]
        %v404 = vld [vmem:[%s290 + $0x340] sm:$0xff]
        %v405 = vld [vmem:[%s290 + $0x348] sm:$0xff]
        %v406 = vld [vmem:[%s290 + $0x350] sm:$0xff]
        %v407 = vld [vmem:[%s290 + $0x358] sm:$0xff]
        %v408 = vld [vmem:[%s290 + $0x360] sm:$0xff]
        %v409 = vld [vmem:[%s290 + $0x368] sm:$0xff]
        %v410 = vld [vmem:[%s290 + $0x370] sm:$0xff]
        %v411 = vld [vmem:[%s290 + $0x378] sm:$0xff]
        %v412 = vld [vmem:[%s290 + $0x380] sm:$0xff]
        %v413 = vld [vmem:[%s290 + $0x388] sm:$0xff]
        %v414 = vld [vmem:[%s290 + $0x390] sm:$0xff]
        %v415 = vld [vmem:[%s290 + $0x398] sm:$0xff]
        %v416 = vld [vmem:[%s290 + $0x3a0] sm:$0xff]
        %v417 = vld [vmem:[%s290 + $0x3a8] sm:$0xff]
        %v418 = vld [vmem:[%s290 + $0x3b0] sm:$0xff]
        %v419 = vld [vmem:[%s290 + $0x3b8] sm:$0xff]
        %v420 = vld [vmem:[%s290 + $0x3c0] sm:$0xff]
        %v421 = vld [vmem:[%s290 + $0x3c8] sm:$0xff]
        %v422 = vld [vmem:[%s290 + $0x3d0] sm:$0xff]
        %v423 = vld [vmem:[%s290 + $0x3d8] sm:$0xff]
        %v424 = vld [vmem:[%s290 + $0x3e0] sm:$0xff]
        %v425 = vld [vmem:[%s290 + $0x3e8] sm:$0xff]
        %v426 = vld [vmem:[%s290 + $0x3f0] sm:$0xff]
        %v427 = vld [vmem:[%s290 + $0x3f8] sm:$0xff]
        %v428 = vld [vmem:[%s290 + $0x400] sm:$0xff]
        %v429 = vld [vmem:[%s290 + $0x408] sm:$0xff]
        %v430 = vld [vmem:[%s290 + $0x410] sm:$0xff]
        %v431 = vld [vmem:[%s290 + $0x418] sm:$0xff]
        %v432 = vld [vmem:[%s290 + $0x420] sm:$0xff]
        %v433 = vld [vmem:[%s290 + $0x428] sm:$0xff]
        %v434 = vld [vmem:[%s290 + $0x430] sm:$0xff]
        %v435 = vld [vmem:[%s290 + $0x438] sm:$0xff]
        %v436 = vld [vmem:[%s290 + $0x440] sm:$0xff]
        %v437 = vld [vmem:[%s290 + $0x448] sm:$0xff]
        %v438 = vld [vmem:[%s290 + $0x450] sm:$0xff]
        %v439 = vld [vmem:[%s290 + $0x458] sm:$0xff]
        %v440 = vld [vmem:[%s290 + $0x460] sm:$0xff]
        %v441 = vld [vmem:[%s290 + $0x468] sm:$0xff]
        %v442 = vld [vmem:[%s290 + $0x470] sm:$0xff]
        %v443 = vld [vmem:[%s290 + $0x478] sm:$0xff]
        %v444 = vld [vmem:[%s290 + $0x480] sm:$0xff]
        %v445 = vld [vmem:[%s290 + $0x488] sm:$0xff]
        %v446 = vld [vmem:[%s290 + $0x490] sm:$0xff]
        %v447 = vld [vmem:[%s290 + $0x498] sm:$0xff]
        %v448 = vld [vmem:[%s290 + $0x4a0] sm:$0xff]
        %v449 = vld [vmem:[%s290 + $0x4a8] sm:$0xff]
        %v450 = vld [vmem:[%s290 + $0x4b0] sm:$0xff]
        %v451 = vld [vmem:[%s290 + $0x4b8] sm:$0xff]
        %v452 = vld [vmem:[%s290 + $0x4c0] sm:$0xff]
        %v453 = vld [vmem:[%s290 + $0x4c8] sm:$0xff]
        %v454 = vld [vmem:[%s290 + $0x4d0] sm:$0xff]
        %v455 = vld [vmem:[%s290 + $0x4d8] sm:$0xff]
        %v456 = vld [vmem:[%s290 + $0x4e0] sm:$0xff]
        %v457 = vld [vmem:[%s290 + $0x4e8] sm:$0xff]
        %v458 = vld [vmem:[%s290 + $0x4f0] sm:$0xff]
        %v459 = vld [vmem:[%s290 + $0x4f8] sm:$0xff]
        %v460 = vld [vmem:[%s290 + $0x500] sm:$0xff]
        %v461 = vld [vmem:[%s290 + $0x508] sm:$0xff]
        %v462 = vld [vmem:[%s290 + $0x510] sm:$0xff]
        %v463 = vld [vmem:[%s290 + $0x518] sm:$0xff]
        %v464 = vld [vmem:[%s290 + $0x520] sm:$0xff]
        %v465 = vld [vmem:[%s290 + $0x528] sm:$0xff]
        %v466 = vld [vmem:[%s290 + $0x530] sm:$0xff]
        %v467 = vld [vmem:[%s290 + $0x538] sm:$0xff]
        %v468 = vld [vmem:[%s290 + $0x540] sm:$0xff]
        %v469 = vld [vmem:[%s290 + $0x548] sm:$0xff]
        %v470 = vld [vmem:[%s290 + $0x550] sm:$0xff]
        %v471 = vld [vmem:[%s290 + $0x558] sm:$0xff]
        %v472 = vld [vmem:[%s290 + $0x560] sm:$0xff]
        %v473 = vld [vmem:[%s290 + $0x568] sm:$0xff]
        %v474 = vld [vmem:[%s290 + $0x570] sm:$0xff]
        %v475 = vld [vmem:[%s290 + $0x578] sm:$0xff]
        %v476 = vld [vmem:[%s290 + $0x580] sm:$0xff]
        %v477 = vld [vmem:[%s290 + $0x588] sm:$0xff]
        %v478 = vld [vmem:[%s290 + $0x590] sm:$0xff]
        %v479 = vld [vmem:[%s290 + $0x598] sm:$0xff]
        %v480 = vld [vmem:[%s290 + $0x5a0] sm:$0xff]
        %v481 = vld [vmem:[%s290 + $0x5a8] sm:$0xff]
        %v482 = vld [vmem:[%s290 + $0x5b0] sm:$0xff]
        %v483 = vld [vmem:[%s290 + $0x5b8] sm:$0xff]
        %v484 = vld [vmem:[%s290 + $0x5c0] sm:$0xff]
        %v485 = vld [vmem:[%s290 + $0x5c8] sm:$0xff]
        %v486 = vld [vmem:[%s290 + $0x5d0] sm:$0xff]
        %v487 = vld [vmem:[%s290 + $0x5d8] sm:$0xff]
        %v488 = vld [vmem:[%s290 + $0x5e0] sm:$0xff]
        %v489 = vld [vmem:[%s290 + $0x5e8] sm:$0xff]
        %v490 = vld [vmem:[%s290 + $0x5f0] sm:$0xff]
        %v491 = vld [vmem:[%s290 + $0x5f8] sm:$0xff]
        %v492 = vld [vmem:[%s290 + $0x600] sm:$0xff]
        %v493 = vld [vmem:[%s290 + $0x608] sm:$0xff]
        %v494 = vld [vmem:[%s290 + $0x610] sm:$0xff]
        %v495 = vld [vmem:[%s290 + $0x618] sm:$0xff]
        %v496 = vld [vmem:[%s290 + $0x620] sm:$0xff]
        %v497 = vld [vmem:[%s290 + $0x628] sm:$0xff]
        %v498 = vld [vmem:[%s290 + $0x630] sm:$0xff]
        %v499 = vld [vmem:[%s290 + $0x638] sm:$0xff]
        %v500 = vld [vmem:[%s290 + $0x640] sm:$0xff]
        %v501 = vld [vmem:[%s290 + $0x648] sm:$0xff]
        %v502 = vld [vmem:[%s290 + $0x650] sm:$0xff]
        %v503 = vld [vmem:[%s290 + $0x658] sm:$0xff]
        %v504 = vld [vmem:[%s290 + $0x660] sm:$0xff]
        %v505 = vld [vmem:[%s290 + $0x668] sm:$0xff]
        %v506 = vld [vmem:[%s290 + $0x670] sm:$0xff]
        %v507 = vld [vmem:[%s290 + $0x678] sm:$0xff]
        %v508 = vld [vmem:[%s290 + $0x680] sm:$0xff]
        %v509 = vld [vmem:[%s290 + $0x688] sm:$0xff]
        %v510 = vld [vmem:[%s290 + $0x690] sm:$0xff]
        %v511 = vld [vmem:[%s290 + $0x698] sm:$0xff]
        %v512 = vld [vmem:[%s290 + $0x6a0] sm:$0xff]
        %v513 = vld [vmem:[%s290 + $0x6a8] sm:$0xff]
        %v514 = vld [vmem:[%s290 + $0x6b0] sm:$0xff]
        %v515 = vld [vmem:[%s290 + $0x6b8] sm:$0xff]
        %v516 = vld [vmem:[%s290 + $0x6c0] sm:$0xff]
        %v517 = vld [vmem:[%s290 + $0x6c8] sm:$0xff]
        %v518 = vld [vmem:[%s290 + $0x6d0] sm:$0xff]
        %v519 = vld [vmem:[%s290 + $0x6d8] sm:$0xff]
        %v520 = vld [vmem:[%s290 + $0x6e0] sm:$0xff]
        %v521 = vld [vmem:[%s290 + $0x6e8] sm:$0xff]
        %v522 = vld [vmem:[%s290 + $0x6f0] sm:$0xff]
        %v523 = vld [vmem:[%s290 + $0x6f8] sm:$0xff]
        %v524 = vld [vmem:[%s290 + $0x700] sm:$0xff]
        %v525 = vld [vmem:[%s290 + $0x708] sm:$0xff]
        %v526 = vld [vmem:[%s290 + $0x710] sm:$0xff]
        %v527 = vld [vmem:[%s290 + $0x718] sm:$0xff]
        %v528 = vld [vmem:[%s290 + $0x720] sm:$0xff]
        %v529 = vld [vmem:[%s290 + $0x728] sm:$0xff]
        %v530 = vld [vmem:[%s290 + $0x730] sm:$0xff]
        %v531 = vld [vmem:[%s290 + $0x738] sm:$0xff]
        %v532 = vld [vmem:[%s290 + $0x740] sm:$0xff]
        %v533 = vld [vmem:[%s290 + $0x748] sm:$0xff]
        %v534 = vld [vmem:[%s290 + $0x750] sm:$0xff]
        %v535 = vld [vmem:[%s290 + $0x758] sm:$0xff]
        %v536 = vld [vmem:[%s290 + $0x760] sm:$0xff]
        %v537 = vld [vmem:[%s290 + $0x768] sm:$0xff]
        %v538 = vld [vmem:[%s290 + $0x770] sm:$0xff]
        %v539 = vld [vmem:[%s290 + $0x778] sm:$0xff]
        %v540 = vld [vmem:[%s290 + $0x780] sm:$0xff]
        %v541 = vld [vmem:[%s290 + $0x788] sm:$0xff]
        %v542 = vld [vmem:[%s290 + $0x790] sm:$0xff]
        %v543 = vld [vmem:[%s290 + $0x798] sm:$0xff]
        %v544 = vld [vmem:[%s290 + $0x7a0] sm:$0xff]
        %v545 = vld [vmem:[%s290 + $0x7a8] sm:$0xff]
        %v546 = vld [vmem:[%s290 + $0x7b0] sm:$0xff]
        %v547 = vld [vmem:[%s290 + $0x7b8] sm:$0xff]
        %v548 = vld [vmem:[%s290 + $0x7c0] sm:$0xff]
        %v549 = vld [vmem:[%s290 + $0x7c8] sm:$0xff]
        %v550 = vld [vmem:[%s290 + $0x7d0] sm:$0xff]
        %v551 = vld [vmem:[%s290 + $0x7d8] sm:$0xff]
        %v552 = vld [vmem:[%s290 + $0x7e0] sm:$0xff]
        %v553 = vld [vmem:[%s290 + $0x7e8] sm:$0xff]
        %v554 = vld [vmem:[%s290 + $0x7f0] sm:$0xff]
        %v555 = vld [vmem:[%s290 + $0x7f8] sm:$0xff]
        %v556 = vld [vmem:[%s290 + $0x800] sm:$0xff]
        %v557 = vld [vmem:[%s290 + $0x808] sm:$0xff]
        %v558 = vld [vmem:[%s290 + $0x810] sm:$0xff]
        %v559 = vld [vmem:[%s290 + $0x818] sm:$0xff]
        %v560 = vld [vmem:[%s290 + $0x820] sm:$0xff]
        %v561 = vld [vmem:[%s290 + $0x828] sm:$0xff]
        %v562 = vld [vmem:[%s290 + $0x830] sm:$0xff]
        %v563 = vld [vmem:[%s290 + $0x838] sm:$0xff]
        %v564 = vld [vmem:[%s290 + $0x840] sm:$0xff]
        %v565 = vld [vmem:[%s290 + $0x848] sm:$0xff]
        %v566 = vld [vmem:[%s290 + $0x850] sm:$0xff]
        %v567 = vld [vmem:[%s290 + $0x858] sm:$0xff]
        %v568 = vld [vmem:[%s290 + $0x860] sm:$0xff]
        %v569 = vld [vmem:[%s290 + $0x868] sm:$0xff]
        %v570 = vld [vmem:[%s290 + $0x870] sm:$0xff]
        %v571 = vld [vmem:[%s290 + $0x878] sm:$0xff]
        %v572 = vld [vmem:[%s290 + $0x880] sm:$0xff]
        %v573 = vld [vmem:[%s290 + $0x888] sm:$0xff]
        %v574 = vld [vmem:[%s290 + $0x890] sm:$0xff]
        %v575 = vld [vmem:[%s290 + $0x898] sm:$0xff]
        %v576 = vld [vmem:[%s290 + $0x8a0] sm:$0xff]
        %v577 = vld [vmem:[%s290 + $0x8a8] sm:$0xff]
        %v578 = vld [vmem:[%s290 + $0x8b0] sm:$0xff]
        %v579 = vld [vmem:[%s290 + $0x8b8] sm:$0xff]
        %v580 = vld [vmem:[%s290 + $0x8c0] sm:$0xff]
        %v581 = vld [vmem:[%s290 + $0x8c8] sm:$0xff]
        %v582 = vld [vmem:[%s290 + $0x8d0] sm:$0xff]
        %v583 = vld [vmem:[%s290 + $0x8d8] sm:$0xff]
        %v584 = vld [vmem:[%s290 + $0x8e0] sm:$0xff]
        %v585 = vld [vmem:[%s290 + $0x8e8] sm:$0xff]
        %v586 = vld [vmem:[%s290 + $0x8f0] sm:$0xff]
        %v587 = vld [vmem:[%s290 + $0x8f8] sm:$0xff]
        %v588 = vld [vmem:[%s290 + $0x900] sm:$0xff]
        %v589 = vld [vmem:[%s290 + $0x908] sm:$0xff]
        %v590 = vld [vmem:[%s290 + $0x910] sm:$0xff]
        %v591 = vld [vmem:[%s290 + $0x918] sm:$0xff]
        %v592 = vld [vmem:[%s290 + $0x920] sm:$0xff]
        %v593 = vld [vmem:[%s290 + $0x928] sm:$0xff]
        %v594 = vld [vmem:[%s290 + $0x930] sm:$0xff]
        %v595 = vld [vmem:[%s290 + $0x938] sm:$0xff]
        %v596 = vld [vmem:[%s290 + $0x940] sm:$0xff]
        %v597 = vld [vmem:[%s290 + $0x948] sm:$0xff]
        %v598 = vld [vmem:[%s290 + $0x950] sm:$0xff]
        %v599 = vld [vmem:[%s290 + $0x958] sm:$0xff]
        %v600 = vld [vmem:[%s290 + $0x960] sm:$0xff]
        %v601 = vld [vmem:[%s290 + $0x968] sm:$0xff]
        %v602 = vld [vmem:[%s290 + $0x970] sm:$0xff]
        %v603 = vld [vmem:[%s290 + $0x978] sm:$0xff]
        %v604 = vld [vmem:[%s290 + $0x980] sm:$0xff]
        %v605 = vld [vmem:[%s290 + $0x988] sm:$0xff]
        %v606 = vld [vmem:[%s290 + $0x990] sm:$0xff]
        %v607 = vld [vmem:[%s290 + $0x998] sm:$0xff]
        %v608 = vld [vmem:[%s290 + $0x9a0] sm:$0xff]
        %v609 = vld [vmem:[%s290 + $0x9a8] sm:$0xff]
        %v610 = vld [vmem:[%s290 + $0x9b0] sm:$0xff]
        %v611 = vld [vmem:[%s290 + $0x9b8] sm:$0xff]
        %v612 = vld [vmem:[%s290 + $0x9c0] sm:$0xff]
        %v613 = vld [vmem:[%s290 + $0x9c8] sm:$0xff]
        %v614 = vld [vmem:[%s290 + $0x9d0] sm:$0xff]
        %v615 = vld [vmem:[%s290 + $0x9d8] sm:$0xff]
        %v616 = vld [vmem:[%s290 + $0x9e0] sm:$0xff]
        %v617 = vld [vmem:[%s290 + $0x9e8] sm:$0xff]
        %v618 = vld [vmem:[%s290 + $0x9f0] sm:$0xff]
        %v619 = vld [vmem:[%s290 + $0x9f8] sm:$0xff]
        %v620 = vld [vmem:[%s290 + $0xa00] sm:$0xff]
        %v621 = vld [vmem:[%s290 + $0xa08] sm:$0xff]
        %v622 = vld [vmem:[%s290 + $0xa10] sm:$0xff]
        %v623 = vld [vmem:[%s290 + $0xa18] sm:$0xff]
        %v624 = vld [vmem:[%s290 + $0xa20] sm:$0xff]
        %v625 = vld [vmem:[%s290 + $0xa28] sm:$0xff]
        %v626 = vld [vmem:[%s290 + $0xa30] sm:$0xff]
        %v627 = vld [vmem:[%s290 + $0xa38] sm:$0xff]
        %v628 = vld [vmem:[%s290 + $0xa40] sm:$0xff]
        %v629 = vld [vmem:[%s290 + $0xa48] sm:$0xff]
        %v630 = vld [vmem:[%s290 + $0xa50] sm:$0xff]
        %v631 = vld [vmem:[%s290 + $0xa58] sm:$0xff]
        %v632 = vld [vmem:[%s290 + $0xa60] sm:$0xff]
        %v633 = vld [vmem:[%s290 + $0xa68] sm:$0xff]
        %v634 = vld [vmem:[%s290 + $0xa70] sm:$0xff]
        %v635 = vld [vmem:[%s290 + $0xa78] sm:$0xff]
        %v636 = vld [vmem:[%s290 + $0xa80] sm:$0xff]
        %v637 = vld [vmem:[%s290 + $0xa88] sm:$0xff]
        %v638 = vld [vmem:[%s290 + $0xa90] sm:$0xff]
        %v639 = vld [vmem:[%s290 + $0xa98] sm:$0xff]
        %v640 = vld [vmem:[%s290 + $0xaa0] sm:$0xff]
        %v641 = vld [vmem:[%s290 + $0xaa8] sm:$0xff]
        %v642 = vld [vmem:[%s290 + $0xab0] sm:$0xff]
        %v643 = vld [vmem:[%s290 + $0xab8] sm:$0xff]
        %v644 = vld [vmem:[%s290 + $0xac0] sm:$0xff]
        %v645 = vld [vmem:[%s290 + $0xac8] sm:$0xff]
        %v646 = vld [vmem:[%s290 + $0xad0] sm:$0xff]
        %v647 = vld [vmem:[%s290 + $0xad8] sm:$0xff]
        %v648 = vld [vmem:[%s290 + $0xae0] sm:$0xff]
        %v649 = vld [vmem:[%s290 + $0xae8] sm:$0xff]
        %v650 = vld [vmem:[%s290 + $0xaf0] sm:$0xff]
        %v651 = vld [vmem:[%s290 + $0xaf8] sm:$0xff]
        %v652 = vld [vmem:[%s290 + $0xb00] sm:$0xff]
        %v653 = vld [vmem:[%s290 + $0xb08] sm:$0xff]
        %v654 = vld [vmem:[%s290 + $0xb10] sm:$0xff]
        %v655 = vld [vmem:[%s290 + $0xb18] sm:$0xff]
        %v656 = vld [vmem:[%s290 + $0xb20] sm:$0xff]
        %v657 = vld [vmem:[%s290 + $0xb28] sm:$0xff]
        %v658 = vld [vmem:[%s290 + $0xb30] sm:$0xff]
        %v659 = vld [vmem:[%s290 + $0xb38] sm:$0xff]
        %v660 = vld [vmem:[%s290 + $0xb40] sm:$0xff]
        %v661 = vld [vmem:[%s290 + $0xb48] sm:$0xff]
        %v662 = vld [vmem:[%s290 + $0xb50] sm:$0xff]
        %v663 = vld [vmem:[%s290 + $0xb58] sm:$0xff]
        %v664 = vld [vmem:[%s290 + $0xb60] sm:$0xff]
        %v665 = vld [vmem:[%s290 + $0xb68] sm:$0xff]
        %v666 = vld [vmem:[%s290 + $0xb70] sm:$0xff]
        %v667 = vld [vmem:[%s290 + $0xb78] sm:$0xff]
        %v668 = vld [vmem:[%s290 + $0xb80] sm:$0xff]
        %v669 = vld [vmem:[%s290 + $0xb88] sm:$0xff]
        %v670 = vld [vmem:[%s290 + $0xb90] sm:$0xff]
        %v671 = vld [vmem:[%s290 + $0xb98] sm:$0xff]
        %v672 = vld [vmem:[%s290 + $0xba0] sm:$0xff]
        %v673 = vld [vmem:[%s290 + $0xba8] sm:$0xff]
        %v674 = vld [vmem:[%s290 + $0xbb0] sm:$0xff]
        %v675 = vld [vmem:[%s290 + $0xbb8] sm:$0xff]
        %v676 = vld [vmem:[%s290 + $0xbc0] sm:$0xff]
        %v677 = vld [vmem:[%s290 + $0xbc8] sm:$0xff]
        %v678 = vld [vmem:[%s290 + $0xbd0] sm:$0xff]
        %v679 = vld [vmem:[%s290 + $0xbd8] sm:$0xff]
        %v680 = vld [vmem:[%s290 + $0xbe0] sm:$0xff]
        %v681 = vld [vmem:[%s290 + $0xbe8] sm:$0xff]
        %v682 = vld [vmem:[%s290 + $0xbf0] sm:$0xff]
        %v683 = vld [vmem:[%s290 + $0xbf8] sm:$0xff]
        %v684 = vld [vmem:[%s290 + $0xc00] sm:$0xff]
        %v685 = vld [vmem:[%s290 + $0xc08] sm:$0xff]
        %v686 = vld [vmem:[%s290 + $0xc10] sm:$0xff]
        %v687 = vld [vmem:[%s290 + $0xc18] sm:$0xff]
        %v688 = vld [vmem:[%s290 + $0xc20] sm:$0xff]
        %v689 = vld [vmem:[%s290 + $0xc28] sm:$0xff]
        %v690 = vld [vmem:[%s290 + $0xc30] sm:$0xff]
        %v691 = vld [vmem:[%s290 + $0xc38] sm:$0xff]
        %v692 = vld [vmem:[%s290 + $0xc40] sm:$0xff]
        %v693 = vld [vmem:[%s290 + $0xc48] sm:$0xff]
        %v694 = vld [vmem:[%s290 + $0xc50] sm:$0xff]
        %v695 = vld [vmem:[%s290 + $0xc58] sm:$0xff]
        %v696 = vld [vmem:[%s290 + $0xc60] sm:$0xff]
        %v697 = vld [vmem:[%s290 + $0xc68] sm:$0xff]
        %v698 = vld [vmem:[%s290 + $0xc70] sm:$0xff]
        %v699 = vld [vmem:[%s290 + $0xc78] sm:$0xff]
        %v700 = vld [vmem:[%s290 + $0xc80] sm:$0xff]
        %v701 = vld [vmem:[%s290 + $0xc88] sm:$0xff]
        %v702 = vld [vmem:[%s290 + $0xc90] sm:$0xff]
        %v703 = vld [vmem:[%s290 + $0xc98] sm:$0xff]
        %v704 = vld [vmem:[%s290 + $0xca0] sm:$0xff]
        %v705 = vld [vmem:[%s290 + $0xca8] sm:$0xff]
        %v706 = vld [vmem:[%s290 + $0xcb0] sm:$0xff]
        %v707 = vld [vmem:[%s290 + $0xcb8] sm:$0xff]
        %v708 = vld [vmem:[%s290 + $0xcc0] sm:$0xff]
        %v709 = vld [vmem:[%s290 + $0xcc8] sm:$0xff]
        %v710 = vld [vmem:[%s290 + $0xcd0] sm:$0xff]
        %v711 = vld [vmem:[%s290 + $0xcd8] sm:$0xff]
        %v712 = vld [vmem:[%s290 + $0xce0] sm:$0xff]
        %v713 = vld [vmem:[%s290 + $0xce8] sm:$0xff]
        %v714 = vld [vmem:[%s290 + $0xcf0] sm:$0xff]
        %v715 = vld [vmem:[%s290 + $0xcf8] sm:$0xff]
        %v716 = vld [vmem:[%s290 + $0xd00] sm:$0xff]
        %v717 = vld [vmem:[%s290 + $0xd08] sm:$0xff]
        %v718 = vld [vmem:[%s290 + $0xd10] sm:$0xff]
        %v719 = vld [vmem:[%s290 + $0xd18] sm:$0xff]
        %v720 = vld [vmem:[%s290 + $0xd20] sm:$0xff]
        %v721 = vld [vmem:[%s290 + $0xd28] sm:$0xff]
        %v722 = vld [vmem:[%s290 + $0xd30] sm:$0xff]
        %v723 = vld [vmem:[%s290 + $0xd38] sm:$0xff]
        %v724 = vld [vmem:[%s290 + $0xd40] sm:$0xff]
        %v725 = vld [vmem:[%s290 + $0xd48] sm:$0xff]
        %v726 = vld [vmem:[%s290 + $0xd50] sm:$0xff]
        %v727 = vld [vmem:[%s290 + $0xd58] sm:$0xff]
        %v728 = vld [vmem:[%s290 + $0xd60] sm:$0xff]
        %v729 = vld [vmem:[%s290 + $0xd68] sm:$0xff]
        %v730 = vld [vmem:[%s290 + $0xd70] sm:$0xff]
        %v731 = vld [vmem:[%s290 + $0xd78] sm:$0xff]
        %v732 = vld [vmem:[%s290 + $0xd80] sm:$0xff]
        %v733 = vld [vmem:[%s290 + $0xd88] sm:$0xff]
        %v734 = vld [vmem:[%s290 + $0xd90] sm:$0xff]
        %v735 = vld [vmem:[%s290 + $0xd98] sm:$0xff]
        %v736 = vld [vmem:[%s290 + $0xda0] sm:$0xff]
        %v737 = vld [vmem:[%s290 + $0xda8] sm:$0xff]
        %v738 = vld [vmem:[%s290 + $0xdb0] sm:$0xff]
        %v739 = vld [vmem:[%s290 + $0xdb8] sm:$0xff]
        %v740 = vld [vmem:[%s290 + $0xdc0] sm:$0xff]
        %v741 = vld [vmem:[%s290 + $0xdc8] sm:$0xff]
        %v742 = vld [vmem:[%s290 + $0xdd0] sm:$0xff]
        %v743 = vld [vmem:[%s290 + $0xdd8] sm:$0xff]
        %v744 = vld [vmem:[%s290 + $0xde0] sm:$0xff]
        %v745 = vld [vmem:[%s290 + $0xde8] sm:$0xff]
        %v746 = vld [vmem:[%s290 + $0xdf0] sm:$0xff]
        %v747 = vld [vmem:[%s290 + $0xdf8] sm:$0xff]
        %v748 = vld [vmem:[%s290 + $0xe00] sm:$0xff]
        %v749 = vld [vmem:[%s290 + $0xe08] sm:$0xff]
        %v750 = vld [vmem:[%s290 + $0xe10] sm:$0xff]
        %v751 = vld [vmem:[%s290 + $0xe18] sm:$0xff]
        %v752 = vld [vmem:[%s290 + $0xe20] sm:$0xff]
        %v753 = vld [vmem:[%s290 + $0xe28] sm:$0xff]
        %v754 = vld [vmem:[%s290 + $0xe30] sm:$0xff]
        %v755 = vld [vmem:[%s290 + $0xe38] sm:$0xff]
        %v756 = vld [vmem:[%s290 + $0xe40] sm:$0xff]
        %v757 = vld [vmem:[%s290 + $0xe48] sm:$0xff]
        %v758 = vld [vmem:[%s290 + $0xe50] sm:$0xff]
        %v759 = vld [vmem:[%s290 + $0xe58] sm:$0xff]
        %v760 = vld [vmem:[%s290 + $0xe60] sm:$0xff]
        %v761 = vld [vmem:[%s290 + $0xe68] sm:$0xff]
        %v762 = vld [vmem:[%s290 + $0xe70] sm:$0xff]
        %v763 = vld [vmem:[%s290 + $0xe78] sm:$0xff]
        %v764 = vld [vmem:[%s290 + $0xe80] sm:$0xff]
        %v765 = vld [vmem:[%s290 + $0xe88] sm:$0xff]
        %v766 = vld [vmem:[%s290 + $0xe90] sm:$0xff]
        %v767 = vld [vmem:[%s290 + $0xe98] sm:$0xff]
        %v768 = vld [vmem:[%s290 + $0xea0] sm:$0xff]
        %v769 = vld [vmem:[%s290 + $0xea8] sm:$0xff]
        %v770 = vld [vmem:[%s290 + $0xeb0] sm:$0xff]
        %v771 = vld [vmem:[%s290 + $0xeb8] sm:$0xff]
        %v772 = vld [vmem:[%s290 + $0xec0] sm:$0xff]
        %v773 = vld [vmem:[%s290 + $0xec8] sm:$0xff]
        %v774 = vld [vmem:[%s290 + $0xed0] sm:$0xff]
        %v775 = vld [vmem:[%s290 + $0xed8] sm:$0xff]
        %v776 = vld [vmem:[%s290 + $0xee0] sm:$0xff]
        %v777 = vld [vmem:[%s290 + $0xee8] sm:$0xff]
        %v778 = vld [vmem:[%s290 + $0xef0] sm:$0xff]
        %v779 = vld [vmem:[%s290 + $0xef8] sm:$0xff]
        %v780 = vld [vmem:[%s290 + $0xf00] sm:$0xff]
        %v781 = vld [vmem:[%s290 + $0xf08] sm:$0xff]
        %v782 = vld [vmem:[%s290 + $0xf10] sm:$0xff]
        %v783 = vld [vmem:[%s290 + $0xf18] sm:$0xff]
        %v784 = vld [vmem:[%s290 + $0xf20] sm:$0xff]
        %v785 = vld [vmem:[%s290 + $0xf28] sm:$0xff]
        %v786 = vld [vmem:[%s290 + $0xf30] sm:$0xff]
        %v787 = vld [vmem:[%s290 + $0xf38] sm:$0xff]
        %v788 = vld [vmem:[%s290 + $0xf40] sm:$0xff]
        %v789 = vld [vmem:[%s290 + $0xf48] sm:$0xff]
        %v790 = vld [vmem:[%s290 + $0xf50] sm:$0xff]
        %v791 = vld [vmem:[%s290 + $0xf58] sm:$0xff]
        %v792 = vld [vmem:[%s290 + $0xf60] sm:$0xff]
        %v793 = vld [vmem:[%s290 + $0xf68] sm:$0xff]
        %v794 = vld [vmem:[%s290 + $0xf70] sm:$0xff]
        %v795 = vld [vmem:[%s290 + $0xf78] sm:$0xff]
        %v796 = vld [vmem:[%s290 + $0xf80] sm:$0xff]
        %v797 = vld [vmem:[%s290 + $0xf88] sm:$0xff]
        %v798 = vld [vmem:[%s290 + $0xf90] sm:$0xff]
        %v799 = vld [vmem:[%s290 + $0xf98] sm:$0xff]
        %v800 = vld [vmem:[%s290 + $0xfa0] sm:$0xff]
        %v801 = vld [vmem:[%s290 + $0xfa8] sm:$0xff]
        %v802 = vld [vmem:[%s290 + $0xfb0] sm:$0xff]
        %v803 = vld [vmem:[%s290 + $0xfb8] sm:$0xff]
        %v804 = vld [vmem:[%s290 + $0xfc0] sm:$0xff]
        %v805 = vld [vmem:[%s290 + $0xfc8] sm:$0xff]
        %v806 = vld [vmem:[%s290 + $0xfd0] sm:$0xff]
        %v807 = vld [vmem:[%s290 + $0xfd8] sm:$0xff]
        %v808 = vld [vmem:[%s290 + $0xfe0] sm:$0xff]
        %v809 = vld [vmem:[%s290 + $0xfe8] sm:$0xff]
        %v810 = vld [vmem:[%s290 + $0xff0] sm:$0xff]
        %v811 = vld [vmem:[%s290 + $0xff8] sm:$0xff]
        %v814 = vcombine.high %v298, %v298
        %v816 = vunpack.c.l.s4 1983009808
        %v817 = vunpack.c.0.s8 %v816
        %v818 = vlaneseq
        %v819 = vshrl.u32 %v818, 7
        %v820 = vsub.s32 %v817, %v819
        %v821 = vrot.slane %v298, %v820
        %v823 = vunpack.c.l.s4 1983009808
        %v824 = vunpack.c.0.s8 %v823
        %v825 = vlaneseq
        %v826 = vshrl.u32 %v825, 7
        %v827 = vsub.s32 %v824, %v826
        %v828 = vrot.slane %v814, %v827
        %v829 = vcombine.high %v821, %v821
        %v830 = vcombine.high %v828, %v828
        %v831 = vcombine.high %v299, %v299
        %v833 = vunpack.c.l.s4 1983009808
        %v834 = vunpack.c.0.s8 %v833
        %v835 = vlaneseq
        %v836 = vshrl.u32 %v835, 7
        %v837 = vsub.s32 %v834, %v836
        %v838 = vrot.slane %v299, %v837
        %v840 = vunpack.c.l.s4 1983009808
        %v841 = vunpack.c.0.s8 %v840
        %v842 = vlaneseq
        %v843 = vshrl.u32 %v842, 7
        %v844 = vsub.s32 %v841, %v843
        %v845 = vrot.slane %v831, %v844
        %v846 = vcombine.high %v838, %v838
        %v847 = vcombine.high %v845, %v845
        %856 = vmatprep.subr.mxu0 %v361
        %857 = vmatpush1.msra.mxu0 %v360
        %858 = vmatprep.subr.mxu0 %v357
        %859 = vmatpush1.msra.mxu0 %v356
        %860 = vmatprep.subr.mxu0 %v353
        %861 = vmatpush1.msra.mxu0 %v352
        %862 = vmatprep.subr.mxu0 %v349
        %863 = vmatpush1.msra.mxu0 %v348
        %864 = vmatprep.subr.mxu0 %v345
        %865 = vmatpush1.msra.mxu0 %v344
        %866 = vmatprep.subr.mxu0 %v341
        %867 = vmatpush1.msra.mxu0 %v340
        %868 = vmatprep.subr.mxu0 %v337
        %869 = vmatpush1.msra.mxu0 %v336
        %870 = vmatprep.subr.mxu0 %v333
        %871 = vmatpush1.msra.mxu0 %v332
        %872 = vmatprep.subr.mxu0 %v329
        %873 = vmatpush1.msra.mxu0 %v328
        %874 = vmatprep.subr.mxu0 %v325
        %875 = vmatpush1.msra.mxu0 %v324
        %876 = vmatprep.subr.mxu0 %v321
        %877 = vmatpush1.msra.mxu0 %v320
        %878 = vmatprep.subr.mxu0 %v317
        %879 = vmatpush1.msra.mxu0 %v316
        %880 = vmatprep.subr.mxu0 %v313
        %881 = vmatpush1.msra.mxu0 %v312
        %882 = vmatprep.subr.mxu0 %v309
        %883 = vmatpush1.msra.mxu0 %v308
        %884 = vmatprep.subr.mxu0 %v305
        %885 = vmatpush1.msra.mxu0 %v304
        %886 = vmatprep.subr.mxu0 %v301
        %887 = vmatpush1.msra.mxu0 %v300
        %888 = vmatprep.subr.mxu0 %v425
        %889 = vmatpush2.msra.mxu0 %v424
        %890 = vmatprep.subr.mxu0 %v421
        %891 = vmatpush2.msra.mxu0 %v420
        %892 = vmatprep.subr.mxu0 %v417
        %893 = vmatpush2.msra.mxu0 %v416
        %894 = vmatprep.subr.mxu0 %v413
        %895 = vmatpush2.msra.mxu0 %v412
        %896 = vmatprep.subr.mxu0 %v409
        %897 = vmatpush2.msra.mxu0 %v408
        %898 = vmatprep.subr.mxu0 %v405
        %899 = vmatpush2.msra.mxu0 %v404
        %900 = vmatprep.subr.mxu0 %v401
        %901 = vmatpush2.msra.mxu0 %v400
        %902 = vmatprep.subr.mxu0 %v397
        %903 = vmatpush2.msra.mxu0 %v396
        %904 = vmatprep.subr.mxu0 %v393
        %905 = vmatpush2.msra.mxu0 %v392
        %906 = vmatprep.subr.mxu0 %v389
        %907 = vmatpush2.msra.mxu0 %v388
        %908 = vmatprep.subr.mxu0 %v385
        %909 = vmatpush2.msra.mxu0 %v384
        %910 = vmatprep.subr.mxu0 %v381
        %911 = vmatpush2.msra.mxu0 %v380
        %912 = vmatprep.subr.mxu0 %v377
        %913 = vmatpush2.msra.mxu0 %v376
        %914 = vmatprep.subr.mxu0 %v373
        %915 = vmatpush2.msra.mxu0 %v372
        %916 = vmatprep.subr.mxu0 %v369
        %917 = vmatpush2.msra.mxu0 %v368
        %918 = vmatprep.subr.mxu0 %v365
        %919 = vmatpush2.msra.mxu0 %v364
        %920 = vmatprep.mubr.f32.mxu0 %v829
        %921 = vmatmul.mubr.f32.gmra.mxu0 %v821
        %v922 = vpop.f32.mrf.mxu0
        %v923 = vadd.f32 0.0, %v922
        %v924 = vpop.f32.mrf.mxu0
        %v925 = vadd.f32 0.0, %v924
        %926 = vdwg.mxu0
        %927 = vmatprep.subr.mxu0 %v489
        %928 = vmatpush1.msra.mxu0 %v488
        %929 = vmatprep.subr.mxu0 %v485
        %930 = vmatpush1.msra.mxu0 %v484
        %931 = vmatprep.subr.mxu0 %v481
        %932 = vmatpush1.msra.mxu0 %v480
        %933 = vmatprep.subr.mxu0 %v477
        %934 = vmatpush1.msra.mxu0 %v476
        %935 = vmatprep.subr.mxu0 %v473
        %936 = vmatpush1.msra.mxu0 %v472
        %937 = vmatprep.subr.mxu0 %v469
        %938 = vmatpush1.msra.mxu0 %v468
        %939 = vmatprep.subr.mxu0 %v465
        %940 = vmatpush1.msra.mxu0 %v464
        %941 = vmatprep.subr.mxu0 %v461
        %942 = vmatpush1.msra.mxu0 %v460
        %943 = vmatprep.subr.mxu0 %v457
        %944 = vmatpush1.msra.mxu0 %v456
        %945 = vmatprep.subr.mxu0 %v453
        %946 = vmatpush1.msra.mxu0 %v452
        %947 = vmatprep.subr.mxu0 %v449
        %948 = vmatpush1.msra.mxu0 %v448
        %949 = vmatprep.subr.mxu0 %v445
        %950 = vmatpush1.msra.mxu0 %v444
        %951 = vmatprep.subr.mxu0 %v441
        %952 = vmatpush1.msra.mxu0 %v440
        %953 = vmatprep.subr.mxu0 %v437
        %954 = vmatpush1.msra.mxu0 %v436
        %955 = vmatprep.subr.mxu0 %v433
        %956 = vmatpush1.msra.mxu0 %v432
        %957 = vmatprep.subr.mxu0 %v429
        %958 = vmatpush1.msra.mxu0 %v428
        %959 = vmatprep.subr.mxu0 %v553
        %960 = vmatpush2.msra.mxu0 %v552
        %961 = vmatprep.subr.mxu0 %v549
        %962 = vmatpush2.msra.mxu0 %v548
        %963 = vmatprep.subr.mxu0 %v545
        %964 = vmatpush2.msra.mxu0 %v544
        %965 = vmatprep.subr.mxu0 %v541
        %966 = vmatpush2.msra.mxu0 %v540
        %967 = vmatprep.subr.mxu0 %v537
        %968 = vmatpush2.msra.mxu0 %v536
        %969 = vmatprep.subr.mxu0 %v533
        %970 = vmatpush2.msra.mxu0 %v532
        %971 = vmatprep.subr.mxu0 %v529
        %972 = vmatpush2.msra.mxu0 %v528
        %973 = vmatprep.subr.mxu0 %v525
        %974 = vmatpush2.msra.mxu0 %v524
        %975 = vmatprep.subr.mxu0 %v521
        %976 = vmatpush2.msra.mxu0 %v520
        %977 = vmatprep.subr.mxu0 %v517
        %978 = vmatpush2.msra.mxu0 %v516
        %979 = vmatprep.subr.mxu0 %v513
        %980 = vmatpush2.msra.mxu0 %v512
        %981 = vmatprep.subr.mxu0 %v509
        %982 = vmatpush2.msra.mxu0 %v508
        %983 = vmatprep.subr.mxu0 %v505
        %984 = vmatpush2.msra.mxu0 %v504
        %985 = vmatprep.subr.mxu0 %v501
        %986 = vmatpush2.msra.mxu0 %v500
        %987 = vmatprep.subr.mxu0 %v497
        %988 = vmatpush2.msra.mxu0 %v496
        %989 = vmatprep.subr.mxu0 %v493
        %990 = vmatpush2.msra.mxu0 %v492
        %991 = vmatprep.mubr.f32.mxu0 %v830
        %992 = vmatmul.mubr.f32.gmra.mxu0 %v828
        %v993 = vpop.f32.mrf.mxu0
        %v994 = vadd.f32 %v923, %v993
        %v995 = vpop.f32.mrf.mxu0
        %v996 = vadd.f32 %v925, %v995
        %997 = vdwg.mxu0
        %998 = vmatprep.subr.mxu0 %v617
        %999 = vmatpush1.msra.mxu0 %v616
        %1000 = vmatprep.subr.mxu0 %v613
        %1001 = vmatpush1.msra.mxu0 %v612
        %1002 = vmatprep.subr.mxu0 %v609
        %1003 = vmatpush1.msra.mxu0 %v608
        %1004 = vmatprep.subr.mxu0 %v605
        %1005 = vmatpush1.msra.mxu0 %v604
        %1006 = vmatprep.subr.mxu0 %v601
        %1007 = vmatpush1.msra.mxu0 %v600
        %1008 = vmatprep.subr.mxu0 %v597
        %1009 = vmatpush1.msra.mxu0 %v596
        %1010 = vmatprep.subr.mxu0 %v593
        %1011 = vmatpush1.msra.mxu0 %v592
        %1012 = vmatprep.subr.mxu0 %v589
        %1013 = vmatpush1.msra.mxu0 %v588
        %1014 = vmatprep.subr.mxu0 %v585
        %1015 = vmatpush1.msra.mxu0 %v584
        %1016 = vmatprep.subr.mxu0 %v581
        %1017 = vmatpush1.msra.mxu0 %v580
        %1018 = vmatprep.subr.mxu0 %v577
        %1019 = vmatpush1.msra.mxu0 %v576
        %1020 = vmatprep.subr.mxu0 %v573
        %1021 = vmatpush1.msra.mxu0 %v572
        %1022 = vmatprep.subr.mxu0 %v569
        %1023 = vmatpush1.msra.mxu0 %v568
        %1024 = vmatprep.subr.mxu0 %v565
        %1025 = vmatpush1.msra.mxu0 %v564
        %1026 = vmatprep.subr.mxu0 %v561
        %1027 = vmatpush1.msra.mxu0 %v560
        %1028 = vmatprep.subr.mxu0 %v557
        %1029 = vmatpush1.msra.mxu0 %v556
        %1030 = vmatprep.subr.mxu0 %v681
        %1031 = vmatpush2.msra.mxu0 %v680
        %1032 = vmatprep.subr.mxu0 %v677
        %1033 = vmatpush2.msra.mxu0 %v676
        %1034 = vmatprep.subr.mxu0 %v673
        %1035 = vmatpush2.msra.mxu0 %v672
        %1036 = vmatprep.subr.mxu0 %v669
        %1037 = vmatpush2.msra.mxu0 %v668
        %1038 = vmatprep.subr.mxu0 %v665
        %1039 = vmatpush2.msra.mxu0 %v664
        %1040 = vmatprep.subr.mxu0 %v661
        %1041 = vmatpush2.msra.mxu0 %v660
        %1042 = vmatprep.subr.mxu0 %v657
        %1043 = vmatpush2.msra.mxu0 %v656
        %1044 = vmatprep.subr.mxu0 %v653
        %1045 = vmatpush2.msra.mxu0 %v652
        %1046 = vmatprep.subr.mxu0 %v649
        %1047 = vmatpush2.msra.mxu0 %v648
        %1048 = vmatprep.subr.mxu0 %v645
        %1049 = vmatpush2.msra.mxu0 %v644
        %1050 = vmatprep.subr.mxu0 %v641
        %1051 = vmatpush2.msra.mxu0 %v640
        %1052 = vmatprep.subr.mxu0 %v637
        %1053 = vmatpush2.msra.mxu0 %v636
        %1054 = vmatprep.subr.mxu0 %v633
        %1055 = vmatpush2.msra.mxu0 %v632
        %1056 = vmatprep.subr.mxu0 %v629
        %1057 = vmatpush2.msra.mxu0 %v628
        %1058 = vmatprep.subr.mxu0 %v625
        %1059 = vmatpush2.msra.mxu0 %v624
        %1060 = vmatprep.subr.mxu0 %v621
        %1061 = vmatpush2.msra.mxu0 %v620
        %1062 = vmatprep.mubr.f32.mxu0 %v846
        %1063 = vmatmul.mubr.f32.gmra.mxu0 %v838
        %v1064 = vpop.f32.mrf.mxu0
        %v1065 = vadd.f32 %v994, %v1064
        %v1066 = vpop.f32.mrf.mxu0
        %v1067 = vadd.f32 %v996, %v1066
        %1068 = vdwg.mxu0
        %1069 = vmatprep.subr.mxu0 %v745
        %1070 = vmatpush1.msra.mxu0 %v744
        %1071 = vmatprep.subr.mxu0 %v741
        %1072 = vmatpush1.msra.mxu0 %v740
        %1073 = vmatprep.subr.mxu0 %v737
        %1074 = vmatpush1.msra.mxu0 %v736
        %1075 = vmatprep.subr.mxu0 %v733
        %1076 = vmatpush1.msra.mxu0 %v732
        %1077 = vmatprep.subr.mxu0 %v729
        %1078 = vmatpush1.msra.mxu0 %v728
        %1079 = vmatprep.subr.mxu0 %v725
        %1080 = vmatpush1.msra.mxu0 %v724
        %1081 = vmatprep.subr.mxu0 %v721
        %1082 = vmatpush1.msra.mxu0 %v720
        %1083 = vmatprep.subr.mxu0 %v717
        %1084 = vmatpush1.msra.mxu0 %v716
        %1085 = vmatprep.subr.mxu0 %v713
        %1086 = vmatpush1.msra.mxu0 %v712
        %1087 = vmatprep.subr.mxu0 %v709
        %1088 = vmatpush1.msra.mxu0 %v708
        %1089 = vmatprep.subr.mxu0 %v705
        %1090 = vmatpush1.msra.mxu0 %v704
        %1091 = vmatprep.subr.mxu0 %v701
        %1092 = vmatpush1.msra.mxu0 %v700
        %1093 = vmatprep.subr.mxu0 %v697
        %1094 = vmatpush1.msra.mxu0 %v696
        %1095 = vmatprep.subr.mxu0 %v693
        %1096 = vmatpush1.msra.mxu0 %v692
        %1097 = vmatprep.subr.mxu0 %v689
        %1098 = vmatpush1.msra.mxu0 %v688
        %1099 = vmatprep.subr.mxu0 %v685
        %1100 = vmatpush1.msra.mxu0 %v684
        %1101 = vmatprep.subr.mxu0 %v809
        %1102 = vmatpush2.msra.mxu0 %v808
        %1103 = vmatprep.subr.mxu0 %v805
        %1104 = vmatpush2.msra.mxu0 %v804
        %1105 = vmatprep.subr.mxu0 %v801
        %1106 = vmatpush2.msra.mxu0 %v800
        %1107 = vmatprep.subr.mxu0 %v797
        %1108 = vmatpush2.msra.mxu0 %v796
        %1109 = vmatprep.subr.mxu0 %v793
        %1110 = vmatpush2.msra.mxu0 %v792
        %1111 = vmatprep.subr.mxu0 %v789
        %1112 = vmatpush2.msra.mxu0 %v788
        %1113 = vmatprep.subr.mxu0 %v785
        %1114 = vmatpush2.msra.mxu0 %v784
        %1115 = vmatprep.subr.mxu0 %v781
        %1116 = vmatpush2.msra.mxu0 %v780
        %1117 = vmatprep.subr.mxu0 %v777
        %1118 = vmatpush2.msra.mxu0 %v776
        %1119 = vmatprep.subr.mxu0 %v773
        %1120 = vmatpush2.msra.mxu0 %v772
        %1121 = vmatprep.subr.mxu0 %v769
        %1122 = vmatpush2.msra.mxu0 %v768
        %1123 = vmatprep.subr.mxu0 %v765
        %1124 = vmatpush2.msra.mxu0 %v764
        %1125 = vmatprep.subr.mxu0 %v761
        %1126 = vmatpush2.msra.mxu0 %v760
        %1127 = vmatprep.subr.mxu0 %v757
        %1128 = vmatpush2.msra.mxu0 %v756
        %1129 = vmatprep.subr.mxu0 %v753
        %1130 = vmatpush2.msra.mxu0 %v752
        %1131 = vmatprep.subr.mxu0 %v749
        %1132 = vmatpush2.msra.mxu0 %v748
        %1133 = vmatprep.mubr.f32.mxu0 %v847
        %1134 = vmatmul.mubr.f32.gmra.mxu0 %v845
        %v1135 = vpop.f32.mrf.mxu0
        %v1136 = vadd.f32 %v1065, %v1135
        %v1137 = vpop.f32.mrf.mxu0
        %v1138 = vadd.f32 %v1067, %v1137
        %1139 = vdwg.mxu0
        %1140 = vmatprep.subr.mxu0 %v363
        %1141 = vmatpush1.msra.mxu0 %v362
        %1142 = vmatprep.subr.mxu0 %v359
        %1143 = vmatpush1.msra.mxu0 %v358
        %1144 = vmatprep.subr.mxu0 %v355
        %1145 = vmatpush1.msra.mxu0 %v354
        %1146 = vmatprep.subr.mxu0 %v351
        %1147 = vmatpush1.msra.mxu0 %v350
        %1148 = vmatprep.subr.mxu0 %v347
        %1149 = vmatpush1.msra.mxu0 %v346
        %1150 = vmatprep.subr.mxu0 %v343
        %1151 = vmatpush1.msra.mxu0 %v342
        %1152 = vmatprep.subr.mxu0 %v339
        %1153 = vmatpush1.msra.mxu0 %v338
        %1154 = vmatprep.subr.mxu0 %v335
        %1155 = vmatpush1.msra.mxu0 %v334
        %1156 = vmatprep.subr.mxu0 %v331
        %1157 = vmatpush1.msra.mxu0 %v330
        %1158 = vmatprep.subr.mxu0 %v327
        %1159 = vmatpush1.msra.mxu0 %v326
        %1160 = vmatprep.subr.mxu0 %v323
        %1161 = vmatpush1.msra.mxu0 %v322
        %1162 = vmatprep.subr.mxu0 %v319
        %1163 = vmatpush1.msra.mxu0 %v318
        %1164 = vmatprep.subr.mxu0 %v315
        %1165 = vmatpush1.msra.mxu0 %v314
        %1166 = vmatprep.subr.mxu0 %v311
        %1167 = vmatpush1.msra.mxu0 %v310
        %1168 = vmatprep.subr.mxu0 %v307
        %1169 = vmatpush1.msra.mxu0 %v306
        %1170 = vmatprep.subr.mxu0 %v303
        %1171 = vmatpush1.msra.mxu0 %v302
        %1172 = vmatprep.subr.mxu0 %v427
        %1173 = vmatpush2.msra.mxu0 %v426
        %1174 = vmatprep.subr.mxu0 %v423
        %1175 = vmatpush2.msra.mxu0 %v422
        %1176 = vmatprep.subr.mxu0 %v419
        %1177 = vmatpush2.msra.mxu0 %v418
        %1178 = vmatprep.subr.mxu0 %v415
        %1179 = vmatpush2.msra.mxu0 %v414
        %1180 = vmatprep.subr.mxu0 %v411
        %1181 = vmatpush2.msra.mxu0 %v410
        %1182 = vmatprep.subr.mxu0 %v407
        %1183 = vmatpush2.msra.mxu0 %v406
        %1184 = vmatprep.subr.mxu0 %v403
        %1185 = vmatpush2.msra.mxu0 %v402
        %1186 = vmatprep.subr.mxu0 %v399
        %1187 = vmatpush2.msra.mxu0 %v398
        %1188 = vmatprep.subr.mxu0 %v395
        %1189 = vmatpush2.msra.mxu0 %v394
        %1190 = vmatprep.subr.mxu0 %v391
        %1191 = vmatpush2.msra.mxu0 %v390
        %1192 = vmatprep.subr.mxu0 %v387
        %1193 = vmatpush2.msra.mxu0 %v386
        %1194 = vmatprep.subr.mxu0 %v383
        %1195 = vmatpush2.msra.mxu0 %v382
        %1196 = vmatprep.subr.mxu0 %v379
        %1197 = vmatpush2.msra.mxu0 %v378
        %1198 = vmatprep.subr.mxu0 %v375
        %1199 = vmatpush2.msra.mxu0 %v374
        %1200 = vmatprep.subr.mxu0 %v371
        %1201 = vmatpush2.msra.mxu0 %v370
        %1202 = vmatprep.subr.mxu0 %v367
        %1203 = vmatpush2.msra.mxu0 %v366
        %1204 = vmatprep.mubr.f32.mxu0 %v829
        %1205 = vmatmul.mubr.f32.gmra.mxu0 %v821
        %v1206 = vpop.f32.mrf.mxu0
        %v1207 = vadd.f32 0.0, %v1206
        %v1208 = vpop.f32.mrf.mxu0
        %v1209 = vadd.f32 0.0, %v1208
        %1210 = vdwg.mxu0
        %1211 = vmatprep.subr.mxu0 %v491
        %1212 = vmatpush1.msra.mxu0 %v490
        %1213 = vmatprep.subr.mxu0 %v487
        %1214 = vmatpush1.msra.mxu0 %v486
        %1215 = vmatprep.subr.mxu0 %v483
        %1216 = vmatpush1.msra.mxu0 %v482
        %1217 = vmatprep.subr.mxu0 %v479
        %1218 = vmatpush1.msra.mxu0 %v478
        %1219 = vmatprep.subr.mxu0 %v475
        %1220 = vmatpush1.msra.mxu0 %v474
        %1221 = vmatprep.subr.mxu0 %v471
        %1222 = vmatpush1.msra.mxu0 %v470
        %1223 = vmatprep.subr.mxu0 %v467
        %1224 = vmatpush1.msra.mxu0 %v466
        %1225 = vmatprep.subr.mxu0 %v463
        %1226 = vmatpush1.msra.mxu0 %v462
        %1227 = vmatprep.subr.mxu0 %v459
        %1228 = vmatpush1.msra.mxu0 %v458
        %1229 = vmatprep.subr.mxu0 %v455
        %1230 = vmatpush1.msra.mxu0 %v454
        %1231 = vmatprep.subr.mxu0 %v451
        %1232 = vmatpush1.msra.mxu0 %v450
        %1233 = vmatprep.subr.mxu0 %v447
        %1234 = vmatpush1.msra.mxu0 %v446
        %1235 = vmatprep.subr.mxu0 %v443
        %1236 = vmatpush1.msra.mxu0 %v442
        %1237 = vmatprep.subr.mxu0 %v439
        %1238 = vmatpush1.msra.mxu0 %v438
        %1239 = vmatprep.subr.mxu0 %v435
        %1240 = vmatpush1.msra.mxu0 %v434
        %1241 = vmatprep.subr.mxu0 %v431
        %1242 = vmatpush1.msra.mxu0 %v430
        %1243 = vmatprep.subr.mxu0 %v555
        %1244 = vmatpush2.msra.mxu0 %v554
        %1245 = vmatprep.subr.mxu0 %v551
        %1246 = vmatpush2.msra.mxu0 %v550
        %1247 = vmatprep.subr.mxu0 %v547
        %1248 = vmatpush2.msra.mxu0 %v546
        %1249 = vmatprep.subr.mxu0 %v543
        %1250 = vmatpush2.msra.mxu0 %v542
        %1251 = vmatprep.subr.mxu0 %v539
        %1252 = vmatpush2.msra.mxu0 %v538
        %1253 = vmatprep.subr.mxu0 %v535
        %1254 = vmatpush2.msra.mxu0 %v534
        %1255 = vmatprep.subr.mxu0 %v531
        %1256 = vmatpush2.msra.mxu0 %v530
        %1257 = vmatprep.subr.mxu0 %v527
        %1258 = vmatpush2.msra.mxu0 %v526
        %1259 = vmatprep.subr.mxu0 %v523
        %1260 = vmatpush2.msra.mxu0 %v522
        %1261 = vmatprep.subr.mxu0 %v519
        %1262 = vmatpush2.msra.mxu0 %v518
        %1263 = vmatprep.subr.mxu0 %v515
        %1264 = vmatpush2.msra.mxu0 %v514
        %1265 = vmatprep.subr.mxu0 %v511
        %1266 = vmatpush2.msra.mxu0 %v510
        %1267 = vmatprep.subr.mxu0 %v507
        %1268 = vmatpush2.msra.mxu0 %v506
        %1269 = vmatprep.subr.mxu0 %v503
        %1270 = vmatpush2.msra.mxu0 %v502
        %1271 = vmatprep.subr.mxu0 %v499
        %1272 = vmatpush2.msra.mxu0 %v498
        %1273 = vmatprep.subr.mxu0 %v495
        %1274 = vmatpush2.msra.mxu0 %v494
        %1275 = vmatprep.mubr.f32.mxu0 %v830
        %1276 = vmatmul.mubr.f32.gmra.mxu0 %v828
        %v1277 = vpop.f32.mrf.mxu0
        %v1278 = vadd.f32 %v1207, %v1277
        %v1279 = vpop.f32.mrf.mxu0
        %v1280 = vadd.f32 %v1209, %v1279
        %1281 = vdwg.mxu0
        %1282 = vmatprep.subr.mxu0 %v619
        %1283 = vmatpush1.msra.mxu0 %v618
        %1284 = vmatprep.subr.mxu0 %v615
        %1285 = vmatpush1.msra.mxu0 %v614
        %1286 = vmatprep.subr.mxu0 %v611
        %1287 = vmatpush1.msra.mxu0 %v610
        %1288 = vmatprep.subr.mxu0 %v607
        %1289 = vmatpush1.msra.mxu0 %v606
        %1290 = vmatprep.subr.mxu0 %v603
        %1291 = vmatpush1.msra.mxu0 %v602
        %1292 = vmatprep.subr.mxu0 %v599
        %1293 = vmatpush1.msra.mxu0 %v598
        %1294 = vmatprep.subr.mxu0 %v595
        %1295 = vmatpush1.msra.mxu0 %v594
        %1296 = vmatprep.subr.mxu0 %v591
        %1297 = vmatpush1.msra.mxu0 %v590
        %1298 = vmatprep.subr.mxu0 %v587
        %1299 = vmatpush1.msra.mxu0 %v586
        %1300 = vmatprep.subr.mxu0 %v583
        %1301 = vmatpush1.msra.mxu0 %v582
        %1302 = vmatprep.subr.mxu0 %v579
        %1303 = vmatpush1.msra.mxu0 %v578
        %1304 = vmatprep.subr.mxu0 %v575
        %1305 = vmatpush1.msra.mxu0 %v574
        %1306 = vmatprep.subr.mxu0 %v571
        %1307 = vmatpush1.msra.mxu0 %v570
        %1308 = vmatprep.subr.mxu0 %v567
        %1309 = vmatpush1.msra.mxu0 %v566
        %1310 = vmatprep.subr.mxu0 %v563
        %1311 = vmatpush1.msra.mxu0 %v562
        %1312 = vmatprep.subr.mxu0 %v559
        %1313 = vmatpush1.msra.mxu0 %v558
        %1314 = vmatprep.subr.mxu0 %v683
        %1315 = vmatpush2.msra.mxu0 %v682
        %1316 = vmatprep.subr.mxu0 %v679
        %1317 = vmatpush2.msra.mxu0 %v678
        %1318 = vmatprep.subr.mxu0 %v675
        %1319 = vmatpush2.msra.mxu0 %v674
        %1320 = vmatprep.subr.mxu0 %v671
        %1321 = vmatpush2.msra.mxu0 %v670
        %1322 = vmatprep.subr.mxu0 %v667
        %1323 = vmatpush2.msra.mxu0 %v666
        %1324 = vmatprep.subr.mxu0 %v663
        %1325 = vmatpush2.msra.mxu0 %v662
        %1326 = vmatprep.subr.mxu0 %v659
        %1327 = vmatpush2.msra.mxu0 %v658
        %1328 = vmatprep.subr.mxu0 %v655
        %1329 = vmatpush2.msra.mxu0 %v654
        %1330 = vmatprep.subr.mxu0 %v651
        %1331 = vmatpush2.msra.mxu0 %v650
        %1332 = vmatprep.subr.mxu0 %v647
        %1333 = vmatpush2.msra.mxu0 %v646
        %1334 = vmatprep.subr.mxu0 %v643
        %1335 = vmatpush2.msra.mxu0 %v642
        %1336 = vmatprep.subr.mxu0 %v639
        %1337 = vmatpush2.msra.mxu0 %v638
        %1338 = vmatprep.subr.mxu0 %v635
        %1339 = vmatpush2.msra.mxu0 %v634
        %1340 = vmatprep.subr.mxu0 %v631
        %1341 = vmatpush2.msra.mxu0 %v630
        %1342 = vmatprep.subr.mxu0 %v627
        %1343 = vmatpush2.msra.mxu0 %v626
        %1344 = vmatprep.subr.mxu0 %v623
        %1345 = vmatpush2.msra.mxu0 %v622
        %1346 = vmatprep.mubr.f32.mxu0 %v846
        %1347 = vmatmul.mubr.f32.gmra.mxu0 %v838
        %v1348 = vpop.f32.mrf.mxu0
        %v1349 = vadd.f32 %v1278, %v1348
        %v1350 = vpop.f32.mrf.mxu0
        %v1351 = vadd.f32 %v1280, %v1350
        %1352 = vdwg.mxu0
        %1353 = vmatprep.subr.mxu0 %v747
        %1354 = vmatpush1.msra.mxu0 %v746
        %1355 = vmatprep.subr.mxu0 %v743
        %1356 = vmatpush1.msra.mxu0 %v742
        %1357 = vmatprep.subr.mxu0 %v739
        %1358 = vmatpush1.msra.mxu0 %v738
        %1359 = vmatprep.subr.mxu0 %v735
        %1360 = vmatpush1.msra.mxu0 %v734
        %1361 = vmatprep.subr.mxu0 %v731
        %1362 = vmatpush1.msra.mxu0 %v730
        %1363 = vmatprep.subr.mxu0 %v727
        %1364 = vmatpush1.msra.mxu0 %v726
        %1365 = vmatprep.subr.mxu0 %v723
        %1366 = vmatpush1.msra.mxu0 %v722
        %1367 = vmatprep.subr.mxu0 %v719
        %1368 = vmatpush1.msra.mxu0 %v718
        %1369 = vmatprep.subr.mxu0 %v715
        %1370 = vmatpush1.msra.mxu0 %v714
        %1371 = vmatprep.subr.mxu0 %v711
        %1372 = vmatpush1.msra.mxu0 %v710
        %1373 = vmatprep.subr.mxu0 %v707
        %1374 = vmatpush1.msra.mxu0 %v706
        %1375 = vmatprep.subr.mxu0 %v703
        %1376 = vmatpush1.msra.mxu0 %v702
        %1377 = vmatprep.subr.mxu0 %v699
        %1378 = vmatpush1.msra.mxu0 %v698
        %1379 = vmatprep.subr.mxu0 %v695
        %1380 = vmatpush1.msra.mxu0 %v694
        %1381 = vmatprep.subr.mxu0 %v691
        %1382 = vmatpush1.msra.mxu0 %v690
        %1383 = vmatprep.subr.mxu0 %v687
        %1384 = vmatpush1.msra.mxu0 %v686
        %1385 = vmatprep.subr.mxu0 %v811
        %1386 = vmatpush2.msra.mxu0 %v810
        %1387 = vmatprep.subr.mxu0 %v807
        %1388 = vmatpush2.msra.mxu0 %v806
        %1389 = vmatprep.subr.mxu0 %v803
        %1390 = vmatpush2.msra.mxu0 %v802
        %1391 = vmatprep.subr.mxu0 %v799
        %1392 = vmatpush2.msra.mxu0 %v798
        %1393 = vmatprep.subr.mxu0 %v795
        %1394 = vmatpush2.msra.mxu0 %v794
        %1395 = vmatprep.subr.mxu0 %v791
        %1396 = vmatpush2.msra.mxu0 %v790
        %1397 = vmatprep.subr.mxu0 %v787
        %1398 = vmatpush2.msra.mxu0 %v786
        %1399 = vmatprep.subr.mxu0 %v783
        %1400 = vmatpush2.msra.mxu0 %v782
        %1401 = vmatprep.subr.mxu0 %v779
        %1402 = vmatpush2.msra.mxu0 %v778
        %1403 = vmatprep.subr.mxu0 %v775
        %1404 = vmatpush2.msra.mxu0 %v774
        %1405 = vmatprep.subr.mxu0 %v771
        %1406 = vmatpush2.msra.mxu0 %v770
        %1407 = vmatprep.subr.mxu0 %v767
        %1408 = vmatpush2.msra.mxu0 %v766
        %1409 = vmatprep.subr.mxu0 %v763
        %1410 = vmatpush2.msra.mxu0 %v762
        %1411 = vmatprep.subr.mxu0 %v759
        %1412 = vmatpush2.msra.mxu0 %v758
        %1413 = vmatprep.subr.mxu0 %v755
        %1414 = vmatpush2.msra.mxu0 %v754
        %1415 = vmatprep.subr.mxu0 %v751
        %1416 = vmatpush2.msra.mxu0 %v750
        %1417 = vmatprep.mubr.f32.mxu0 %v847
        %1418 = vmatmul.mubr.f32.gmra.mxu0 %v845
        %v1419 = vpop.f32.mrf.mxu0
        %v1420 = vadd.f32 %v1349, %v1419
        %v1421 = vpop.f32.mrf.mxu0
        %v1422 = vadd.f32 %v1351, %v1421
        %1423 = vdwg.mxu0
        %v1428 = vcombine.low %v1136, %v1138
        %v1429 = vcombine.low %v1420, %v1422
        %v1431 = vunpack.c.l.s4 1983009808
        %v1432 = vunpack.c.0.s8 %v1431
        %v1433 = vlaneseq
        %v1434 = vshrl.u32 %v1433, 7
        %v1435 = vsub.s32 %v1432, %v1434
        %v1436 = vrot.slane %v1428, %v1435
        %v1438 = vunpack.c.l.s4 1983009808
        %v1439 = vunpack.c.0.s8 %v1438
        %v1440 = vlaneseq
        %v1441 = vshrl.u32 %v1440, 7
        %v1442 = vsub.s32 %v1439, %v1441
        %v1443 = vrot.slane %v1429, %v1442
        %v1444 = vcombine.low %v1436, %v1443
        %v1446 = vadd.f32 %v297, %v1444
        %1447 = vst [vmem:[#allocation2] sm:$0xff] %v1446
        %p1448 = scmp.eq.s32.totalorder %s19, 3
        // Predicated region
        $region53: #{cnn_forward.5} parent=47 // pred_check
          %p1449 = pneg %p1448
        $region54: #{cnn_forward.5} parent=47 // pred_check_branch
          %1451 = sbr.rel (%p1449) target = $region56
        $region55: #{cnn_forward.5} parent=47 // pred_region
          %v1452 = vld [vmem:[#allocation2] sm:$0xff]
          %v1453 = vld [vmem:[%s2] sm:$0xf]
          %v1455 = vlaneseq
          %v1456 = vshrl.u32 %v1455, 7
          %v1457 = vsub.s32 0, %v1456
          %v1458 = vrot.slane %v1453, %v1457
          %v1459 = vlaneseq
          %v1460 = vshrl.u32 %v1459, 7
          %v1461 = vsub.s32 1, %v1460
          %v1462 = vrot.slane %v1453, %v1461
          %v1463 = vlaneseq
          %v1464 = vshrl.u32 %v1463, 7
          %v1465 = vsub.s32 2, %v1464
          %v1466 = vrot.slane %v1453, %v1465
          %v1467 = vlaneseq
          %v1468 = vshrl.u32 %v1467, 7
          %v1469 = vsub.s32 3, %v1468
          %v1470 = vrot.slane %v1453, %v1469
          %v1471 = vcombine.low %v1458, %v1462
          %v1472 = vcombine.low %v1466, %v1470
          %v1474 = vunpack.c.l.s4 1983009808
          %v1475 = vunpack.c.0.s8 %v1474
          %v1476 = vlaneseq
          %v1477 = vshrl.u32 %v1476, 7
          %v1478 = vsub.s32 %v1475, %v1477
          %v1479 = vrot.slane %v1471, %v1478
          %v1481 = vunpack.c.l.s4 1983009808
          %v1482 = vunpack.c.0.s8 %v1481
          %v1483 = vlaneseq
          %v1484 = vshrl.u32 %v1483, 7
          %v1485 = vsub.s32 %v1482, %v1484
          %v1486 = vrot.slane %v1472, %v1485
          %v1487 = vcombine.low %v1479, %v1486
          %v1489 = vadd.f32 %v1452, %v1487
          %v1490 = vmax.f32 %v1489, 0.0
          %v1491 = vld [vmem:[%s3] sm:$0xff]
          %v1492 = vld [vmem:[%s3 + $0x8] sm:$0xff]
          %v1493 = vld [vmem:[%s3 + $0x10] sm:$0xff]
          %v1494 = vld [vmem:[%s3 + $0x18] sm:$0xff]
          %v1495 = vld [vmem:[%s3 + $0x20] sm:$0xff]
          %v1496 = vld [vmem:[%s3 + $0x28] sm:$0xff]
          %v1497 = vld [vmem:[%s3 + $0x30] sm:$0xff]
          %v1498 = vld [vmem:[%s3 + $0x38] sm:$0xff]
          %v1499 = vld [vmem:[%s3 + $0x40] sm:$0xff]
          %v1500 = vld [vmem:[%s3 + $0x48] sm:$0xff]
          %v1501 = vld [vmem:[%s3 + $0x50] sm:$0xff]
          %v1502 = vld [vmem:[%s3 + $0x58] sm:$0xff]
          %v1503 = vld [vmem:[%s3 + $0x60] sm:$0xff]
          %v1504 = vld [vmem:[%s3 + $0x68] sm:$0xff]
          %v1505 = vld [vmem:[%s3 + $0x70] sm:$0xff]
          %v1506 = vld [vmem:[%s3 + $0x78] sm:$0xff]
          %v1507 = vld [vmem:[%s3 + $0x80] sm:$0xff]
          %v1508 = vld [vmem:[%s3 + $0x88] sm:$0xff]
          %v1509 = vld [vmem:[%s3 + $0x90] sm:$0xff]
          %v1510 = vld [vmem:[%s3 + $0x98] sm:$0xff]
          %v1511 = vld [vmem:[%s3 + $0xa0] sm:$0xff]
          %v1512 = vld [vmem:[%s3 + $0xa8] sm:$0xff]
          %v1513 = vld [vmem:[%s3 + $0xb0] sm:$0xff]
          %v1514 = vld [vmem:[%s3 + $0xb8] sm:$0xff]
          %v1515 = vld [vmem:[%s3 + $0xc0] sm:$0xff]
          %v1516 = vld [vmem:[%s3 + $0xc8] sm:$0xff]
          %v1517 = vld [vmem:[%s3 + $0xd0] sm:$0xff]
          %v1518 = vld [vmem:[%s3 + $0xd8] sm:$0xff]
          %v1519 = vld [vmem:[%s3 + $0xe0] sm:$0xff]
          %v1520 = vld [vmem:[%s3 + $0xe8] sm:$0xff]
          %v1521 = vld [vmem:[%s3 + $0xf0] sm:$0xff]
          %v1522 = vld [vmem:[%s3 + $0xf8] sm:$0xff]
          %v1523 = vld [vmem:[%s3 + $0x100] sm:$0xff]
          %v1524 = vld [vmem:[%s3 + $0x108] sm:$0xff]
          %v1525 = vld [vmem:[%s3 + $0x110] sm:$0xff]
          %v1526 = vld [vmem:[%s3 + $0x118] sm:$0xff]
          %v1527 = vld [vmem:[%s3 + $0x120] sm:$0xff]
          %v1528 = vld [vmem:[%s3 + $0x128] sm:$0xff]
          %v1529 = vld [vmem:[%s3 + $0x130] sm:$0xff]
          %v1530 = vld [vmem:[%s3 + $0x138] sm:$0xff]
          %v1531 = vld [vmem:[%s3 + $0x140] sm:$0xff]
          %v1532 = vld [vmem:[%s3 + $0x148] sm:$0xff]
          %v1533 = vld [vmem:[%s3 + $0x150] sm:$0xff]
          %v1534 = vld [vmem:[%s3 + $0x158] sm:$0xff]
          %v1535 = vld [vmem:[%s3 + $0x160] sm:$0xff]
          %v1536 = vld [vmem:[%s3 + $0x168] sm:$0xff]
          %v1537 = vld [vmem:[%s3 + $0x170] sm:$0xff]
          %v1538 = vld [vmem:[%s3 + $0x178] sm:$0xff]
          %v1539 = vld [vmem:[%s3 + $0x180] sm:$0xff]
          %v1540 = vld [vmem:[%s3 + $0x188] sm:$0xff]
          %v1541 = vld [vmem:[%s3 + $0x190] sm:$0xff]
          %v1542 = vld [vmem:[%s3 + $0x198] sm:$0xff]
          %v1543 = vld [vmem:[%s3 + $0x1a0] sm:$0xff]
          %v1544 = vld [vmem:[%s3 + $0x1a8] sm:$0xff]
          %v1545 = vld [vmem:[%s3 + $0x1b0] sm:$0xff]
          %v1546 = vld [vmem:[%s3 + $0x1b8] sm:$0xff]
          %v1547 = vld [vmem:[%s3 + $0x1c0] sm:$0xff]
          %v1548 = vld [vmem:[%s3 + $0x1c8] sm:$0xff]
          %v1549 = vld [vmem:[%s3 + $0x1d0] sm:$0xff]
          %v1550 = vld [vmem:[%s3 + $0x1d8] sm:$0xff]
          %v1551 = vld [vmem:[%s3 + $0x1e0] sm:$0xff]
          %v1552 = vld [vmem:[%s3 + $0x1e8] sm:$0xff]
          %v1553 = vld [vmem:[%s3 + $0x1f0] sm:$0xff]
          %v1554 = vld [vmem:[%s3 + $0x1f8] sm:$0xff]
          %v1555 = vld [vmem:[%s4] sm:$0x1]
          %v1557 = vlaneseq
          %v1558 = vshrl.u32 %v1557, 7
          %v1559 = vsub.s32 0, %v1558
          %v1560 = vrot.slane %v1555, %v1559
          %v1563 = vcombine.high %v1490, %v1490
          %v1565 = vunpack.c.l.s4 1983009808
          %v1566 = vunpack.c.0.s8 %v1565
          %v1567 = vlaneseq
          %v1568 = vshrl.u32 %v1567, 7
          %v1569 = vsub.s32 %v1566, %v1568
          %v1570 = vrot.slane %v1490, %v1569
          %v1572 = vunpack.c.l.s4 1983009808
          %v1573 = vunpack.c.0.s8 %v1572
          %v1574 = vlaneseq
          %v1575 = vshrl.u32 %v1574, 7
          %v1576 = vsub.s32 %v1573, %v1575
          %v1577 = vrot.slane %v1563, %v1576
          %v1578 = vcombine.high %v1570, %v1570
          %v1579 = vcombine.high %v1577, %v1577
          %1584 = vmatprep.subr.mxu0 0.0
          %1585 = vmatpush1.msra.mxu0 %v1506
          %1586 = vmatprep.subr.mxu0 0.0
          %1587 = vmatpush1.msra.mxu0 %v1505
          %1588 = vmatprep.subr.mxu0 0.0
          %1589 = vmatpush1.msra.mxu0 %v1504
          %1590 = vmatprep.subr.mxu0 0.0
          %1591 = vmatpush1.msra.mxu0 %v1503
          %1592 = vmatprep.subr.mxu0 0.0
          %1593 = vmatpush1.msra.mxu0 %v1502
          %1594 = vmatprep.subr.mxu0 0.0
          %1595 = vmatpush1.msra.mxu0 %v1501
          %1596 = vmatprep.subr.mxu0 0.0
          %1597 = vmatpush1.msra.mxu0 %v1500
          %1598 = vmatprep.subr.mxu0 0.0
          %1599 = vmatpush1.msra.mxu0 %v1499
          %1600 = vmatprep.subr.mxu0 0.0
          %1601 = vmatpush1.msra.mxu0 %v1498
          %1602 = vmatprep.subr.mxu0 0.0
          %1603 = vmatpush1.msra.mxu0 %v1497
          %1604 = vmatprep.subr.mxu0 0.0
          %1605 = vmatpush1.msra.mxu0 %v1496
          %1606 = vmatprep.subr.mxu0 0.0
          %1607 = vmatpush1.msra.mxu0 %v1495
          %1608 = vmatprep.subr.mxu0 0.0
          %1609 = vmatpush1.msra.mxu0 %v1494
          %1610 = vmatprep.subr.mxu0 0.0
          %1611 = vmatpush1.msra.mxu0 %v1493
          %1612 = vmatprep.subr.mxu0 0.0
          %1613 = vmatpush1.msra.mxu0 %v1492
          %1614 = vmatprep.subr.mxu0 0.0
          %1615 = vmatpush1.msra.mxu0 %v1491
          %1616 = vmatprep.subr.mxu0 0.0
          %1617 = vmatpush2.msra.mxu0 %v1522
          %1618 = vmatprep.subr.mxu0 0.0
          %1619 = vmatpush2.msra.mxu0 %v1521
          %1620 = vmatprep.subr.mxu0 0.0
          %1621 = vmatpush2.msra.mxu0 %v1520
          %1622 = vmatprep.subr.mxu0 0.0
          %1623 = vmatpush2.msra.mxu0 %v1519
          %1624 = vmatprep.subr.mxu0 0.0
          %1625 = vmatpush2.msra.mxu0 %v1518
          %1626 = vmatprep.subr.mxu0 0.0
          %1627 = vmatpush2.msra.mxu0 %v1517
          %1628 = vmatprep.subr.mxu0 0.0
          %1629 = vmatpush2.msra.mxu0 %v1516
          %1630 = vmatprep.subr.mxu0 0.0
          %1631 = vmatpush2.msra.mxu0 %v1515
          %1632 = vmatprep.subr.mxu0 0.0
          %1633 = vmatpush2.msra.mxu0 %v1514
          %1634 = vmatprep.subr.mxu0 0.0
          %1635 = vmatpush2.msra.mxu0 %v1513
          %1636 = vmatprep.subr.mxu0 0.0
          %1637 = vmatpush2.msra.mxu0 %v1512
          %1638 = vmatprep.subr.mxu0 0.0
          %1639 = vmatpush2.msra.mxu0 %v1511
          %1640 = vmatprep.subr.mxu0 0.0
          %1641 = vmatpush2.msra.mxu0 %v1510
          %1642 = vmatprep.subr.mxu0 0.0
          %1643 = vmatpush2.msra.mxu0 %v1509
          %1644 = vmatprep.subr.mxu0 0.0
          %1645 = vmatpush2.msra.mxu0 %v1508
          %1646 = vmatprep.subr.mxu0 0.0
          %1647 = vmatpush2.msra.mxu0 %v1507
          %1648 = vmatprep.mubr.f32.mxu0 %v1578
          %1649 = vmatmul.mubr.f32.gmra.mxu0 %v1570
          %v1650 = vpop.f32.mrf.mxu0
          %v1651 = vadd.f32 %v1560, %v1650
          %v1652 = vpop.f32.mrf.mxu0
          %1653 = vdwg.mxu0
          %1654 = vmatprep.subr.mxu0 0.0
          %1655 = vmatpush1.msra.mxu0 %v1538
          %1656 = vmatprep.subr.mxu0 0.0
          %1657 = vmatpush1.msra.mxu0 %v1537
          %1658 = vmatprep.subr.mxu0 0.0
          %1659 = vmatpush1.msra.mxu0 %v1536
          %1660 = vmatprep.subr.mxu0 0.0
          %1661 = vmatpush1.msra.mxu0 %v1535
          %1662 = vmatprep.subr.mxu0 0.0
          %1663 = vmatpush1.msra.mxu0 %v1534
          %1664 = vmatprep.subr.mxu0 0.0
          %1665 = vmatpush1.msra.mxu0 %v1533
          %1666 = vmatprep.subr.mxu0 0.0
          %1667 = vmatpush1.msra.mxu0 %v1532
          %1668 = vmatprep.subr.mxu0 0.0
          %1669 = vmatpush1.msra.mxu0 %v1531
          %1670 = vmatprep.subr.mxu0 0.0
          %1671 = vmatpush1.msra.mxu0 %v1530
          %1672 = vmatprep.subr.mxu0 0.0
          %1673 = vmatpush1.msra.mxu0 %v1529
          %1674 = vmatprep.subr.mxu0 0.0
          %1675 = vmatpush1.msra.mxu0 %v1528
          %1676 = vmatprep.subr.mxu0 0.0
          %1677 = vmatpush1.msra.mxu0 %v1527
          %1678 = vmatprep.subr.mxu0 0.0
          %1679 = vmatpush1.msra.mxu0 %v1526
          %1680 = vmatprep.subr.mxu0 0.0
          %1681 = vmatpush1.msra.mxu0 %v1525
          %1682 = vmatprep.subr.mxu0 0.0
          %1683 = vmatpush1.msra.mxu0 %v1524
          %1684 = vmatprep.subr.mxu0 0.0
          %1685 = vmatpush1.msra.mxu0 %v1523
          %1686 = vmatprep.subr.mxu0 0.0
          %1687 = vmatpush2.msra.mxu0 %v1554
          %1688 = vmatprep.subr.mxu0 0.0
          %1689 = vmatpush2.msra.mxu0 %v1553
          %1690 = vmatprep.subr.mxu0 0.0
          %1691 = vmatpush2.msra.mxu0 %v1552
          %1692 = vmatprep.subr.mxu0 0.0
          %1693 = vmatpush2.msra.mxu0 %v1551
          %1694 = vmatprep.subr.mxu0 0.0
          %1695 = vmatpush2.msra.mxu0 %v1550
          %1696 = vmatprep.subr.mxu0 0.0
          %1697 = vmatpush2.msra.mxu0 %v1549
          %1698 = vmatprep.subr.mxu0 0.0
          %1699 = vmatpush2.msra.mxu0 %v1548
          %1700 = vmatprep.subr.mxu0 0.0
          %1701 = vmatpush2.msra.mxu0 %v1547
          %1702 = vmatprep.subr.mxu0 0.0
          %1703 = vmatpush2.msra.mxu0 %v1546
          %1704 = vmatprep.subr.mxu0 0.0
          %1705 = vmatpush2.msra.mxu0 %v1545
          %1706 = vmatprep.subr.mxu0 0.0
          %1707 = vmatpush2.msra.mxu0 %v1544
          %1708 = vmatprep.subr.mxu0 0.0
          %1709 = vmatpush2.msra.mxu0 %v1543
          %1710 = vmatprep.subr.mxu0 0.0
          %1711 = vmatpush2.msra.mxu0 %v1542
          %1712 = vmatprep.subr.mxu0 0.0
          %1713 = vmatpush2.msra.mxu0 %v1541
          %1714 = vmatprep.subr.mxu0 0.0
          %1715 = vmatpush2.msra.mxu0 %v1540
          %1716 = vmatprep.subr.mxu0 0.0
          %1717 = vmatpush2.msra.mxu0 %v1539
          %1718 = vmatprep.mubr.f32.mxu0 %v1579
          %1719 = vmatmul.mubr.f32.gmra.mxu0 %v1577
          %v1720 = vpop.f32.mrf.mxu0
          %v1721 = vadd.f32 %v1651, %v1720
          %v1722 = vpop.f32.mrf.mxu0
          %1723 = vdwg.mxu0
          %v1724 = vmax.f32 %v1721, 0.0
          %v1725 = vld [vmem:[%s5] sm:$0xff]
          %v1726 = vld [vmem:[%s5 + $0x8] sm:$0xff]
          %v1727 = vld [vmem:[%s5 + $0x10] sm:$0xff]
          %v1728 = vld [vmem:[%s5 + $0x18] sm:$0xff]
          %v1729 = vld [vmem:[%s5 + $0x20] sm:$0xff]
          %v1730 = vld [vmem:[%s5 + $0x28] sm:$0xff]
          %v1731 = vld [vmem:[%s5 + $0x30] sm:$0xff]
          %v1732 = vld [vmem:[%s5 + $0x38] sm:$0xff]
          %v1733 = vld [vmem:[%s5 + $0x40] sm:$0xff]
          %v1734 = vld [vmem:[%s5 + $0x48] sm:$0xff]
          %v1735 = vld [vmem:[%s5 + $0x50] sm:$0xff]
          %v1736 = vld [vmem:[%s5 + $0x58] sm:$0xff]
          %v1737 = vld [vmem:[%s5 + $0x60] sm:$0xff]
          %v1738 = vld [vmem:[%s5 + $0x68] sm:$0xff]
          %v1739 = vld [vmem:[%s5 + $0x70] sm:$0xff]
          %v1740 = vld [vmem:[%s5 + $0x78] sm:$0xff]
          %v1741 = vld [vmem:[%s6] sm:$0x1]
          %v1743 = vlaneseq
          %v1744 = vshrl.u32 %v1743, 7
          %v1745 = vsub.s32 0, %v1744
          %v1746 = vrot.slane %v1741, %v1745
          %1748 = vmatprep.subr.mxu0 0.0
          %1749 = vmatpush1.msra.mxu0 %v1740
          %1750 = vmatprep.subr.mxu0 0.0
          %1751 = vmatpush1.msra.mxu0 %v1739
          %1752 = vmatprep.subr.mxu0 0.0
          %1753 = vmatpush1.msra.mxu0 %v1738
          %1754 = vmatprep.subr.mxu0 0.0
          %1755 = vmatpush1.msra.mxu0 %v1737
          %1756 = vmatprep.subr.mxu0 0.0
          %1757 = vmatpush1.msra.mxu0 %v1736
          %1758 = vmatprep.subr.mxu0 0.0
          %1759 = vmatpush1.msra.mxu0 %v1735
          %1760 = vmatprep.subr.mxu0 0.0
          %1761 = vmatpush1.msra.mxu0 %v1734
          %1762 = vmatprep.subr.mxu0 0.0
          %1763 = vmatpush1.msra.mxu0 %v1733
          %1764 = vmatprep.subr.mxu0 0.0
          %1765 = vmatpush1.msra.mxu0 %v1732
          %1766 = vmatprep.subr.mxu0 0.0
          %1767 = vmatpush1.msra.mxu0 %v1731
          %1768 = vmatprep.subr.mxu0 0.0
          %1769 = vmatpush1.msra.mxu0 %v1730
          %1770 = vmatprep.subr.mxu0 0.0
          %1771 = vmatpush1.msra.mxu0 %v1729
          %1772 = vmatprep.subr.mxu0 0.0
          %1773 = vmatpush1.msra.mxu0 %v1728
          %1774 = vmatprep.subr.mxu0 0.0
          %1775 = vmatpush1.msra.mxu0 %v1727
          %1776 = vmatprep.subr.mxu0 0.0
          %1777 = vmatpush1.msra.mxu0 %v1726
          %1778 = vmatprep.subr.mxu0 0.0
          %1779 = vmatpush1.msra.mxu0 %v1725
          %1780 = vmatprep.subr.mxu0 0.0
          %1781 = vmatpush2.msra.mxu0 0.0
          %1782 = vmatprep.subr.mxu0 0.0
          %1783 = vmatpush2.msra.mxu0 0.0
          %1784 = vmatprep.subr.mxu0 0.0
          %1785 = vmatpush2.msra.mxu0 0.0
          %1786 = vmatprep.subr.mxu0 0.0
          %1787 = vmatpush2.msra.mxu0 0.0
          %1788 = vmatprep.subr.mxu0 0.0
          %1789 = vmatpush2.msra.mxu0 0.0
          %1790 = vmatprep.subr.mxu0 0.0
          %1791 = vmatpush2.msra.mxu0 0.0
          %1792 = vmatprep.subr.mxu0 0.0
          %1793 = vmatpush2.msra.mxu0 0.0
          %1794 = vmatprep.subr.mxu0 0.0
          %1795 = vmatpush2.msra.mxu0 0.0
          %1796 = vmatprep.subr.mxu0 0.0
          %1797 = vmatpush2.msra.mxu0 0.0
          %1798 = vmatprep.subr.mxu0 0.0
          %1799 = vmatpush2.msra.mxu0 0.0
          %1800 = vmatprep.subr.mxu0 0.0
          %1801 = vmatpush2.msra.mxu0 0.0
          %1802 = vmatprep.subr.mxu0 0.0
          %1803 = vmatpush2.msra.mxu0 0.0
          %1804 = vmatprep.subr.mxu0 0.0
          %1805 = vmatpush2.msra.mxu0 0.0
          %1806 = vmatprep.subr.mxu0 0.0
          %1807 = vmatpush2.msra.mxu0 0.0
          %1808 = vmatprep.subr.mxu0 0.0
          %1809 = vmatpush2.msra.mxu0 0.0
          %1810 = vmatprep.subr.mxu0 0.0
          %1811 = vmatpush2.msra.mxu0 0.0
          %1812 = vmatprep.mubr.f32.mxu0 0.0
          %1813 = vmatmul.mubr.f32.gmra.mxu0 %v1724
          %v1814 = vpop.f32.mrf.mxu0
          %v1815 = vadd.f32 %v1746, %v1814
          %v1816 = vpop.f32.mrf.mxu0
          %1817 = vdwg.mxu0
          %vm1818 = vcmask 74752
          %1819 = vst.msk [vmem:[#allocation3] sm:$0x3] %vm1818, %v1815
        $region56: #{cnn_forward.5} parent=47 // pred_fallthru
          _
        // Predicated region
        $region57: #{cnn_forward.5} parent=47 // pred_check
          %p1820 = pneg %p189
        $region58: #{cnn_forward.5} parent=47 // pred_check_branch
          %1822 = sbr.rel (%p1820) target = $region60
        $region59: #{cnn_forward.5} parent=47 // pred_region
          %s1824 = ssub.s32 32, 32
          %1825 = vsyncadd [#allocation4], %s1824
          %s1827 = sshll.u32 [#allocation3], 4
          %s1828 = int_to_ptr.vmem [resolvable:$true] %s1827
          %1830 = dma.vmem_to_hbm [thread:$0]  %s1828, 32, %s7, [#allocation4]
        $region60: #{cnn_forward.5} parent=47 // pred_fallthru
          _
        // Predicated region
        $region61: #{cnn_forward.5} parent=47 // pred_check
          %p1831 = pneg %p189
        $region62: #{cnn_forward.5} parent=47 // pred_check_branch
          %1833 = sbr.rel (%p1831) target = $region64
        $region63: #{cnn_forward.5} parent=47 // pred_region
          %1834 = dma.done [#allocation4], 32
        $region64: #{cnn_forward.5} parent=47 // pred_fallthru
          _
      $region48: #{cnn_forward.5} parent=5 // pred_fallthru
        _
      %p1835 = scmp.le.s32.totalorder 2, %s14
      // Predicated region
      $region65: #{cnn_forward.5} parent=5 // pred_check
        %p1836 = pneg %p1835
      $region66: #{cnn_forward.5} parent=5 // pred_check_branch
        %1838 = sbr.rel (%p1836) target = $region68
      $region67: #{cnn_forward.5} parent=5 // pred_region
        %s1839 = ssub.s32 %s14, 2
      $region68: #{cnn_forward.5} parent=5 // pred_fallthru
        _
    $region6: #{cnn_forward.5} parent=1 // loop_footer
      %s18 = sadd.s32 1, %s14
    $region7: #{cnn_forward.5} parent=1 // loop_footer_branch
      %13 = sbr.rel target = $region3
    $region8: #{cnn_forward.5} parent=1 // loop_exit
      _
    %1840 = vsyncpa [#allocation4], 1
    %s1841 = scalar_lea.sflag [#allocation4], 1
    %1842 = vsyncpa %s1841, 1

// kernel: cnn_forward.4
$region0: #{cnn_forward.4}
  #allocation0 [shape = 'u32[]', space=smem, size = 0x4, offset = 0x4, fixed_abs, tag = 'smem constant byte address 0x4 - core index']
  #allocation1 [shape = 'u32[144,128]{1,0:T(1,128)}', space=vmem, size = 0x12000, scoped, tag = 'internal scratch']
  #allocation2 [shape = 'f32[16,1024]{1,0:T(8,128)}', space=vmem, size = 0x10000, scoped, tag = 'scratch operand']
  #allocation3 [shape = 'f32[16,512]{1,0:T(8,128)}', space=vmem, size = 0x8000, scoped, tag = 'scratch operand']
  %s0 = inlined_call_operand.vmem [shape: f32[2,18,576], index: 0, kind: input, shape index: {}]
  %s1 = inlined_call_operand.hbm [shape: f32[3,576,1024], index: 1, kind: input, shape index: {}]
  %s2 = inlined_call_operand.hbm [shape: f32[1,1024], index: 2, kind: input, shape index: {}]
  %s3 = inlined_call_operand.vmem [shape: f32[2,8,512], index: 3, kind: output, shape index: {}]
  %s4 = sld [smem:[#allocation0]]
  $region53: #{cnn_forward.4} parent=0
    _
  %s6 = ssub.s32 1, %s4
  %s7 = scalar_select 0, %s6, %s4
  $region1: #{cnn_forward.4} parent=0
    #allocation4 [shape = 'u8[7077888]{0}', space=vmem, size = 0x6c0000, scoped, tag = 'input window, operand 1, single buffered']
    #allocation5 [shape = 's32[2]{0}', space=sflag, size = 0x8, scoped, tag = 'scoped memory for cnn_forward.4']
    #allocation6 [shape = 'u8[4096]{0}', space=vmem, size = 0x1000, scoped, tag = 'input window, operand 2, single buffered']
    #allocation7 [shape = 's32[1]{0}', space=sflag, size = 0x4, scoped, tag = 'scoped memory for cnn_forward.4']
    %8 = vsyncpa [#allocation5], 0
    %9 = vsyncpa [#allocation7], 0
    loop: start=0, step=1, limit=4
    $region2: #{cnn_forward.4} parent=1 // loop_pre_header
      _
    $region3: #{cnn_forward.4} parent=1 // loop_header
      %s11 = sphi 0, %s15
      %p12 = scmp.ge.s32.totalorder %s11, 4
      %s21 = sphi 0, %s23
      %s24 = sphi 0, %s21
      %s25 = sphi 0, %s24
      %s41 = sphi 0, %s25
      %s45 = sphi 0, %s45
      %s47 = sphi 0, %s45
      %s48 = sphi 0, %s47
      %s62 = sphi 0, %s48
      %s66 = sphi 0, %s66
      %s68 = sphi 0, %s66
      %s69 = sphi 0, %s68
      %s83 = sphi 0, %s69
      %s89 = sphi 0, %s91
      %s92 = sphi 0, %s89
      %s93 = sphi 0, %s92
      %s109 = sphi 0, %s93
    $region4: #{cnn_forward.4} parent=1 // loop_header_branch
      %14 = sbr.rel (%p12) target = $region8
    $region5: #{cnn_forward.4} parent=1 // loop_body
      %s16 = ssub.s32 %s11, 1
      %s17 = ssub.s32 %s11, 2
      %s18 = sadd.s32 %s11, 1
      %s19 = ssub.s32 %s11, %s18
      %p20 = scmp.eq.s32.totalorder %s19, 0
      %s22 = sadd.s32 %s21, 1
      %s23 = scalar_select %p20, %s21, %s22
      %p26 = pneg %p20
      %p27 = scmp.eq.s32.totalorder %s11, 1
      %p28 = por %p26, %p27
      %p29 = scmp.ne.s32.totalorder %s21, %s24
      %p30 = scmp.eq.s32.totalorder %s11, 0
      %p31 = por %p29, %p30
      %p32 = scmp.ne.s32.totalorder %s21, %s24
      %p33 = scmp.eq.s32.totalorder %s16, 1
      %p34 = por %p32, %p33
      %p35 = scmp.ne.s32.totalorder %s24, %s25
      %p36 = scmp.eq.s32.totalorder %s16, 0
      %p37 = por %p35, %p36
      %p38 = scmp.ne.s32.totalorder %s24, %s25
      %p39 = scmp.eq.s32.totalorder %s17, 1
      %p40 = por %p38, %p39
      %p42 = scmp.ne.s32.totalorder %s25, %s41
      %p43 = scmp.eq.s32.totalorder %s17, 0
      %p44 = por %p42, %p43
      %s46 = sadd.s32 %s45, 1
      %p49 = scmp.eq.s32.totalorder %s11, 1
      %p50 = scmp.ne.s32.totalorder %s45, %s47
      %p51 = scmp.eq.s32.totalorder %s11, 0
      %p52 = por %p50, %p51
      %p53 = scmp.ne.s32.totalorder %s45, %s47
      %p54 = scmp.eq.s32.totalorder %s16, 1
      %p55 = por %p53, %p54
      %p56 = scmp.ne.s32.totalorder %s47, %s48
      %p57 = scmp.eq.s32.totalorder %s16, 0
      %p58 = por %p56, %p57
      %p59 = scmp.ne.s32.totalorder %s47, %s48
      %p60 = scmp.eq.s32.totalorder %s17, 1
      %p61 = por %p59, %p60
      %p63 = scmp.ne.s32.totalorder %s48, %s62
      %p64 = scmp.eq.s32.totalorder %s17, 0
      %p65 = por %p63, %p64
      %s67 = sadd.s32 %s66, 1
      %p70 = scmp.eq.s32.totalorder %s11, 1
      %p71 = scmp.ne.s32.totalorder %s66, %s68
      %p72 = scmp.eq.s32.totalorder %s11, 0
      %p73 = por %p71, %p72
      %p74 = scmp.ne.s32.totalorder %s66, %s68
      %p75 = scmp.eq.s32.totalorder %s16, 1
      %p76 = por %p74, %p75
      %p77 = scmp.ne.s32.totalorder %s68, %s69
      %p78 = scmp.eq.s32.totalorder %s16, 0
      %p79 = por %p77, %p78
      %p80 = scmp.ne.s32.totalorder %s68, %s69
      %p81 = scmp.eq.s32.totalorder %s17, 1
      %p82 = por %p80, %p81
      %p84 = scmp.ne.s32.totalorder %s69, %s83
      %p85 = scmp.eq.s32.totalorder %s17, 0
      %p86 = por %p84, %p85
      %s87 = ssub.s32 %s11, %s18
      %p88 = scmp.eq.s32.totalorder %s87, 0
      %s90 = sadd.s32 %s89, 1
      %s91 = scalar_select %p88, %s89, %s90
      %p94 = pneg %p88
      %p95 = scmp.eq.s32.totalorder %s11, 1
      %p96 = por %p94, %p95
      %p97 = scmp.ne.s32.totalorder %s89, %s92
      %p98 = scmp.eq.s32.totalorder %s11, 0
      %p99 = por %p97, %p98
      %p100 = scmp.ne.s32.totalorder %s89, %s92
      %p101 = scmp.eq.s32.totalorder %s16, 1
      %p102 = por %p100, %p101
      %p103 = scmp.ne.s32.totalorder %s92, %s93
      %p104 = scmp.eq.s32.totalorder %s16, 0
      %p105 = por %p103, %p104
      %p106 = scmp.ne.s32.totalorder %s92, %s93
      %p107 = scmp.eq.s32.totalorder %s17, 1
      %p108 = por %p106, %p107
      %p110 = scmp.ne.s32.totalorder %s93, %s109
      %p111 = scmp.eq.s32.totalorder %s17, 0
      %p112 = por %p110, %p111
      %p113 = scmp.le.s32.totalorder 1, %s11
      %p114 = scmp.lt.s32.totalorder %s11, 3
      %p115 = pnand %p113, %p114
      %p116 = pneg %p115
      // Predicated region
      $region9: #{cnn_forward.4} parent=5 // pred_check
        _
      $region10: #{cnn_forward.4} parent=5 // pred_check_branch
        %118 = sbr.rel (%p115) target = $region12
      $region11: #{cnn_forward.4} parent=5 // pred_region
        %s119 = ssub.s32 %s11, 1
        // Predicated region
        $region13: #{cnn_forward.4} parent=11 // pred_check
          %p120 = pneg %p58
        $region14: #{cnn_forward.4} parent=11 // pred_check_branch
          %122 = sbr.rel (%p120) target = $region16
        $region15: #{cnn_forward.4} parent=11 // pred_region
          %s124 = ssub.s32 221184, 221184
          %125 = vsyncadd [#allocation5], %s124
          %s126 = sshll.u32 [#allocation4], 4
          %s127 = int_to_ptr.vmem [resolvable:$true] %s126
          %132 = dma.hbm_to_vmem [thread:$0]  %s1, 221184, %s127, [#allocation5], 1024, 1024, 64
        $region16: #{cnn_forward.4} parent=11 // pred_fallthru
          _
        // Predicated region
        $region17: #{cnn_forward.4} parent=11 // pred_check
          %p133 = pneg %p79
        $region18: #{cnn_forward.4} parent=11 // pred_check_branch
          %135 = sbr.rel (%p133) target = $region20
        $region19: #{cnn_forward.4} parent=11 // pred_region
          %s137 = ssub.s32 128, 128
          %138 = vsyncadd [#allocation7], %s137
          %s140 = sshll.u32 [#allocation6], 4
          %s141 = int_to_ptr.vmem [resolvable:$true] %s140
          %143 = dma.hbm_to_vmem [thread:$0]  %s2, 128, %s141, [#allocation7]
        $region20: #{cnn_forward.4} parent=11 // pred_fallthru
          _
      $region12: #{cnn_forward.4} parent=5 // pred_fallthru
        _
      %p144 = scmp.lt.s32.totalorder %s11, 2
      // Predicated region
      $region21: #{cnn_forward.4} parent=5 // pred_check
        %p145 = pneg %p144
      $region22: #{cnn_forward.4} parent=5 // pred_check_branch
        %147 = sbr.rel (%p145) target = $region24
      $region23: #{cnn_forward.4} parent=5 // pred_region
        // Predicated region
        $region25: #{cnn_forward.4} parent=23 // pred_check
          %p148 = pneg %p31
        $region26: #{cnn_forward.4} parent=23 // pred_check_branch
          %150 = sbr.rel (%p148) target = $region28
        $region27: #{cnn_forward.4} parent=23 // pred_region
          %p151 = scmp.lt.s32.totalorder %s11, 1
          %s152 = scalar_select %p151, %s11, 1
          %s153 = smul.addr %s152, 15
          %s154 = smul.addr %s153, 8
          %s155 = scalar_lea.vmem %s0, %s154
        $region28: #{cnn_forward.4} parent=23 // pred_fallthru
          _
      $region24: #{cnn_forward.4} parent=5 // pred_fallthru
        _
      %p156 = scmp.le.s32.totalorder 1, %s11
      %p157 = scmp.lt.s32.totalorder %s11, 3
      %p158 = pnand %p156, %p157
      %p159 = pneg %p158
      // Predicated region
      $region29: #{cnn_forward.4} parent=5 // pred_check
        _
      $region30: #{cnn_forward.4} parent=5 // pred_check_branch
        %161 = sbr.rel (%p158) target = $region32
      $region31: #{cnn_forward.4} parent=5 // pred_region
        %s162 = ssub.s32 %s11, 1
        // Predicated region
        $region33: #{cnn_forward.4} parent=31 // pred_check
          %p163 = pneg %p58
        $region34: #{cnn_forward.4} parent=31 // pred_check_branch
          %165 = sbr.rel (%p163) target = $region36
        $region35: #{cnn_forward.4} parent=31 // pred_region
          %166 = dma.done [#allocation5], 221184
        $region36: #{cnn_forward.4} parent=31 // pred_fallthru
          _
        // Predicated region
        $region37: #{cnn_forward.4} parent=31 // pred_check
          %p167 = pneg %p79
        $region38: #{cnn_forward.4} parent=31 // pred_check_branch
          %169 = sbr.rel (%p167) target = $region40
        $region39: #{cnn_forward.4} parent=31 // pred_region
          %170 = dma.done [#allocation7], 128
        $region40: #{cnn_forward.4} parent=31 // pred_fallthru
          _
        %p171 = scmp.lt.s32.totalorder %s16, 1
        %s172 = scalar_select %p171, %s16, 1
        %s173 = smul.addr %s172, 15
        %s174 = smul.addr %s173, 8
        %s175 = scalar_lea.vmem %s0, %s174
        %p176 = pneg %p37
        %p177 = pneg %p34
        %p178 = pneg %p58
        %p179 = pneg %p55
        %p180 = pneg %p79
        %p181 = pneg %p76
        %p182 = pneg %p105
        %p183 = pneg %p102
        %p184 = scmp.lt.s32.totalorder %s16, 1
        %s185 = scalar_select %p184, %s16, 1
        %s186 = smul.addr %s185, 4
        %s187 = smul.addr %s186, 8
        %s188 = scalar_lea.vmem %s3, %s187
        %p189 = scmp.lt.s32.totalorder %s16, 1
        %s190 = scalar_select %p189, %s16, 1
        %s191 = smul.addr %s190, 15
        %s192 = smul.addr %s191, 8
        %s193 = scalar_lea.vmem %s0, %s192
        %p194 = scmp.lt.s32.totalorder %s16, 1
        %s195 = scalar_select %p194, %s16, 1
        %s196 = smul.addr %s195, 4
        %s197 = smul.addr %s196, 8
        %s198 = scalar_lea.vmem %s3, %s197
        %v199 = vld [vmem:[%s193] sm:$0xff]
        %v200 = vld [vmem:[%s193 + $0x8] sm:$0xff]
        %v201 = vld [vmem:[%s193 + $0x10] sm:$0xff]
        %v202 = vld [vmem:[%s193 + $0x18] sm:$0xff]
        %v203 = vld [vmem:[%s193 + $0x20] sm:$0xff]
        %v204 = vld [vmem:[%s193 + $0x28] sm:$0xff]
        %v205 = vld [vmem:[%s193 + $0x30] sm:$0xff]
        %v206 = vld [vmem:[%s193 + $0x38] sm:$0xff]
        %v207 = vld [vmem:[%s193 + $0x40] sm:$0xff]
        %v208 = vld [vmem:[%s193 + $0x48] sm:$0xff]
        %v209 = vld [vmem:[#allocation4] sm:$0xff]
        %v210 = vld [vmem:[#allocation4 + $0x8] sm:$0xff]
        %v211 = vld [vmem:[#allocation4 + $0x10] sm:$0xff]
        %v212 = vld [vmem:[#allocation4 + $0x18] sm:$0xff]
        %v213 = vld [vmem:[#allocation4 + $0x20] sm:$0xff]
        %v214 = vld [vmem:[#allocation4 + $0x28] sm:$0xff]
        %v215 = vld [vmem:[#allocation4 + $0x30] sm:$0xff]
        %v216 = vld [vmem:[#allocation4 + $0x38] sm:$0xff]
        %v217 = vld [vmem:[#allocation4 + $0x40] sm:$0xff]
        %v218 = vld [vmem:[#allocation4 + $0x48] sm:$0xff]
        %v219 = vld [vmem:[#allocation4 + $0x50] sm:$0xff]
        %v220 = vld [vmem:[#allocation4 + $0x58] sm:$0xff]
        %v221 = vld [vmem:[#allocation4 + $0x60] sm:$0xff]
        %v222 = vld [vmem:[#allocation4 + $0x68] sm:$0xff]
        %v223 = vld [vmem:[#allocation4 + $0x70] sm:$0xff]
        %v224 = vld [vmem:[#allocation4 + $0x78] sm:$0xff]
        %v225 = vld [vmem:[#allocation4 + $0x80] sm:$0xff]
        %v226 = vld [vmem:[#allocation4 + $0x88] sm:$0xff]
        %v227 = vld [vmem:[#allocation4 + $0x90] sm:$0xff]
        %v228 = vld [vmem:[#allocation4 + $0x98] sm:$0xff]
        %v229 = vld [vmem:[#allocation4 + $0xa0] sm:$0xff]
        %v230 = vld [vmem:[#allocation4 + $0xa8] sm:$0xff]
        %v231 = vld [vmem:[#allocation4 + $0xb0] sm:$0xff]
        %v232 = vld [vmem:[#allocation4 + $0xb8] sm:$0xff]
        %v233 = vld [vmem:[#allocation4 + $0xc0] sm:$0xff]
        %v234 = vld [vmem:[#allocation4 + $0xc8] sm:$0xff]
        %v235 = vld [vmem:[#allocation4 + $0xd0] sm:$0xff]
        %v236 = vld [vmem:[#allocation4 + $0xd8] sm:$0xff]
        %v237 = vld [vmem:[#allocation4 + $0xe0] sm:$0xff]
        %v238 = vld [vmem:[#allocation4 + $0xe8] sm:$0xff]
        %v239 = vld [vmem:[#allocation4 + $0xf0] sm:$0xff]
        %v240 = vld [vmem:[#allocation4 + $0xf8] sm:$0xff]
        %v241 = vld [vmem:[#allocation4 + $0x100] sm:$0xff]
        %v242 = vld [vmem:[#allocation4 + $0x108] sm:$0xff]
        %v243 = vld [vmem:[#allocation4 + $0x110] sm:$0xff]
        %v244 = vld [vmem:[#allocation4 + $0x118] sm:$0xff]
        %v245 = vld [vmem:[#allocation4 + $0x120] sm:$0xff]
        %v246 = vld [vmem:[#allocation4 + $0x128] sm:$0xff]
        %v247 = vld [vmem:[#allocation4 + $0x130] sm:$0xff]
        %v248 = vld [vmem:[#allocation4 + $0x138] sm:$0xff]
        %v249 = vld [vmem:[#allocation4 + $0x140] sm:$0xff]
        %v250 = vld [vmem:[#allocation4 + $0x148] sm:$0xff]
        %v251 = vld [vmem:[#allocation4 + $0x150] sm:$0xff]
        %v252 = vld [vmem:[#allocation4 + $0x158] sm:$0xff]
        %v253 = vld [vmem:[#allocation4 + $0x160] sm:$0xff]
        %v254 = vld [vmem:[#allocation4 + $0x168] sm:$0xff]
        %v255 = vld [vmem:[#allocation4 + $0x170] sm:$0xff]
        %v256 = vld [vmem:[#allocation4 + $0x178] sm:$0xff]
        %v257 = vld [vmem:[#allocation4 + $0x180] sm:$0xff]
        %v258 = vld [vmem:[#allocation4 + $0x188] sm:$0xff]
        %v259 = vld [vmem:[#allocation4 + $0x190] sm:$0xff]
        %v260 = vld [vmem:[#allocation4 + $0x198] sm:$0xff]
        %v261 = vld [vmem:[#allocation4 + $0x1a0] sm:$0xff]
        %v262 = vld [vmem:[#allocation4 + $0x1a8] sm:$0xff]
        %v263 = vld [vmem:[#allocation4 + $0x1b0] sm:$0xff]
        %v264 = vld [vmem:[#allocation4 + $0x1b8] sm:$0xff]
        %v265 = vld [vmem:[#allocation4 + $0x1c0] sm:$0xff]
        %v266 = vld [vmem:[#allocation4 + $0x1c8] sm:$0xff]
        %v267 = vld [vmem:[#allocation4 + $0x1d0] sm:$0xff]
        %v268 = vld [vmem:[#allocation4 + $0x1d8] sm:$0xff]
        %v269 = vld [vmem:[#allocation4 + $0x1e0] sm:$0xff]
        %v270 = vld [vmem:[#allocation4 + $0x1e8] sm:$0xff]
        %v271 = vld [vmem:[#allocation4 + $0x1f0] sm:$0xff]
        %v272 = vld [vmem:[#allocation4 + $0x1f8] sm:$0xff]
        %v273 = vld [vmem:[#allocation4 + $0x200] sm:$0xff]
        %v274 = vld [vmem:[#allocation4 + $0x208] sm:$0xff]
        %v275 = vld [vmem:[#allocation4 + $0x210] sm:$0xff]
        %v276 = vld [vmem:[#allocation4 + $0x218] sm:$0xff]
        %v277 = vld [vmem:[#allocation4 + $0x220] sm:$0xff]
        %v278 = vld [vmem:[#allocation4 + $0x228] sm:$0xff]
        %v279 = vld [vmem:[#allocation4 + $0x230] sm:$0xff]
        %v280 = vld [vmem:[#allocation4 + $0x238] sm:$0xff]
        %v281 = vld [vmem:[#allocation4 + $0x240] sm:$0xff]
        %v282 = vld [vmem:[#allocation4 + $0x248] sm:$0xff]
        %v283 = vld [vmem:[#allocation4 + $0x250] sm:$0xff]
        %v284 = vld [vmem:[#allocation4 + $0x258] sm:$0xff]
        %v285 = vld [vmem:[#allocation4 + $0x260] sm:$0xff]
        %v286 = vld [vmem:[#allocation4 + $0x268] sm:$0xff]
        %v287 = vld [vmem:[#allocation4 + $0x270] sm:$0xff]
        %v288 = vld [vmem:[#allocation4 + $0x278] sm:$0xff]
        %v289 = vld [vmem:[#allocation4 + $0x280] sm:$0xff]
        %v290 = vld [vmem:[#allocation4 + $0x288] sm:$0xff]
        %v291 = vld [vmem:[#allocation4 + $0x290] sm:$0xff]
        %v292 = vld [vmem:[#allocation4 + $0x298] sm:$0xff]
        %v293 = vld [vmem:[#allocation4 + $0x2a0] sm:$0xff]
        %v294 = vld [vmem:[#allocation4 + $0x2a8] sm:$0xff]
        %v295 = vld [vmem:[#allocation4 + $0x2b0] sm:$0xff]
        %v296 = vld [vmem:[#allocation4 + $0x2b8] sm:$0xff]
        %v297 = vld [vmem:[#allocation4 + $0x2c0] sm:$0xff]
        %v298 = vld [vmem:[#allocation4 + $0x2c8] sm:$0xff]
        %v299 = vld [vmem:[#allocation4 + $0x2d0] sm:$0xff]
        %v300 = vld [vmem:[#allocation4 + $0x2d8] sm:$0xff]
        %v301 = vld [vmem:[#allocation4 + $0x2e0] sm:$0xff]
        %v302 = vld [vmem:[#allocation4 + $0x2e8] sm:$0xff]
        %v303 = vld [vmem:[#allocation4 + $0x2f0] sm:$0xff]
        %v304 = vld [vmem:[#allocation4 + $0x2f8] sm:$0xff]
        %v305 = vld [vmem:[#allocation4 + $0x300] sm:$0xff]
        %v306 = vld [vmem:[#allocation4 + $0x308] sm:$0xff]
        %v307 = vld [vmem:[#allocation4 + $0x310] sm:$0xff]
        %v308 = vld [vmem:[#allocation4 + $0x318] sm:$0xff]
        %v309 = vld [vmem:[#allocation4 + $0x320] sm:$0xff]
        %v310 = vld [vmem:[#allocation4 + $0x328] sm:$0xff]
        %v311 = vld [vmem:[#allocation4 + $0x330] sm:$0xff]
        %v312 = vld [vmem:[#allocation4 + $0x338] sm:$0xff]
        %v313 = vld [vmem:[#allocation4 + $0x340] sm:$0xff]
        %v314 = vld [vmem:[#allocation4 + $0x348] sm:$0xff]
        %v315 = vld [vmem:[#allocation4 + $0x350] sm:$0xff]
        %v316 = vld [vmem:[#allocation4 + $0x358] sm:$0xff]
        %v317 = vld [vmem:[#allocation4 + $0x360] sm:$0xff]
        %v318 = vld [vmem:[#allocation4 + $0x368] sm:$0xff]
        %v319 = vld [vmem:[#allocation4 + $0x370] sm:$0xff]
        %v320 = vld [vmem:[#allocation4 + $0x378] sm:$0xff]
        %v321 = vld [vmem:[#allocation4 + $0x380] sm:$0xff]
        %v322 = vld [vmem:[#allocation4 + $0x388] sm:$0xff]
        %v323 = vld [vmem:[#allocation4 + $0x390] sm:$0xff]
        %v324 = vld [vmem:[#allocation4 + $0x398] sm:$0xff]
        %v325 = vld [vmem:[#allocation4 + $0x3a0] sm:$0xff]
        %v326 = vld [vmem:[#allocation4 + $0x3a8] sm:$0xff]
        %v327 = vld [vmem:[#allocation4 + $0x3b0] sm:$0xff]
        %v328 = vld [vmem:[#allocation4 + $0x3b8] sm:$0xff]
        %v329 = vld [vmem:[#allocation4 + $0x3c0] sm:$0xff]
        %v330 = vld [vmem:[#allocation4 + $0x3c8] sm:$0xff]
        %v331 = vld [vmem:[#allocation4 + $0x3d0] sm:$0xff]
        %v332 = vld [vmem:[#allocation4 + $0x3d8] sm:$0xff]
        %v333 = vld [vmem:[#allocation4 + $0x3e0] sm:$0xff]
        %v334 = vld [vmem:[#allocation4 + $0x3e8] sm:$0xff]
        %v335 = vld [vmem:[#allocation4 + $0x3f0] sm:$0xff]
        %v336 = vld [vmem:[#allocation4 + $0x3f8] sm:$0xff]
        %v337 = vld [vmem:[#allocation4 + $0x400] sm:$0xff]
        %v338 = vld [vmem:[#allocation4 + $0x408] sm:$0xff]
        %v339 = vld [vmem:[#allocation4 + $0x410] sm:$0xff]
        %v340 = vld [vmem:[#allocation4 + $0x418] sm:$0xff]
        %v341 = vld [vmem:[#allocation4 + $0x420] sm:$0xff]
        %v342 = vld [vmem:[#allocation4 + $0x428] sm:$0xff]
        %v343 = vld [vmem:[#allocation4 + $0x430] sm:$0xff]
        %v344 = vld [vmem:[#allocation4 + $0x438] sm:$0xff]
        %v345 = vld [vmem:[#allocation4 + $0x440] sm:$0xff]
        %v346 = vld [vmem:[#allocation4 + $0x448] sm:$0xff]
        %v347 = vld [vmem:[#allocation4 + $0x450] sm:$0xff]
        %v348 = vld [vmem:[#allocation4 + $0x458] sm:$0xff]
        %v349 = vld [vmem:[#allocation4 + $0x460] sm:$0xff]
        %v350 = vld [vmem:[#allocation4 + $0x468] sm:$0xff]
        %v351 = vld [vmem:[#allocation4 + $0x470] sm:$0xff]
        %v352 = vld [vmem:[#allocation4 + $0x478] sm:$0xff]
        %v353 = vld [vmem:[#allocation4 + $0x480] sm:$0xff]
        %v354 = vld [vmem:[#allocation4 + $0x488] sm:$0xff]
        %v355 = vld [vmem:[#allocation4 + $0x490] sm:$0xff]
        %v356 = vld [vmem:[#allocation4 + $0x498] sm:$0xff]
        %v357 = vld [vmem:[#allocation4 + $0x4a0] sm:$0xff]
        %v358 = vld [vmem:[#allocation4 + $0x4a8] sm:$0xff]
        %v359 = vld [vmem:[#allocation4 + $0x4b0] sm:$0xff]
        %v360 = vld [vmem:[#allocation4 + $0x4b8] sm:$0xff]
        %v361 = vld [vmem:[#allocation4 + $0x4c0] sm:$0xff]
        %v362 = vld [vmem:[#allocation4 + $0x4c8] sm:$0xff]
        %v363 = vld [vmem:[#allocation4 + $0x4d0] sm:$0xff]
        %v364 = vld [vmem:[#allocation4 + $0x4d8] sm:$0xff]
        %v365 = vld [vmem:[#allocation4 + $0x4e0] sm:$0xff]
        %v366 = vld [vmem:[#allocation4 + $0x4e8] sm:$0xff]
        %v367 = vld [vmem:[#allocation4 + $0x4f0] sm:$0xff]
        %v368 = vld [vmem:[#allocation4 + $0x4f8] sm:$0xff]
        %v369 = vld [vmem:[#allocation4 + $0x500] sm:$0xff]
        %v370 = vld [vmem:[#allocation4 + $0x508] sm:$0xff]
        %v371 = vld [vmem:[#allocation4 + $0x510] sm:$0xff]
        %v372 = vld [vmem:[#allocation4 + $0x518] sm:$0xff]
        %v373 = vld [vmem:[#allocation4 + $0x520] sm:$0xff]
        %v374 = vld [vmem:[#allocation4 + $0x528] sm:$0xff]
        %v375 = vld [vmem:[#allocation4 + $0x530] sm:$0xff]
        %v376 = vld [vmem:[#allocation4 + $0x538] sm:$0xff]
        %v377 = vld [vmem:[#allocation4 + $0x540] sm:$0xff]
        %v378 = vld [vmem:[#allocation4 + $0x548] sm:$0xff]
        %v379 = vld [vmem:[#allocation4 + $0x550] sm:$0xff]
        %v380 = vld [vmem:[#allocation4 + $0x558] sm:$0xff]
        %v381 = vld [vmem:[#allocation4 + $0x560] sm:$0xff]
        %v382 = vld [vmem:[#allocation4 + $0x568] sm:$0xff]
        %v383 = vld [vmem:[#allocation4 + $0x570] sm:$0xff]
        %v384 = vld [vmem:[#allocation4 + $0x578] sm:$0xff]
        %v385 = vld [vmem:[#allocation4 + $0x580] sm:$0xff]
        %v386 = vld [vmem:[#allocation4 + $0x588] sm:$0xff]
        %v387 = vld [vmem:[#allocation4 + $0x590] sm:$0xff]
        %v388 = vld [vmem:[#allocation4 + $0x598] sm:$0xff]
        %v389 = vld [vmem:[#allocation4 + $0x5a0] sm:$0xff]
        %v390 = vld [vmem:[#allocation4 + $0x5a8] sm:$0xff]
        %v391 = vld [vmem:[#allocation4 + $0x5b0] sm:$0xff]
        %v392 = vld [vmem:[#allocation4 + $0x5b8] sm:$0xff]
        %v393 = vld [vmem:[#allocation4 + $0x5c0] sm:$0xff]
        %v394 = vld [vmem:[#allocation4 + $0x5c8] sm:$0xff]
        %v395 = vld [vmem:[#allocation4 + $0x5d0] sm:$0xff]
        %v396 = vld [vmem:[#allocation4 + $0x5d8] sm:$0xff]
        %v397 = vld [vmem:[#allocation4 + $0x5e0] sm:$0xff]
        %v398 = vld [vmem:[#allocation4 + $0x5e8] sm:$0xff]
        %v399 = vld [vmem:[#allocation4 + $0x5f0] sm:$0xff]
        %v400 = vld [vmem:[#allocation4 + $0x5f8] sm:$0xff]
        %v401 = vld [vmem:[#allocation4 + $0x600] sm:$0xff]
        %v402 = vld [vmem:[#allocation4 + $0x608] sm:$0xff]
        %v403 = vld [vmem:[#allocation4 + $0x610] sm:$0xff]
        %v404 = vld [vmem:[#allocation4 + $0x618] sm:$0xff]
        %v405 = vld [vmem:[#allocation4 + $0x620] sm:$0xff]
        %v406 = vld [vmem:[#allocation4 + $0x628] sm:$0xff]
        %v407 = vld [vmem:[#allocation4 + $0x630] sm:$0xff]
        %v408 = vld [vmem:[#allocation4 + $0x638] sm:$0xff]
        %v409 = vld [vmem:[#allocation4 + $0x640] sm:$0xff]
        %v410 = vld [vmem:[#allocation4 + $0x648] sm:$0xff]
        %v411 = vld [vmem:[#allocation4 + $0x650] sm:$0xff]
        %v412 = vld [vmem:[#allocation4 + $0x658] sm:$0xff]
        %v413 = vld [vmem:[#allocation4 + $0x660] sm:$0xff]
        %v414 = vld [vmem:[#allocation4 + $0x668] sm:$0xff]
        %v415 = vld [vmem:[#allocation4 + $0x670] sm:$0xff]
        %v416 = vld [vmem:[#allocation4 + $0x678] sm:$0xff]
        %v417 = vld [vmem:[#allocation4 + $0x680] sm:$0xff]
        %v418 = vld [vmem:[#allocation4 + $0x688] sm:$0xff]
        %v419 = vld [vmem:[#allocation4 + $0x690] sm:$0xff]
        %v420 = vld [vmem:[#allocation4 + $0x698] sm:$0xff]
        %v421 = vld [vmem:[#allocation4 + $0x6a0] sm:$0xff]
        %v422 = vld [vmem:[#allocation4 + $0x6a8] sm:$0xff]
        %v423 = vld [vmem:[#allocation4 + $0x6b0] sm:$0xff]
        %v424 = vld [vmem:[#allocation4 + $0x6b8] sm:$0xff]
        %v425 = vld [vmem:[#allocation4 + $0x6c0] sm:$0xff]
        %v426 = vld [vmem:[#allocation4 + $0x6c8] sm:$0xff]
        %v427 = vld [vmem:[#allocation4 + $0x6d0] sm:$0xff]
        %v428 = vld [vmem:[#allocation4 + $0x6d8] sm:$0xff]
        %v429 = vld [vmem:[#allocation4 + $0x6e0] sm:$0xff]
        %v430 = vld [vmem:[#allocation4 + $0x6e8] sm:$0xff]
        %v431 = vld [vmem:[#allocation4 + $0x6f0] sm:$0xff]
        %v432 = vld [vmem:[#allocation4 + $0x6f8] sm:$0xff]
        %v433 = vld [vmem:[#allocation4 + $0x700] sm:$0xff]
        %v434 = vld [vmem:[#allocation4 + $0x708] sm:$0xff]
        %v435 = vld [vmem:[#allocation4 + $0x710] sm:$0xff]
        %v436 = vld [vmem:[#allocation4 + $0x718] sm:$0xff]
        %v437 = vld [vmem:[#allocation4 + $0x720] sm:$0xff]
        %v438 = vld [vmem:[#allocation4 + $0x728] sm:$0xff]
        %v439 = vld [vmem:[#allocation4 + $0x730] sm:$0xff]
        %v440 = vld [vmem:[#allocation4 + $0x738] sm:$0xff]
        %v441 = vld [vmem:[#allocation4 + $0x740] sm:$0xff]
        %v442 = vld [vmem:[#allocation4 + $0x748] sm:$0xff]
        %v443 = vld [vmem:[#allocation4 + $0x750] sm:$0xff]
        %v444 = vld [vmem:[#allocation4 + $0x758] sm:$0xff]
        %v445 = vld [vmem:[#allocation4 + $0x760] sm:$0xff]
        %v446 = vld [vmem:[#allocation4 + $0x768] sm:$0xff]
        %v447 = vld [vmem:[#allocation4 + $0x770] sm:$0xff]
        %v448 = vld [vmem:[#allocation4 + $0x778] sm:$0xff]
        %v449 = vld [vmem:[#allocation4 + $0x780] sm:$0xff]
        %v450 = vld [vmem:[#allocation4 + $0x788] sm:$0xff]
        %v451 = vld [vmem:[#allocation4 + $0x790] sm:$0xff]
        %v452 = vld [vmem:[#allocation4 + $0x798] sm:$0xff]
        %v453 = vld [vmem:[#allocation4 + $0x7a0] sm:$0xff]
        %v454 = vld [vmem:[#allocation4 + $0x7a8] sm:$0xff]
        %v455 = vld [vmem:[#allocation4 + $0x7b0] sm:$0xff]
        %v456 = vld [vmem:[#allocation4 + $0x7b8] sm:$0xff]
        %v457 = vld [vmem:[#allocation4 + $0x7c0] sm:$0xff]
        %v458 = vld [vmem:[#allocation4 + $0x7c8] sm:$0xff]
        %v459 = vld [vmem:[#allocation4 + $0x7d0] sm:$0xff]
        %v460 = vld [vmem:[#allocation4 + $0x7d8] sm:$0xff]
        %v461 = vld [vmem:[#allocation4 + $0x7e0] sm:$0xff]
        %v462 = vld [vmem:[#allocation4 + $0x7e8] sm:$0xff]
        %v463 = vld [vmem:[#allocation4 + $0x7f0] sm:$0xff]
        %v464 = vld [vmem:[#allocation4 + $0x7f8] sm:$0xff]
        %v465 = vld [vmem:[#allocation4 + $0x800] sm:$0xff]
        %v466 = vld [vmem:[#allocation4 + $0x808] sm:$0xff]
        %v467 = vld [vmem:[#allocation4 + $0x810] sm:$0xff]
        %v468 = vld [vmem:[#allocation4 + $0x818] sm:$0xff]
        %v469 = vld [vmem:[#allocation4 + $0x820] sm:$0xff]
        %v470 = vld [vmem:[#allocation4 + $0x828] sm:$0xff]
        %v471 = vld [vmem:[#allocation4 + $0x830] sm:$0xff]
        %v472 = vld [vmem:[#allocation4 + $0x838] sm:$0xff]
        %v473 = vld [vmem:[#allocation4 + $0x840] sm:$0xff]
        %v474 = vld [vmem:[#allocation4 + $0x848] sm:$0xff]
        %v475 = vld [vmem:[#allocation4 + $0x850] sm:$0xff]
        %v476 = vld [vmem:[#allocation4 + $0x858] sm:$0xff]
        %v477 = vld [vmem:[#allocation4 + $0x860] sm:$0xff]
        %v478 = vld [vmem:[#allocation4 + $0x868] sm:$0xff]
        %v479 = vld [vmem:[#allocation4 + $0x870] sm:$0xff]
        %v480 = vld [vmem:[#allocation4 + $0x878] sm:$0xff]
        %v481 = vld [vmem:[#allocation4 + $0x880] sm:$0xff]
        %v482 = vld [vmem:[#allocation4 + $0x888] sm:$0xff]
        %v483 = vld [vmem:[#allocation4 + $0x890] sm:$0xff]
        %v484 = vld [vmem:[#allocation4 + $0x898] sm:$0xff]
        %v485 = vld [vmem:[#allocation4 + $0x8a0] sm:$0xff]
        %v486 = vld [vmem:[#allocation4 + $0x8a8] sm:$0xff]
        %v487 = vld [vmem:[#allocation4 + $0x8b0] sm:$0xff]
        %v488 = vld [vmem:[#allocation4 + $0x8b8] sm:$0xff]
        %v489 = vld [vmem:[#allocation4 + $0x8c0] sm:$0xff]
        %v490 = vld [vmem:[#allocation4 + $0x8c8] sm:$0xff]
        %v491 = vld [vmem:[#allocation4 + $0x8d0] sm:$0xff]
        %v492 = vld [vmem:[#allocation4 + $0x8d8] sm:$0xff]
        %v493 = vld [vmem:[#allocation4 + $0x8e0] sm:$0xff]
        %v494 = vld [vmem:[#allocation4 + $0x8e8] sm:$0xff]
        %v495 = vld [vmem:[#allocation4 + $0x8f0] sm:$0xff]
        %v496 = vld [vmem:[#allocation4 + $0x8f8] sm:$0xff]
        %v497 = vld [vmem:[#allocation4 + $0x900] sm:$0xff]
        %v498 = vld [vmem:[#allocation4 + $0x908] sm:$0xff]
        %v499 = vld [vmem:[#allocation4 + $0x910] sm:$0xff]
        %v500 = vld [vmem:[#allocation4 + $0x918] sm:$0xff]
        %v501 = vld [vmem:[#allocation4 + $0x920] sm:$0xff]
        %v502 = vld [vmem:[#allocation4 + $0x928] sm:$0xff]
        %v503 = vld [vmem:[#allocation4 + $0x930] sm:$0xff]
        %v504 = vld [vmem:[#allocation4 + $0x938] sm:$0xff]
        %v505 = vld [vmem:[#allocation4 + $0x940] sm:$0xff]
        %v506 = vld [vmem:[#allocation4 + $0x948] sm:$0xff]
        %v507 = vld [vmem:[#allocation4 + $0x950] sm:$0xff]
        %v508 = vld [vmem:[#allocation4 + $0x958] sm:$0xff]
        %v509 = vld [vmem:[#allocation4 + $0x960] sm:$0xff]
        %v510 = vld [vmem:[#allocation4 + $0x968] sm:$0xff]
        %v511 = vld [vmem:[#allocation4 + $0x970] sm:$0xff]
        %v512 = vld [vmem:[#allocation4 + $0x978] sm:$0xff]
        %v513 = vld [vmem:[#allocation4 + $0x980] sm:$0xff]
        %v514 = vld [vmem:[#allocation4 + $0x988] sm:$0xff]
        %v515 = vld [vmem:[#allocation4 + $0x990] sm:$0xff]
        %v516 = vld [vmem:[#allocation4 + $0x998] sm:$0xff]
        %v517 = vld [vmem:[#allocation4 + $0x9a0] sm:$0xff]
        %v518 = vld [vmem:[#allocation4 + $0x9a8] sm:$0xff]
        %v519 = vld [vmem:[#allocation4 + $0x9b0] sm:$0xff]
        %v520 = vld [vmem:[#allocation4 + $0x9b8] sm:$0xff]
        %v521 = vld [vmem:[#allocation4 + $0x9c0] sm:$0xff]
        %v522 = vld [vmem:[#allocation4 + $0x9c8] sm:$0xff]
        %v523 = vld [vmem:[#allocation4 + $0x9d0] sm:$0xff]
        %v524 = vld [vmem:[#allocation4 + $0x9d8] sm:$0xff]
        %v525 = vld [vmem:[#allocation4 + $0x9e0] sm:$0xff]
        %v526 = vld [vmem:[#allocation4 + $0x9e8] sm:$0xff]
        %v527 = vld [vmem:[#allocation4 + $0x9f0] sm:$0xff]
        %v528 = vld [vmem:[#allocation4 + $0x9f8] sm:$0xff]
        %v529 = vld [vmem:[#allocation4 + $0xa00] sm:$0xff]
        %v530 = vld [vmem:[#allocation4 + $0xa08] sm:$0xff]
        %v531 = vld [vmem:[#allocation4 + $0xa10] sm:$0xff]
        %v532 = vld [vmem:[#allocation4 + $0xa18] sm:$0xff]
        %v533 = vld [vmem:[#allocation4 + $0xa20] sm:$0xff]
        %v534 = vld [vmem:[#allocation4 + $0xa28] sm:$0xff]
        %v535 = vld [vmem:[#allocation4 + $0xa30] sm:$0xff]
        %v536 = vld [vmem:[#allocation4 + $0xa38] sm:$0xff]
        %v537 = vld [vmem:[#allocation4 + $0xa40] sm:$0xff]
        %v538 = vld [vmem:[#allocation4 + $0xa48] sm:$0xff]
        %v539 = vld [vmem:[#allocation4 + $0xa50] sm:$0xff]
        %v540 = vld [vmem:[#allocation4 + $0xa58] sm:$0xff]
        %v541 = vld [vmem:[#allocation4 + $0xa60] sm:$0xff]
        %v542 = vld [vmem:[#allocation4 + $0xa68] sm:$0xff]
        %v543 = vld [vmem:[#allocation4 + $0xa70] sm:$0xff]
        %v544 = vld [vmem:[#allocation4 + $0xa78] sm:$0xff]
        %v545 = vld [vmem:[#allocation4 + $0xa80] sm:$0xff]
        %v546 = vld [vmem:[#allocation4 + $0xa88] sm:$0xff]
        %v547 = vld [vmem:[#allocation4 + $0xa90] sm:$0xff]
        %v548 = vld [vmem:[#allocation4 + $0xa98] sm:$0xff]
        %v549 = vld [vmem:[#allocation4 + $0xaa0] sm:$0xff]
        %v550 = vld [vmem:[#allocation4 + $0xaa8] sm:$0xff]
        %v551 = vld [vmem:[#allocation4 + $0xab0] sm:$0xff]
        %v552 = vld [vmem:[#allocation4 + $0xab8] sm:$0xff]
        %v553 = vld [vmem:[#allocation4 + $0xac0] sm:$0xff]
        %v554 = vld [vmem:[#allocation4 + $0xac8] sm:$0xff]
        %v555 = vld [vmem:[#allocation4 + $0xad0] sm:$0xff]
        %v556 = vld [vmem:[#allocation4 + $0xad8] sm:$0xff]
        %v557 = vld [vmem:[#allocation4 + $0xae0] sm:$0xff]
        %v558 = vld [vmem:[#allocation4 + $0xae8] sm:$0xff]
        %v559 = vld [vmem:[#allocation4 + $0xaf0] sm:$0xff]
        %v560 = vld [vmem:[#allocation4 + $0xaf8] sm:$0xff]
        %v561 = vld [vmem:[#allocation4 + $0xb00] sm:$0xff]
        %v562 = vld [vmem:[#allocation4 + $0xb08] sm:$0xff]
        %v563 = vld [vmem:[#allocation4 + $0xb10] sm:$0xff]
        %v564 = vld [vmem:[#allocation4 + $0xb18] sm:$0xff]
        %v565 = vld [vmem:[#allocation4 + $0xb20] sm:$0xff]
        %v566 = vld [vmem:[#allocation4 + $0xb28] sm:$0xff]
        %v567 = vld [vmem:[#allocation4 + $0xb30] sm:$0xff]
        %v568 = vld [vmem:[#allocation4 + $0xb38] sm:$0xff]
        %v569 = vld [vmem:[#allocation4 + $0xb40] sm:$0xff]
        %v570 = vld [vmem:[#allocation4 + $0xb48] sm:$0xff]
        %v571 = vld [vmem:[#allocation4 + $0xb50] sm:$0xff]
        %v572 = vld [vmem:[#allocation4 + $0xb58] sm:$0xff]
        %v573 = vld [vmem:[#allocation4 + $0xb60] sm:$0xff]
        %v574 = vld [vmem:[#allocation4 + $0xb68] sm:$0xff]
        %v575 = vld [vmem:[#allocation4 + $0xb70] sm:$0xff]
        %v576 = vld [vmem:[#allocation4 + $0xb78] sm:$0xff]
        %v577 = vld [vmem:[#allocation4 + $0xb80] sm:$0xff]
        %v578 = vld [vmem:[#allocation4 + $0xb88] sm:$0xff]
        %v579 = vld [vmem:[#allocation4 + $0xb90] sm:$0xff]
        %v580 = vld [vmem:[#allocation4 + $0xb98] sm:$0xff]
        %v581 = vld [vmem:[#allocation4 + $0xba0] sm:$0xff]
        %v582 = vld [vmem:[#allocation4 + $0xba8] sm:$0xff]
        %v583 = vld [vmem:[#allocation4 + $0xbb0] sm:$0xff]
        %v584 = vld [vmem:[#allocation4 + $0xbb8] sm:$0xff]
        %v585 = vld [vmem:[#allocation4 + $0xbc0] sm:$0xff]
        %v586 = vld [vmem:[#allocation4 + $0xbc8] sm:$0xff]
        %v587 = vld [vmem:[#allocation4 + $0xbd0] sm:$0xff]
        %v588 = vld [vmem:[#allocation4 + $0xbd8] sm:$0xff]
        %v589 = vld [vmem:[#allocation4 + $0xbe0] sm:$0xff]
        %v590 = vld [vmem:[#allocation4 + $0xbe8] sm:$0xff]
        %v591 = vld [vmem:[#allocation4 + $0xbf0] sm:$0xff]
        %v592 = vld [vmem:[#allocation4 + $0xbf8] sm:$0xff]
        %v593 = vld [vmem:[#allocation4 + $0xc00] sm:$0xff]
        %v594 = vld [vmem:[#allocation4 + $0xc08] sm:$0xff]
        %v595 = vld [vmem:[#allocation4 + $0xc10] sm:$0xff]
        %v596 = vld [vmem:[#allocation4 + $0xc18] sm:$0xff]
        %v597 = vld [vmem:[#allocation4 + $0xc20] sm:$0xff]
        %v598 = vld [vmem:[#allocation4 + $0xc28] sm:$0xff]
        %v599 = vld [vmem:[#allocation4 + $0xc30] sm:$0xff]
        %v600 = vld [vmem:[#allocation4 + $0xc38] sm:$0xff]
        %v601 = vld [vmem:[#allocation4 + $0xc40] sm:$0xff]
        %v602 = vld [vmem:[#allocation4 + $0xc48] sm:$0xff]
        %v603 = vld [vmem:[#allocation4 + $0xc50] sm:$0xff]
        %v604 = vld [vmem:[#allocation4 + $0xc58] sm:$0xff]
        %v605 = vld [vmem:[#allocation4 + $0xc60] sm:$0xff]
        %v606 = vld [vmem:[#allocation4 + $0xc68] sm:$0xff]
        %v607 = vld [vmem:[#allocation4 + $0xc70] sm:$0xff]
        %v608 = vld [vmem:[#allocation4 + $0xc78] sm:$0xff]
        %v609 = vld [vmem:[#allocation4 + $0xc80] sm:$0xff]
        %v610 = vld [vmem:[#allocation4 + $0xc88] sm:$0xff]
        %v611 = vld [vmem:[#allocation4 + $0xc90] sm:$0xff]
        %v612 = vld [vmem:[#allocation4 + $0xc98] sm:$0xff]
        %v613 = vld [vmem:[#allocation4 + $0xca0] sm:$0xff]
        %v614 = vld [vmem:[#allocation4 + $0xca8] sm:$0xff]
        %v615 = vld [vmem:[#allocation4 + $0xcb0] sm:$0xff]
        %v616 = vld [vmem:[#allocation4 + $0xcb8] sm:$0xff]
        %v617 = vld [vmem:[#allocation4 + $0xcc0] sm:$0xff]
        %v618 = vld [vmem:[#allocation4 + $0xcc8] sm:$0xff]
        %v619 = vld [vmem:[#allocation4 + $0xcd0] sm:$0xff]
        %v620 = vld [vmem:[#allocation4 + $0xcd8] sm:$0xff]
        %v621 = vld [vmem:[#allocation4 + $0xce0] sm:$0xff]
        %v622 = vld [vmem:[#allocation4 + $0xce8] sm:$0xff]
        %v623 = vld [vmem:[#allocation4 + $0xcf0] sm:$0xff]
        %v624 = vld [vmem:[#allocation4 + $0xcf8] sm:$0xff]
        %v625 = vld [vmem:[#allocation4 + $0xd00] sm:$0xff]
        %v626 = vld [vmem:[#allocation4 + $0xd08] sm:$0xff]
        %v627 = vld [vmem:[#allocation4 + $0xd10] sm:$0xff]
        %v628 = vld [vmem:[#allocation4 + $0xd18] sm:$0xff]
        %v629 = vld [vmem:[#allocation4 + $0xd20] sm:$0xff]
        %v630 = vld [vmem:[#allocation4 + $0xd28] sm:$0xff]
        %v631 = vld [vmem:[#allocation4 + $0xd30] sm:$0xff]
        %v632 = vld [vmem:[#allocation4 + $0xd38] sm:$0xff]
        %v633 = vld [vmem:[#allocation4 + $0xd40] sm:$0xff]
        %v634 = vld [vmem:[#allocation4 + $0xd48] sm:$0xff]
        %v635 = vld [vmem:[#allocation4 + $0xd50] sm:$0xff]
        %v636 = vld [vmem:[#allocation4 + $0xd58] sm:$0xff]
        %v637 = vld [vmem:[#allocation4 + $0xd60] sm:$0xff]
        %v638 = vld [vmem:[#allocation4 + $0xd68] sm:$0xff]
        %v639 = vld [vmem:[#allocation4 + $0xd70] sm:$0xff]
        %v640 = vld [vmem:[#allocation4 + $0xd78] sm:$0xff]
        %v641 = vld [vmem:[#allocation4 + $0xd80] sm:$0xff]
        %v642 = vld [vmem:[#allocation4 + $0xd88] sm:$0xff]
        %v643 = vld [vmem:[#allocation4 + $0xd90] sm:$0xff]
        %v644 = vld [vmem:[#allocation4 + $0xd98] sm:$0xff]
        %v645 = vld [vmem:[#allocation4 + $0xda0] sm:$0xff]
        %v646 = vld [vmem:[#allocation4 + $0xda8] sm:$0xff]
        %v647 = vld [vmem:[#allocation4 + $0xdb0] sm:$0xff]
        %v648 = vld [vmem:[#allocation4 + $0xdb8] sm:$0xff]
        %v649 = vld [vmem:[#allocation4 + $0xdc0] sm:$0xff]
        %v650 = vld [vmem:[#allocation4 + $0xdc8] sm:$0xff]
        %v651 = vld [vmem:[#allocation4 + $0xdd0] sm:$0xff]
        %v652 = vld [vmem:[#allocation4 + $0xdd8] sm:$0xff]
        %v653 = vld [vmem:[#allocation4 + $0xde0] sm:$0xff]
        %v654 = vld [vmem:[#allocation4 + $0xde8] sm:$0xff]
        %v655 = vld [vmem:[#allocation4 + $0xdf0] sm:$0xff]
        %v656 = vld [vmem:[#allocation4 + $0xdf8] sm:$0xff]
        %v657 = vld [vmem:[#allocation4 + $0xe00] sm:$0xff]
        %v658 = vld [vmem:[#allocation4 + $0xe08] sm:$0xff]
        %v659 = vld [vmem:[#allocation4 + $0xe10] sm:$0xff]
        %v660 = vld [vmem:[#allocation4 + $0xe18] sm:$0xff]
        %v661 = vld [vmem:[#allocation4 + $0xe20] sm:$0xff]
        %v662 = vld [vmem:[#allocation4 + $0xe28] sm:$0xff]
        %v663 = vld [vmem:[#allocation4 + $0xe30] sm:$0xff]
        %v664 = vld [vmem:[#allocation4 + $0xe38] sm:$0xff]
        %v665 = vld [vmem:[#allocation4 + $0xe40] sm:$0xff]
        %v666 = vld [vmem:[#allocation4 + $0xe48] sm:$0xff]
        %v667 = vld [vmem:[#allocation4 + $0xe50] sm:$0xff]
        %v668 = vld [vmem:[#allocation4 + $0xe58] sm:$0xff]
        %v669 = vld [vmem:[#allocation4 + $0xe60] sm:$0xff]
        %v670 = vld [vmem:[#allocation4 + $0xe68] sm:$0xff]
        %v671 = vld [vmem:[#allocation4 + $0xe70] sm:$0xff]
        %v672 = vld [vmem:[#allocation4 + $0xe78] sm:$0xff]
        %v673 = vld [vmem:[#allocation4 + $0xe80] sm:$0xff]
        %v674 = vld [vmem:[#allocation4 + $0xe88] sm:$0xff]
        %v675 = vld [vmem:[#allocation4 + $0xe90] sm:$0xff]
        %v676 = vld [vmem:[#allocation4 + $0xe98] sm:$0xff]
        %v677 = vld [vmem:[#allocation4 + $0xea0] sm:$0xff]
        %v678 = vld [vmem:[#allocation4 + $0xea8] sm:$0xff]
        %v679 = vld [vmem:[#allocation4 + $0xeb0] sm:$0xff]
        %v680 = vld [vmem:[#allocation4 + $0xeb8] sm:$0xff]
        %v681 = vld [vmem:[#allocation4 + $0xec0] sm:$0xff]
        %v682 = vld [vmem:[#allocation4 + $0xec8] sm:$0xff]
        %v683 = vld [vmem:[#allocation4 + $0xed0] sm:$0xff]
        %v684 = vld [vmem:[#allocation4 + $0xed8] sm:$0xff]
        %v685 = vld [vmem:[#allocation4 + $0xee0] sm:$0xff]
        %v686 = vld [vmem:[#allocation4 + $0xee8] sm:$0xff]
        %v687 = vld [vmem:[#allocation4 + $0xef0] sm:$0xff]
        %v688 = vld [vmem:[#allocation4 + $0xef8] sm:$0xff]
        %v689 = vld [vmem:[#allocation4 + $0xf00] sm:$0xff]
        %v690 = vld [vmem:[#allocation4 + $0xf08] sm:$0xff]
        %v691 = vld [vmem:[#allocation4 + $0xf10] sm:$0xff]
        %v692 = vld [vmem:[#allocation4 + $0xf18] sm:$0xff]
        %v693 = vld [vmem:[#allocation4 + $0xf20] sm:$0xff]
        %v694 = vld [vmem:[#allocation4 + $0xf28] sm:$0xff]
        %v695 = vld [vmem:[#allocation4 + $0xf30] sm:$0xff]
        %v696 = vld [vmem:[#allocation4 + $0xf38] sm:$0xff]
        %v697 = vld [vmem:[#allocation4 + $0xf40] sm:$0xff]
        %v698 = vld [vmem:[#allocation4 + $0xf48] sm:$0xff]
        %v699 = vld [vmem:[#allocation4 + $0xf50] sm:$0xff]
        %v700 = vld [vmem:[#allocation4 + $0xf58] sm:$0xff]
        %v701 = vld [vmem:[#allocation4 + $0xf60] sm:$0xff]
        %v702 = vld [vmem:[#allocation4 + $0xf68] sm:$0xff]
        %v703 = vld [vmem:[#allocation4 + $0xf70] sm:$0xff]
        %v704 = vld [vmem:[#allocation4 + $0xf78] sm:$0xff]
        %v705 = vld [vmem:[#allocation4 + $0xf80] sm:$0xff]
        %v706 = vld [vmem:[#allocation4 + $0xf88] sm:$0xff]
        %v707 = vld [vmem:[#allocation4 + $0xf90] sm:$0xff]
        %v708 = vld [vmem:[#allocation4 + $0xf98] sm:$0xff]
        %v709 = vld [vmem:[#allocation4 + $0xfa0] sm:$0xff]
        %v710 = vld [vmem:[#allocation4 + $0xfa8] sm:$0xff]
        %v711 = vld [vmem:[#allocation4 + $0xfb0] sm:$0xff]
        %v712 = vld [vmem:[#allocation4 + $0xfb8] sm:$0xff]
        %v713 = vld [vmem:[#allocation4 + $0xfc0] sm:$0xff]
        %v714 = vld [vmem:[#allocation4 + $0xfc8] sm:$0xff]
        %v715 = vld [vmem:[#allocation4 + $0xfd0] sm:$0xff]
        %v716 = vld [vmem:[#allocation4 + $0xfd8] sm:$0xff]
        %v717 = vld [vmem:[#allocation4 + $0xfe0] sm:$0xff]
        %v718 = vld [vmem:[#allocation4 + $0xfe8] sm:$0xff]
        %v719 = vld [vmem:[#allocation4 + $0xff0] sm:$0xff]
        %v720 = vld [vmem:[#allocation4 + $0xff8] sm:$0xff]
        %v721 = vld [vmem:[#allocation4 + $0x1000] sm:$0xff]
        %v722 = vld [vmem:[#allocation4 + $0x1008] sm:$0xff]
        %v723 = vld [vmem:[#allocation4 + $0x1010] sm:$0xff]
        %v724 = vld [vmem:[#allocation4 + $0x1018] sm:$0xff]
        %v725 = vld [vmem:[#allocation4 + $0x1020] sm:$0xff]
        %v726 = vld [vmem:[#allocation4 + $0x1028] sm:$0xff]
        %v727 = vld [vmem:[#allocation4 + $0x1030] sm:$0xff]
        %v728 = vld [vmem:[#allocation4 + $0x1038] sm:$0xff]
        %v729 = vld [vmem:[#allocation4 + $0x1040] sm:$0xff]
        %v730 = vld [vmem:[#allocation4 + $0x1048] sm:$0xff]
        %v731 = vld [vmem:[#allocation4 + $0x1050] sm:$0xff]
        %v732 = vld [vmem:[#allocation4 + $0x1058] sm:$0xff]
        %v733 = vld [vmem:[#allocation4 + $0x1060] sm:$0xff]
        %v734 = vld [vmem:[#allocation4 + $0x1068] sm:$0xff]
        %v735 = vld [vmem:[#allocation4 + $0x1070] sm:$0xff]
        %v736 = vld [vmem:[#allocation4 + $0x1078] sm:$0xff]
        %v737 = vld [vmem:[#allocation4 + $0x1080] sm:$0xff]
        %v738 = vld [vmem:[#allocation4 + $0x1088] sm:$0xff]
        %v739 = vld [vmem:[#allocation4 + $0x1090] sm:$0xff]
        %v740 = vld [vmem:[#allocation4 + $0x1098] sm:$0xff]
        %v741 = vld [vmem:[#allocation4 + $0x10a0] sm:$0xff]
        %v742 = vld [vmem:[#allocation4 + $0x10a8] sm:$0xff]
        %v743 = vld [vmem:[#allocation4 + $0x10b0] sm:$0xff]
        %v744 = vld [vmem:[#allocation4 + $0x10b8] sm:$0xff]
        %v745 = vld [vmem:[#allocation4 + $0x10c0] sm:$0xff]
        %v746 = vld [vmem:[#allocation4 + $0x10c8] sm:$0xff]
        %v747 = vld [vmem:[#allocation4 + $0x10d0] sm:$0xff]
        %v748 = vld [vmem:[#allocation4 + $0x10d8] sm:$0xff]
        %v749 = vld [vmem:[#allocation4 + $0x10e0] sm:$0xff]
        %v750 = vld [vmem:[#allocation4 + $0x10e8] sm:$0xff]
        %v751 = vld [vmem:[#allocation4 + $0x10f0] sm:$0xff]
        %v752 = vld [vmem:[#allocation4 + $0x10f8] sm:$0xff]
        %v753 = vld [vmem:[#allocation4 + $0x1100] sm:$0xff]
        %v754 = vld [vmem:[#allocation4 + $0x1108] sm:$0xff]
        %v755 = vld [vmem:[#allocation4 + $0x1110] sm:$0xff]
        %v756 = vld [vmem:[#allocation4 + $0x1118] sm:$0xff]
        %v757 = vld [vmem:[#allocation4 + $0x1120] sm:$0xff]
        %v758 = vld [vmem:[#allocation4 + $0x1128] sm:$0xff]
        %v759 = vld [vmem:[#allocation4 + $0x1130] sm:$0xff]
        %v760 = vld [vmem:[#allocation4 + $0x1138] sm:$0xff]
        %v761 = vld [vmem:[#allocation4 + $0x1140] sm:$0xff]
        %v762 = vld [vmem:[#allocation4 + $0x1148] sm:$0xff]
        %v763 = vld [vmem:[#allocation4 + $0x1150] sm:$0xff]
        %v764 = vld [vmem:[#allocation4 + $0x1158] sm:$0xff]
        %v765 = vld [vmem:[#allocation4 + $0x1160] sm:$0xff]
        %v766 = vld [vmem:[#allocation4 + $0x1168] sm:$0xff]
        %v767 = vld [vmem:[#allocation4 + $0x1170] sm:$0xff]
        %v768 = vld [vmem:[#allocation4 + $0x1178] sm:$0xff]
        %v769 = vld [vmem:[#allocation4 + $0x1180] sm:$0xff]
        %v770 = vld [vmem:[#allocation4 + $0x1188] sm:$0xff]
        %v771 = vld [vmem:[#allocation4 + $0x1190] sm:$0xff]
        %v772 = vld [vmem:[#allocation4 + $0x1198] sm:$0xff]
        %v773 = vld [vmem:[#allocation4 + $0x11a0] sm:$0xff]
        %v774 = vld [vmem:[#allocation4 + $0x11a8] sm:$0xff]
        %v775 = vld [vmem:[#allocation4 + $0x11b0] sm:$0xff]
        %v776 = vld [vmem:[#allocation4 + $0x11b8] sm:$0xff]
        %v777 = vld [vmem:[#allocation4 + $0x11c0] sm:$0xff]
        %v778 = vld [vmem:[#allocation4 + $0x11c8] sm:$0xff]
        %v779 = vld [vmem:[#allocation4 + $0x11d0] sm:$0xff]
        %v780 = vld [vmem:[#allocation4 + $0x11d8] sm:$0xff]
        %v781 = vld [vmem:[#allocation4 + $0x11e0] sm:$0xff]
        %v782 = vld [vmem:[#allocation4 + $0x11e8] sm:$0xff]
        %v783 = vld [vmem:[#allocation4 + $0x11f0] sm:$0xff]
        %v784 = vld [vmem:[#allocation4 + $0x11f8] sm:$0xff]
        %vm785 = vcmask 523264
        %v787 = vsel %vm785, %v203, 0
        %v790 = vsel %vm785, %v208, 0
        %792 = vmatprep.subr.mxu0 %v330
        %793 = vmatpush1.msra.mxu0 %v329
        %794 = vmatprep.subr.mxu0 %v322
        %795 = vmatpush1.msra.mxu0 %v321
        %796 = vmatprep.subr.mxu0 %v314
        %797 = vmatpush1.msra.mxu0 %v313
        %798 = vmatprep.subr.mxu0 %v306
        %799 = vmatpush1.msra.mxu0 %v305
        %800 = vmatprep.subr.mxu0 %v298
        %801 = vmatpush1.msra.mxu0 %v297
        %802 = vmatprep.subr.mxu0 %v290
        %803 = vmatpush1.msra.mxu0 %v289
        %804 = vmatprep.subr.mxu0 %v282
        %805 = vmatpush1.msra.mxu0 %v281
        %806 = vmatprep.subr.mxu0 %v274
        %807 = vmatpush1.msra.mxu0 %v273
        %808 = vmatprep.subr.mxu0 %v266
        %809 = vmatpush1.msra.mxu0 %v265
        %810 = vmatprep.subr.mxu0 %v258
        %811 = vmatpush1.msra.mxu0 %v257
        %812 = vmatprep.subr.mxu0 %v250
        %813 = vmatpush1.msra.mxu0 %v249
        %814 = vmatprep.subr.mxu0 %v242
        %815 = vmatpush1.msra.mxu0 %v241
        %816 = vmatprep.subr.mxu0 %v234
        %817 = vmatpush1.msra.mxu0 %v233
        %818 = vmatprep.subr.mxu0 %v226
        %819 = vmatpush1.msra.mxu0 %v225
        %820 = vmatprep.subr.mxu0 %v218
        %821 = vmatpush1.msra.mxu0 %v217
        %822 = vmatprep.subr.mxu0 %v210
        %823 = vmatpush1.msra.mxu0 %v209
        %824 = vmatprep.subr.mxu0 %v458
        %825 = vmatpush2.msra.mxu0 %v457
        %826 = vmatprep.subr.mxu0 %v450
        %827 = vmatpush2.msra.mxu0 %v449
        %828 = vmatprep.subr.mxu0 %v442
        %829 = vmatpush2.msra.mxu0 %v441
        %830 = vmatprep.subr.mxu0 %v434
        %831 = vmatpush2.msra.mxu0 %v433
        %832 = vmatprep.subr.mxu0 %v426
        %833 = vmatpush2.msra.mxu0 %v425
        %834 = vmatprep.subr.mxu0 %v418
        %835 = vmatpush2.msra.mxu0 %v417
        %836 = vmatprep.subr.mxu0 %v410
        %837 = vmatpush2.msra.mxu0 %v409
        %838 = vmatprep.subr.mxu0 %v402
        %839 = vmatpush2.msra.mxu0 %v401
        %840 = vmatprep.subr.mxu0 %v394
        %841 = vmatpush2.msra.mxu0 %v393
        %842 = vmatprep.subr.mxu0 %v386
        %843 = vmatpush2.msra.mxu0 %v385
        %844 = vmatprep.subr.mxu0 %v378
        %845 = vmatpush2.msra.mxu0 %v377
        %846 = vmatprep.subr.mxu0 %v370
        %847 = vmatpush2.msra.mxu0 %v369
        %848 = vmatprep.subr.mxu0 %v362
        %849 = vmatpush2.msra.mxu0 %v361
        %850 = vmatprep.subr.mxu0 %v354
        %851 = vmatpush2.msra.mxu0 %v353
        %852 = vmatprep.subr.mxu0 %v346
        %853 = vmatpush2.msra.mxu0 %v345
        %854 = vmatprep.subr.mxu0 %v338
        %855 = vmatpush2.msra.mxu0 %v337
        %856 = vmatprep.mubr.f32.mxu0 %v200
        %857 = vmatmul.mubr.f32.gmra.mxu0 %v199
        %v858 = vpop.f32.mrf.mxu0
        %v859 = vadd.f32 0.0, %v858
        %v860 = vpop.f32.mrf.mxu0
        %v861 = vadd.f32 0.0, %v860
        %862 = vmatprep.mubr.f32.mxu0 %v205
        %863 = vmatmul.mubr.f32.gmra.mxu0 %v204
        %v864 = vpop.f32.mrf.mxu0
        %v865 = vadd.f32 0.0, %v864
        %v866 = vpop.f32.mrf.mxu0
        %v867 = vadd.f32 0.0, %v866
        %868 = vdwg.mxu0
        %869 = vmatprep.subr.mxu0 %v586
        %870 = vmatpush1.msra.mxu0 %v585
        %871 = vmatprep.subr.mxu0 %v578
        %872 = vmatpush1.msra.mxu0 %v577
        %873 = vmatprep.subr.mxu0 %v570
        %874 = vmatpush1.msra.mxu0 %v569
        %875 = vmatprep.subr.mxu0 %v562
        %876 = vmatpush1.msra.mxu0 %v561
        %877 = vmatprep.subr.mxu0 %v554
        %878 = vmatpush1.msra.mxu0 %v553
        %879 = vmatprep.subr.mxu0 %v546
        %880 = vmatpush1.msra.mxu0 %v545
        %881 = vmatprep.subr.mxu0 %v538
        %882 = vmatpush1.msra.mxu0 %v537
        %883 = vmatprep.subr.mxu0 %v530
        %884 = vmatpush1.msra.mxu0 %v529
        %885 = vmatprep.subr.mxu0 %v522
        %886 = vmatpush1.msra.mxu0 %v521
        %887 = vmatprep.subr.mxu0 %v514
        %888 = vmatpush1.msra.mxu0 %v513
        %889 = vmatprep.subr.mxu0 %v506
        %890 = vmatpush1.msra.mxu0 %v505
        %891 = vmatprep.subr.mxu0 %v498
        %892 = vmatpush1.msra.mxu0 %v497
        %893 = vmatprep.subr.mxu0 %v490
        %894 = vmatpush1.msra.mxu0 %v489
        %895 = vmatprep.subr.mxu0 %v482
        %896 = vmatpush1.msra.mxu0 %v481
        %897 = vmatprep.subr.mxu0 %v474
        %898 = vmatpush1.msra.mxu0 %v473
        %899 = vmatprep.subr.mxu0 %v466
        %900 = vmatpush1.msra.mxu0 %v465
        %901 = vmatprep.subr.mxu0 %v714
        %902 = vmatpush2.msra.mxu0 %v713
        %903 = vmatprep.subr.mxu0 %v706
        %904 = vmatpush2.msra.mxu0 %v705
        %905 = vmatprep.subr.mxu0 %v698
        %906 = vmatpush2.msra.mxu0 %v697
        %907 = vmatprep.subr.mxu0 %v690
        %908 = vmatpush2.msra.mxu0 %v689
        %909 = vmatprep.subr.mxu0 %v682
        %910 = vmatpush2.msra.mxu0 %v681
        %911 = vmatprep.subr.mxu0 %v674
        %912 = vmatpush2.msra.mxu0 %v673
        %913 = vmatprep.subr.mxu0 %v666
        %914 = vmatpush2.msra.mxu0 %v665
        %915 = vmatprep.subr.mxu0 %v658
        %916 = vmatpush2.msra.mxu0 %v657
        %917 = vmatprep.subr.mxu0 %v650
        %918 = vmatpush2.msra.mxu0 %v649
        %919 = vmatprep.subr.mxu0 %v642
        %920 = vmatpush2.msra.mxu0 %v641
        %921 = vmatprep.subr.mxu0 %v634
        %922 = vmatpush2.msra.mxu0 %v633
        %923 = vmatprep.subr.mxu0 %v626
        %924 = vmatpush2.msra.mxu0 %v625
        %925 = vmatprep.subr.mxu0 %v618
        %926 = vmatpush2.msra.mxu0 %v617
        %927 = vmatprep.subr.mxu0 %v610
        %928 = vmatpush2.msra.mxu0 %v609
        %929 = vmatprep.subr.mxu0 %v602
        %930 = vmatpush2.msra.mxu0 %v601
        %931 = vmatprep.subr.mxu0 %v594
        %932 = vmatpush2.msra.mxu0 %v593
        %933 = vmatprep.mubr.f32.mxu0 %v202
        %934 = vmatmul.mubr.f32.gmra.mxu0 %v201
        %v935 = vpop.f32.mrf.mxu0
        %v936 = vadd.f32 %v859, %v935
        %v937 = vpop.f32.mrf.mxu0
        %v938 = vadd.f32 %v861, %v937
        %939 = vmatprep.mubr.f32.mxu0 %v207
        %940 = vmatmul.mubr.f32.gmra.mxu0 %v206
        %v941 = vpop.f32.mrf.mxu0
        %v942 = vadd.f32 %v865, %v941
        %v943 = vpop.f32.mrf.mxu0
        %v944 = vadd.f32 %v867, %v943
        %945 = vdwg.mxu0
        %946 = vmatprep.subr.mxu0 0.0
        %947 = vmatpush1.msra.mxu0 0.0
        %948 = vmatprep.subr.mxu0 0.0
        %949 = vmatpush1.msra.mxu0 0.0
        %950 = vmatprep.subr.mxu0 0.0
        %951 = vmatpush1.msra.mxu0 0.0
        %952 = vmatprep.subr.mxu0 0.0
        %953 = vmatpush1.msra.mxu0 0.0
        %954 = vmatprep.subr.mxu0 0.0
        %955 = vmatpush1.msra.mxu0 0.0
        %956 = vmatprep.subr.mxu0 0.0
        %957 = vmatpush1.msra.mxu0 0.0
        %958 = vmatprep.subr.mxu0 0.0
        %959 = vmatpush1.msra.mxu0 0.0
        %960 = vmatprep.subr.mxu0 0.0
        %961 = vmatpush1.msra.mxu0 0.0
        %962 = vmatprep.subr.mxu0 %v778
        %963 = vmatpush1.msra.mxu0 %v777
        %964 = vmatprep.subr.mxu0 %v770
        %965 = vmatpush1.msra.mxu0 %v769
        %966 = vmatprep.subr.mxu0 %v762
        %967 = vmatpush1.msra.mxu0 %v761
        %968 = vmatprep.subr.mxu0 %v754
        %969 = vmatpush1.msra.mxu0 %v753
        %970 = vmatprep.subr.mxu0 %v746
        %971 = vmatpush1.msra.mxu0 %v745
        %972 = vmatprep.subr.mxu0 %v738
        %973 = vmatpush1.msra.mxu0 %v737
        %974 = vmatprep.subr.mxu0 %v730
        %975 = vmatpush1.msra.mxu0 %v729
        %976 = vmatprep.subr.mxu0 %v722
        %977 = vmatpush1.msra.mxu0 %v721
        %978 = vmatprep.subr.mxu0 0.0
        %979 = vmatpush2.msra.mxu0 0.0
        %980 = vmatprep.subr.mxu0 0.0
        %981 = vmatpush2.msra.mxu0 0.0
        %982 = vmatprep.subr.mxu0 0.0
        %983 = vmatpush2.msra.mxu0 0.0
        %984 = vmatprep.subr.mxu0 0.0
        %985 = vmatpush2.msra.mxu0 0.0
        %986 = vmatprep.subr.mxu0 0.0
        %987 = vmatpush2.msra.mxu0 0.0
        %988 = vmatprep.subr.mxu0 0.0
        %989 = vmatpush2.msra.mxu0 0.0
        %990 = vmatprep.subr.mxu0 0.0
        %991 = vmatpush2.msra.mxu0 0.0
        %992 = vmatprep.subr.mxu0 0.0
        %993 = vmatpush2.msra.mxu0 0.0
        %994 = vmatprep.subr.mxu0 0.0
        %995 = vmatpush2.msra.mxu0 0.0
        %996 = vmatprep.subr.mxu0 0.0
        %997 = vmatpush2.msra.mxu0 0.0
        %998 = vmatprep.subr.mxu0 0.0
        %999 = vmatpush2.msra.mxu0 0.0
        %1000 = vmatprep.subr.mxu0 0.0
        %1001 = vmatpush2.msra.mxu0 0.0
        %1002 = vmatprep.subr.mxu0 0.0
        %1003 = vmatpush2.msra.mxu0 0.0
        %1004 = vmatprep.subr.mxu0 0.0
        %1005 = vmatpush2.msra.mxu0 0.0
        %1006 = vmatprep.subr.mxu0 0.0
        %1007 = vmatpush2.msra.mxu0 0.0
        %1008 = vmatprep.subr.mxu0 0.0
        %1009 = vmatpush2.msra.mxu0 0.0
        %1010 = vmatprep.mubr.f32.mxu0 0.0
        %1011 = vmatmul.mubr.f32.gmra.mxu0 %v787
        %v1012 = vpop.f32.mrf.mxu0
        %v1013 = vadd.f32 %v936, %v1012
        %v1014 = vpop.f32.mrf.mxu0
        %v1015 = vadd.f32 %v938, %v1014
        %1016 = vmatprep.mubr.f32.mxu0 0.0
        %1017 = vmatmul.mubr.f32.gmra.mxu0 %v790
        %v1018 = vpop.f32.mrf.mxu0
        %v1019 = vadd.f32 %v942, %v1018
        %v1020 = vpop.f32.mrf.mxu0
        %v1021 = vadd.f32 %v944, %v1020
        %1022 = vdwg.mxu0
        %1023 = vmatprep.subr.mxu0 %v332
        %1024 = vmatpush1.msra.mxu0 %v331
        %1025 = vmatprep.subr.mxu0 %v324
        %1026 = vmatpush1.msra.mxu0 %v323
        %1027 = vmatprep.subr.mxu0 %v316
        %1028 = vmatpush1.msra.mxu0 %v315
        %1029 = vmatprep.subr.mxu0 %v308
        %1030 = vmatpush1.msra.mxu0 %v307
        %1031 = vmatprep.subr.mxu0 %v300
        %1032 = vmatpush1.msra.mxu0 %v299
        %1033 = vmatprep.subr.mxu0 %v292
        %1034 = vmatpush1.msra.mxu0 %v291
        %1035 = vmatprep.subr.mxu0 %v284
        %1036 = vmatpush1.msra.mxu0 %v283
        %1037 = vmatprep.subr.mxu0 %v276
        %1038 = vmatpush1.msra.mxu0 %v275
        %1039 = vmatprep.subr.mxu0 %v268
        %1040 = vmatpush1.msra.mxu0 %v267
        %1041 = vmatprep.subr.mxu0 %v260
        %1042 = vmatpush1.msra.mxu0 %v259
        %1043 = vmatprep.subr.mxu0 %v252
        %1044 = vmatpush1.msra.mxu0 %v251
        %1045 = vmatprep.subr.mxu0 %v244
        %1046 = vmatpush1.msra.mxu0 %v243
        %1047 = vmatprep.subr.mxu0 %v236
        %1048 = vmatpush1.msra.mxu0 %v235
        %1049 = vmatprep.subr.mxu0 %v228
        %1050 = vmatpush1.msra.mxu0 %v227
        %1051 = vmatprep.subr.mxu0 %v220
        %1052 = vmatpush1.msra.mxu0 %v219
        %1053 = vmatprep.subr.mxu0 %v212
        %1054 = vmatpush1.msra.mxu0 %v211
        %1055 = vmatprep.subr.mxu0 %v460
        %1056 = vmatpush2.msra.mxu0 %v459
        %1057 = vmatprep.subr.mxu0 %v452
        %1058 = vmatpush2.msra.mxu0 %v451
        %1059 = vmatprep.subr.mxu0 %v444
        %1060 = vmatpush2.msra.mxu0 %v443
        %1061 = vmatprep.subr.mxu0 %v436
        %1062 = vmatpush2.msra.mxu0 %v435
        %1063 = vmatprep.subr.mxu0 %v428
        %1064 = vmatpush2.msra.mxu0 %v427
        %1065 = vmatprep.subr.mxu0 %v420
        %1066 = vmatpush2.msra.mxu0 %v419
        %1067 = vmatprep.subr.mxu0 %v412
        %1068 = vmatpush2.msra.mxu0 %v411
        %1069 = vmatprep.subr.mxu0 %v404
        %1070 = vmatpush2.msra.mxu0 %v403
        %1071 = vmatprep.subr.mxu0 %v396
        %1072 = vmatpush2.msra.mxu0 %v395
        %1073 = vmatprep.subr.mxu0 %v388
        %1074 = vmatpush2.msra.mxu0 %v387
        %1075 = vmatprep.subr.mxu0 %v380
        %1076 = vmatpush2.msra.mxu0 %v379
        %1077 = vmatprep.subr.mxu0 %v372
        %1078 = vmatpush2.msra.mxu0 %v371
        %1079 = vmatprep.subr.mxu0 %v364
        %1080 = vmatpush2.msra.mxu0 %v363
        %1081 = vmatprep.subr.mxu0 %v356
        %1082 = vmatpush2.msra.mxu0 %v355
        %1083 = vmatprep.subr.mxu0 %v348
        %1084 = vmatpush2.msra.mxu0 %v347
        %1085 = vmatprep.subr.mxu0 %v340
        %1086 = vmatpush2.msra.mxu0 %v339
        %1087 = vmatprep.mubr.f32.mxu0 %v200
        %1088 = vmatmul.mubr.f32.gmra.mxu0 %v199
        %v1089 = vpop.f32.mrf.mxu0
        %v1090 = vadd.f32 0.0, %v1089
        %v1091 = vpop.f32.mrf.mxu0
        %v1092 = vadd.f32 0.0, %v1091
        %1093 = vmatprep.mubr.f32.mxu0 %v205
        %1094 = vmatmul.mubr.f32.gmra.mxu0 %v204
        %v1095 = vpop.f32.mrf.mxu0
        %v1096 = vadd.f32 0.0, %v1095
        %v1097 = vpop.f32.mrf.mxu0
        %v1098 = vadd.f32 0.0, %v1097
        %1099 = vdwg.mxu0
        %1100 = vmatprep.subr.mxu0 %v588
        %1101 = vmatpush1.msra.mxu0 %v587
        %1102 = vmatprep.subr.mxu0 %v580
        %1103 = vmatpush1.msra.mxu0 %v579
        %1104 = vmatprep.subr.mxu0 %v572
        %1105 = vmatpush1.msra.mxu0 %v571
        %1106 = vmatprep.subr.mxu0 %v564
        %1107 = vmatpush1.msra.mxu0 %v563
        %1108 = vmatprep.subr.mxu0 %v556
        %1109 = vmatpush1.msra.mxu0 %v555
        %1110 = vmatprep.subr.mxu0 %v548
        %1111 = vmatpush1.msra.mxu0 %v547
        %1112 = vmatprep.subr.mxu0 %v540
        %1113 = vmatpush1.msra.mxu0 %v539
        %1114 = vmatprep.subr.mxu0 %v532
        %1115 = vmatpush1.msra.mxu0 %v531
        %1116 = vmatprep.subr.mxu0 %v524
        %1117 = vmatpush1.msra.mxu0 %v523
        %1118 = vmatprep.subr.mxu0 %v516
        %1119 = vmatpush1.msra.mxu0 %v515
        %1120 = vmatprep.subr.mxu0 %v508
        %1121 = vmatpush1.msra.mxu0 %v507
        %1122 = vmatprep.subr.mxu0 %v500
        %1123 = vmatpush1.msra.mxu0 %v499
        %1124 = vmatprep.subr.mxu0 %v492
        %1125 = vmatpush1.msra.mxu0 %v491
        %1126 = vmatprep.subr.mxu0 %v484
        %1127 = vmatpush1.msra.mxu0 %v483
        %1128 = vmatprep.subr.mxu0 %v476
        %1129 = vmatpush1.msra.mxu0 %v475
        %1130 = vmatprep.subr.mxu0 %v468
        %1131 = vmatpush1.msra.mxu0 %v467
        %1132 = vmatprep.subr.mxu0 %v716
        %1133 = vmatpush2.msra.mxu0 %v715
        %1134 = vmatprep.subr.mxu0 %v708
        %1135 = vmatpush2.msra.mxu0 %v707
        %1136 = vmatprep.subr.mxu0 %v700
        %1137 = vmatpush2.msra.mxu0 %v699
        %1138 = vmatprep.subr.mxu0 %v692
        %1139 = vmatpush2.msra.mxu0 %v691
        %1140 = vmatprep.subr.mxu0 %v684
        %1141 = vmatpush2.msra.mxu0 %v683
        %1142 = vmatprep.subr.mxu0 %v676
        %1143 = vmatpush2.msra.mxu0 %v675
        %1144 = vmatprep.subr.mxu0 %v668
        %1145 = vmatpush2.msra.mxu0 %v667
        %1146 = vmatprep.subr.mxu0 %v660
        %1147 = vmatpush2.msra.mxu0 %v659
        %1148 = vmatprep.subr.mxu0 %v652
        %1149 = vmatpush2.msra.mxu0 %v651
        %1150 = vmatprep.subr.mxu0 %v644
        %1151 = vmatpush2.msra.mxu0 %v643
        %1152 = vmatprep.subr.mxu0 %v636
        %1153 = vmatpush2.msra.mxu0 %v635
        %1154 = vmatprep.subr.mxu0 %v628
        %1155 = vmatpush2.msra.mxu0 %v627
        %1156 = vmatprep.subr.mxu0 %v620
        %1157 = vmatpush2.msra.mxu0 %v619
        %1158 = vmatprep.subr.mxu0 %v612
        %1159 = vmatpush2.msra.mxu0 %v611
        %1160 = vmatprep.subr.mxu0 %v604
        %1161 = vmatpush2.msra.mxu0 %v603
        %1162 = vmatprep.subr.mxu0 %v596
        %1163 = vmatpush2.msra.mxu0 %v595
        %1164 = vmatprep.mubr.f32.mxu0 %v202
        %1165 = vmatmul.mubr.f32.gmra.mxu0 %v201
        %v1166 = vpop.f32.mrf.mxu0
        %v1167 = vadd.f32 %v1090, %v1166
        %v1168 = vpop.f32.mrf.mxu0
        %v1169 = vadd.f32 %v1092, %v1168
        %1170 = vmatprep.mubr.f32.mxu0 %v207
        %1171 = vmatmul.mubr.f32.gmra.mxu0 %v206
        %v1172 = vpop.f32.mrf.mxu0
        %v1173 = vadd.f32 %v1096, %v1172
        %v1174 = vpop.f32.mrf.mxu0
        %v1175 = vadd.f32 %v1098, %v1174
        %1176 = vdwg.mxu0
        %1177 = vmatprep.subr.mxu0 0.0
        %1178 = vmatpush1.msra.mxu0 0.0
        %1179 = vmatprep.subr.mxu0 0.0
        %1180 = vmatpush1.msra.mxu0 0.0
        %1181 = vmatprep.subr.mxu0 0.0
        %1182 = vmatpush1.msra.mxu0 0.0
        %1183 = vmatprep.subr.mxu0 0.0
        %1184 = vmatpush1.msra.mxu0 0.0
        %1185 = vmatprep.subr.mxu0 0.0
        %1186 = vmatpush1.msra.mxu0 0.0
        %1187 = vmatprep.subr.mxu0 0.0
        %1188 = vmatpush1.msra.mxu0 0.0
        %1189 = vmatprep.subr.mxu0 0.0
        %1190 = vmatpush1.msra.mxu0 0.0
        %1191 = vmatprep.subr.mxu0 0.0
        %1192 = vmatpush1.msra.mxu0 0.0
        %1193 = vmatprep.subr.mxu0 %v780
        %1194 = vmatpush1.msra.mxu0 %v779
        %1195 = vmatprep.subr.mxu0 %v772
        %1196 = vmatpush1.msra.mxu0 %v771
        %1197 = vmatprep.subr.mxu0 %v764
        %1198 = vmatpush1.msra.mxu0 %v763
        %1199 = vmatprep.subr.mxu0 %v756
        %1200 = vmatpush1.msra.mxu0 %v755
        %1201 = vmatprep.subr.mxu0 %v748
        %1202 = vmatpush1.msra.mxu0 %v747
        %1203 = vmatprep.subr.mxu0 %v740
        %1204 = vmatpush1.msra.mxu0 %v739
        %1205 = vmatprep.subr.mxu0 %v732
        %1206 = vmatpush1.msra.mxu0 %v731
        %1207 = vmatprep.subr.mxu0 %v724
        %1208 = vmatpush1.msra.mxu0 %v723
        %1209 = vmatprep.subr.mxu0 0.0
        %1210 = vmatpush2.msra.mxu0 0.0
        %1211 = vmatprep.subr.mxu0 0.0
        %1212 = vmatpush2.msra.mxu0 0.0
        %1213 = vmatprep.subr.mxu0 0.0
        %1214 = vmatpush2.msra.mxu0 0.0
        %1215 = vmatprep.subr.mxu0 0.0
        %1216 = vmatpush2.msra.mxu0 0.0
        %1217 = vmatprep.subr.mxu0 0.0
        %1218 = vmatpush2.msra.mxu0 0.0
        %1219 = vmatprep.subr.mxu0 0.0
        %1220 = vmatpush2.msra.mxu0 0.0
        %1221 = vmatprep.subr.mxu0 0.0
        %1222 = vmatpush2.msra.mxu0 0.0
        %1223 = vmatprep.subr.mxu0 0.0
        %1224 = vmatpush2.msra.mxu0 0.0
        %1225 = vmatprep.subr.mxu0 0.0
        %1226 = vmatpush2.msra.mxu0 0.0
        %1227 = vmatprep.subr.mxu0 0.0
        %1228 = vmatpush2.msra.mxu0 0.0
        %1229 = vmatprep.subr.mxu0 0.0
        %1230 = vmatpush2.msra.mxu0 0.0
        %1231 = vmatprep.subr.mxu0 0.0
        %1232 = vmatpush2.msra.mxu0 0.0
        %1233 = vmatprep.subr.mxu0 0.0
        %1234 = vmatpush2.msra.mxu0 0.0
        %1235 = vmatprep.subr.mxu0 0.0
        %1236 = vmatpush2.msra.mxu0 0.0
        %1237 = vmatprep.subr.mxu0 0.0
        %1238 = vmatpush2.msra.mxu0 0.0
        %1239 = vmatprep.subr.mxu0 0.0
        %1240 = vmatpush2.msra.mxu0 0.0
        %1241 = vmatprep.mubr.f32.mxu0 0.0
        %1242 = vmatmul.mubr.f32.gmra.mxu0 %v787
        %v1243 = vpop.f32.mrf.mxu0
        %v1244 = vadd.f32 %v1167, %v1243
        %v1245 = vpop.f32.mrf.mxu0
        %v1246 = vadd.f32 %v1169, %v1245
        %1247 = vmatprep.mubr.f32.mxu0 0.0
        %1248 = vmatmul.mubr.f32.gmra.mxu0 %v790
        %v1249 = vpop.f32.mrf.mxu0
        %v1250 = vadd.f32 %v1173, %v1249
        %v1251 = vpop.f32.mrf.mxu0
        %v1252 = vadd.f32 %v1175, %v1251
        %1253 = vdwg.mxu0
        %1254 = vmatprep.subr.mxu0 %v334
        %1255 = vmatpush1.msra.mxu0 %v333
        %1256 = vmatprep.subr.mxu0 %v326
        %1257 = vmatpush1.msra.mxu0 %v325
        %1258 = vmatprep.subr.mxu0 %v318
        %1259 = vmatpush1.msra.mxu0 %v317
        %1260 = vmatprep.subr.mxu0 %v310
        %1261 = vmatpush1.msra.mxu0 %v309
        %1262 = vmatprep.subr.mxu0 %v302
        %1263 = vmatpush1.msra.mxu0 %v301
        %1264 = vmatprep.subr.mxu0 %v294
        %1265 = vmatpush1.msra.mxu0 %v293
        %1266 = vmatprep.subr.mxu0 %v286
        %1267 = vmatpush1.msra.mxu0 %v285
        %1268 = vmatprep.subr.mxu0 %v278
        %1269 = vmatpush1.msra.mxu0 %v277
        %1270 = vmatprep.subr.mxu0 %v270
        %1271 = vmatpush1.msra.mxu0 %v269
        %1272 = vmatprep.subr.mxu0 %v262
        %1273 = vmatpush1.msra.mxu0 %v261
        %1274 = vmatprep.subr.mxu0 %v254
        %1275 = vmatpush1.msra.mxu0 %v253
        %1276 = vmatprep.subr.mxu0 %v246
        %1277 = vmatpush1.msra.mxu0 %v245
        %1278 = vmatprep.subr.mxu0 %v238
        %1279 = vmatpush1.msra.mxu0 %v237
        %1280 = vmatprep.subr.mxu0 %v230
        %1281 = vmatpush1.msra.mxu0 %v229
        %1282 = vmatprep.subr.mxu0 %v222
        %1283 = vmatpush1.msra.mxu0 %v221
        %1284 = vmatprep.subr.mxu0 %v214
        %1285 = vmatpush1.msra.mxu0 %v213
        %1286 = vmatprep.subr.mxu0 %v462
        %1287 = vmatpush2.msra.mxu0 %v461
        %1288 = vmatprep.subr.mxu0 %v454
        %1289 = vmatpush2.msra.mxu0 %v453
        %1290 = vmatprep.subr.mxu0 %v446
        %1291 = vmatpush2.msra.mxu0 %v445
        %1292 = vmatprep.subr.mxu0 %v438
        %1293 = vmatpush2.msra.mxu0 %v437
        %1294 = vmatprep.subr.mxu0 %v430
        %1295 = vmatpush2.msra.mxu0 %v429
        %1296 = vmatprep.subr.mxu0 %v422
        %1297 = vmatpush2.msra.mxu0 %v421
        %1298 = vmatprep.subr.mxu0 %v414
        %1299 = vmatpush2.msra.mxu0 %v413
        %1300 = vmatprep.subr.mxu0 %v406
        %1301 = vmatpush2.msra.mxu0 %v405
        %1302 = vmatprep.subr.mxu0 %v398
        %1303 = vmatpush2.msra.mxu0 %v397
        %1304 = vmatprep.subr.mxu0 %v390
        %1305 = vmatpush2.msra.mxu0 %v389
        %1306 = vmatprep.subr.mxu0 %v382
        %1307 = vmatpush2.msra.mxu0 %v381
        %1308 = vmatprep.subr.mxu0 %v374
        %1309 = vmatpush2.msra.mxu0 %v373
        %1310 = vmatprep.subr.mxu0 %v366
        %1311 = vmatpush2.msra.mxu0 %v365
        %1312 = vmatprep.subr.mxu0 %v358
        %1313 = vmatpush2.msra.mxu0 %v357
        %1314 = vmatprep.subr.mxu0 %v350
        %1315 = vmatpush2.msra.mxu0 %v349
        %1316 = vmatprep.subr.mxu0 %v342
        %1317 = vmatpush2.msra.mxu0 %v341
        %1318 = vmatprep.mubr.f32.mxu0 %v200
        %1319 = vmatmul.mubr.f32.gmra.mxu0 %v199
        %v1320 = vpop.f32.mrf.mxu0
        %v1321 = vadd.f32 0.0, %v1320
        %v1322 = vpop.f32.mrf.mxu0
        %v1323 = vadd.f32 0.0, %v1322
        %1324 = vmatprep.mubr.f32.mxu0 %v205
        %1325 = vmatmul.mubr.f32.gmra.mxu0 %v204
        %v1326 = vpop.f32.mrf.mxu0
        %v1327 = vadd.f32 0.0, %v1326
        %v1328 = vpop.f32.mrf.mxu0
        %v1329 = vadd.f32 0.0, %v1328
        %1330 = vdwg.mxu0
        %1331 = vmatprep.subr.mxu0 %v590
        %1332 = vmatpush1.msra.mxu0 %v589
        %1333 = vmatprep.subr.mxu0 %v582
        %1334 = vmatpush1.msra.mxu0 %v581
        %1335 = vmatprep.subr.mxu0 %v574
        %1336 = vmatpush1.msra.mxu0 %v573
        %1337 = vmatprep.subr.mxu0 %v566
        %1338 = vmatpush1.msra.mxu0 %v565
        %1339 = vmatprep.subr.mxu0 %v558
        %1340 = vmatpush1.msra.mxu0 %v557
        %1341 = vmatprep.subr.mxu0 %v550
        %1342 = vmatpush1.msra.mxu0 %v549
        %1343 = vmatprep.subr.mxu0 %v542
        %1344 = vmatpush1.msra.mxu0 %v541
        %1345 = vmatprep.subr.mxu0 %v534
        %1346 = vmatpush1.msra.mxu0 %v533
        %1347 = vmatprep.subr.mxu0 %v526
        %1348 = vmatpush1.msra.mxu0 %v525
        %1349 = vmatprep.subr.mxu0 %v518
        %1350 = vmatpush1.msra.mxu0 %v517
        %1351 = vmatprep.subr.mxu0 %v510
        %1352 = vmatpush1.msra.mxu0 %v509
        %1353 = vmatprep.subr.mxu0 %v502
        %1354 = vmatpush1.msra.mxu0 %v501
        %1355 = vmatprep.subr.mxu0 %v494
        %1356 = vmatpush1.msra.mxu0 %v493
        %1357 = vmatprep.subr.mxu0 %v486
        %1358 = vmatpush1.msra.mxu0 %v485
        %1359 = vmatprep.subr.mxu0 %v478
        %1360 = vmatpush1.msra.mxu0 %v477
        %1361 = vmatprep.subr.mxu0 %v470
        %1362 = vmatpush1.msra.mxu0 %v469
        %1363 = vmatprep.subr.mxu0 %v718
        %1364 = vmatpush2.msra.mxu0 %v717
        %1365 = vmatprep.subr.mxu0 %v710
        %1366 = vmatpush2.msra.mxu0 %v709
        %1367 = vmatprep.subr.mxu0 %v702
        %1368 = vmatpush2.msra.mxu0 %v701
        %1369 = vmatprep.subr.mxu0 %v694
        %1370 = vmatpush2.msra.mxu0 %v693
        %1371 = vmatprep.subr.mxu0 %v686
        %1372 = vmatpush2.msra.mxu0 %v685
        %1373 = vmatprep.subr.mxu0 %v678
        %1374 = vmatpush2.msra.mxu0 %v677
        %1375 = vmatprep.subr.mxu0 %v670
        %1376 = vmatpush2.msra.mxu0 %v669
        %1377 = vmatprep.subr.mxu0 %v662
        %1378 = vmatpush2.msra.mxu0 %v661
        %1379 = vmatprep.subr.mxu0 %v654
        %1380 = vmatpush2.msra.mxu0 %v653
        %1381 = vmatprep.subr.mxu0 %v646
        %1382 = vmatpush2.msra.mxu0 %v645
        %1383 = vmatprep.subr.mxu0 %v638
        %1384 = vmatpush2.msra.mxu0 %v637
        %1385 = vmatprep.subr.mxu0 %v630
        %1386 = vmatpush2.msra.mxu0 %v629
        %1387 = vmatprep.subr.mxu0 %v622
        %1388 = vmatpush2.msra.mxu0 %v621
        %1389 = vmatprep.subr.mxu0 %v614
        %1390 = vmatpush2.msra.mxu0 %v613
        %1391 = vmatprep.subr.mxu0 %v606
        %1392 = vmatpush2.msra.mxu0 %v605
        %1393 = vmatprep.subr.mxu0 %v598
        %1394 = vmatpush2.msra.mxu0 %v597
        %1395 = vmatprep.mubr.f32.mxu0 %v202
        %1396 = vmatmul.mubr.f32.gmra.mxu0 %v201
        %v1397 = vpop.f32.mrf.mxu0
        %v1398 = vadd.f32 %v1321, %v1397
        %v1399 = vpop.f32.mrf.mxu0
        %v1400 = vadd.f32 %v1323, %v1399
        %1401 = vmatprep.mubr.f32.mxu0 %v207
        %1402 = vmatmul.mubr.f32.gmra.mxu0 %v206
        %v1403 = vpop.f32.mrf.mxu0
        %v1404 = vadd.f32 %v1327, %v1403
        %v1405 = vpop.f32.mrf.mxu0
        %v1406 = vadd.f32 %v1329, %v1405
        %1407 = vdwg.mxu0
        %1408 = vmatprep.subr.mxu0 0.0
        %1409 = vmatpush1.msra.mxu0 0.0
        %1410 = vmatprep.subr.mxu0 0.0
        %1411 = vmatpush1.msra.mxu0 0.0
        %1412 = vmatprep.subr.mxu0 0.0
        %1413 = vmatpush1.msra.mxu0 0.0
        %1414 = vmatprep.subr.mxu0 0.0
        %1415 = vmatpush1.msra.mxu0 0.0
        %1416 = vmatprep.subr.mxu0 0.0
        %1417 = vmatpush1.msra.mxu0 0.0
        %1418 = vmatprep.subr.mxu0 0.0
        %1419 = vmatpush1.msra.mxu0 0.0
        %1420 = vmatprep.subr.mxu0 0.0
        %1421 = vmatpush1.msra.mxu0 0.0
        %1422 = vmatprep.subr.mxu0 0.0
        %1423 = vmatpush1.msra.mxu0 0.0
        %1424 = vmatprep.subr.mxu0 %v782
        %1425 = vmatpush1.msra.mxu0 %v781
        %1426 = vmatprep.subr.mxu0 %v774
        %1427 = vmatpush1.msra.mxu0 %v773
        %1428 = vmatprep.subr.mxu0 %v766
        %1429 = vmatpush1.msra.mxu0 %v765
        %1430 = vmatprep.subr.mxu0 %v758
        %1431 = vmatpush1.msra.mxu0 %v757
        %1432 = vmatprep.subr.mxu0 %v750
        %1433 = vmatpush1.msra.mxu0 %v749
        %1434 = vmatprep.subr.mxu0 %v742
        %1435 = vmatpush1.msra.mxu0 %v741
        %1436 = vmatprep.subr.mxu0 %v734
        %1437 = vmatpush1.msra.mxu0 %v733
        %1438 = vmatprep.subr.mxu0 %v726
        %1439 = vmatpush1.msra.mxu0 %v725
        %1440 = vmatprep.subr.mxu0 0.0
        %1441 = vmatpush2.msra.mxu0 0.0
        %1442 = vmatprep.subr.mxu0 0.0
        %1443 = vmatpush2.msra.mxu0 0.0
        %1444 = vmatprep.subr.mxu0 0.0
        %1445 = vmatpush2.msra.mxu0 0.0
        %1446 = vmatprep.subr.mxu0 0.0
        %1447 = vmatpush2.msra.mxu0 0.0
        %1448 = vmatprep.subr.mxu0 0.0
        %1449 = vmatpush2.msra.mxu0 0.0
        %1450 = vmatprep.subr.mxu0 0.0
        %1451 = vmatpush2.msra.mxu0 0.0
        %1452 = vmatprep.subr.mxu0 0.0
        %1453 = vmatpush2.msra.mxu0 0.0
        %1454 = vmatprep.subr.mxu0 0.0
        %1455 = vmatpush2.msra.mxu0 0.0
        %1456 = vmatprep.subr.mxu0 0.0
        %1457 = vmatpush2.msra.mxu0 0.0
        %1458 = vmatprep.subr.mxu0 0.0
        %1459 = vmatpush2.msra.mxu0 0.0
        %1460 = vmatprep.subr.mxu0 0.0
        %1461 = vmatpush2.msra.mxu0 0.0
        %1462 = vmatprep.subr.mxu0 0.0
        %1463 = vmatpush2.msra.mxu0 0.0
        %1464 = vmatprep.subr.mxu0 0.0
        %1465 = vmatpush2.msra.mxu0 0.0
        %1466 = vmatprep.subr.mxu0 0.0
        %1467 = vmatpush2.msra.mxu0 0.0
        %1468 = vmatprep.subr.mxu0 0.0
        %1469 = vmatpush2.msra.mxu0 0.0
        %1470 = vmatprep.subr.mxu0 0.0
        %1471 = vmatpush2.msra.mxu0 0.0
        %1472 = vmatprep.mubr.f32.mxu0 0.0
        %1473 = vmatmul.mubr.f32.gmra.mxu0 %v787
        %v1474 = vpop.f32.mrf.mxu0
        %v1475 = vadd.f32 %v1398, %v1474
        %v1476 = vpop.f32.mrf.mxu0
        %v1477 = vadd.f32 %v1400, %v1476
        %1478 = vmatprep.mubr.f32.mxu0 0.0
        %1479 = vmatmul.mubr.f32.gmra.mxu0 %v790
        %v1480 = vpop.f32.mrf.mxu0
        %v1481 = vadd.f32 %v1404, %v1480
        %v1482 = vpop.f32.mrf.mxu0
        %v1483 = vadd.f32 %v1406, %v1482
        %1484 = vdwg.mxu0
        %1485 = vmatprep.subr.mxu0 %v336
        %1486 = vmatpush1.msra.mxu0 %v335
        %1487 = vmatprep.subr.mxu0 %v328
        %1488 = vmatpush1.msra.mxu0 %v327
        %1489 = vmatprep.subr.mxu0 %v320
        %1490 = vmatpush1.msra.mxu0 %v319
        %1491 = vmatprep.subr.mxu0 %v312
        %1492 = vmatpush1.msra.mxu0 %v311
        %1493 = vmatprep.subr.mxu0 %v304
        %1494 = vmatpush1.msra.mxu0 %v303
        %1495 = vmatprep.subr.mxu0 %v296
        %1496 = vmatpush1.msra.mxu0 %v295
        %1497 = vmatprep.subr.mxu0 %v288
        %1498 = vmatpush1.msra.mxu0 %v287
        %1499 = vmatprep.subr.mxu0 %v280
        %1500 = vmatpush1.msra.mxu0 %v279
        %1501 = vmatprep.subr.mxu0 %v272
        %1502 = vmatpush1.msra.mxu0 %v271
        %1503 = vmatprep.subr.mxu0 %v264
        %1504 = vmatpush1.msra.mxu0 %v263
        %1505 = vmatprep.subr.mxu0 %v256
        %1506 = vmatpush1.msra.mxu0 %v255
        %1507 = vmatprep.subr.mxu0 %v248
        %1508 = vmatpush1.msra.mxu0 %v247
        %1509 = vmatprep.subr.mxu0 %v240
        %1510 = vmatpush1.msra.mxu0 %v239
        %1511 = vmatprep.subr.mxu0 %v232
        %1512 = vmatpush1.msra.mxu0 %v231
        %1513 = vmatprep.subr.mxu0 %v224
        %1514 = vmatpush1.msra.mxu0 %v223
        %1515 = vmatprep.subr.mxu0 %v216
        %1516 = vmatpush1.msra.mxu0 %v215
        %1517 = vmatprep.subr.mxu0 %v464
        %1518 = vmatpush2.msra.mxu0 %v463
        %1519 = vmatprep.subr.mxu0 %v456
        %1520 = vmatpush2.msra.mxu0 %v455
        %1521 = vmatprep.subr.mxu0 %v448
        %1522 = vmatpush2.msra.mxu0 %v447
        %1523 = vmatprep.subr.mxu0 %v440
        %1524 = vmatpush2.msra.mxu0 %v439
        %1525 = vmatprep.subr.mxu0 %v432
        %1526 = vmatpush2.msra.mxu0 %v431
        %1527 = vmatprep.subr.mxu0 %v424
        %1528 = vmatpush2.msra.mxu0 %v423
        %1529 = vmatprep.subr.mxu0 %v416
        %1530 = vmatpush2.msra.mxu0 %v415
        %1531 = vmatprep.subr.mxu0 %v408
        %1532 = vmatpush2.msra.mxu0 %v407
        %1533 = vmatprep.subr.mxu0 %v400
        %1534 = vmatpush2.msra.mxu0 %v399
        %1535 = vmatprep.subr.mxu0 %v392
        %1536 = vmatpush2.msra.mxu0 %v391
        %1537 = vmatprep.subr.mxu0 %v384
        %1538 = vmatpush2.msra.mxu0 %v383
        %1539 = vmatprep.subr.mxu0 %v376
        %1540 = vmatpush2.msra.mxu0 %v375
        %1541 = vmatprep.subr.mxu0 %v368
        %1542 = vmatpush2.msra.mxu0 %v367
        %1543 = vmatprep.subr.mxu0 %v360
        %1544 = vmatpush2.msra.mxu0 %v359
        %1545 = vmatprep.subr.mxu0 %v352
        %1546 = vmatpush2.msra.mxu0 %v351
        %1547 = vmatprep.subr.mxu0 %v344
        %1548 = vmatpush2.msra.mxu0 %v343
        %1549 = vmatprep.mubr.f32.mxu0 %v200
        %1550 = vmatmul.mubr.f32.gmra.mxu0 %v199
        %v1551 = vpop.f32.mrf.mxu0
        %v1552 = vadd.f32 0.0, %v1551
        %v1553 = vpop.f32.mrf.mxu0
        %v1554 = vadd.f32 0.0, %v1553
        %1555 = vmatprep.mubr.f32.mxu0 %v205
        %1556 = vmatmul.mubr.f32.gmra.mxu0 %v204
        %v1557 = vpop.f32.mrf.mxu0
        %v1558 = vadd.f32 0.0, %v1557
        %v1559 = vpop.f32.mrf.mxu0
        %v1560 = vadd.f32 0.0, %v1559
        %1561 = vdwg.mxu0
        %1562 = vmatprep.subr.mxu0 %v592
        %1563 = vmatpush1.msra.mxu0 %v591
        %1564 = vmatprep.subr.mxu0 %v584
        %1565 = vmatpush1.msra.mxu0 %v583
        %1566 = vmatprep.subr.mxu0 %v576
        %1567 = vmatpush1.msra.mxu0 %v575
        %1568 = vmatprep.subr.mxu0 %v568
        %1569 = vmatpush1.msra.mxu0 %v567
        %1570 = vmatprep.subr.mxu0 %v560
        %1571 = vmatpush1.msra.mxu0 %v559
        %1572 = vmatprep.subr.mxu0 %v552
        %1573 = vmatpush1.msra.mxu0 %v551
        %1574 = vmatprep.subr.mxu0 %v544
        %1575 = vmatpush1.msra.mxu0 %v543
        %1576 = vmatprep.subr.mxu0 %v536
        %1577 = vmatpush1.msra.mxu0 %v535
        %1578 = vmatprep.subr.mxu0 %v528
        %1579 = vmatpush1.msra.mxu0 %v527
        %1580 = vmatprep.subr.mxu0 %v520
        %1581 = vmatpush1.msra.mxu0 %v519
        %1582 = vmatprep.subr.mxu0 %v512
        %1583 = vmatpush1.msra.mxu0 %v511
        %1584 = vmatprep.subr.mxu0 %v504
        %1585 = vmatpush1.msra.mxu0 %v503
        %1586 = vmatprep.subr.mxu0 %v496
        %1587 = vmatpush1.msra.mxu0 %v495
        %1588 = vmatprep.subr.mxu0 %v488
        %1589 = vmatpush1.msra.mxu0 %v487
        %1590 = vmatprep.subr.mxu0 %v480
        %1591 = vmatpush1.msra.mxu0 %v479
        %1592 = vmatprep.subr.mxu0 %v472
        %1593 = vmatpush1.msra.mxu0 %v471
        %1594 = vmatprep.subr.mxu0 %v720
        %1595 = vmatpush2.msra.mxu0 %v719
        %1596 = vmatprep.subr.mxu0 %v712
        %1597 = vmatpush2.msra.mxu0 %v711
        %1598 = vmatprep.subr.mxu0 %v704
        %1599 = vmatpush2.msra.mxu0 %v703
        %1600 = vmatprep.subr.mxu0 %v696
        %1601 = vmatpush2.msra.mxu0 %v695
        %1602 = vmatprep.subr.mxu0 %v688
        %1603 = vmatpush2.msra.mxu0 %v687
        %1604 = vmatprep.subr.mxu0 %v680
        %1605 = vmatpush2.msra.mxu0 %v679
        %1606 = vmatprep.subr.mxu0 %v672
        %1607 = vmatpush2.msra.mxu0 %v671
        %1608 = vmatprep.subr.mxu0 %v664
        %1609 = vmatpush2.msra.mxu0 %v663
        %1610 = vmatprep.subr.mxu0 %v656
        %1611 = vmatpush2.msra.mxu0 %v655
        %1612 = vmatprep.subr.mxu0 %v648
        %1613 = vmatpush2.msra.mxu0 %v647
        %1614 = vmatprep.subr.mxu0 %v640
        %1615 = vmatpush2.msra.mxu0 %v639
        %1616 = vmatprep.subr.mxu0 %v632
        %1617 = vmatpush2.msra.mxu0 %v631
        %1618 = vmatprep.subr.mxu0 %v624
        %1619 = vmatpush2.msra.mxu0 %v623
        %1620 = vmatprep.subr.mxu0 %v616
        %1621 = vmatpush2.msra.mxu0 %v615
        %1622 = vmatprep.subr.mxu0 %v608
        %1623 = vmatpush2.msra.mxu0 %v607
        %1624 = vmatprep.subr.mxu0 %v600
        %1625 = vmatpush2.msra.mxu0 %v599
        %1626 = vmatprep.mubr.f32.mxu0 %v202
        %1627 = vmatmul.mubr.f32.gmra.mxu0 %v201
        %v1628 = vpop.f32.mrf.mxu0
        %v1629 = vadd.f32 %v1552, %v1628
        %v1630 = vpop.f32.mrf.mxu0
        %v1631 = vadd.f32 %v1554, %v1630
        %1632 = vmatprep.mubr.f32.mxu0 %v207
        %1633 = vmatmul.mubr.f32.gmra.mxu0 %v206
        %v1634 = vpop.f32.mrf.mxu0
        %v1635 = vadd.f32 %v1558, %v1634
        %v1636 = vpop.f32.mrf.mxu0
        %v1637 = vadd.f32 %v1560, %v1636
        %1638 = vdwg.mxu0
        %1639 = vmatprep.subr.mxu0 0.0
        %1640 = vmatpush1.msra.mxu0 0.0
        %1641 = vmatprep.subr.mxu0 0.0
        %1642 = vmatpush1.msra.mxu0 0.0
        %1643 = vmatprep.subr.mxu0 0.0
        %1644 = vmatpush1.msra.mxu0 0.0
        %1645 = vmatprep.subr.mxu0 0.0
        %1646 = vmatpush1.msra.mxu0 0.0
        %1647 = vmatprep.subr.mxu0 0.0
        %1648 = vmatpush1.msra.mxu0 0.0
        %1649 = vmatprep.subr.mxu0 0.0
        %1650 = vmatpush1.msra.mxu0 0.0
        %1651 = vmatprep.subr.mxu0 0.0
        %1652 = vmatpush1.msra.mxu0 0.0
        %1653 = vmatprep.subr.mxu0 0.0
        %1654 = vmatpush1.msra.mxu0 0.0
        %1655 = vmatprep.subr.mxu0 %v784
        %1656 = vmatpush1.msra.mxu0 %v783
        %1657 = vmatprep.subr.mxu0 %v776
        %1658 = vmatpush1.msra.mxu0 %v775
        %1659 = vmatprep.subr.mxu0 %v768
        %1660 = vmatpush1.msra.mxu0 %v767
        %1661 = vmatprep.subr.mxu0 %v760
        %1662 = vmatpush1.msra.mxu0 %v759
        %1663 = vmatprep.subr.mxu0 %v752
        %1664 = vmatpush1.msra.mxu0 %v751
        %1665 = vmatprep.subr.mxu0 %v744
        %1666 = vmatpush1.msra.mxu0 %v743
        %1667 = vmatprep.subr.mxu0 %v736
        %1668 = vmatpush1.msra.mxu0 %v735
        %1669 = vmatprep.subr.mxu0 %v728
        %1670 = vmatpush1.msra.mxu0 %v727
        %1671 = vmatprep.subr.mxu0 0.0
        %1672 = vmatpush2.msra.mxu0 0.0
        %1673 = vmatprep.subr.mxu0 0.0
        %1674 = vmatpush2.msra.mxu0 0.0
        %1675 = vmatprep.subr.mxu0 0.0
        %1676 = vmatpush2.msra.mxu0 0.0
        %1677 = vmatprep.subr.mxu0 0.0
        %1678 = vmatpush2.msra.mxu0 0.0
        %1679 = vmatprep.subr.mxu0 0.0
        %1680 = vmatpush2.msra.mxu0 0.0
        %1681 = vmatprep.subr.mxu0 0.0
        %1682 = vmatpush2.msra.mxu0 0.0
        %1683 = vmatprep.subr.mxu0 0.0
        %1684 = vmatpush2.msra.mxu0 0.0
        %1685 = vmatprep.subr.mxu0 0.0
        %1686 = vmatpush2.msra.mxu0 0.0
        %1687 = vmatprep.subr.mxu0 0.0
        %1688 = vmatpush2.msra.mxu0 0.0
        %1689 = vmatprep.subr.mxu0 0.0
        %1690 = vmatpush2.msra.mxu0 0.0
        %1691 = vmatprep.subr.mxu0 0.0
        %1692 = vmatpush2.msra.mxu0 0.0
        %1693 = vmatprep.subr.mxu0 0.0
        %1694 = vmatpush2.msra.mxu0 0.0
        %1695 = vmatprep.subr.mxu0 0.0
        %1696 = vmatpush2.msra.mxu0 0.0
        %1697 = vmatprep.subr.mxu0 0.0
        %1698 = vmatpush2.msra.mxu0 0.0
        %1699 = vmatprep.subr.mxu0 0.0
        %1700 = vmatpush2.msra.mxu0 0.0
        %1701 = vmatprep.subr.mxu0 0.0
        %1702 = vmatpush2.msra.mxu0 0.0
        %1703 = vmatprep.mubr.f32.mxu0 0.0
        %1704 = vmatmul.mubr.f32.gmra.mxu0 %v787
        %v1705 = vpop.f32.mrf.mxu0
        %v1706 = vadd.f32 %v1629, %v1705
        %v1707 = vpop.f32.mrf.mxu0
        %v1708 = vadd.f32 %v1631, %v1707
        %1709 = vmatprep.mubr.f32.mxu0 0.0
        %1710 = vmatmul.mubr.f32.gmra.mxu0 %v790
        %v1711 = vpop.f32.mrf.mxu0
        %v1712 = vadd.f32 %v1635, %v1711
        %v1713 = vpop.f32.mrf.mxu0
        %v1714 = vadd.f32 %v1637, %v1713
        %1715 = vdwg.mxu0
        %1716 = vst [vmem:[#allocation2] sm:$0xff] %v1013
        %1717 = vst [vmem:[#allocation2 + $0x8] sm:$0xff] %v1015
        %1718 = vst [vmem:[#allocation2 + $0x10] sm:$0xff] %v1244
        %1719 = vst [vmem:[#allocation2 + $0x18] sm:$0xff] %v1246
        %1720 = vst [vmem:[#allocation2 + $0x20] sm:$0xff] %v1475
        %1721 = vst [vmem:[#allocation2 + $0x28] sm:$0xff] %v1477
        %1722 = vst [vmem:[#allocation2 + $0x30] sm:$0xff] %v1706
        %1723 = vst [vmem:[#allocation2 + $0x38] sm:$0xff] %v1708
        %1724 = vst [vmem:[#allocation2 + $0x40] sm:$0xff] %v1019
        %1725 = vst [vmem:[#allocation2 + $0x48] sm:$0xff] %v1021
        %1726 = vst [vmem:[#allocation2 + $0x50] sm:$0xff] %v1250
        %1727 = vst [vmem:[#allocation2 + $0x58] sm:$0xff] %v1252
        %1728 = vst [vmem:[#allocation2 + $0x60] sm:$0xff] %v1481
        %1729 = vst [vmem:[#allocation2 + $0x68] sm:$0xff] %v1483
        %1730 = vst [vmem:[#allocation2 + $0x70] sm:$0xff] %v1712
        %1731 = vst [vmem:[#allocation2 + $0x78] sm:$0xff] %v1714
        %v1732 = vld [vmem:[#allocation2] sm:$0xff]
        %v1733 = vld [vmem:[#allocation2 + $0x8] sm:$0xff]
        %v1734 = vld [vmem:[#allocation2 + $0x10] sm:$0xff]
        %v1735 = vld [vmem:[#allocation2 + $0x18] sm:$0xff]
        %v1736 = vld [vmem:[#allocation2 + $0x20] sm:$0xff]
        %v1737 = vld [vmem:[#allocation2 + $0x28] sm:$0xff]
        %v1738 = vld [vmem:[#allocation2 + $0x30] sm:$0xff]
        %v1739 = vld [vmem:[#allocation2 + $0x38] sm:$0xff]
        %v1740 = vld [vmem:[#allocation2 + $0x40] sm:$0xff]
        %v1741 = vld [vmem:[#allocation2 + $0x48] sm:$0xff]
        %v1742 = vld [vmem:[#allocation2 + $0x50] sm:$0xff]
        %v1743 = vld [vmem:[#allocation2 + $0x58] sm:$0xff]
        %v1744 = vld [vmem:[#allocation2 + $0x60] sm:$0xff]
        %v1745 = vld [vmem:[#allocation2 + $0x68] sm:$0xff]
        %v1746 = vld [vmem:[#allocation2 + $0x70] sm:$0xff]
        %v1747 = vld [vmem:[#allocation2 + $0x78] sm:$0xff]
        %v1748 = vld [vmem:[%s193] sm:$0xfe]
        %v1749 = vld [vmem:[%s193 + $0x8] sm:$0xfe]
        %v1750 = vld [vmem:[%s193 + $0x10] sm:$0xfe]
        %v1751 = vld [vmem:[%s193 + $0x18] sm:$0xfe]
        %v1752 = vld [vmem:[%s193 + $0x20] sm:$0xfe]
        %v1753 = vld [vmem:[%s193 + $0x28] sm:$0xff]
        %v1754 = vld [vmem:[%s193 + $0x30] sm:$0xff]
        %v1755 = vld [vmem:[%s193 + $0x38] sm:$0xff]
        %v1756 = vld [vmem:[%s193 + $0x40] sm:$0xff]
        %v1757 = vld [vmem:[%s193 + $0x48] sm:$0xff]
        %v1758 = vld [vmem:[%s193 + $0x50] sm:$0x1]
        %v1759 = vld [vmem:[%s193 + $0x58] sm:$0x1]
        %v1760 = vld [vmem:[%s193 + $0x60] sm:$0x1]
        %v1761 = vld [vmem:[%s193 + $0x68] sm:$0x1]
        %v1762 = vld [vmem:[%s193 + $0x70] sm:$0x1]
        %s1763 = scalar_lea.vmem [#allocation4], 4608
        %v1764 = vld [vmem:[%s1763] sm:$0xff]
        %v1765 = vld [vmem:[%s1763 + $0x8] sm:$0xff]
        %v1766 = vld [vmem:[%s1763 + $0x10] sm:$0xff]
        %v1767 = vld [vmem:[%s1763 + $0x18] sm:$0xff]
        %v1768 = vld [vmem:[%s1763 + $0x20] sm:$0xff]
        %v1769 = vld [vmem:[%s1763 + $0x28] sm:$0xff]
        %v1770 = vld [vmem:[%s1763 + $0x30] sm:$0xff]
        %v1771 = vld [vmem:[%s1763 + $0x38] sm:$0xff]
        %v1772 = vld [vmem:[%s1763 + $0x40] sm:$0xff]
        %v1773 = vld [vmem:[%s1763 + $0x48] sm:$0xff]
        %v1774 = vld [vmem:[%s1763 + $0x50] sm:$0xff]
        %v1775 = vld [vmem:[%s1763 + $0x58] sm:$0xff]
        %v1776 = vld [vmem:[%s1763 + $0x60] sm:$0xff]
        %v1777 = vld [vmem:[%s1763 + $0x68] sm:$0xff]
        %v1778 = vld [vmem:[%s1763 + $0x70] sm:$0xff]
        %v1779 = vld [vmem:[%s1763 + $0x78] sm:$0xff]
        %v1780 = vld [vmem:[%s1763 + $0x80] sm:$0xff]
        %v1781 = vld [vmem:[%s1763 + $0x88] sm:$0xff]
        %v1782 = vld [vmem:[%s1763 + $0x90] sm:$0xff]
        %v1783 = vld [vmem:[%s1763 + $0x98] sm:$0xff]
        %v1784 = vld [vmem:[%s1763 + $0xa0] sm:$0xff]
        %v1785 = vld [vmem:[%s1763 + $0xa8] sm:$0xff]
        %v1786 = vld [vmem:[%s1763 + $0xb0] sm:$0xff]
        %v1787 = vld [vmem:[%s1763 + $0xb8] sm:$0xff]
        %v1788 = vld [vmem:[%s1763 + $0xc0] sm:$0xff]
        %v1789 = vld [vmem:[%s1763 + $0xc8] sm:$0xff]
        %v1790 = vld [vmem:[%s1763 + $0xd0] sm:$0xff]
        %v1791 = vld [vmem:[%s1763 + $0xd8] sm:$0xff]
        %v1792 = vld [vmem:[%s1763 + $0xe0] sm:$0xff]
        %v1793 = vld [vmem:[%s1763 + $0xe8] sm:$0xff]
        %v1794 = vld [vmem:[%s1763 + $0xf0] sm:$0xff]
        %v1795 = vld [vmem:[%s1763 + $0xf8] sm:$0xff]
        %v1796 = vld [vmem:[%s1763 + $0x100] sm:$0xff]
        %v1797 = vld [vmem:[%s1763 + $0x108] sm:$0xff]
        %v1798 = vld [vmem:[%s1763 + $0x110] sm:$0xff]
        %v1799 = vld [vmem:[%s1763 + $0x118] sm:$0xff]
        %v1800 = vld [vmem:[%s1763 + $0x120] sm:$0xff]
        %v1801 = vld [vmem:[%s1763 + $0x128] sm:$0xff]
        %v1802 = vld [vmem:[%s1763 + $0x130] sm:$0xff]
        %v1803 = vld [vmem:[%s1763 + $0x138] sm:$0xff]
        %v1804 = vld [vmem:[%s1763 + $0x140] sm:$0xff]
        %v1805 = vld [vmem:[%s1763 + $0x148] sm:$0xff]
        %v1806 = vld [vmem:[%s1763 + $0x150] sm:$0xff]
        %v1807 = vld [vmem:[%s1763 + $0x158] sm:$0xff]
        %v1808 = vld [vmem:[%s1763 + $0x160] sm:$0xff]
        %v1809 = vld [vmem:[%s1763 + $0x168] sm:$0xff]
        %v1810 = vld [vmem:[%s1763 + $0x170] sm:$0xff]
        %v1811 = vld [vmem:[%s1763 + $0x178] sm:$0xff]
        %v1812 = vld [vmem:[%s1763 + $0x180] sm:$0xff]
        %v1813 = vld [vmem:[%s1763 + $0x188] sm:$0xff]
        %v1814 = vld [vmem:[%s1763 + $0x190] sm:$0xff]
        %v1815 = vld [vmem:[%s1763 + $0x198] sm:$0xff]
        %v1816 = vld [vmem:[%s1763 + $0x1a0] sm:$0xff]
        %v1817 = vld [vmem:[%s1763 + $0x1a8] sm:$0xff]
        %v1818 = vld [vmem:[%s1763 + $0x1b0] sm:$0xff]
        %v1819 = vld [vmem:[%s1763 + $0x1b8] sm:$0xff]
        %v1820 = vld [vmem:[%s1763 + $0x1c0] sm:$0xff]
        %v1821 = vld [vmem:[%s1763 + $0x1c8] sm:$0xff]
        %v1822 = vld [vmem:[%s1763 + $0x1d0] sm:$0xff]
        %v1823 = vld [vmem:[%s1763 + $0x1d8] sm:$0xff]
        %v1824 = vld [vmem:[%s1763 + $0x1e0] sm:$0xff]
        %v1825 = vld [vmem:[%s1763 + $0x1e8] sm:$0xff]
        %v1826 = vld [vmem:[%s1763 + $0x1f0] sm:$0xff]
        %v1827 = vld [vmem:[%s1763 + $0x1f8] sm:$0xff]
        %v1828 = vld [vmem:[%s1763 + $0x200] sm:$0xff]
        %v1829 = vld [vmem:[%s1763 + $0x208] sm:$0xff]
        %v1830 = vld [vmem:[%s1763 + $0x210] sm:$0xff]
        %v1831 = vld [vmem:[%s1763 + $0x218] sm:$0xff]
        %v1832 = vld [vmem:[%s1763 + $0x220] sm:$0xff]
        %v1833 = vld [vmem:[%s1763 + $0x228] sm:$0xff]
        %v1834 = vld [vmem:[%s1763 + $0x230] sm:$0xff]
        %v1835 = vld [vmem:[%s1763 + $0x238] sm:$0xff]
        %v1836 = vld [vmem:[%s1763 + $0x240] sm:$0xff]
        %v1837 = vld [vmem:[%s1763 + $0x248] sm:$0xff]
        %v1838 = vld [vmem:[%s1763 + $0x250] sm:$0xff]
        %v1839 = vld [vmem:[%s1763 + $0x258] sm:$0xff]
        %v1840 = vld [vmem:[%s1763 + $0x260] sm:$0xff]
        %v1841 = vld [vmem:[%s1763 + $0x268] sm:$0xff]
        %v1842 = vld [vmem:[%s1763 + $0x270] sm:$0xff]
        %v1843 = vld [vmem:[%s1763 + $0x278] sm:$0xff]
        %v1844 = vld [vmem:[%s1763 + $0x280] sm:$0xff]
        %v1845 = vld [vmem:[%s1763 + $0x288] sm:$0xff]
        %v1846 = vld [vmem:[%s1763 + $0x290] sm:$0xff]
        %v1847 = vld [vmem:[%s1763 + $0x298] sm:$0xff]
        %v1848 = vld [vmem:[%s1763 + $0x2a0] sm:$0xff]
        %v1849 = vld [vmem:[%s1763 + $0x2a8] sm:$0xff]
        %v1850 = vld [vmem:[%s1763 + $0x2b0] sm:$0xff]
        %v1851 = vld [vmem:[%s1763 + $0x2b8] sm:$0xff]
        %v1852 = vld [vmem:[%s1763 + $0x2c0] sm:$0xff]
        %v1853 = vld [vmem:[%s1763 + $0x2c8] sm:$0xff]
        %v1854 = vld [vmem:[%s1763 + $0x2d0] sm:$0xff]
        %v1855 = vld [vmem:[%s1763 + $0x2d8] sm:$0xff]
        %v1856 = vld [vmem:[%s1763 + $0x2e0] sm:$0xff]
        %v1857 = vld [vmem:[%s1763 + $0x2e8] sm:$0xff]
        %v1858 = vld [vmem:[%s1763 + $0x2f0] sm:$0xff]
        %v1859 = vld [vmem:[%s1763 + $0x2f8] sm:$0xff]
        %v1860 = vld [vmem:[%s1763 + $0x300] sm:$0xff]
        %v1861 = vld [vmem:[%s1763 + $0x308] sm:$0xff]
        %v1862 = vld [vmem:[%s1763 + $0x310] sm:$0xff]
        %v1863 = vld [vmem:[%s1763 + $0x318] sm:$0xff]
        %v1864 = vld [vmem:[%s1763 + $0x320] sm:$0xff]
        %v1865 = vld [vmem:[%s1763 + $0x328] sm:$0xff]
        %v1866 = vld [vmem:[%s1763 + $0x330] sm:$0xff]
        %v1867 = vld [vmem:[%s1763 + $0x338] sm:$0xff]
        %v1868 = vld [vmem:[%s1763 + $0x340] sm:$0xff]
        %v1869 = vld [vmem:[%s1763 + $0x348] sm:$0xff]
        %v1870 = vld [vmem:[%s1763 + $0x350] sm:$0xff]
        %v1871 = vld [vmem:[%s1763 + $0x358] sm:$0xff]
        %v1872 = vld [vmem:[%s1763 + $0x360] sm:$0xff]
        %v1873 = vld [vmem:[%s1763 + $0x368] sm:$0xff]
        %v1874 = vld [vmem:[%s1763 + $0x370] sm:$0xff]
        %v1875 = vld [vmem:[%s1763 + $0x378] sm:$0xff]
        %v1876 = vld [vmem:[%s1763 + $0x380] sm:$0xff]
        %v1877 = vld [vmem:[%s1763 + $0x388] sm:$0xff]
        %v1878 = vld [vmem:[%s1763 + $0x390] sm:$0xff]
        %v1879 = vld [vmem:[%s1763 + $0x398] sm:$0xff]
        %v1880 = vld [vmem:[%s1763 + $0x3a0] sm:$0xff]
        %v1881 = vld [vmem:[%s1763 + $0x3a8] sm:$0xff]
        %v1882 = vld [vmem:[%s1763 + $0x3b0] sm:$0xff]
        %v1883 = vld [vmem:[%s1763 + $0x3b8] sm:$0xff]
        %v1884 = vld [vmem:[%s1763 + $0x3c0] sm:$0xff]
        %v1885 = vld [vmem:[%s1763 + $0x3c8] sm:$0xff]
        %v1886 = vld [vmem:[%s1763 + $0x3d0] sm:$0xff]
        %v1887 = vld [vmem:[%s1763 + $0x3d8] sm:$0xff]
        %v1888 = vld [vmem:[%s1763 + $0x3e0] sm:$0xff]
        %v1889 = vld [vmem:[%s1763 + $0x3e8] sm:$0xff]
        %v1890 = vld [vmem:[%s1763 + $0x3f0] sm:$0xff]
        %v1891 = vld [vmem:[%s1763 + $0x3f8] sm:$0xff]
        %v1892 = vld [vmem:[%s1763 + $0x400] sm:$0xff]
        %v1893 = vld [vmem:[%s1763 + $0x408] sm:$0xff]
        %v1894 = vld [vmem:[%s1763 + $0x410] sm:$0xff]
        %v1895 = vld [vmem:[%s1763 + $0x418] sm:$0xff]
        %v1896 = vld [vmem:[%s1763 + $0x420] sm:$0xff]
        %v1897 = vld [vmem:[%s1763 + $0x428] sm:$0xff]
        %v1898 = vld [vmem:[%s1763 + $0x430] sm:$0xff]
        %v1899 = vld [vmem:[%s1763 + $0x438] sm:$0xff]
        %v1900 = vld [vmem:[%s1763 + $0x440] sm:$0xff]
        %v1901 = vld [vmem:[%s1763 + $0x448] sm:$0xff]
        %v1902 = vld [vmem:[%s1763 + $0x450] sm:$0xff]
        %v1903 = vld [vmem:[%s1763 + $0x458] sm:$0xff]
        %v1904 = vld [vmem:[%s1763 + $0x460] sm:$0xff]
        %v1905 = vld [vmem:[%s1763 + $0x468] sm:$0xff]
        %v1906 = vld [vmem:[%s1763 + $0x470] sm:$0xff]
        %v1907 = vld [vmem:[%s1763 + $0x478] sm:$0xff]
        %v1908 = vld [vmem:[%s1763 + $0x480] sm:$0xff]
        %v1909 = vld [vmem:[%s1763 + $0x488] sm:$0xff]
        %v1910 = vld [vmem:[%s1763 + $0x490] sm:$0xff]
        %v1911 = vld [vmem:[%s1763 + $0x498] sm:$0xff]
        %v1912 = vld [vmem:[%s1763 + $0x4a0] sm:$0xff]
        %v1913 = vld [vmem:[%s1763 + $0x4a8] sm:$0xff]
        %v1914 = vld [vmem:[%s1763 + $0x4b0] sm:$0xff]
        %v1915 = vld [vmem:[%s1763 + $0x4b8] sm:$0xff]
        %v1916 = vld [vmem:[%s1763 + $0x4c0] sm:$0xff]
        %v1917 = vld [vmem:[%s1763 + $0x4c8] sm:$0xff]
        %v1918 = vld [vmem:[%s1763 + $0x4d0] sm:$0xff]
        %v1919 = vld [vmem:[%s1763 + $0x4d8] sm:$0xff]
        %v1920 = vld [vmem:[%s1763 + $0x4e0] sm:$0xff]
        %v1921 = vld [vmem:[%s1763 + $0x4e8] sm:$0xff]
        %v1922 = vld [vmem:[%s1763 + $0x4f0] sm:$0xff]
        %v1923 = vld [vmem:[%s1763 + $0x4f8] sm:$0xff]
        %v1924 = vld [vmem:[%s1763 + $0x500] sm:$0xff]
        %v1925 = vld [vmem:[%s1763 + $0x508] sm:$0xff]
        %v1926 = vld [vmem:[%s1763 + $0x510] sm:$0xff]
        %v1927 = vld [vmem:[%s1763 + $0x518] sm:$0xff]
        %v1928 = vld [vmem:[%s1763 + $0x520] sm:$0xff]
        %v1929 = vld [vmem:[%s1763 + $0x528] sm:$0xff]
        %v1930 = vld [vmem:[%s1763 + $0x530] sm:$0xff]
        %v1931 = vld [vmem:[%s1763 + $0x538] sm:$0xff]
        %v1932 = vld [vmem:[%s1763 + $0x540] sm:$0xff]
        %v1933 = vld [vmem:[%s1763 + $0x548] sm:$0xff]
        %v1934 = vld [vmem:[%s1763 + $0x550] sm:$0xff]
        %v1935 = vld [vmem:[%s1763 + $0x558] sm:$0xff]
        %v1936 = vld [vmem:[%s1763 + $0x560] sm:$0xff]
        %v1937 = vld [vmem:[%s1763 + $0x568] sm:$0xff]
        %v1938 = vld [vmem:[%s1763 + $0x570] sm:$0xff]
        %v1939 = vld [vmem:[%s1763 + $0x578] sm:$0xff]
        %v1940 = vld [vmem:[%s1763 + $0x580] sm:$0xff]
        %v1941 = vld [vmem:[%s1763 + $0x588] sm:$0xff]
        %v1942 = vld [vmem:[%s1763 + $0x590] sm:$0xff]
        %v1943 = vld [vmem:[%s1763 + $0x598] sm:$0xff]
        %v1944 = vld [vmem:[%s1763 + $0x5a0] sm:$0xff]
        %v1945 = vld [vmem:[%s1763 + $0x5a8] sm:$0xff]
        %v1946 = vld [vmem:[%s1763 + $0x5b0] sm:$0xff]
        %v1947 = vld [vmem:[%s1763 + $0x5b8] sm:$0xff]
        %v1948 = vld [vmem:[%s1763 + $0x5c0] sm:$0xff]
        %v1949 = vld [vmem:[%s1763 + $0x5c8] sm:$0xff]
        %v1950 = vld [vmem:[%s1763 + $0x5d0] sm:$0xff]
        %v1951 = vld [vmem:[%s1763 + $0x5d8] sm:$0xff]
        %v1952 = vld [vmem:[%s1763 + $0x5e0] sm:$0xff]
        %v1953 = vld [vmem:[%s1763 + $0x5e8] sm:$0xff]
        %v1954 = vld [vmem:[%s1763 + $0x5f0] sm:$0xff]
        %v1955 = vld [vmem:[%s1763 + $0x5f8] sm:$0xff]
        %v1956 = vld [vmem:[%s1763 + $0x600] sm:$0xff]
        %v1957 = vld [vmem:[%s1763 + $0x608] sm:$0xff]
        %v1958 = vld [vmem:[%s1763 + $0x610] sm:$0xff]
        %v1959 = vld [vmem:[%s1763 + $0x618] sm:$0xff]
        %v1960 = vld [vmem:[%s1763 + $0x620] sm:$0xff]
        %v1961 = vld [vmem:[%s1763 + $0x628] sm:$0xff]
        %v1962 = vld [vmem:[%s1763 + $0x630] sm:$0xff]
        %v1963 = vld [vmem:[%s1763 + $0x638] sm:$0xff]
        %v1964 = vld [vmem:[%s1763 + $0x640] sm:$0xff]
        %v1965 = vld [vmem:[%s1763 + $0x648] sm:$0xff]
        %v1966 = vld [vmem:[%s1763 + $0x650] sm:$0xff]
        %v1967 = vld [vmem:[%s1763 + $0x658] sm:$0xff]
        %v1968 = vld [vmem:[%s1763 + $0x660] sm:$0xff]
        %v1969 = vld [vmem:[%s1763 + $0x668] sm:$0xff]
        %v1970 = vld [vmem:[%s1763 + $0x670] sm:$0xff]
        %v1971 = vld [vmem:[%s1763 + $0x678] sm:$0xff]
        %v1972 = vld [vmem:[%s1763 + $0x680] sm:$0xff]
        %v1973 = vld [vmem:[%s1763 + $0x688] sm:$0xff]
        %v1974 = vld [vmem:[%s1763 + $0x690] sm:$0xff]
        %v1975 = vld [vmem:[%s1763 + $0x698] sm:$0xff]
        %v1976 = vld [vmem:[%s1763 + $0x6a0] sm:$0xff]
        %v1977 = vld [vmem:[%s1763 + $0x6a8] sm:$0xff]
        %v1978 = vld [vmem:[%s1763 + $0x6b0] sm:$0xff]
        %v1979 = vld [vmem:[%s1763 + $0x6b8] sm:$0xff]
        %v1980 = vld [vmem:[%s1763 + $0x6c0] sm:$0xff]
        %v1981 = vld [vmem:[%s1763 + $0x6c8] sm:$0xff]
        %v1982 = vld [vmem:[%s1763 + $0x6d0] sm:$0xff]
        %v1983 = vld [vmem:[%s1763 + $0x6d8] sm:$0xff]
        %v1984 = vld [vmem:[%s1763 + $0x6e0] sm:$0xff]
        %v1985 = vld [vmem:[%s1763 + $0x6e8] sm:$0xff]
        %v1986 = vld [vmem:[%s1763 + $0x6f0] sm:$0xff]
        %v1987 = vld [vmem:[%s1763 + $0x6f8] sm:$0xff]
        %v1988 = vld [vmem:[%s1763 + $0x700] sm:$0xff]
        %v1989 = vld [vmem:[%s1763 + $0x708] sm:$0xff]
        %v1990 = vld [vmem:[%s1763 + $0x710] sm:$0xff]
        %v1991 = vld [vmem:[%s1763 + $0x718] sm:$0xff]
        %v1992 = vld [vmem:[%s1763 + $0x720] sm:$0xff]
        %v1993 = vld [vmem:[%s1763 + $0x728] sm:$0xff]
        %v1994 = vld [vmem:[%s1763 + $0x730] sm:$0xff]
        %v1995 = vld [vmem:[%s1763 + $0x738] sm:$0xff]
        %v1996 = vld [vmem:[%s1763 + $0x740] sm:$0xff]
        %v1997 = vld [vmem:[%s1763 + $0x748] sm:$0xff]
        %v1998 = vld [vmem:[%s1763 + $0x750] sm:$0xff]
        %v1999 = vld [vmem:[%s1763 + $0x758] sm:$0xff]
        %v2000 = vld [vmem:[%s1763 + $0x760] sm:$0xff]
        %v2001 = vld [vmem:[%s1763 + $0x768] sm:$0xff]
        %v2002 = vld [vmem:[%s1763 + $0x770] sm:$0xff]
        %v2003 = vld [vmem:[%s1763 + $0x778] sm:$0xff]
        %v2004 = vld [vmem:[%s1763 + $0x780] sm:$0xff]
        %v2005 = vld [vmem:[%s1763 + $0x788] sm:$0xff]
        %v2006 = vld [vmem:[%s1763 + $0x790] sm:$0xff]
        %v2007 = vld [vmem:[%s1763 + $0x798] sm:$0xff]
        %v2008 = vld [vmem:[%s1763 + $0x7a0] sm:$0xff]
        %v2009 = vld [vmem:[%s1763 + $0x7a8] sm:$0xff]
        %v2010 = vld [vmem:[%s1763 + $0x7b0] sm:$0xff]
        %v2011 = vld [vmem:[%s1763 + $0x7b8] sm:$0xff]
        %v2012 = vld [vmem:[%s1763 + $0x7c0] sm:$0xff]
        %v2013 = vld [vmem:[%s1763 + $0x7c8] sm:$0xff]
        %v2014 = vld [vmem:[%s1763 + $0x7d0] sm:$0xff]
        %v2015 = vld [vmem:[%s1763 + $0x7d8] sm:$0xff]
        %v2016 = vld [vmem:[%s1763 + $0x7e0] sm:$0xff]
        %v2017 = vld [vmem:[%s1763 + $0x7e8] sm:$0xff]
        %v2018 = vld [vmem:[%s1763 + $0x7f0] sm:$0xff]
        %v2019 = vld [vmem:[%s1763 + $0x7f8] sm:$0xff]
        %v2020 = vld [vmem:[%s1763 + $0x800] sm:$0xff]
        %v2021 = vld [vmem:[%s1763 + $0x808] sm:$0xff]
        %v2022 = vld [vmem:[%s1763 + $0x810] sm:$0xff]
        %v2023 = vld [vmem:[%s1763 + $0x818] sm:$0xff]
        %v2024 = vld [vmem:[%s1763 + $0x820] sm:$0xff]
        %v2025 = vld [vmem:[%s1763 + $0x828] sm:$0xff]
        %v2026 = vld [vmem:[%s1763 + $0x830] sm:$0xff]
        %v2027 = vld [vmem:[%s1763 + $0x838] sm:$0xff]
        %v2028 = vld [vmem:[%s1763 + $0x840] sm:$0xff]
        %v2029 = vld [vmem:[%s1763 + $0x848] sm:$0xff]
        %v2030 = vld [vmem:[%s1763 + $0x850] sm:$0xff]
        %v2031 = vld [vmem:[%s1763 + $0x858] sm:$0xff]
        %v2032 = vld [vmem:[%s1763 + $0x860] sm:$0xff]
        %v2033 = vld [vmem:[%s1763 + $0x868] sm:$0xff]
        %v2034 = vld [vmem:[%s1763 + $0x870] sm:$0xff]
        %v2035 = vld [vmem:[%s1763 + $0x878] sm:$0xff]
        %v2036 = vld [vmem:[%s1763 + $0x880] sm:$0xff]
        %v2037 = vld [vmem:[%s1763 + $0x888] sm:$0xff]
        %v2038 = vld [vmem:[%s1763 + $0x890] sm:$0xff]
        %v2039 = vld [vmem:[%s1763 + $0x898] sm:$0xff]
        %v2040 = vld [vmem:[%s1763 + $0x8a0] sm:$0xff]
        %v2041 = vld [vmem:[%s1763 + $0x8a8] sm:$0xff]
        %v2042 = vld [vmem:[%s1763 + $0x8b0] sm:$0xff]
        %v2043 = vld [vmem:[%s1763 + $0x8b8] sm:$0xff]
        %v2044 = vld [vmem:[%s1763 + $0x8c0] sm:$0xff]
        %v2045 = vld [vmem:[%s1763 + $0x8c8] sm:$0xff]
        %v2046 = vld [vmem:[%s1763 + $0x8d0] sm:$0xff]
        %v2047 = vld [vmem:[%s1763 + $0x8d8] sm:$0xff]
        %v2048 = vld [vmem:[%s1763 + $0x8e0] sm:$0xff]
        %v2049 = vld [vmem:[%s1763 + $0x8e8] sm:$0xff]
        %v2050 = vld [vmem:[%s1763 + $0x8f0] sm:$0xff]
        %v2051 = vld [vmem:[%s1763 + $0x8f8] sm:$0xff]
        %v2052 = vld [vmem:[%s1763 + $0x900] sm:$0xff]
        %v2053 = vld [vmem:[%s1763 + $0x908] sm:$0xff]
        %v2054 = vld [vmem:[%s1763 + $0x910] sm:$0xff]
        %v2055 = vld [vmem:[%s1763 + $0x918] sm:$0xff]
        %v2056 = vld [vmem:[%s1763 + $0x920] sm:$0xff]
        %v2057 = vld [vmem:[%s1763 + $0x928] sm:$0xff]
        %v2058 = vld [vmem:[%s1763 + $0x930] sm:$0xff]
        %v2059 = vld [vmem:[%s1763 + $0x938] sm:$0xff]
        %v2060 = vld [vmem:[%s1763 + $0x940] sm:$0xff]
        %v2061 = vld [vmem:[%s1763 + $0x948] sm:$0xff]
        %v2062 = vld [vmem:[%s1763 + $0x950] sm:$0xff]
        %v2063 = vld [vmem:[%s1763 + $0x958] sm:$0xff]
        %v2064 = vld [vmem:[%s1763 + $0x960] sm:$0xff]
        %v2065 = vld [vmem:[%s1763 + $0x968] sm:$0xff]
        %v2066 = vld [vmem:[%s1763 + $0x970] sm:$0xff]
        %v2067 = vld [vmem:[%s1763 + $0x978] sm:$0xff]
        %v2068 = vld [vmem:[%s1763 + $0x980] sm:$0xff]
        %v2069 = vld [vmem:[%s1763 + $0x988] sm:$0xff]
        %v2070 = vld [vmem:[%s1763 + $0x990] sm:$0xff]
        %v2071 = vld [vmem:[%s1763 + $0x998] sm:$0xff]
        %v2072 = vld [vmem:[%s1763 + $0x9a0] sm:$0xff]
        %v2073 = vld [vmem:[%s1763 + $0x9a8] sm:$0xff]
        %v2074 = vld [vmem:[%s1763 + $0x9b0] sm:$0xff]
        %v2075 = vld [vmem:[%s1763 + $0x9b8] sm:$0xff]
        %v2076 = vld [vmem:[%s1763 + $0x9c0] sm:$0xff]
        %v2077 = vld [vmem:[%s1763 + $0x9c8] sm:$0xff]
        %v2078 = vld [vmem:[%s1763 + $0x9d0] sm:$0xff]
        %v2079 = vld [vmem:[%s1763 + $0x9d8] sm:$0xff]
        %v2080 = vld [vmem:[%s1763 + $0x9e0] sm:$0xff]
        %v2081 = vld [vmem:[%s1763 + $0x9e8] sm:$0xff]
        %v2082 = vld [vmem:[%s1763 + $0x9f0] sm:$0xff]
        %v2083 = vld [vmem:[%s1763 + $0x9f8] sm:$0xff]
        %v2084 = vld [vmem:[%s1763 + $0xa00] sm:$0xff]
        %v2085 = vld [vmem:[%s1763 + $0xa08] sm:$0xff]
        %v2086 = vld [vmem:[%s1763 + $0xa10] sm:$0xff]
        %v2087 = vld [vmem:[%s1763 + $0xa18] sm:$0xff]
        %v2088 = vld [vmem:[%s1763 + $0xa20] sm:$0xff]
        %v2089 = vld [vmem:[%s1763 + $0xa28] sm:$0xff]
        %v2090 = vld [vmem:[%s1763 + $0xa30] sm:$0xff]
        %v2091 = vld [vmem:[%s1763 + $0xa38] sm:$0xff]
        %v2092 = vld [vmem:[%s1763 + $0xa40] sm:$0xff]
        %v2093 = vld [vmem:[%s1763 + $0xa48] sm:$0xff]
        %v2094 = vld [vmem:[%s1763 + $0xa50] sm:$0xff]
        %v2095 = vld [vmem:[%s1763 + $0xa58] sm:$0xff]
        %v2096 = vld [vmem:[%s1763 + $0xa60] sm:$0xff]
        %v2097 = vld [vmem:[%s1763 + $0xa68] sm:$0xff]
        %v2098 = vld [vmem:[%s1763 + $0xa70] sm:$0xff]
        %v2099 = vld [vmem:[%s1763 + $0xa78] sm:$0xff]
        %v2100 = vld [vmem:[%s1763 + $0xa80] sm:$0xff]
        %v2101 = vld [vmem:[%s1763 + $0xa88] sm:$0xff]
        %v2102 = vld [vmem:[%s1763 + $0xa90] sm:$0xff]
        %v2103 = vld [vmem:[%s1763 + $0xa98] sm:$0xff]
        %v2104 = vld [vmem:[%s1763 + $0xaa0] sm:$0xff]
        %v2105 = vld [vmem:[%s1763 + $0xaa8] sm:$0xff]
        %v2106 = vld [vmem:[%s1763 + $0xab0] sm:$0xff]
        %v2107 = vld [vmem:[%s1763 + $0xab8] sm:$0xff]
        %v2108 = vld [vmem:[%s1763 + $0xac0] sm:$0xff]
        %v2109 = vld [vmem:[%s1763 + $0xac8] sm:$0xff]
        %v2110 = vld [vmem:[%s1763 + $0xad0] sm:$0xff]
        %v2111 = vld [vmem:[%s1763 + $0xad8] sm:$0xff]
        %v2112 = vld [vmem:[%s1763 + $0xae0] sm:$0xff]
        %v2113 = vld [vmem:[%s1763 + $0xae8] sm:$0xff]
        %v2114 = vld [vmem:[%s1763 + $0xaf0] sm:$0xff]
        %v2115 = vld [vmem:[%s1763 + $0xaf8] sm:$0xff]
        %v2116 = vld [vmem:[%s1763 + $0xb00] sm:$0xff]
        %v2117 = vld [vmem:[%s1763 + $0xb08] sm:$0xff]
        %v2118 = vld [vmem:[%s1763 + $0xb10] sm:$0xff]
        %v2119 = vld [vmem:[%s1763 + $0xb18] sm:$0xff]
        %v2120 = vld [vmem:[%s1763 + $0xb20] sm:$0xff]
        %v2121 = vld [vmem:[%s1763 + $0xb28] sm:$0xff]
        %v2122 = vld [vmem:[%s1763 + $0xb30] sm:$0xff]
        %v2123 = vld [vmem:[%s1763 + $0xb38] sm:$0xff]
        %v2124 = vld [vmem:[%s1763 + $0xb40] sm:$0xff]
        %v2125 = vld [vmem:[%s1763 + $0xb48] sm:$0xff]
        %v2126 = vld [vmem:[%s1763 + $0xb50] sm:$0xff]
        %v2127 = vld [vmem:[%s1763 + $0xb58] sm:$0xff]
        %v2128 = vld [vmem:[%s1763 + $0xb60] sm:$0xff]
        %v2129 = vld [vmem:[%s1763 + $0xb68] sm:$0xff]
        %v2130 = vld [vmem:[%s1763 + $0xb70] sm:$0xff]
        %v2131 = vld [vmem:[%s1763 + $0xb78] sm:$0xff]
        %v2132 = vld [vmem:[%s1763 + $0xb80] sm:$0xff]
        %v2133 = vld [vmem:[%s1763 + $0xb88] sm:$0xff]
        %v2134 = vld [vmem:[%s1763 + $0xb90] sm:$0xff]
        %v2135 = vld [vmem:[%s1763 + $0xb98] sm:$0xff]
        %v2136 = vld [vmem:[%s1763 + $0xba0] sm:$0xff]
        %v2137 = vld [vmem:[%s1763 + $0xba8] sm:$0xff]
        %v2138 = vld [vmem:[%s1763 + $0xbb0] sm:$0xff]
        %v2139 = vld [vmem:[%s1763 + $0xbb8] sm:$0xff]
        %v2140 = vld [vmem:[%s1763 + $0xbc0] sm:$0xff]
        %v2141 = vld [vmem:[%s1763 + $0xbc8] sm:$0xff]
        %v2142 = vld [vmem:[%s1763 + $0xbd0] sm:$0xff]
        %v2143 = vld [vmem:[%s1763 + $0xbd8] sm:$0xff]
        %v2144 = vld [vmem:[%s1763 + $0xbe0] sm:$0xff]
        %v2145 = vld [vmem:[%s1763 + $0xbe8] sm:$0xff]
        %v2146 = vld [vmem:[%s1763 + $0xbf0] sm:$0xff]
        %v2147 = vld [vmem:[%s1763 + $0xbf8] sm:$0xff]
        %v2148 = vld [vmem:[%s1763 + $0xc00] sm:$0xff]
        %v2149 = vld [vmem:[%s1763 + $0xc08] sm:$0xff]
        %v2150 = vld [vmem:[%s1763 + $0xc10] sm:$0xff]
        %v2151 = vld [vmem:[%s1763 + $0xc18] sm:$0xff]
        %v2152 = vld [vmem:[%s1763 + $0xc20] sm:$0xff]
        %v2153 = vld [vmem:[%s1763 + $0xc28] sm:$0xff]
        %v2154 = vld [vmem:[%s1763 + $0xc30] sm:$0xff]
        %v2155 = vld [vmem:[%s1763 + $0xc38] sm:$0xff]
        %v2156 = vld [vmem:[%s1763 + $0xc40] sm:$0xff]
        %v2157 = vld [vmem:[%s1763 + $0xc48] sm:$0xff]
        %v2158 = vld [vmem:[%s1763 + $0xc50] sm:$0xff]
        %v2159 = vld [vmem:[%s1763 + $0xc58] sm:$0xff]
        %v2160 = vld [vmem:[%s1763 + $0xc60] sm:$0xff]
        %v2161 = vld [vmem:[%s1763 + $0xc68] sm:$0xff]
        %v2162 = vld [vmem:[%s1763 + $0xc70] sm:$0xff]
        %v2163 = vld [vmem:[%s1763 + $0xc78] sm:$0xff]
        %v2164 = vld [vmem:[%s1763 + $0xc80] sm:$0xff]
        %v2165 = vld [vmem:[%s1763 + $0xc88] sm:$0xff]
        %v2166 = vld [vmem:[%s1763 + $0xc90] sm:$0xff]
        %v2167 = vld [vmem:[%s1763 + $0xc98] sm:$0xff]
        %v2168 = vld [vmem:[%s1763 + $0xca0] sm:$0xff]
        %v2169 = vld [vmem:[%s1763 + $0xca8] sm:$0xff]
        %v2170 = vld [vmem:[%s1763 + $0xcb0] sm:$0xff]
        %v2171 = vld [vmem:[%s1763 + $0xcb8] sm:$0xff]
        %v2172 = vld [vmem:[%s1763 + $0xcc0] sm:$0xff]
        %v2173 = vld [vmem:[%s1763 + $0xcc8] sm:$0xff]
        %v2174 = vld [vmem:[%s1763 + $0xcd0] sm:$0xff]
        %v2175 = vld [vmem:[%s1763 + $0xcd8] sm:$0xff]
        %v2176 = vld [vmem:[%s1763 + $0xce0] sm:$0xff]
        %v2177 = vld [vmem:[%s1763 + $0xce8] sm:$0xff]
        %v2178 = vld [vmem:[%s1763 + $0xcf0] sm:$0xff]
        %v2179 = vld [vmem:[%s1763 + $0xcf8] sm:$0xff]
        %v2180 = vld [vmem:[%s1763 + $0xd00] sm:$0xff]
        %v2181 = vld [vmem:[%s1763 + $0xd08] sm:$0xff]
        %v2182 = vld [vmem:[%s1763 + $0xd10] sm:$0xff]
        %v2183 = vld [vmem:[%s1763 + $0xd18] sm:$0xff]
        %v2184 = vld [vmem:[%s1763 + $0xd20] sm:$0xff]
        %v2185 = vld [vmem:[%s1763 + $0xd28] sm:$0xff]
        %v2186 = vld [vmem:[%s1763 + $0xd30] sm:$0xff]
        %v2187 = vld [vmem:[%s1763 + $0xd38] sm:$0xff]
        %v2188 = vld [vmem:[%s1763 + $0xd40] sm:$0xff]
        %v2189 = vld [vmem:[%s1763 + $0xd48] sm:$0xff]
        %v2190 = vld [vmem:[%s1763 + $0xd50] sm:$0xff]
        %v2191 = vld [vmem:[%s1763 + $0xd58] sm:$0xff]
        %v2192 = vld [vmem:[%s1763 + $0xd60] sm:$0xff]
        %v2193 = vld [vmem:[%s1763 + $0xd68] sm:$0xff]
        %v2194 = vld [vmem:[%s1763 + $0xd70] sm:$0xff]
        %v2195 = vld [vmem:[%s1763 + $0xd78] sm:$0xff]
        %v2196 = vld [vmem:[%s1763 + $0xd80] sm:$0xff]
        %v2197 = vld [vmem:[%s1763 + $0xd88] sm:$0xff]
        %v2198 = vld [vmem:[%s1763 + $0xd90] sm:$0xff]
        %v2199 = vld [vmem:[%s1763 + $0xd98] sm:$0xff]
        %v2200 = vld [vmem:[%s1763 + $0xda0] sm:$0xff]
        %v2201 = vld [vmem:[%s1763 + $0xda8] sm:$0xff]
        %v2202 = vld [vmem:[%s1763 + $0xdb0] sm:$0xff]
        %v2203 = vld [vmem:[%s1763 + $0xdb8] sm:$0xff]
        %v2204 = vld [vmem:[%s1763 + $0xdc0] sm:$0xff]
        %v2205 = vld [vmem:[%s1763 + $0xdc8] sm:$0xff]
        %v2206 = vld [vmem:[%s1763 + $0xdd0] sm:$0xff]
        %v2207 = vld [vmem:[%s1763 + $0xdd8] sm:$0xff]
        %v2208 = vld [vmem:[%s1763 + $0xde0] sm:$0xff]
        %v2209 = vld [vmem:[%s1763 + $0xde8] sm:$0xff]
        %v2210 = vld [vmem:[%s1763 + $0xdf0] sm:$0xff]
        %v2211 = vld [vmem:[%s1763 + $0xdf8] sm:$0xff]
        %v2212 = vld [vmem:[%s1763 + $0xe00] sm:$0xff]
        %v2213 = vld [vmem:[%s1763 + $0xe08] sm:$0xff]
        %v2214 = vld [vmem:[%s1763 + $0xe10] sm:$0xff]
        %v2215 = vld [vmem:[%s1763 + $0xe18] sm:$0xff]
        %v2216 = vld [vmem:[%s1763 + $0xe20] sm:$0xff]
        %v2217 = vld [vmem:[%s1763 + $0xe28] sm:$0xff]
        %v2218 = vld [vmem:[%s1763 + $0xe30] sm:$0xff]
        %v2219 = vld [vmem:[%s1763 + $0xe38] sm:$0xff]
        %v2220 = vld [vmem:[%s1763 + $0xe40] sm:$0xff]
        %v2221 = vld [vmem:[%s1763 + $0xe48] sm:$0xff]
        %v2222 = vld [vmem:[%s1763 + $0xe50] sm:$0xff]
        %v2223 = vld [vmem:[%s1763 + $0xe58] sm:$0xff]
        %v2224 = vld [vmem:[%s1763 + $0xe60] sm:$0xff]
        %v2225 = vld [vmem:[%s1763 + $0xe68] sm:$0xff]
        %v2226 = vld [vmem:[%s1763 + $0xe70] sm:$0xff]
        %v2227 = vld [vmem:[%s1763 + $0xe78] sm:$0xff]
        %v2228 = vld [vmem:[%s1763 + $0xe80] sm:$0xff]
        %v2229 = vld [vmem:[%s1763 + $0xe88] sm:$0xff]
        %v2230 = vld [vmem:[%s1763 + $0xe90] sm:$0xff]
        %v2231 = vld [vmem:[%s1763 + $0xe98] sm:$0xff]
        %v2232 = vld [vmem:[%s1763 + $0xea0] sm:$0xff]
        %v2233 = vld [vmem:[%s1763 + $0xea8] sm:$0xff]
        %v2234 = vld [vmem:[%s1763 + $0xeb0] sm:$0xff]
        %v2235 = vld [vmem:[%s1763 + $0xeb8] sm:$0xff]
        %v2236 = vld [vmem:[%s1763 + $0xec0] sm:$0xff]
        %v2237 = vld [vmem:[%s1763 + $0xec8] sm:$0xff]
        %v2238 = vld [vmem:[%s1763 + $0xed0] sm:$0xff]
        %v2239 = vld [vmem:[%s1763 + $0xed8] sm:$0xff]
        %v2240 = vld [vmem:[%s1763 + $0xee0] sm:$0xff]
        %v2241 = vld [vmem:[%s1763 + $0xee8] sm:$0xff]
        %v2242 = vld [vmem:[%s1763 + $0xef0] sm:$0xff]
        %v2243 = vld [vmem:[%s1763 + $0xef8] sm:$0xff]
        %v2244 = vld [vmem:[%s1763 + $0xf00] sm:$0xff]
        %v2245 = vld [vmem:[%s1763 + $0xf08] sm:$0xff]
        %v2246 = vld [vmem:[%s1763 + $0xf10] sm:$0xff]
        %v2247 = vld [vmem:[%s1763 + $0xf18] sm:$0xff]
        %v2248 = vld [vmem:[%s1763 + $0xf20] sm:$0xff]
        %v2249 = vld [vmem:[%s1763 + $0xf28] sm:$0xff]
        %v2250 = vld [vmem:[%s1763 + $0xf30] sm:$0xff]
        %v2251 = vld [vmem:[%s1763 + $0xf38] sm:$0xff]
        %v2252 = vld [vmem:[%s1763 + $0xf40] sm:$0xff]
        %v2253 = vld [vmem:[%s1763 + $0xf48] sm:$0xff]
        %v2254 = vld [vmem:[%s1763 + $0xf50] sm:$0xff]
        %v2255 = vld [vmem:[%s1763 + $0xf58] sm:$0xff]
        %v2256 = vld [vmem:[%s1763 + $0xf60] sm:$0xff]
        %v2257 = vld [vmem:[%s1763 + $0xf68] sm:$0xff]
        %v2258 = vld [vmem:[%s1763 + $0xf70] sm:$0xff]
        %v2259 = vld [vmem:[%s1763 + $0xf78] sm:$0xff]
        %v2260 = vld [vmem:[%s1763 + $0xf80] sm:$0xff]
        %v2261 = vld [vmem:[%s1763 + $0xf88] sm:$0xff]
        %v2262 = vld [vmem:[%s1763 + $0xf90] sm:$0xff]
        %v2263 = vld [vmem:[%s1763 + $0xf98] sm:$0xff]
        %v2264 = vld [vmem:[%s1763 + $0xfa0] sm:$0xff]
        %v2265 = vld [vmem:[%s1763 + $0xfa8] sm:$0xff]
        %v2266 = vld [vmem:[%s1763 + $0xfb0] sm:$0xff]
        %v2267 = vld [vmem:[%s1763 + $0xfb8] sm:$0xff]
        %v2268 = vld [vmem:[%s1763 + $0xfc0] sm:$0xff]
        %v2269 = vld [vmem:[%s1763 + $0xfc8] sm:$0xff]
        %v2270 = vld [vmem:[%s1763 + $0xfd0] sm:$0xff]
        %v2271 = vld [vmem:[%s1763 + $0xfd8] sm:$0xff]
        %v2272 = vld [vmem:[%s1763 + $0xfe0] sm:$0xff]
        %v2273 = vld [vmem:[%s1763 + $0xfe8] sm:$0xff]
        %v2274 = vld [vmem:[%s1763 + $0xff0] sm:$0xff]
        %v2275 = vld [vmem:[%s1763 + $0xff8] sm:$0xff]
        %v2276 = vld [vmem:[%s1763 + $0x1000] sm:$0xff]
        %v2277 = vld [vmem:[%s1763 + $0x1008] sm:$0xff]
        %v2278 = vld [vmem:[%s1763 + $0x1010] sm:$0xff]
        %v2279 = vld [vmem:[%s1763 + $0x1018] sm:$0xff]
        %v2280 = vld [vmem:[%s1763 + $0x1020] sm:$0xff]
        %v2281 = vld [vmem:[%s1763 + $0x1028] sm:$0xff]
        %v2282 = vld [vmem:[%s1763 + $0x1030] sm:$0xff]
        %v2283 = vld [vmem:[%s1763 + $0x1038] sm:$0xff]
        %v2284 = vld [vmem:[%s1763 + $0x1040] sm:$0xff]
        %v2285 = vld [vmem:[%s1763 + $0x1048] sm:$0xff]
        %v2286 = vld [vmem:[%s1763 + $0x1050] sm:$0xff]
        %v2287 = vld [vmem:[%s1763 + $0x1058] sm:$0xff]
        %v2288 = vld [vmem:[%s1763 + $0x1060] sm:$0xff]
        %v2289 = vld [vmem:[%s1763 + $0x1068] sm:$0xff]
        %v2290 = vld [vmem:[%s1763 + $0x1070] sm:$0xff]
        %v2291 = vld [vmem:[%s1763 + $0x1078] sm:$0xff]
        %v2292 = vld [vmem:[%s1763 + $0x1080] sm:$0xff]
        %v2293 = vld [vmem:[%s1763 + $0x1088] sm:$0xff]
        %v2294 = vld [vmem:[%s1763 + $0x1090] sm:$0xff]
        %v2295 = vld [vmem:[%s1763 + $0x1098] sm:$0xff]
        %v2296 = vld [vmem:[%s1763 + $0x10a0] sm:$0xff]
        %v2297 = vld [vmem:[%s1763 + $0x10a8] sm:$0xff]
        %v2298 = vld [vmem:[%s1763 + $0x10b0] sm:$0xff]
        %v2299 = vld [vmem:[%s1763 + $0x10b8] sm:$0xff]
        %v2300 = vld [vmem:[%s1763 + $0x10c0] sm:$0xff]
        %v2301 = vld [vmem:[%s1763 + $0x10c8] sm:$0xff]
        %v2302 = vld [vmem:[%s1763 + $0x10d0] sm:$0xff]
        %v2303 = vld [vmem:[%s1763 + $0x10d8] sm:$0xff]
        %v2304 = vld [vmem:[%s1763 + $0x10e0] sm:$0xff]
        %v2305 = vld [vmem:[%s1763 + $0x10e8] sm:$0xff]
        %v2306 = vld [vmem:[%s1763 + $0x10f0] sm:$0xff]
        %v2307 = vld [vmem:[%s1763 + $0x10f8] sm:$0xff]
        %v2308 = vld [vmem:[%s1763 + $0x1100] sm:$0xff]
        %v2309 = vld [vmem:[%s1763 + $0x1108] sm:$0xff]
        %v2310 = vld [vmem:[%s1763 + $0x1110] sm:$0xff]
        %v2311 = vld [vmem:[%s1763 + $0x1118] sm:$0xff]
        %v2312 = vld [vmem:[%s1763 + $0x1120] sm:$0xff]
        %v2313 = vld [vmem:[%s1763 + $0x1128] sm:$0xff]
        %v2314 = vld [vmem:[%s1763 + $0x1130] sm:$0xff]
        %v2315 = vld [vmem:[%s1763 + $0x1138] sm:$0xff]
        %v2316 = vld [vmem:[%s1763 + $0x1140] sm:$0xff]
        %v2317 = vld [vmem:[%s1763 + $0x1148] sm:$0xff]
        %v2318 = vld [vmem:[%s1763 + $0x1150] sm:$0xff]
        %v2319 = vld [vmem:[%s1763 + $0x1158] sm:$0xff]
        %v2320 = vld [vmem:[%s1763 + $0x1160] sm:$0xff]
        %v2321 = vld [vmem:[%s1763 + $0x1168] sm:$0xff]
        %v2322 = vld [vmem:[%s1763 + $0x1170] sm:$0xff]
        %v2323 = vld [vmem:[%s1763 + $0x1178] sm:$0xff]
        %v2324 = vld [vmem:[%s1763 + $0x1180] sm:$0xff]
        %v2325 = vld [vmem:[%s1763 + $0x1188] sm:$0xff]
        %v2326 = vld [vmem:[%s1763 + $0x1190] sm:$0xff]
        %v2327 = vld [vmem:[%s1763 + $0x1198] sm:$0xff]
        %v2328 = vld [vmem:[%s1763 + $0x11a0] sm:$0xff]
        %v2329 = vld [vmem:[%s1763 + $0x11a8] sm:$0xff]
        %v2330 = vld [vmem:[%s1763 + $0x11b0] sm:$0xff]
        %v2331 = vld [vmem:[%s1763 + $0x11b8] sm:$0xff]
        %v2332 = vld [vmem:[%s1763 + $0x11c0] sm:$0xff]
        %v2333 = vld [vmem:[%s1763 + $0x11c8] sm:$0xff]
        %v2334 = vld [vmem:[%s1763 + $0x11d0] sm:$0xff]
        %v2335 = vld [vmem:[%s1763 + $0x11d8] sm:$0xff]
        %v2336 = vld [vmem:[%s1763 + $0x11e0] sm:$0xff]
        %v2337 = vld [vmem:[%s1763 + $0x11e8] sm:$0xff]
        %v2338 = vld [vmem:[%s1763 + $0x11f0] sm:$0xff]
        %v2339 = vld [vmem:[%s1763 + $0x11f8] sm:$0xff]
        %vm2355 = vcmask 1046528
        %v2356 = vrot.slane %v1748, 1
        %v2357 = vrot.slane %v1753, 1
        %v2358 = vsel %vm2355, %v2356, %v2357
        %v2359 = vrot.slane %v1749, 1
        %v2360 = vrot.slane %v1754, 1
        %v2361 = vsel %vm2355, %v2359, %v2360
        %v2362 = vrot.slane %v1750, 1
        %v2363 = vrot.slane %v1755, 1
        %v2364 = vsel %vm2355, %v2362, %v2363
        %v2365 = vrot.slane %v1751, 1
        %v2366 = vrot.slane %v1756, 1
        %v2367 = vsel %vm2355, %v2365, %v2366
        %v2368 = vrot.slane %v1752, 1
        %v2369 = vrot.slane %v1757, 1
        %v2370 = vsel %vm2355, %v2368, %v2369
        %v2371 = vrot.slane %v1758, 1
        %v2372 = vsel %vm2355, %v2357, %v2371
        %v2373 = vrot.slane %v1759, 1
        %v2374 = vsel %vm2355, %v2360, %v2373
        %v2375 = vrot.slane %v1760, 1
        %v2376 = vsel %vm2355, %v2363, %v2375
        %v2377 = vrot.slane %v1761, 1
        %v2378 = vsel %vm2355, %v2366, %v2377
        %v2379 = vrot.slane %v1762, 1
        %v2380 = vsel %vm2355, %v2369, %v2379
        %v2389 = vsel %vm785, %v2370, 0
        %v2391 = vsel %vm785, %v2380, 0
        %2393 = vmatprep.subr.mxu0 %v1885
        %2394 = vmatpush1.msra.mxu0 %v1884
        %2395 = vmatprep.subr.mxu0 %v1877
        %2396 = vmatpush1.msra.mxu0 %v1876
        %2397 = vmatprep.subr.mxu0 %v1869
        %2398 = vmatpush1.msra.mxu0 %v1868
        %2399 = vmatprep.subr.mxu0 %v1861
        %2400 = vmatpush1.msra.mxu0 %v1860
        %2401 = vmatprep.subr.mxu0 %v1853
        %2402 = vmatpush1.msra.mxu0 %v1852
        %2403 = vmatprep.subr.mxu0 %v1845
        %2404 = vmatpush1.msra.mxu0 %v1844
        %2405 = vmatprep.subr.mxu0 %v1837
        %2406 = vmatpush1.msra.mxu0 %v1836
        %2407 = vmatprep.subr.mxu0 %v1829
        %2408 = vmatpush1.msra.mxu0 %v1828
        %2409 = vmatprep.subr.mxu0 %v1821
        %2410 = vmatpush1.msra.mxu0 %v1820
        %2411 = vmatprep.subr.mxu0 %v1813
        %2412 = vmatpush1.msra.mxu0 %v1812
        %2413 = vmatprep.subr.mxu0 %v1805
        %2414 = vmatpush1.msra.mxu0 %v1804
        %2415 = vmatprep.subr.mxu0 %v1797
        %2416 = vmatpush1.msra.mxu0 %v1796
        %2417 = vmatprep.subr.mxu0 %v1789
        %2418 = vmatpush1.msra.mxu0 %v1788
        %2419 = vmatprep.subr.mxu0 %v1781
        %2420 = vmatpush1.msra.mxu0 %v1780
        %2421 = vmatprep.subr.mxu0 %v1773
        %2422 = vmatpush1.msra.mxu0 %v1772
        %2423 = vmatprep.subr.mxu0 %v1765
        %2424 = vmatpush1.msra.mxu0 %v1764
        %2425 = vmatprep.subr.mxu0 %v2013
        %2426 = vmatpush2.msra.mxu0 %v2012
        %2427 = vmatprep.subr.mxu0 %v2005
        %2428 = vmatpush2.msra.mxu0 %v2004
        %2429 = vmatprep.subr.mxu0 %v1997
        %2430 = vmatpush2.msra.mxu0 %v1996
        %2431 = vmatprep.subr.mxu0 %v1989
        %2432 = vmatpush2.msra.mxu0 %v1988
        %2433 = vmatprep.subr.mxu0 %v1981
        %2434 = vmatpush2.msra.mxu0 %v1980
        %2435 = vmatprep.subr.mxu0 %v1973
        %2436 = vmatpush2.msra.mxu0 %v1972
        %2437 = vmatprep.subr.mxu0 %v1965
        %2438 = vmatpush2.msra.mxu0 %v1964
        %2439 = vmatprep.subr.mxu0 %v1957
        %2440 = vmatpush2.msra.mxu0 %v1956
        %2441 = vmatprep.subr.mxu0 %v1949
        %2442 = vmatpush2.msra.mxu0 %v1948
        %2443 = vmatprep.subr.mxu0 %v1941
        %2444 = vmatpush2.msra.mxu0 %v1940
        %2445 = vmatprep.subr.mxu0 %v1933
        %2446 = vmatpush2.msra.mxu0 %v1932
        %2447 = vmatprep.subr.mxu0 %v1925
        %2448 = vmatpush2.msra.mxu0 %v1924
        %2449 = vmatprep.subr.mxu0 %v1917
        %2450 = vmatpush2.msra.mxu0 %v1916
        %2451 = vmatprep.subr.mxu0 %v1909
        %2452 = vmatpush2.msra.mxu0 %v1908
        %2453 = vmatprep.subr.mxu0 %v1901
        %2454 = vmatpush2.msra.mxu0 %v1900
        %2455 = vmatprep.subr.mxu0 %v1893
        %2456 = vmatpush2.msra.mxu0 %v1892
        %2457 = vmatprep.mubr.f32.mxu0 %v2361
        %2458 = vmatmul.mubr.f32.gmra.mxu0 %v2358
        %v2459 = vpop.f32.mrf.mxu0
        %v2460 = vadd.f32 0.0, %v2459
        %v2461 = vpop.f32.mrf.mxu0
        %v2462 = vadd.f32 0.0, %v2461
        %2463 = vmatprep.mubr.f32.mxu0 %v2374
        %2464 = vmatmul.mubr.f32.gmra.mxu0 %v2372
        %v2465 = vpop.f32.mrf.mxu0
        %v2466 = vadd.f32 0.0, %v2465
        %v2467 = vpop.f32.mrf.mxu0
        %v2468 = vadd.f32 0.0, %v2467
        %2469 = vdwg.mxu0
        %2470 = vmatprep.subr.mxu0 %v2141
        %2471 = vmatpush1.msra.mxu0 %v2140
        %2472 = vmatprep.subr.mxu0 %v2133
        %2473 = vmatpush1.msra.mxu0 %v2132
        %2474 = vmatprep.subr.mxu0 %v2125
        %2475 = vmatpush1.msra.mxu0 %v2124
        %2476 = vmatprep.subr.mxu0 %v2117
        %2477 = vmatpush1.msra.mxu0 %v2116
        %2478 = vmatprep.subr.mxu0 %v2109
        %2479 = vmatpush1.msra.mxu0 %v2108
        %2480 = vmatprep.subr.mxu0 %v2101
        %2481 = vmatpush1.msra.mxu0 %v2100
        %2482 = vmatprep.subr.mxu0 %v2093
        %2483 = vmatpush1.msra.mxu0 %v2092
        %2484 = vmatprep.subr.mxu0 %v2085
        %2485 = vmatpush1.msra.mxu0 %v2084
        %2486 = vmatprep.subr.mxu0 %v2077
        %2487 = vmatpush1.msra.mxu0 %v2076
        %2488 = vmatprep.subr.mxu0 %v2069
        %2489 = vmatpush1.msra.mxu0 %v2068
        %2490 = vmatprep.subr.mxu0 %v2061
        %2491 = vmatpush1.msra.mxu0 %v2060
        %2492 = vmatprep.subr.mxu0 %v2053
        %2493 = vmatpush1.msra.mxu0 %v2052
        %2494 = vmatprep.subr.mxu0 %v2045
        %2495 = vmatpush1.msra.mxu0 %v2044
        %2496 = vmatprep.subr.mxu0 %v2037
        %2497 = vmatpush1.msra.mxu0 %v2036
        %2498 = vmatprep.subr.mxu0 %v2029
        %2499 = vmatpush1.msra.mxu0 %v2028
        %2500 = vmatprep.subr.mxu0 %v2021
        %2501 = vmatpush1.msra.mxu0 %v2020
        %2502 = vmatprep.subr.mxu0 %v2269
        %2503 = vmatpush2.msra.mxu0 %v2268
        %2504 = vmatprep.subr.mxu0 %v2261
        %2505 = vmatpush2.msra.mxu0 %v2260
        %2506 = vmatprep.subr.mxu0 %v2253
        %2507 = vmatpush2.msra.mxu0 %v2252
        %2508 = vmatprep.subr.mxu0 %v2245
        %2509 = vmatpush2.msra.mxu0 %v2244
        %2510 = vmatprep.subr.mxu0 %v2237
        %2511 = vmatpush2.msra.mxu0 %v2236
        %2512 = vmatprep.subr.mxu0 %v2229
        %2513 = vmatpush2.msra.mxu0 %v2228
        %2514 = vmatprep.subr.mxu0 %v2221
        %2515 = vmatpush2.msra.mxu0 %v2220
        %2516 = vmatprep.subr.mxu0 %v2213
        %2517 = vmatpush2.msra.mxu0 %v2212
        %2518 = vmatprep.subr.mxu0 %v2205
        %2519 = vmatpush2.msra.mxu0 %v2204
        %2520 = vmatprep.subr.mxu0 %v2197
        %2521 = vmatpush2.msra.mxu0 %v2196
        %2522 = vmatprep.subr.mxu0 %v2189
        %2523 = vmatpush2.msra.mxu0 %v2188
        %2524 = vmatprep.subr.mxu0 %v2181
        %2525 = vmatpush2.msra.mxu0 %v2180
        %2526 = vmatprep.subr.mxu0 %v2173
        %2527 = vmatpush2.msra.mxu0 %v2172
        %2528 = vmatprep.subr.mxu0 %v2165
        %2529 = vmatpush2.msra.mxu0 %v2164
        %2530 = vmatprep.subr.mxu0 %v2157
        %2531 = vmatpush2.msra.mxu0 %v2156
        %2532 = vmatprep.subr.mxu0 %v2149
        %2533 = vmatpush2.msra.mxu0 %v2148
        %2534 = vmatprep.mubr.f32.mxu0 %v2367
        %2535 = vmatmul.mubr.f32.gmra.mxu0 %v2364
        %v2536 = vpop.f32.mrf.mxu0
        %v2537 = vadd.f32 %v2460, %v2536
        %v2538 = vpop.f32.mrf.mxu0
        %v2539 = vadd.f32 %v2462, %v2538
        %2540 = vmatprep.mubr.f32.mxu0 %v2378
        %2541 = vmatmul.mubr.f32.gmra.mxu0 %v2376
        %v2542 = vpop.f32.mrf.mxu0
        %v2543 = vadd.f32 %v2466, %v2542
        %v2544 = vpop.f32.mrf.mxu0
        %v2545 = vadd.f32 %v2468, %v2544
        %2546 = vdwg.mxu0
        %2547 = vmatprep.subr.mxu0 0.0
        %2548 = vmatpush1.msra.mxu0 0.0
        %2549 = vmatprep.subr.mxu0 0.0
        %2550 = vmatpush1.msra.mxu0 0.0
        %2551 = vmatprep.subr.mxu0 0.0
        %2552 = vmatpush1.msra.mxu0 0.0
        %2553 = vmatprep.subr.mxu0 0.0
        %2554 = vmatpush1.msra.mxu0 0.0
        %2555 = vmatprep.subr.mxu0 0.0
        %2556 = vmatpush1.msra.mxu0 0.0
        %2557 = vmatprep.subr.mxu0 0.0
        %2558 = vmatpush1.msra.mxu0 0.0
        %2559 = vmatprep.subr.mxu0 0.0
        %2560 = vmatpush1.msra.mxu0 0.0
        %2561 = vmatprep.subr.mxu0 0.0
        %2562 = vmatpush1.msra.mxu0 0.0
        %2563 = vmatprep.subr.mxu0 %v2333
        %2564 = vmatpush1.msra.mxu0 %v2332
        %2565 = vmatprep.subr.mxu0 %v2325
        %2566 = vmatpush1.msra.mxu0 %v2324
        %2567 = vmatprep.subr.mxu0 %v2317
        %2568 = vmatpush1.msra.mxu0 %v2316
        %2569 = vmatprep.subr.mxu0 %v2309
        %2570 = vmatpush1.msra.mxu0 %v2308
        %2571 = vmatprep.subr.mxu0 %v2301
        %2572 = vmatpush1.msra.mxu0 %v2300
        %2573 = vmatprep.subr.mxu0 %v2293
        %2574 = vmatpush1.msra.mxu0 %v2292
        %2575 = vmatprep.subr.mxu0 %v2285
        %2576 = vmatpush1.msra.mxu0 %v2284
        %2577 = vmatprep.subr.mxu0 %v2277
        %2578 = vmatpush1.msra.mxu0 %v2276
        %2579 = vmatprep.subr.mxu0 0.0
        %2580 = vmatpush2.msra.mxu0 0.0
        %2581 = vmatprep.subr.mxu0 0.0
        %2582 = vmatpush2.msra.mxu0 0.0
        %2583 = vmatprep.subr.mxu0 0.0
        %2584 = vmatpush2.msra.mxu0 0.0
        %2585 = vmatprep.subr.mxu0 0.0
        %2586 = vmatpush2.msra.mxu0 0.0
        %2587 = vmatprep.subr.mxu0 0.0
        %2588 = vmatpush2.msra.mxu0 0.0
        %2589 = vmatprep.subr.mxu0 0.0
        %2590 = vmatpush2.msra.mxu0 0.0
        %2591 = vmatprep.subr.mxu0 0.0
        %2592 = vmatpush2.msra.mxu0 0.0
        %2593 = vmatprep.subr.mxu0 0.0
        %2594 = vmatpush2.msra.mxu0 0.0
        %2595 = vmatprep.subr.mxu0 0.0
        %2596 = vmatpush2.msra.mxu0 0.0
        %2597 = vmatprep.subr.mxu0 0.0
        %2598 = vmatpush2.msra.mxu0 0.0
        %2599 = vmatprep.subr.mxu0 0.0
        %2600 = vmatpush2.msra.mxu0 0.0
        %2601 = vmatprep.subr.mxu0 0.0
        %2602 = vmatpush2.msra.mxu0 0.0
        %2603 = vmatprep.subr.mxu0 0.0
        %2604 = vmatpush2.msra.mxu0 0.0
        %2605 = vmatprep.subr.mxu0 0.0
        %2606 = vmatpush2.msra.mxu0 0.0
        %2607 = vmatprep.subr.mxu0 0.0
        %2608 = vmatpush2.msra.mxu0 0.0
        %2609 = vmatprep.subr.mxu0 0.0
        %2610 = vmatpush2.msra.mxu0 0.0
        %2611 = vmatprep.mubr.f32.mxu0 0.0
        %2612 = vmatmul.mubr.f32.gmra.mxu0 %v2389
        %v2613 = vpop.f32.mrf.mxu0
        %v2614 = vadd.f32 %v2537, %v2613
        %v2615 = vpop.f32.mrf.mxu0
        %v2616 = vadd.f32 %v2539, %v2615
        %2617 = vmatprep.mubr.f32.mxu0 0.0
        %2618 = vmatmul.mubr.f32.gmra.mxu0 %v2391
        %v2619 = vpop.f32.mrf.mxu0
        %v2620 = vadd.f32 %v2543, %v2619
        %v2621 = vpop.f32.mrf.mxu0
        %v2622 = vadd.f32 %v2545, %v2621
        %2623 = vdwg.mxu0
        %2624 = vmatprep.subr.mxu0 %v1887
        %2625 = vmatpush1.msra.mxu0 %v1886
        %2626 = vmatprep.subr.mxu0 %v1879
        %2627 = vmatpush1.msra.mxu0 %v1878
        %2628 = vmatprep.subr.mxu0 %v1871
        %2629 = vmatpush1.msra.mxu0 %v1870
        %2630 = vmatprep.subr.mxu0 %v1863
        %2631 = vmatpush1.msra.mxu0 %v1862
        %2632 = vmatprep.subr.mxu0 %v1855
        %2633 = vmatpush1.msra.mxu0 %v1854
        %2634 = vmatprep.subr.mxu0 %v1847
        %2635 = vmatpush1.msra.mxu0 %v1846
        %2636 = vmatprep.subr.mxu0 %v1839
        %2637 = vmatpush1.msra.mxu0 %v1838
        %2638 = vmatprep.subr.mxu0 %v1831
        %2639 = vmatpush1.msra.mxu0 %v1830
        %2640 = vmatprep.subr.mxu0 %v1823
        %2641 = vmatpush1.msra.mxu0 %v1822
        %2642 = vmatprep.subr.mxu0 %v1815
        %2643 = vmatpush1.msra.mxu0 %v1814
        %2644 = vmatprep.subr.mxu0 %v1807
        %2645 = vmatpush1.msra.mxu0 %v1806
        %2646 = vmatprep.subr.mxu0 %v1799
        %2647 = vmatpush1.msra.mxu0 %v1798
        %2648 = vmatprep.subr.mxu0 %v1791
        %2649 = vmatpush1.msra.mxu0 %v1790
        %2650 = vmatprep.subr.mxu0 %v1783
        %2651 = vmatpush1.msra.mxu0 %v1782
        %2652 = vmatprep.subr.mxu0 %v1775
        %2653 = vmatpush1.msra.mxu0 %v1774
        %2654 = vmatprep.subr.mxu0 %v1767
        %2655 = vmatpush1.msra.mxu0 %v1766
        %2656 = vmatprep.subr.mxu0 %v2015
        %2657 = vmatpush2.msra.mxu0 %v2014
        %2658 = vmatprep.subr.mxu0 %v2007
        %2659 = vmatpush2.msra.mxu0 %v2006
        %2660 = vmatprep.subr.mxu0 %v1999
        %2661 = vmatpush2.msra.mxu0 %v1998
        %2662 = vmatprep.subr.mxu0 %v1991
        %2663 = vmatpush2.msra.mxu0 %v1990
        %2664 = vmatprep.subr.mxu0 %v1983
        %2665 = vmatpush2.msra.mxu0 %v1982
        %2666 = vmatprep.subr.mxu0 %v1975
        %2667 = vmatpush2.msra.mxu0 %v1974
        %2668 = vmatprep.subr.mxu0 %v1967
        %2669 = vmatpush2.msra.mxu0 %v1966
        %2670 = vmatprep.subr.mxu0 %v1959
        %2671 = vmatpush2.msra.mxu0 %v1958
        %2672 = vmatprep.subr.mxu0 %v1951
        %2673 = vmatpush2.msra.mxu0 %v1950
        %2674 = vmatprep.subr.mxu0 %v1943
        %2675 = vmatpush2.msra.mxu0 %v1942
        %2676 = vmatprep.subr.mxu0 %v1935
        %2677 = vmatpush2.msra.mxu0 %v1934
        %2678 = vmatprep.subr.mxu0 %v1927
        %2679 = vmatpush2.msra.mxu0 %v1926
        %2680 = vmatprep.subr.mxu0 %v1919
        %2681 = vmatpush2.msra.mxu0 %v1918
        %2682 = vmatprep.subr.mxu0 %v1911
        %2683 = vmatpush2.msra.mxu0 %v1910
        %2684 = vmatprep.subr.mxu0 %v1903
        %2685 = vmatpush2.msra.mxu0 %v1902
        %2686 = vmatprep.subr.mxu0 %v1895
        %2687 = vmatpush2.msra.mxu0 %v1894
        %2688 = vmatprep.mubr.f32.mxu0 %v2361
        %2689 = vmatmul.mubr.f32.gmra.mxu0 %v2358
        %v2690 = vpop.f32.mrf.mxu0
        %v2691 = vadd.f32 0.0, %v2690
        %v2692 = vpop.f32.mrf.mxu0
        %v2693 = vadd.f32 0.0, %v2692
        %2694 = vmatprep.mubr.f32.mxu0 %v2374
        %2695 = vmatmul.mubr.f32.gmra.mxu0 %v2372
        %v2696 = vpop.f32.mrf.mxu0
        %v2697 = vadd.f32 0.0, %v2696
        %v2698 = vpop.f32.mrf.mxu0
        %v2699 = vadd.f32 0.0, %v2698
        %2700 = vdwg.mxu0
        %2701 = vmatprep.subr.mxu0 %v2143
        %2702 = vmatpush1.msra.mxu0 %v2142
        %2703 = vmatprep.subr.mxu0 %v2135
        %2704 = vmatpush1.msra.mxu0 %v2134
        %2705 = vmatprep.subr.mxu0 %v2127
        %2706 = vmatpush1.msra.mxu0 %v2126
        %2707 = vmatprep.subr.mxu0 %v2119
        %2708 = vmatpush1.msra.mxu0 %v2118
        %2709 = vmatprep.subr.mxu0 %v2111
        %2710 = vmatpush1.msra.mxu0 %v2110
        %2711 = vmatprep.subr.mxu0 %v2103
        %2712 = vmatpush1.msra.mxu0 %v2102
        %2713 = vmatprep.subr.mxu0 %v2095
        %2714 = vmatpush1.msra.mxu0 %v2094
        %2715 = vmatprep.subr.mxu0 %v2087
        %2716 = vmatpush1.msra.mxu0 %v2086
        %2717 = vmatprep.subr.mxu0 %v2079
        %2718 = vmatpush1.msra.mxu0 %v2078
        %2719 = vmatprep.subr.mxu0 %v2071
        %2720 = vmatpush1.msra.mxu0 %v2070
        %2721 = vmatprep.subr.mxu0 %v2063
        %2722 = vmatpush1.msra.mxu0 %v2062
        %2723 = vmatprep.subr.mxu0 %v2055
        %2724 = vmatpush1.msra.mxu0 %v2054
        %2725 = vmatprep.subr.mxu0 %v2047
        %2726 = vmatpush1.msra.mxu0 %v2046
        %2727 = vmatprep.subr.mxu0 %v2039
        %2728 = vmatpush1.msra.mxu0 %v2038
        %2729 = vmatprep.subr.mxu0 %v2031
        %2730 = vmatpush1.msra.mxu0 %v2030
        %2731 = vmatprep.subr.mxu0 %v2023
        %2732 = vmatpush1.msra.mxu0 %v2022
        %2733 = vmatprep.subr.mxu0 %v2271
        %2734 = vmatpush2.msra.mxu0 %v2270
        %2735 = vmatprep.subr.mxu0 %v2263
        %2736 = vmatpush2.msra.mxu0 %v2262
        %2737 = vmatprep.subr.mxu0 %v2255
        %2738 = vmatpush2.msra.mxu0 %v2254
        %2739 = vmatprep.subr.mxu0 %v2247
        %2740 = vmatpush2.msra.mxu0 %v2246
        %2741 = vmatprep.subr.mxu0 %v2239
        %2742 = vmatpush2.msra.mxu0 %v2238
        %2743 = vmatprep.subr.mxu0 %v2231
        %2744 = vmatpush2.msra.mxu0 %v2230
        %2745 = vmatprep.subr.mxu0 %v2223
        %2746 = vmatpush2.msra.mxu0 %v2222
        %2747 = vmatprep.subr.mxu0 %v2215
        %2748 = vmatpush2.msra.mxu0 %v2214
        %2749 = vmatprep.subr.mxu0 %v2207
        %2750 = vmatpush2.msra.mxu0 %v2206
        %2751 = vmatprep.subr.mxu0 %v2199
        %2752 = vmatpush2.msra.mxu0 %v2198
        %2753 = vmatprep.subr.mxu0 %v2191
        %2754 = vmatpush2.msra.mxu0 %v2190
        %2755 = vmatprep.subr.mxu0 %v2183
        %2756 = vmatpush2.msra.mxu0 %v2182
        %2757 = vmatprep.subr.mxu0 %v2175
        %2758 = vmatpush2.msra.mxu0 %v2174
        %2759 = vmatprep.subr.mxu0 %v2167
        %2760 = vmatpush2.msra.mxu0 %v2166
        %2761 = vmatprep.subr.mxu0 %v2159
        %2762 = vmatpush2.msra.mxu0 %v2158
        %2763 = vmatprep.subr.mxu0 %v2151
        %2764 = vmatpush2.msra.mxu0 %v2150
        %2765 = vmatprep.mubr.f32.mxu0 %v2367
        %2766 = vmatmul.mubr.f32.gmra.mxu0 %v2364
        %v2767 = vpop.f32.mrf.mxu0
        %v2768 = vadd.f32 %v2691, %v2767
        %v2769 = vpop.f32.mrf.mxu0
        %v2770 = vadd.f32 %v2693, %v2769
        %2771 = vmatprep.mubr.f32.mxu0 %v2378
        %2772 = vmatmul.mubr.f32.gmra.mxu0 %v2376
        %v2773 = vpop.f32.mrf.mxu0
        %v2774 = vadd.f32 %v2697, %v2773
        %v2775 = vpop.f32.mrf.mxu0
        %v2776 = vadd.f32 %v2699, %v2775
        %2777 = vdwg.mxu0
        %2778 = vmatprep.subr.mxu0 0.0
        %2779 = vmatpush1.msra.mxu0 0.0
        %2780 = vmatprep.subr.mxu0 0.0
        %2781 = vmatpush1.msra.mxu0 0.0
        %2782 = vmatprep.subr.mxu0 0.0
        %2783 = vmatpush1.msra.mxu0 0.0
        %2784 = vmatprep.subr.mxu0 0.0
        %2785 = vmatpush1.msra.mxu0 0.0
        %2786 = vmatprep.subr.mxu0 0.0
        %2787 = vmatpush1.msra.mxu0 0.0
        %2788 = vmatprep.subr.mxu0 0.0
        %2789 = vmatpush1.msra.mxu0 0.0
        %2790 = vmatprep.subr.mxu0 0.0
        %2791 = vmatpush1.msra.mxu0 0.0
        %2792 = vmatprep.subr.mxu0 0.0
        %2793 = vmatpush1.msra.mxu0 0.0
        %2794 = vmatprep.subr.mxu0 %v2335
        %2795 = vmatpush1.msra.mxu0 %v2334
        %2796 = vmatprep.subr.mxu0 %v2327
        %2797 = vmatpush1.msra.mxu0 %v2326
        %2798 = vmatprep.subr.mxu0 %v2319
        %2799 = vmatpush1.msra.mxu0 %v2318
        %2800 = vmatprep.subr.mxu0 %v2311
        %2801 = vmatpush1.msra.mxu0 %v2310
        %2802 = vmatprep.subr.mxu0 %v2303
        %2803 = vmatpush1.msra.mxu0 %v2302
        %2804 = vmatprep.subr.mxu0 %v2295
        %2805 = vmatpush1.msra.mxu0 %v2294
        %2806 = vmatprep.subr.mxu0 %v2287
        %2807 = vmatpush1.msra.mxu0 %v2286
        %2808 = vmatprep.subr.mxu0 %v2279
        %2809 = vmatpush1.msra.mxu0 %v2278
        %2810 = vmatprep.subr.mxu0 0.0
        %2811 = vmatpush2.msra.mxu0 0.0
        %2812 = vmatprep.subr.mxu0 0.0
        %2813 = vmatpush2.msra.mxu0 0.0
        %2814 = vmatprep.subr.mxu0 0.0
        %2815 = vmatpush2.msra.mxu0 0.0
        %2816 = vmatprep.subr.mxu0 0.0
        %2817 = vmatpush2.msra.mxu0 0.0
        %2818 = vmatprep.subr.mxu0 0.0
        %2819 = vmatpush2.msra.mxu0 0.0
        %2820 = vmatprep.subr.mxu0 0.0
        %2821 = vmatpush2.msra.mxu0 0.0
        %2822 = vmatprep.subr.mxu0 0.0
        %2823 = vmatpush2.msra.mxu0 0.0
        %2824 = vmatprep.subr.mxu0 0.0
        %2825 = vmatpush2.msra.mxu0 0.0
        %2826 = vmatprep.subr.mxu0 0.0
        %2827 = vmatpush2.msra.mxu0 0.0
        %2828 = vmatprep.subr.mxu0 0.0
        %2829 = vmatpush2.msra.mxu0 0.0
        %2830 = vmatprep.subr.mxu0 0.0
        %2831 = vmatpush2.msra.mxu0 0.0
        %2832 = vmatprep.subr.mxu0 0.0
        %2833 = vmatpush2.msra.mxu0 0.0
        %2834 = vmatprep.subr.mxu0 0.0
        %2835 = vmatpush2.msra.mxu0 0.0
        %2836 = vmatprep.subr.mxu0 0.0
        %2837 = vmatpush2.msra.mxu0 0.0
        %2838 = vmatprep.subr.mxu0 0.0
        %2839 = vmatpush2.msra.mxu0 0.0
        %2840 = vmatprep.subr.mxu0 0.0
        %2841 = vmatpush2.msra.mxu0 0.0
        %2842 = vmatprep.mubr.f32.mxu0 0.0
        %2843 = vmatmul.mubr.f32.gmra.mxu0 %v2389
        %v2844 = vpop.f32.mrf.mxu0
        %v2845 = vadd.f32 %v2768, %v2844
        %v2846 = vpop.f32.mrf.mxu0
        %v2847 = vadd.f32 %v2770, %v2846
        %2848 = vmatprep.mubr.f32.mxu0 0.0
        %2849 = vmatmul.mubr.f32.gmra.mxu0 %v2391
        %v2850 = vpop.f32.mrf.mxu0
        %v2851 = vadd.f32 %v2774, %v2850
        %v2852 = vpop.f32.mrf.mxu0
        %v2853 = vadd.f32 %v2776, %v2852
        %2854 = vdwg.mxu0
        %2855 = vmatprep.subr.mxu0 %v1889
        %2856 = vmatpush1.msra.mxu0 %v1888
        %2857 = vmatprep.subr.mxu0 %v1881
        %2858 = vmatpush1.msra.mxu0 %v1880
        %2859 = vmatprep.subr.mxu0 %v1873
        %2860 = vmatpush1.msra.mxu0 %v1872
        %2861 = vmatprep.subr.mxu0 %v1865
        %2862 = vmatpush1.msra.mxu0 %v1864
        %2863 = vmatprep.subr.mxu0 %v1857
        %2864 = vmatpush1.msra.mxu0 %v1856
        %2865 = vmatprep.subr.mxu0 %v1849
        %2866 = vmatpush1.msra.mxu0 %v1848
        %2867 = vmatprep.subr.mxu0 %v1841
        %2868 = vmatpush1.msra.mxu0 %v1840
        %2869 = vmatprep.subr.mxu0 %v1833
        %2870 = vmatpush1.msra.mxu0 %v1832
        %2871 = vmatprep.subr.mxu0 %v1825
        %2872 = vmatpush1.msra.mxu0 %v1824
        %2873 = vmatprep.subr.mxu0 %v1817
        %2874 = vmatpush1.msra.mxu0 %v1816
        %2875 = vmatprep.subr.mxu0 %v1809
        %2876 = vmatpush1.msra.mxu0 %v1808
        %2877 = vmatprep.subr.mxu0 %v1801
        %2878 = vmatpush1.msra.mxu0 %v1800
        %2879 = vmatprep.subr.mxu0 %v1793
        %2880 = vmatpush1.msra.mxu0 %v1792
        %2881 = vmatprep.subr.mxu0 %v1785
        %2882 = vmatpush1.msra.mxu0 %v1784
        %2883 = vmatprep.subr.mxu0 %v1777
        %2884 = vmatpush1.msra.mxu0 %v1776
        %2885 = vmatprep.subr.mxu0 %v1769
        %2886 = vmatpush1.msra.mxu0 %v1768
        %2887 = vmatprep.subr.mxu0 %v2017
        %2888 = vmatpush2.msra.mxu0 %v2016
        %2889 = vmatprep.subr.mxu0 %v2009
        %2890 = vmatpush2.msra.mxu0 %v2008
        %2891 = vmatprep.subr.mxu0 %v2001
        %2892 = vmatpush2.msra.mxu0 %v2000
        %2893 = vmatprep.subr.mxu0 %v1993
        %2894 = vmatpush2.msra.mxu0 %v1992
        %2895 = vmatprep.subr.mxu0 %v1985
        %2896 = vmatpush2.msra.mxu0 %v1984
        %2897 = vmatprep.subr.mxu0 %v1977
        %2898 = vmatpush2.msra.mxu0 %v1976
        %2899 = vmatprep.subr.mxu0 %v1969
        %2900 = vmatpush2.msra.mxu0 %v1968
        %2901 = vmatprep.subr.mxu0 %v1961
        %2902 = vmatpush2.msra.mxu0 %v1960
        %2903 = vmatprep.subr.mxu0 %v1953
        %2904 = vmatpush2.msra.mxu0 %v1952
        %2905 = vmatprep.subr.mxu0 %v1945
        %2906 = vmatpush2.msra.mxu0 %v1944
        %2907 = vmatprep.subr.mxu0 %v1937
        %2908 = vmatpush2.msra.mxu0 %v1936
        %2909 = vmatprep.subr.mxu0 %v1929
        %2910 = vmatpush2.msra.mxu0 %v1928
        %2911 = vmatprep.subr.mxu0 %v1921
        %2912 = vmatpush2.msra.mxu0 %v1920
        %2913 = vmatprep.subr.mxu0 %v1913
        %2914 = vmatpush2.msra.mxu0 %v1912
        %2915 = vmatprep.subr.mxu0 %v1905
        %2916 = vmatpush2.msra.mxu0 %v1904
        %2917 = vmatprep.subr.mxu0 %v1897
        %2918 = vmatpush2.msra.mxu0 %v1896
        %2919 = vmatprep.mubr.f32.mxu0 %v2361
        %2920 = vmatmul.mubr.f32.gmra.mxu0 %v2358
        %v2921 = vpop.f32.mrf.mxu0
        %v2922 = vadd.f32 0.0, %v2921
        %v2923 = vpop.f32.mrf.mxu0
        %v2924 = vadd.f32 0.0, %v2923
        %2925 = vmatprep.mubr.f32.mxu0 %v2374
        %2926 = vmatmul.mubr.f32.gmra.mxu0 %v2372
        %v2927 = vpop.f32.mrf.mxu0
        %v2928 = vadd.f32 0.0, %v2927
        %v2929 = vpop.f32.mrf.mxu0
        %v2930 = vadd.f32 0.0, %v2929
        %2931 = vdwg.mxu0
        %2932 = vmatprep.subr.mxu0 %v2145
        %2933 = vmatpush1.msra.mxu0 %v2144
        %2934 = vmatprep.subr.mxu0 %v2137
        %2935 = vmatpush1.msra.mxu0 %v2136
        %2936 = vmatprep.subr.mxu0 %v2129
        %2937 = vmatpush1.msra.mxu0 %v2128
        %2938 = vmatprep.subr.mxu0 %v2121
        %2939 = vmatpush1.msra.mxu0 %v2120
        %2940 = vmatprep.subr.mxu0 %v2113
        %2941 = vmatpush1.msra.mxu0 %v2112
        %2942 = vmatprep.subr.mxu0 %v2105
        %2943 = vmatpush1.msra.mxu0 %v2104
        %2944 = vmatprep.subr.mxu0 %v2097
        %2945 = vmatpush1.msra.mxu0 %v2096
        %2946 = vmatprep.subr.mxu0 %v2089
        %2947 = vmatpush1.msra.mxu0 %v2088
        %2948 = vmatprep.subr.mxu0 %v2081
        %2949 = vmatpush1.msra.mxu0 %v2080
        %2950 = vmatprep.subr.mxu0 %v2073
        %2951 = vmatpush1.msra.mxu0 %v2072
        %2952 = vmatprep.subr.mxu0 %v2065
        %2953 = vmatpush1.msra.mxu0 %v2064
        %2954 = vmatprep.subr.mxu0 %v2057
        %2955 = vmatpush1.msra.mxu0 %v2056
        %2956 = vmatprep.subr.mxu0 %v2049
        %2957 = vmatpush1.msra.mxu0 %v2048
        %2958 = vmatprep.subr.mxu0 %v2041
        %2959 = vmatpush1.msra.mxu0 %v2040
        %2960 = vmatprep.subr.mxu0 %v2033
        %2961 = vmatpush1.msra.mxu0 %v2032
        %2962 = vmatprep.subr.mxu0 %v2025
        %2963 = vmatpush1.msra.mxu0 %v2024
        %2964 = vmatprep.subr.mxu0 %v2273
        %2965 = vmatpush2.msra.mxu0 %v2272
        %2966 = vmatprep.subr.mxu0 %v2265
        %2967 = vmatpush2.msra.mxu0 %v2264
        %2968 = vmatprep.subr.mxu0 %v2257
        %2969 = vmatpush2.msra.mxu0 %v2256
        %2970 = vmatprep.subr.mxu0 %v2249
        %2971 = vmatpush2.msra.mxu0 %v2248
        %2972 = vmatprep.subr.mxu0 %v2241
        %2973 = vmatpush2.msra.mxu0 %v2240
        %2974 = vmatprep.subr.mxu0 %v2233
        %2975 = vmatpush2.msra.mxu0 %v2232
        %2976 = vmatprep.subr.mxu0 %v2225
        %2977 = vmatpush2.msra.mxu0 %v2224
        %2978 = vmatprep.subr.mxu0 %v2217
        %2979 = vmatpush2.msra.mxu0 %v2216
        %2980 = vmatprep.subr.mxu0 %v2209
        %2981 = vmatpush2.msra.mxu0 %v2208
        %2982 = vmatprep.subr.mxu0 %v2201
        %2983 = vmatpush2.msra.mxu0 %v2200
        %2984 = vmatprep.subr.mxu0 %v2193
        %2985 = vmatpush2.msra.mxu0 %v2192
        %2986 = vmatprep.subr.mxu0 %v2185
        %2987 = vmatpush2.msra.mxu0 %v2184
        %2988 = vmatprep.subr.mxu0 %v2177
        %2989 = vmatpush2.msra.mxu0 %v2176
        %2990 = vmatprep.subr.mxu0 %v2169
        %2991 = vmatpush2.msra.mxu0 %v2168
        %2992 = vmatprep.subr.mxu0 %v2161
        %2993 = vmatpush2.msra.mxu0 %v2160
        %2994 = vmatprep.subr.mxu0 %v2153
        %2995 = vmatpush2.msra.mxu0 %v2152
        %2996 = vmatprep.mubr.f32.mxu0 %v2367
        %2997 = vmatmul.mubr.f32.gmra.mxu0 %v2364
        %v2998 = vpop.f32.mrf.mxu0
        %v2999 = vadd.f32 %v2922, %v2998
        %v3000 = vpop.f32.mrf.mxu0
        %v3001 = vadd.f32 %v2924, %v3000
        %3002 = vmatprep.mubr.f32.mxu0 %v2378
        %3003 = vmatmul.mubr.f32.gmra.mxu0 %v2376
        %v3004 = vpop.f32.mrf.mxu0
        %v3005 = vadd.f32 %v2928, %v3004
        %v3006 = vpop.f32.mrf.mxu0
        %v3007 = vadd.f32 %v2930, %v3006
        %3008 = vdwg.mxu0
        %3009 = vmatprep.subr.mxu0 0.0
        %3010 = vmatpush1.msra.mxu0 0.0
        %3011 = vmatprep.subr.mxu0 0.0
        %3012 = vmatpush1.msra.mxu0 0.0
        %3013 = vmatprep.subr.mxu0 0.0
        %3014 = vmatpush1.msra.mxu0 0.0
        %3015 = vmatprep.subr.mxu0 0.0
        %3016 = vmatpush1.msra.mxu0 0.0
        %3017 = vmatprep.subr.mxu0 0.0
        %3018 = vmatpush1.msra.mxu0 0.0
        %3019 = vmatprep.subr.mxu0 0.0
        %3020 = vmatpush1.msra.mxu0 0.0
        %3021 = vmatprep.subr.mxu0 0.0
        %3022 = vmatpush1.msra.mxu0 0.0
        %3023 = vmatprep.subr.mxu0 0.0
        %3024 = vmatpush1.msra.mxu0 0.0
        %3025 = vmatprep.subr.mxu0 %v2337
        %3026 = vmatpush1.msra.mxu0 %v2336
        %3027 = vmatprep.subr.mxu0 %v2329
        %3028 = vmatpush1.msra.mxu0 %v2328
        %3029 = vmatprep.subr.mxu0 %v2321
        %3030 = vmatpush1.msra.mxu0 %v2320
        %3031 = vmatprep.subr.mxu0 %v2313
        %3032 = vmatpush1.msra.mxu0 %v2312
        %3033 = vmatprep.subr.mxu0 %v2305
        %3034 = vmatpush1.msra.mxu0 %v2304
        %3035 = vmatprep.subr.mxu0 %v2297
        %3036 = vmatpush1.msra.mxu0 %v2296
        %3037 = vmatprep.subr.mxu0 %v2289
        %3038 = vmatpush1.msra.mxu0 %v2288
        %3039 = vmatprep.subr.mxu0 %v2281
        %3040 = vmatpush1.msra.mxu0 %v2280
        %3041 = vmatprep.subr.mxu0 0.0
        %3042 = vmatpush2.msra.mxu0 0.0
        %3043 = vmatprep.subr.mxu0 0.0
        %3044 = vmatpush2.msra.mxu0 0.0
        %3045 = vmatprep.subr.mxu0 0.0
        %3046 = vmatpush2.msra.mxu0 0.0
        %3047 = vmatprep.subr.mxu0 0.0
        %3048 = vmatpush2.msra.mxu0 0.0
        %3049 = vmatprep.subr.mxu0 0.0
        %3050 = vmatpush2.msra.mxu0 0.0
        %3051 = vmatprep.subr.mxu0 0.0
        %3052 = vmatpush2.msra.mxu0 0.0
        %3053 = vmatprep.subr.mxu0 0.0
        %3054 = vmatpush2.msra.mxu0 0.0
        %3055 = vmatprep.subr.mxu0 0.0
        %3056 = vmatpush2.msra.mxu0 0.0
        %3057 = vmatprep.subr.mxu0 0.0
        %3058 = vmatpush2.msra.mxu0 0.0
        %3059 = vmatprep.subr.mxu0 0.0
        %3060 = vmatpush2.msra.mxu0 0.0
        %3061 = vmatprep.subr.mxu0 0.0
        %3062 = vmatpush2.msra.mxu0 0.0
        %3063 = vmatprep.subr.mxu0 0.0
        %3064 = vmatpush2.msra.mxu0 0.0
        %3065 = vmatprep.subr.mxu0 0.0
        %3066 = vmatpush2.msra.mxu0 0.0
        %3067 = vmatprep.subr.mxu0 0.0
        %3068 = vmatpush2.msra.mxu0 0.0
        %3069 = vmatprep.subr.mxu0 0.0
        %3070 = vmatpush2.msra.mxu0 0.0
        %3071 = vmatprep.subr.mxu0 0.0
        %3072 = vmatpush2.msra.mxu0 0.0
        %3073 = vmatprep.mubr.f32.mxu0 0.0
        %3074 = vmatmul.mubr.f32.gmra.mxu0 %v2389
        %v3075 = vpop.f32.mrf.mxu0
        %v3076 = vadd.f32 %v2999, %v3075
        %v3077 = vpop.f32.mrf.mxu0
        %v3078 = vadd.f32 %v3001, %v3077
        %3079 = vmatprep.mubr.f32.mxu0 0.0
        %3080 = vmatmul.mubr.f32.gmra.mxu0 %v2391
        %v3081 = vpop.f32.mrf.mxu0
        %v3082 = vadd.f32 %v3005, %v3081
        %v3083 = vpop.f32.mrf.mxu0
        %v3084 = vadd.f32 %v3007, %v3083
        %3085 = vdwg.mxu0
        %3086 = vmatprep.subr.mxu0 %v1891
        %3087 = vmatpush1.msra.mxu0 %v1890
        %3088 = vmatprep.subr.mxu0 %v1883
        %3089 = vmatpush1.msra.mxu0 %v1882
        %3090 = vmatprep.subr.mxu0 %v1875
        %3091 = vmatpush1.msra.mxu0 %v1874
        %3092 = vmatprep.subr.mxu0 %v1867
        %3093 = vmatpush1.msra.mxu0 %v1866
        %3094 = vmatprep.subr.mxu0 %v1859
        %3095 = vmatpush1.msra.mxu0 %v1858
        %3096 = vmatprep.subr.mxu0 %v1851
        %3097 = vmatpush1.msra.mxu0 %v1850
        %3098 = vmatprep.subr.mxu0 %v1843
        %3099 = vmatpush1.msra.mxu0 %v1842
        %3100 = vmatprep.subr.mxu0 %v1835
        %3101 = vmatpush1.msra.mxu0 %v1834
        %3102 = vmatprep.subr.mxu0 %v1827
        %3103 = vmatpush1.msra.mxu0 %v1826
        %3104 = vmatprep.subr.mxu0 %v1819
        %3105 = vmatpush1.msra.mxu0 %v1818
        %3106 = vmatprep.subr.mxu0 %v1811
        %3107 = vmatpush1.msra.mxu0 %v1810
        %3108 = vmatprep.subr.mxu0 %v1803
        %3109 = vmatpush1.msra.mxu0 %v1802
        %3110 = vmatprep.subr.mxu0 %v1795
        %3111 = vmatpush1.msra.mxu0 %v1794
        %3112 = vmatprep.subr.mxu0 %v1787
        %3113 = vmatpush1.msra.mxu0 %v1786
        %3114 = vmatprep.subr.mxu0 %v1779
        %3115 = vmatpush1.msra.mxu0 %v1778
        %3116 = vmatprep.subr.mxu0 %v1771
        %3117 = vmatpush1.msra.mxu0 %v1770
        %3118 = vmatprep.subr.mxu0 %v2019
        %3119 = vmatpush2.msra.mxu0 %v2018
        %3120 = vmatprep.subr.mxu0 %v2011
        %3121 = vmatpush2.msra.mxu0 %v2010
        %3122 = vmatprep.subr.mxu0 %v2003
        %3123 = vmatpush2.msra.mxu0 %v2002
        %3124 = vmatprep.subr.mxu0 %v1995
        %3125 = vmatpush2.msra.mxu0 %v1994
        %3126 = vmatprep.subr.mxu0 %v1987
        %3127 = vmatpush2.msra.mxu0 %v1986
        %3128 = vmatprep.subr.mxu0 %v1979
        %3129 = vmatpush2.msra.mxu0 %v1978
        %3130 = vmatprep.subr.mxu0 %v1971
        %3131 = vmatpush2.msra.mxu0 %v1970
        %3132 = vmatprep.subr.mxu0 %v1963
        %3133 = vmatpush2.msra.mxu0 %v1962
        %3134 = vmatprep.subr.mxu0 %v1955
        %3135 = vmatpush2.msra.mxu0 %v1954
        %3136 = vmatprep.subr.mxu0 %v1947
        %3137 = vmatpush2.msra.mxu0 %v1946
        %3138 = vmatprep.subr.mxu0 %v1939
        %3139 = vmatpush2.msra.mxu0 %v1938
        %3140 = vmatprep.subr.mxu0 %v1931
        %3141 = vmatpush2.msra.mxu0 %v1930
        %3142 = vmatprep.subr.mxu0 %v1923
        %3143 = vmatpush2.msra.mxu0 %v1922
        %3144 = vmatprep.subr.mxu0 %v1915
        %3145 = vmatpush2.msra.mxu0 %v1914
        %3146 = vmatprep.subr.mxu0 %v1907
        %3147 = vmatpush2.msra.mxu0 %v1906
        %3148 = vmatprep.subr.mxu0 %v1899
        %3149 = vmatpush2.msra.mxu0 %v1898
        %3150 = vmatprep.mubr.f32.mxu0 %v2361
        %3151 = vmatmul.mubr.f32.gmra.mxu0 %v2358
        %v3152 = vpop.f32.mrf.mxu0
        %v3153 = vadd.f32 0.0, %v3152
        %v3154 = vpop.f32.mrf.mxu0
        %v3155 = vadd.f32 0.0, %v3154
        %3156 = vmatprep.mubr.f32.mxu0 %v2374
        %3157 = vmatmul.mubr.f32.gmra.mxu0 %v2372
        %v3158 = vpop.f32.mrf.mxu0
        %v3159 = vadd.f32 0.0, %v3158
        %v3160 = vpop.f32.mrf.mxu0
        %v3161 = vadd.f32 0.0, %v3160
        %3162 = vdwg.mxu0
        %3163 = vmatprep.subr.mxu0 %v2147
        %3164 = vmatpush1.msra.mxu0 %v2146
        %3165 = vmatprep.subr.mxu0 %v2139
        %3166 = vmatpush1.msra.mxu0 %v2138
        %3167 = vmatprep.subr.mxu0 %v2131
        %3168 = vmatpush1.msra.mxu0 %v2130
        %3169 = vmatprep.subr.mxu0 %v2123
        %3170 = vmatpush1.msra.mxu0 %v2122
        %3171 = vmatprep.subr.mxu0 %v2115
        %3172 = vmatpush1.msra.mxu0 %v2114
        %3173 = vmatprep.subr.mxu0 %v2107
        %3174 = vmatpush1.msra.mxu0 %v2106
        %3175 = vmatprep.subr.mxu0 %v2099
        %3176 = vmatpush1.msra.mxu0 %v2098
        %3177 = vmatprep.subr.mxu0 %v2091
        %3178 = vmatpush1.msra.mxu0 %v2090
        %3179 = vmatprep.subr.mxu0 %v2083
        %3180 = vmatpush1.msra.mxu0 %v2082
        %3181 = vmatprep.subr.mxu0 %v2075
        %3182 = vmatpush1.msra.mxu0 %v2074
        %3183 = vmatprep.subr.mxu0 %v2067
        %3184 = vmatpush1.msra.mxu0 %v2066
        %3185 = vmatprep.subr.mxu0 %v2059
        %3186 = vmatpush1.msra.mxu0 %v2058
        %3187 = vmatprep.subr.mxu0 %v2051
        %3188 = vmatpush1.msra.mxu0 %v2050
        %3189 = vmatprep.subr.mxu0 %v2043
        %3190 = vmatpush1.msra.mxu0 %v2042
        %3191 = vmatprep.subr.mxu0 %v2035
        %3192 = vmatpush1.msra.mxu0 %v2034
        %3193 = vmatprep.subr.mxu0 %v2027
        %3194 = vmatpush1.msra.mxu0 %v2026
        %3195 = vmatprep.subr.mxu0 %v2275
        %3196 = vmatpush2.msra.mxu0 %v2274
        %3197 = vmatprep.subr.mxu0 %v2267
        %3198 = vmatpush2.msra.mxu0 %v2266
        %3199 = vmatprep.subr.mxu0 %v2259
        %3200 = vmatpush2.msra.mxu0 %v2258
        %3201 = vmatprep.subr.mxu0 %v2251
        %3202 = vmatpush2.msra.mxu0 %v2250
        %3203 = vmatprep.subr.mxu0 %v2243
        %3204 = vmatpush2.msra.mxu0 %v2242
        %3205 = vmatprep.subr.mxu0 %v2235
        %3206 = vmatpush2.msra.mxu0 %v2234
        %3207 = vmatprep.subr.mxu0 %v2227
        %3208 = vmatpush2.msra.mxu0 %v2226
        %3209 = vmatprep.subr.mxu0 %v2219
        %3210 = vmatpush2.msra.mxu0 %v2218
        %3211 = vmatprep.subr.mxu0 %v2211
        %3212 = vmatpush2.msra.mxu0 %v2210
        %3213 = vmatprep.subr.mxu0 %v2203
        %3214 = vmatpush2.msra.mxu0 %v2202
        %3215 = vmatprep.subr.mxu0 %v2195
        %3216 = vmatpush2.msra.mxu0 %v2194
        %3217 = vmatprep.subr.mxu0 %v2187
        %3218 = vmatpush2.msra.mxu0 %v2186
        %3219 = vmatprep.subr.mxu0 %v2179
        %3220 = vmatpush2.msra.mxu0 %v2178
        %3221 = vmatprep.subr.mxu0 %v2171
        %3222 = vmatpush2.msra.mxu0 %v2170
        %3223 = vmatprep.subr.mxu0 %v2163
        %3224 = vmatpush2.msra.mxu0 %v2162
        %3225 = vmatprep.subr.mxu0 %v2155
        %3226 = vmatpush2.msra.mxu0 %v2154
        %3227 = vmatprep.mubr.f32.mxu0 %v2367
        %3228 = vmatmul.mubr.f32.gmra.mxu0 %v2364
        %v3229 = vpop.f32.mrf.mxu0
        %v3230 = vadd.f32 %v3153, %v3229
        %v3231 = vpop.f32.mrf.mxu0
        %v3232 = vadd.f32 %v3155, %v3231
        %3233 = vmatprep.mubr.f32.mxu0 %v2378
        %3234 = vmatmul.mubr.f32.gmra.mxu0 %v2376
        %v3235 = vpop.f32.mrf.mxu0
        %v3236 = vadd.f32 %v3159, %v3235
        %v3237 = vpop.f32.mrf.mxu0
        %v3238 = vadd.f32 %v3161, %v3237
        %3239 = vdwg.mxu0
        %3240 = vmatprep.subr.mxu0 0.0
        %3241 = vmatpush1.msra.mxu0 0.0
        %3242 = vmatprep.subr.mxu0 0.0
        %3243 = vmatpush1.msra.mxu0 0.0
        %3244 = vmatprep.subr.mxu0 0.0
        %3245 = vmatpush1.msra.mxu0 0.0
        %3246 = vmatprep.subr.mxu0 0.0
        %3247 = vmatpush1.msra.mxu0 0.0
        %3248 = vmatprep.subr.mxu0 0.0
        %3249 = vmatpush1.msra.mxu0 0.0
        %3250 = vmatprep.subr.mxu0 0.0
        %3251 = vmatpush1.msra.mxu0 0.0
        %3252 = vmatprep.subr.mxu0 0.0
        %3253 = vmatpush1.msra.mxu0 0.0
        %3254 = vmatprep.subr.mxu0 0.0
        %3255 = vmatpush1.msra.mxu0 0.0
        %3256 = vmatprep.subr.mxu0 %v2339
        %3257 = vmatpush1.msra.mxu0 %v2338
        %3258 = vmatprep.subr.mxu0 %v2331
        %3259 = vmatpush1.msra.mxu0 %v2330
        %3260 = vmatprep.subr.mxu0 %v2323
        %3261 = vmatpush1.msra.mxu0 %v2322
        %3262 = vmatprep.subr.mxu0 %v2315
        %3263 = vmatpush1.msra.mxu0 %v2314
        %3264 = vmatprep.subr.mxu0 %v2307
        %3265 = vmatpush1.msra.mxu0 %v2306
        %3266 = vmatprep.subr.mxu0 %v2299
        %3267 = vmatpush1.msra.mxu0 %v2298
        %3268 = vmatprep.subr.mxu0 %v2291
        %3269 = vmatpush1.msra.mxu0 %v2290
        %3270 = vmatprep.subr.mxu0 %v2283
        %3271 = vmatpush1.msra.mxu0 %v2282
        %3272 = vmatprep.subr.mxu0 0.0
        %3273 = vmatpush2.msra.mxu0 0.0
        %3274 = vmatprep.subr.mxu0 0.0
        %3275 = vmatpush2.msra.mxu0 0.0
        %3276 = vmatprep.subr.mxu0 0.0
        %3277 = vmatpush2.msra.mxu0 0.0
        %3278 = vmatprep.subr.mxu0 0.0
        %3279 = vmatpush2.msra.mxu0 0.0
        %3280 = vmatprep.subr.mxu0 0.0
        %3281 = vmatpush2.msra.mxu0 0.0
        %3282 = vmatprep.subr.mxu0 0.0
        %3283 = vmatpush2.msra.mxu0 0.0
        %3284 = vmatprep.subr.mxu0 0.0
        %3285 = vmatpush2.msra.mxu0 0.0
        %3286 = vmatprep.subr.mxu0 0.0
        %3287 = vmatpush2.msra.mxu0 0.0
        %3288 = vmatprep.subr.mxu0 0.0
        %3289 = vmatpush2.msra.mxu0 0.0
        %3290 = vmatprep.subr.mxu0 0.0
        %3291 = vmatpush2.msra.mxu0 0.0
        %3292 = vmatprep.subr.mxu0 0.0
        %3293 = vmatpush2.msra.mxu0 0.0
        %3294 = vmatprep.subr.mxu0 0.0
        %3295 = vmatpush2.msra.mxu0 0.0
        %3296 = vmatprep.subr.mxu0 0.0
        %3297 = vmatpush2.msra.mxu0 0.0
        %3298 = vmatprep.subr.mxu0 0.0
        %3299 = vmatpush2.msra.mxu0 0.0
        %3300 = vmatprep.subr.mxu0 0.0
        %3301 = vmatpush2.msra.mxu0 0.0
        %3302 = vmatprep.subr.mxu0 0.0
        %3303 = vmatpush2.msra.mxu0 0.0
        %3304 = vmatprep.mubr.f32.mxu0 0.0
        %3305 = vmatmul.mubr.f32.gmra.mxu0 %v2389
        %v3306 = vpop.f32.mrf.mxu0
        %v3307 = vadd.f32 %v3230, %v3306
        %v3308 = vpop.f32.mrf.mxu0
        %v3309 = vadd.f32 %v3232, %v3308
        %3310 = vmatprep.mubr.f32.mxu0 0.0
        %3311 = vmatmul.mubr.f32.gmra.mxu0 %v2391
        %v3312 = vpop.f32.mrf.mxu0
        %v3313 = vadd.f32 %v3236, %v3312
        %v3314 = vpop.f32.mrf.mxu0
        %v3315 = vadd.f32 %v3238, %v3314
        %3316 = vdwg.mxu0
        %v3317 = vadd.f32 %v1732, %v2614
        %v3318 = vadd.f32 %v1733, %v2616
        %v3319 = vadd.f32 %v1734, %v2845
        %v3320 = vadd.f32 %v1735, %v2847
        %v3321 = vadd.f32 %v1736, %v3076
        %v3322 = vadd.f32 %v1737, %v3078
        %v3323 = vadd.f32 %v1738, %v3307
        %v3324 = vadd.f32 %v1739, %v3309
        %v3325 = vadd.f32 %v1740, %v2620
        %v3326 = vadd.f32 %v1741, %v2622
        %v3327 = vadd.f32 %v1742, %v2851
        %v3328 = vadd.f32 %v1743, %v2853
        %v3329 = vadd.f32 %v1744, %v3082
        %v3330 = vadd.f32 %v1745, %v3084
        %v3331 = vadd.f32 %v1746, %v3313
        %v3332 = vadd.f32 %v1747, %v3315
        %3333 = vst [vmem:[#allocation2] sm:$0xff] %v3317
        %3334 = vst [vmem:[#allocation2 + $0x8] sm:$0xff] %v3318
        %3335 = vst [vmem:[#allocation2 + $0x10] sm:$0xff] %v3319
        %3336 = vst [vmem:[#allocation2 + $0x18] sm:$0xff] %v3320
        %3337 = vst [vmem:[#allocation2 + $0x20] sm:$0xff] %v3321
        %3338 = vst [vmem:[#allocation2 + $0x28] sm:$0xff] %v3322
        %3339 = vst [vmem:[#allocation2 + $0x30] sm:$0xff] %v3323
        %3340 = vst [vmem:[#allocation2 + $0x38] sm:$0xff] %v3324
        %3341 = vst [vmem:[#allocation2 + $0x40] sm:$0xff] %v3325
        %3342 = vst [vmem:[#allocation2 + $0x48] sm:$0xff] %v3326
        %3343 = vst [vmem:[#allocation2 + $0x50] sm:$0xff] %v3327
        %3344 = vst [vmem:[#allocation2 + $0x58] sm:$0xff] %v3328
        %3345 = vst [vmem:[#allocation2 + $0x60] sm:$0xff] %v3329
        %3346 = vst [vmem:[#allocation2 + $0x68] sm:$0xff] %v3330
        %3347 = vst [vmem:[#allocation2 + $0x70] sm:$0xff] %v3331
        %3348 = vst [vmem:[#allocation2 + $0x78] sm:$0xff] %v3332
        %v3349 = vld [vmem:[#allocation2] sm:$0xff]
        %v3350 = vld [vmem:[#allocation2 + $0x8] sm:$0xff]
        %v3351 = vld [vmem:[#allocation2 + $0x10] sm:$0xff]
        %v3352 = vld [vmem:[#allocation2 + $0x18] sm:$0xff]
        %v3353 = vld [vmem:[#allocation2 + $0x20] sm:$0xff]
        %v3354 = vld [vmem:[#allocation2 + $0x28] sm:$0xff]
        %v3355 = vld [vmem:[#allocation2 + $0x30] sm:$0xff]
        %v3356 = vld [vmem:[#allocation2 + $0x38] sm:$0xff]
        %v3357 = vld [vmem:[#allocation2 + $0x40] sm:$0xff]
        %v3358 = vld [vmem:[#allocation2 + $0x48] sm:$0xff]
        %v3359 = vld [vmem:[#allocation2 + $0x50] sm:$0xff]
        %v3360 = vld [vmem:[#allocation2 + $0x58] sm:$0xff]
        %v3361 = vld [vmem:[#allocation2 + $0x60] sm:$0xff]
        %v3362 = vld [vmem:[#allocation2 + $0x68] sm:$0xff]
        %v3363 = vld [vmem:[#allocation2 + $0x70] sm:$0xff]
        %v3364 = vld [vmem:[#allocation2 + $0x78] sm:$0xff]
        %v3365 = vld [vmem:[%s193] sm:$0xfc]
        %v3366 = vld [vmem:[%s193 + $0x8] sm:$0xfc]
        %v3367 = vld [vmem:[%s193 + $0x10] sm:$0xfc]
        %v3368 = vld [vmem:[%s193 + $0x18] sm:$0xfc]
        %v3369 = vld [vmem:[%s193 + $0x20] sm:$0xfc]
        %v3370 = vld [vmem:[%s193 + $0x28] sm:$0xff]
        %v3371 = vld [vmem:[%s193 + $0x30] sm:$0xff]
        %v3372 = vld [vmem:[%s193 + $0x38] sm:$0xff]
        %v3373 = vld [vmem:[%s193 + $0x40] sm:$0xff]
        %v3374 = vld [vmem:[%s193 + $0x48] sm:$0xff]
        %v3375 = vld [vmem:[%s193 + $0x50] sm:$0x3]
        %v3376 = vld [vmem:[%s193 + $0x58] sm:$0x3]
        %v3377 = vld [vmem:[%s193 + $0x60] sm:$0x3]
        %v3378 = vld [vmem:[%s193 + $0x68] sm:$0x3]
        %v3379 = vld [vmem:[%s193 + $0x70] sm:$0x3]
        %s3380 = scalar_lea.vmem [#allocation4], 9216
        %v3381 = vld [vmem:[%s3380] sm:$0xff]
        %v3382 = vld [vmem:[%s3380 + $0x8] sm:$0xff]
        %v3383 = vld [vmem:[%s3380 + $0x10] sm:$0xff]
        %v3384 = vld [vmem:[%s3380 + $0x18] sm:$0xff]
        %v3385 = vld [vmem:[%s3380 + $0x20] sm:$0xff]
        %v3386 = vld [vmem:[%s3380 + $0x28] sm:$0xff]
        %v3387 = vld [vmem:[%s3380 + $0x30] sm:$0xff]
        %v3388 = vld [vmem:[%s3380 + $0x38] sm:$0xff]
        %v3389 = vld [vmem:[%s3380 + $0x40] sm:$0xff]
        %v3390 = vld [vmem:[%s3380 + $0x48] sm:$0xff]
        %v3391 = vld [vmem:[%s3380 + $0x50] sm:$0xff]
        %v3392 = vld [vmem:[%s3380 + $0x58] sm:$0xff]
        %v3393 = vld [vmem:[%s3380 + $0x60] sm:$0xff]
        %v3394 = vld [vmem:[%s3380 + $0x68] sm:$0xff]
        %v3395 = vld [vmem:[%s3380 + $0x70] sm:$0xff]
        %v3396 = vld [vmem:[%s3380 + $0x78] sm:$0xff]
        %v3397 = vld [vmem:[%s3380 + $0x80] sm:$0xff]
        %v3398 = vld [vmem:[%s3380 + $0x88] sm:$0xff]
        %v3399 = vld [vmem:[%s3380 + $0x90] sm:$0xff]
        %v3400 = vld [vmem:[%s3380 + $0x98] sm:$0xff]
        %v3401 = vld [vmem:[%s3380 + $0xa0] sm:$0xff]
        %v3402 = vld [vmem:[%s3380 + $0xa8] sm:$0xff]
        %v3403 = vld [vmem:[%s3380 + $0xb0] sm:$0xff]
        %v3404 = vld [vmem:[%s3380 + $0xb8] sm:$0xff]
        %v3405 = vld [vmem:[%s3380 + $0xc0] sm:$0xff]
        %v3406 = vld [vmem:[%s3380 + $0xc8] sm:$0xff]
        %v3407 = vld [vmem:[%s3380 + $0xd0] sm:$0xff]
        %v3408 = vld [vmem:[%s3380 + $0xd8] sm:$0xff]
        %v3409 = vld [vmem:[%s3380 + $0xe0] sm:$0xff]
        %v3410 = vld [vmem:[%s3380 + $0xe8] sm:$0xff]
        %v3411 = vld [vmem:[%s3380 + $0xf0] sm:$0xff]
        %v3412 = vld [vmem:[%s3380 + $0xf8] sm:$0xff]
        %v3413 = vld [vmem:[%s3380 + $0x100] sm:$0xff]
        %v3414 = vld [vmem:[%s3380 + $0x108] sm:$0xff]
        %v3415 = vld [vmem:[%s3380 + $0x110] sm:$0xff]
        %v3416 = vld [vmem:[%s3380 + $0x118] sm:$0xff]
        %v3417 = vld [vmem:[%s3380 + $0x120] sm:$0xff]
        %v3418 = vld [vmem:[%s3380 + $0x128] sm:$0xff]
        %v3419 = vld [vmem:[%s3380 + $0x130] sm:$0xff]
        %v3420 = vld [vmem:[%s3380 + $0x138] sm:$0xff]
        %v3421 = vld [vmem:[%s3380 + $0x140] sm:$0xff]
        %v3422 = vld [vmem:[%s3380 + $0x148] sm:$0xff]
        %v3423 = vld [vmem:[%s3380 + $0x150] sm:$0xff]
        %v3424 = vld [vmem:[%s3380 + $0x158] sm:$0xff]
        %v3425 = vld [vmem:[%s3380 + $0x160] sm:$0xff]
        %v3426 = vld [vmem:[%s3380 + $0x168] sm:$0xff]
        %v3427 = vld [vmem:[%s3380 + $0x170] sm:$0xff]
        %v3428 = vld [vmem:[%s3380 + $0x178] sm:$0xff]
        %v3429 = vld [vmem:[%s3380 + $0x180] sm:$0xff]
        %v3430 = vld [vmem:[%s3380 + $0x188] sm:$0xff]
        %v3431 = vld [vmem:[%s3380 + $0x190] sm:$0xff]
        %v3432 = vld [vmem:[%s3380 + $0x198] sm:$0xff]
        %v3433 = vld [vmem:[%s3380 + $0x1a0] sm:$0xff]
        %v3434 = vld [vmem:[%s3380 + $0x1a8] sm:$0xff]
        %v3435 = vld [vmem:[%s3380 + $0x1b0] sm:$0xff]
        %v3436 = vld [vmem:[%s3380 + $0x1b8] sm:$0xff]
        %v3437 = vld [vmem:[%s3380 + $0x1c0] sm:$0xff]
        %v3438 = vld [vmem:[%s3380 + $0x1c8] sm:$0xff]
        %v3439 = vld [vmem:[%s3380 + $0x1d0] sm:$0xff]
        %v3440 = vld [vmem:[%s3380 + $0x1d8] sm:$0xff]
        %v3441 = vld [vmem:[%s3380 + $0x1e0] sm:$0xff]
        %v3442 = vld [vmem:[%s3380 + $0x1e8] sm:$0xff]
        %v3443 = vld [vmem:[%s3380 + $0x1f0] sm:$0xff]
        %v3444 = vld [vmem:[%s3380 + $0x1f8] sm:$0xff]
        %v3445 = vld [vmem:[%s3380 + $0x200] sm:$0xff]
        %v3446 = vld [vmem:[%s3380 + $0x208] sm:$0xff]
        %v3447 = vld [vmem:[%s3380 + $0x210] sm:$0xff]
        %v3448 = vld [vmem:[%s3380 + $0x218] sm:$0xff]
        %v3449 = vld [vmem:[%s3380 + $0x220] sm:$0xff]
        %v3450 = vld [vmem:[%s3380 + $0x228] sm:$0xff]
        %v3451 = vld [vmem:[%s3380 + $0x230] sm:$0xff]
        %v3452 = vld [vmem:[%s3380 + $0x238] sm:$0xff]
        %v3453 = vld [vmem:[%s3380 + $0x240] sm:$0xff]
        %v3454 = vld [vmem:[%s3380 + $0x248] sm:$0xff]
        %v3455 = vld [vmem:[%s3380 + $0x250] sm:$0xff]
        %v3456 = vld [vmem:[%s3380 + $0x258] sm:$0xff]
        %v3457 = vld [vmem:[%s3380 + $0x260] sm:$0xff]
        %v3458 = vld [vmem:[%s3380 + $0x268] sm:$0xff]
        %v3459 = vld [vmem:[%s3380 + $0x270] sm:$0xff]
        %v3460 = vld [vmem:[%s3380 + $0x278] sm:$0xff]
        %v3461 = vld [vmem:[%s3380 + $0x280] sm:$0xff]
        %v3462 = vld [vmem:[%s3380 + $0x288] sm:$0xff]
        %v3463 = vld [vmem:[%s3380 + $0x290] sm:$0xff]
        %v3464 = vld [vmem:[%s3380 + $0x298] sm:$0xff]
        %v3465 = vld [vmem:[%s3380 + $0x2a0] sm:$0xff]
        %v3466 = vld [vmem:[%s3380 + $0x2a8] sm:$0xff]
        %v3467 = vld [vmem:[%s3380 + $0x2b0] sm:$0xff]
        %v3468 = vld [vmem:[%s3380 + $0x2b8] sm:$0xff]
        %v3469 = vld [vmem:[%s3380 + $0x2c0] sm:$0xff]
        %v3470 = vld [vmem:[%s3380 + $0x2c8] sm:$0xff]
        %v3471 = vld [vmem:[%s3380 + $0x2d0] sm:$0xff]
        %v3472 = vld [vmem:[%s3380 + $0x2d8] sm:$0xff]
        %v3473 = vld [vmem:[%s3380 + $0x2e0] sm:$0xff]
        %v3474 = vld [vmem:[%s3380 + $0x2e8] sm:$0xff]
        %v3475 = vld [vmem:[%s3380 + $0x2f0] sm:$0xff]
        %v3476 = vld [vmem:[%s3380 + $0x2f8] sm:$0xff]
        %v3477 = vld [vmem:[%s3380 + $0x300] sm:$0xff]
        %v3478 = vld [vmem:[%s3380 + $0x308] sm:$0xff]
        %v3479 = vld [vmem:[%s3380 + $0x310] sm:$0xff]
        %v3480 = vld [vmem:[%s3380 + $0x318] sm:$0xff]
        %v3481 = vld [vmem:[%s3380 + $0x320] sm:$0xff]
        %v3482 = vld [vmem:[%s3380 + $0x328] sm:$0xff]
        %v3483 = vld [vmem:[%s3380 + $0x330] sm:$0xff]
        %v3484 = vld [vmem:[%s3380 + $0x338] sm:$0xff]
        %v3485 = vld [vmem:[%s3380 + $0x340] sm:$0xff]
        %v3486 = vld [vmem:[%s3380 + $0x348] sm:$0xff]
        %v3487 = vld [vmem:[%s3380 + $0x350] sm:$0xff]
        %v3488 = vld [vmem:[%s3380 + $0x358] sm:$0xff]
        %v3489 = vld [vmem:[%s3380 + $0x360] sm:$0xff]
        %v3490 = vld [vmem:[%s3380 + $0x368] sm:$0xff]
        %v3491 = vld [vmem:[%s3380 + $0x370] sm:$0xff]
        %v3492 = vld [vmem:[%s3380 + $0x378] sm:$0xff]
        %v3493 = vld [vmem:[%s3380 + $0x380] sm:$0xff]
        %v3494 = vld [vmem:[%s3380 + $0x388] sm:$0xff]
        %v3495 = vld [vmem:[%s3380 + $0x390] sm:$0xff]
        %v3496 = vld [vmem:[%s3380 + $0x398] sm:$0xff]
        %v3497 = vld [vmem:[%s3380 + $0x3a0] sm:$0xff]
        %v3498 = vld [vmem:[%s3380 + $0x3a8] sm:$0xff]
        %v3499 = vld [vmem:[%s3380 + $0x3b0] sm:$0xff]
        %v3500 = vld [vmem:[%s3380 + $0x3b8] sm:$0xff]
        %v3501 = vld [vmem:[%s3380 + $0x3c0] sm:$0xff]
        %v3502 = vld [vmem:[%s3380 + $0x3c8] sm:$0xff]
        %v3503 = vld [vmem:[%s3380 + $0x3d0] sm:$0xff]
        %v3504 = vld [vmem:[%s3380 + $0x3d8] sm:$0xff]
        %v3505 = vld [vmem:[%s3380 + $0x3e0] sm:$0xff]
        %v3506 = vld [vmem:[%s3380 + $0x3e8] sm:$0xff]
        %v3507 = vld [vmem:[%s3380 + $0x3f0] sm:$0xff]
        %v3508 = vld [vmem:[%s3380 + $0x3f8] sm:$0xff]
        %v3509 = vld [vmem:[%s3380 + $0x400] sm:$0xff]
        %v3510 = vld [vmem:[%s3380 + $0x408] sm:$0xff]
        %v3511 = vld [vmem:[%s3380 + $0x410] sm:$0xff]
        %v3512 = vld [vmem:[%s3380 + $0x418] sm:$0xff]
        %v3513 = vld [vmem:[%s3380 + $0x420] sm:$0xff]
        %v3514 = vld [vmem:[%s3380 + $0x428] sm:$0xff]
        %v3515 = vld [vmem:[%s3380 + $0x430] sm:$0xff]
        %v3516 = vld [vmem:[%s3380 + $0x438] sm:$0xff]
        %v3517 = vld [vmem:[%s3380 + $0x440] sm:$0xff]
        %v3518 = vld [vmem:[%s3380 + $0x448] sm:$0xff]
        %v3519 = vld [vmem:[%s3380 + $0x450] sm:$0xff]
        %v3520 = vld [vmem:[%s3380 + $0x458] sm:$0xff]
        %v3521 = vld [vmem:[%s3380 + $0x460] sm:$0xff]
        %v3522 = vld [vmem:[%s3380 + $0x468] sm:$0xff]
        %v3523 = vld [vmem:[%s3380 + $0x470] sm:$0xff]
        %v3524 = vld [vmem:[%s3380 + $0x478] sm:$0xff]
        %v3525 = vld [vmem:[%s3380 + $0x480] sm:$0xff]
        %v3526 = vld [vmem:[%s3380 + $0x488] sm:$0xff]
        %v3527 = vld [vmem:[%s3380 + $0x490] sm:$0xff]
        %v3528 = vld [vmem:[%s3380 + $0x498] sm:$0xff]
        %v3529 = vld [vmem:[%s3380 + $0x4a0] sm:$0xff]
        %v3530 = vld [vmem:[%s3380 + $0x4a8] sm:$0xff]
        %v3531 = vld [vmem:[%s3380 + $0x4b0] sm:$0xff]
        %v3532 = vld [vmem:[%s3380 + $0x4b8] sm:$0xff]
        %v3533 = vld [vmem:[%s3380 + $0x4c0] sm:$0xff]
        %v3534 = vld [vmem:[%s3380 + $0x4c8] sm:$0xff]
        %v3535 = vld [vmem:[%s3380 + $0x4d0] sm:$0xff]
        %v3536 = vld [vmem:[%s3380 + $0x4d8] sm:$0xff]
        %v3537 = vld [vmem:[%s3380 + $0x4e0] sm:$0xff]
        %v3538 = vld [vmem:[%s3380 + $0x4e8] sm:$0xff]
        %v3539 = vld [vmem:[%s3380 + $0x4f0] sm:$0xff]
        %v3540 = vld [vmem:[%s3380 + $0x4f8] sm:$0xff]
        %v3541 = vld [vmem:[%s3380 + $0x500] sm:$0xff]
        %v3542 = vld [vmem:[%s3380 + $0x508] sm:$0xff]
        %v3543 = vld [vmem:[%s3380 + $0x510] sm:$0xff]
        %v3544 = vld [vmem:[%s3380 + $0x518] sm:$0xff]
        %v3545 = vld [vmem:[%s3380 + $0x520] sm:$0xff]
        %v3546 = vld [vmem:[%s3380 + $0x528] sm:$0xff]
        %v3547 = vld [vmem:[%s3380 + $0x530] sm:$0xff]
        %v3548 = vld [vmem:[%s3380 + $0x538] sm:$0xff]
        %v3549 = vld [vmem:[%s3380 + $0x540] sm:$0xff]
        %v3550 = vld [vmem:[%s3380 + $0x548] sm:$0xff]
        %v3551 = vld [vmem:[%s3380 + $0x550] sm:$0xff]
        %v3552 = vld [vmem:[%s3380 + $0x558] sm:$0xff]
        %v3553 = vld [vmem:[%s3380 + $0x560] sm:$0xff]
        %v3554 = vld [vmem:[%s3380 + $0x568] sm:$0xff]
        %v3555 = vld [vmem:[%s3380 + $0x570] sm:$0xff]
        %v3556 = vld [vmem:[%s3380 + $0x578] sm:$0xff]
        %v3557 = vld [vmem:[%s3380 + $0x580] sm:$0xff]
        %v3558 = vld [vmem:[%s3380 + $0x588] sm:$0xff]
        %v3559 = vld [vmem:[%s3380 + $0x590] sm:$0xff]
        %v3560 = vld [vmem:[%s3380 + $0x598] sm:$0xff]
        %v3561 = vld [vmem:[%s3380 + $0x5a0] sm:$0xff]
        %v3562 = vld [vmem:[%s3380 + $0x5a8] sm:$0xff]
        %v3563 = vld [vmem:[%s3380 + $0x5b0] sm:$0xff]
        %v3564 = vld [vmem:[%s3380 + $0x5b8] sm:$0xff]
        %v3565 = vld [vmem:[%s3380 + $0x5c0] sm:$0xff]
        %v3566 = vld [vmem:[%s3380 + $0x5c8] sm:$0xff]
        %v3567 = vld [vmem:[%s3380 + $0x5d0] sm:$0xff]
        %v3568 = vld [vmem:[%s3380 + $0x5d8] sm:$0xff]
        %v3569 = vld [vmem:[%s3380 + $0x5e0] sm:$0xff]
        %v3570 = vld [vmem:[%s3380 + $0x5e8] sm:$0xff]
        %v3571 = vld [vmem:[%s3380 + $0x5f0] sm:$0xff]
        %v3572 = vld [vmem:[%s3380 + $0x5f8] sm:$0xff]
        %v3573 = vld [vmem:[%s3380 + $0x600] sm:$0xff]
        %v3574 = vld [vmem:[%s3380 + $0x608] sm:$0xff]
        %v3575 = vld [vmem:[%s3380 + $0x610] sm:$0xff]
        %v3576 = vld [vmem:[%s3380 + $0x618] sm:$0xff]
        %v3577 = vld [vmem:[%s3380 + $0x620] sm:$0xff]
        %v3578 = vld [vmem:[%s3380 + $0x628] sm:$0xff]
        %v3579 = vld [vmem:[%s3380 + $0x630] sm:$0xff]
        %v3580 = vld [vmem:[%s3380 + $0x638] sm:$0xff]
        %v3581 = vld [vmem:[%s3380 + $0x640] sm:$0xff]
        %v3582 = vld [vmem:[%s3380 + $0x648] sm:$0xff]
        %v3583 = vld [vmem:[%s3380 + $0x650] sm:$0xff]
        %v3584 = vld [vmem:[%s3380 + $0x658] sm:$0xff]
        %v3585 = vld [vmem:[%s3380 + $0x660] sm:$0xff]
        %v3586 = vld [vmem:[%s3380 + $0x668] sm:$0xff]
        %v3587 = vld [vmem:[%s3380 + $0x670] sm:$0xff]
        %v3588 = vld [vmem:[%s3380 + $0x678] sm:$0xff]
        %v3589 = vld [vmem:[%s3380 + $0x680] sm:$0xff]
        %v3590 = vld [vmem:[%s3380 + $0x688] sm:$0xff]
        %v3591 = vld [vmem:[%s3380 + $0x690] sm:$0xff]
        %v3592 = vld [vmem:[%s3380 + $0x698] sm:$0xff]
        %v3593 = vld [vmem:[%s3380 + $0x6a0] sm:$0xff]
        %v3594 = vld [vmem:[%s3380 + $0x6a8] sm:$0xff]
        %v3595 = vld [vmem:[%s3380 + $0x6b0] sm:$0xff]
        %v3596 = vld [vmem:[%s3380 + $0x6b8] sm:$0xff]
        %v3597 = vld [vmem:[%s3380 + $0x6c0] sm:$0xff]
        %v3598 = vld [vmem:[%s3380 + $0x6c8] sm:$0xff]
        %v3599 = vld [vmem:[%s3380 + $0x6d0] sm:$0xff]
        %v3600 = vld [vmem:[%s3380 + $0x6d8] sm:$0xff]
        %v3601 = vld [vmem:[%s3380 + $0x6e0] sm:$0xff]
        %v3602 = vld [vmem:[%s3380 + $0x6e8] sm:$0xff]
        %v3603 = vld [vmem:[%s3380 + $0x6f0] sm:$0xff]
        %v3604 = vld [vmem:[%s3380 + $0x6f8] sm:$0xff]
        %v3605 = vld [vmem:[%s3380 + $0x700] sm:$0xff]
        %v3606 = vld [vmem:[%s3380 + $0x708] sm:$0xff]
        %v3607 = vld [vmem:[%s3380 + $0x710] sm:$0xff]
        %v3608 = vld [vmem:[%s3380 + $0x718] sm:$0xff]
        %v3609 = vld [vmem:[%s3380 + $0x720] sm:$0xff]
        %v3610 = vld [vmem:[%s3380 + $0x728] sm:$0xff]
        %v3611 = vld [vmem:[%s3380 + $0x730] sm:$0xff]
        %v3612 = vld [vmem:[%s3380 + $0x738] sm:$0xff]
        %v3613 = vld [vmem:[%s3380 + $0x740] sm:$0xff]
        %v3614 = vld [vmem:[%s3380 + $0x748] sm:$0xff]
        %v3615 = vld [vmem:[%s3380 + $0x750] sm:$0xff]
        %v3616 = vld [vmem:[%s3380 + $0x758] sm:$0xff]
        %v3617 = vld [vmem:[%s3380 + $0x760] sm:$0xff]
        %v3618 = vld [vmem:[%s3380 + $0x768] sm:$0xff]
        %v3619 = vld [vmem:[%s3380 + $0x770] sm:$0xff]
        %v3620 = vld [vmem:[%s3380 + $0x778] sm:$0xff]
        %v3621 = vld [vmem:[%s3380 + $0x780] sm:$0xff]
        %v3622 = vld [vmem:[%s3380 + $0x788] sm:$0xff]
        %v3623 = vld [vmem:[%s3380 + $0x790] sm:$0xff]
        %v3624 = vld [vmem:[%s3380 + $0x798] sm:$0xff]
        %v3625 = vld [vmem:[%s3380 + $0x7a0] sm:$0xff]
        %v3626 = vld [vmem:[%s3380 + $0x7a8] sm:$0xff]
        %v3627 = vld [vmem:[%s3380 + $0x7b0] sm:$0xff]
        %v3628 = vld [vmem:[%s3380 + $0x7b8] sm:$0xff]
        %v3629 = vld [vmem:[%s3380 + $0x7c0] sm:$0xff]
        %v3630 = vld [vmem:[%s3380 + $0x7c8] sm:$0xff]
        %v3631 = vld [vmem:[%s3380 + $0x7d0] sm:$0xff]
        %v3632 = vld [vmem:[%s3380 + $0x7d8] sm:$0xff]
        %v3633 = vld [vmem:[%s3380 + $0x7e0] sm:$0xff]
        %v3634 = vld [vmem:[%s3380 + $0x7e8] sm:$0xff]
        %v3635 = vld [vmem:[%s3380 + $0x7f0] sm:$0xff]
        %v3636 = vld [vmem:[%s3380 + $0x7f8] sm:$0xff]
        %v3637 = vld [vmem:[%s3380 + $0x800] sm:$0xff]
        %v3638 = vld [vmem:[%s3380 + $0x808] sm:$0xff]
        %v3639 = vld [vmem:[%s3380 + $0x810] sm:$0xff]
        %v3640 = vld [vmem:[%s3380 + $0x818] sm:$0xff]
        %v3641 = vld [vmem:[%s3380 + $0x820] sm:$0xff]
        %v3642 = vld [vmem:[%s3380 + $0x828] sm:$0xff]
        %v3643 = vld [vmem:[%s3380 + $0x830] sm:$0xff]
        %v3644 = vld [vmem:[%s3380 + $0x838] sm:$0xff]
        %v3645 = vld [vmem:[%s3380 + $0x840] sm:$0xff]
        %v3646 = vld [vmem:[%s3380 + $0x848] sm:$0xff]
        %v3647 = vld [vmem:[%s3380 + $0x850] sm:$0xff]
        %v3648 = vld [vmem:[%s3380 + $0x858] sm:$0xff]
        %v3649 = vld [vmem:[%s3380 + $0x860] sm:$0xff]
        %v3650 = vld [vmem:[%s3380 + $0x868] sm:$0xff]
        %v3651 = vld [vmem:[%s3380 + $0x870] sm:$0xff]
        %v3652 = vld [vmem:[%s3380 + $0x878] sm:$0xff]
        %v3653 = vld [vmem:[%s3380 + $0x880] sm:$0xff]
        %v3654 = vld [vmem:[%s3380 + $0x888] sm:$0xff]
        %v3655 = vld [vmem:[%s3380 + $0x890] sm:$0xff]
        %v3656 = vld [vmem:[%s3380 + $0x898] sm:$0xff]
        %v3657 = vld [vmem:[%s3380 + $0x8a0] sm:$0xff]
        %v3658 = vld [vmem:[%s3380 + $0x8a8] sm:$0xff]
        %v3659 = vld [vmem:[%s3380 + $0x8b0] sm:$0xff]
        %v3660 = vld [vmem:[%s3380 + $0x8b8] sm:$0xff]
        %v3661 = vld [vmem:[%s3380 + $0x8c0] sm:$0xff]
        %v3662 = vld [vmem:[%s3380 + $0x8c8] sm:$0xff]
        %v3663 = vld [vmem:[%s3380 + $0x8d0] sm:$0xff]
        %v3664 = vld [vmem:[%s3380 + $0x8d8] sm:$0xff]
        %v3665 = vld [vmem:[%s3380 + $0x8e0] sm:$0xff]
        %v3666 = vld [vmem:[%s3380 + $0x8e8] sm:$0xff]
        %v3667 = vld [vmem:[%s3380 + $0x8f0] sm:$0xff]
        %v3668 = vld [vmem:[%s3380 + $0x8f8] sm:$0xff]
        %v3669 = vld [vmem:[%s3380 + $0x900] sm:$0xff]
        %v3670 = vld [vmem:[%s3380 + $0x908] sm:$0xff]
        %v3671 = vld [vmem:[%s3380 + $0x910] sm:$0xff]
        %v3672 = vld [vmem:[%s3380 + $0x918] sm:$0xff]
        %v3673 = vld [vmem:[%s3380 + $0x920] sm:$0xff]
        %v3674 = vld [vmem:[%s3380 + $0x928] sm:$0xff]
        %v3675 = vld [vmem:[%s3380 + $0x930] sm:$0xff]
        %v3676 = vld [vmem:[%s3380 + $0x938] sm:$0xff]
        %v3677 = vld [vmem:[%s3380 + $0x940] sm:$0xff]
        %v3678 = vld [vmem:[%s3380 + $0x948] sm:$0xff]
        %v3679 = vld [vmem:[%s3380 + $0x950] sm:$0xff]
        %v3680 = vld [vmem:[%s3380 + $0x958] sm:$0xff]
        %v3681 = vld [vmem:[%s3380 + $0x960] sm:$0xff]
        %v3682 = vld [vmem:[%s3380 + $0x968] sm:$0xff]
        %v3683 = vld [vmem:[%s3380 + $0x970] sm:$0xff]
        %v3684 = vld [vmem:[%s3380 + $0x978] sm:$0xff]
        %v3685 = vld [vmem:[%s3380 + $0x980] sm:$0xff]
        %v3686 = vld [vmem:[%s3380 + $0x988] sm:$0xff]
        %v3687 = vld [vmem:[%s3380 + $0x990] sm:$0xff]
        %v3688 = vld [vmem:[%s3380 + $0x998] sm:$0xff]
        %v3689 = vld [vmem:[%s3380 + $0x9a0] sm:$0xff]
        %v3690 = vld [vmem:[%s3380 + $0x9a8] sm:$0xff]
        %v3691 = vld [vmem:[%s3380 + $0x9b0] sm:$0xff]
        %v3692 = vld [vmem:[%s3380 + $0x9b8] sm:$0xff]
        %v3693 = vld [vmem:[%s3380 + $0x9c0] sm:$0xff]
        %v3694 = vld [vmem:[%s3380 + $0x9c8] sm:$0xff]
        %v3695 = vld [vmem:[%s3380 + $0x9d0] sm:$0xff]
        %v3696 = vld [vmem:[%s3380 + $0x9d8] sm:$0xff]
        %v3697 = vld [vmem:[%s3380 + $0x9e0] sm:$0xff]
        %v3698 = vld [vmem:[%s3380 + $0x9e8] sm:$0xff]
        %v3699 = vld [vmem:[%s3380 + $0x9f0] sm:$0xff]
        %v3700 = vld [vmem:[%s3380 + $0x9f8] sm:$0xff]
        %v3701 = vld [vmem:[%s3380 + $0xa00] sm:$0xff]
        %v3702 = vld [vmem:[%s3380 + $0xa08] sm:$0xff]
        %v3703 = vld [vmem:[%s3380 + $0xa10] sm:$0xff]
        %v3704 = vld [vmem:[%s3380 + $0xa18] sm:$0xff]
        %v3705 = vld [vmem:[%s3380 + $0xa20] sm:$0xff]
        %v3706 = vld [vmem:[%s3380 + $0xa28] sm:$0xff]
        %v3707 = vld [vmem:[%s3380 + $0xa30] sm:$0xff]
        %v3708 = vld [vmem:[%s3380 + $0xa38] sm:$0xff]
        %v3709 = vld [vmem:[%s3380 + $0xa40] sm:$0xff]
        %v3710 = vld [vmem:[%s3380 + $0xa48] sm:$0xff]
        %v3711 = vld [vmem:[%s3380 + $0xa50] sm:$0xff]
        %v3712 = vld [vmem:[%s3380 + $0xa58] sm:$0xff]
        %v3713 = vld [vmem:[%s3380 + $0xa60] sm:$0xff]
        %v3714 = vld [vmem:[%s3380 + $0xa68] sm:$0xff]
        %v3715 = vld [vmem:[%s3380 + $0xa70] sm:$0xff]
        %v3716 = vld [vmem:[%s3380 + $0xa78] sm:$0xff]
        %v3717 = vld [vmem:[%s3380 + $0xa80] sm:$0xff]
        %v3718 = vld [vmem:[%s3380 + $0xa88] sm:$0xff]
        %v3719 = vld [vmem:[%s3380 + $0xa90] sm:$0xff]
        %v3720 = vld [vmem:[%s3380 + $0xa98] sm:$0xff]
        %v3721 = vld [vmem:[%s3380 + $0xaa0] sm:$0xff]
        %v3722 = vld [vmem:[%s3380 + $0xaa8] sm:$0xff]
        %v3723 = vld [vmem:[%s3380 + $0xab0] sm:$0xff]
        %v3724 = vld [vmem:[%s3380 + $0xab8] sm:$0xff]
        %v3725 = vld [vmem:[%s3380 + $0xac0] sm:$0xff]
        %v3726 = vld [vmem:[%s3380 + $0xac8] sm:$0xff]
        %v3727 = vld [vmem:[%s3380 + $0xad0] sm:$0xff]
        %v3728 = vld [vmem:[%s3380 + $0xad8] sm:$0xff]
        %v3729 = vld [vmem:[%s3380 + $0xae0] sm:$0xff]
        %v3730 = vld [vmem:[%s3380 + $0xae8] sm:$0xff]
        %v3731 = vld [vmem:[%s3380 + $0xaf0] sm:$0xff]
        %v3732 = vld [vmem:[%s3380 + $0xaf8] sm:$0xff]
        %v3733 = vld [vmem:[%s3380 + $0xb00] sm:$0xff]
        %v3734 = vld [vmem:[%s3380 + $0xb08] sm:$0xff]
        %v3735 = vld [vmem:[%s3380 + $0xb10] sm:$0xff]
        %v3736 = vld [vmem:[%s3380 + $0xb18] sm:$0xff]
        %v3737 = vld [vmem:[%s3380 + $0xb20] sm:$0xff]
        %v3738 = vld [vmem:[%s3380 + $0xb28] sm:$0xff]
        %v3739 = vld [vmem:[%s3380 + $0xb30] sm:$0xff]
        %v3740 = vld [vmem:[%s3380 + $0xb38] sm:$0xff]
        %v3741 = vld [vmem:[%s3380 + $0xb40] sm:$0xff]
        %v3742 = vld [vmem:[%s3380 + $0xb48] sm:$0xff]
        %v3743 = vld [vmem:[%s3380 + $0xb50] sm:$0xff]
        %v3744 = vld [vmem:[%s3380 + $0xb58] sm:$0xff]
        %v3745 = vld [vmem:[%s3380 + $0xb60] sm:$0xff]
        %v3746 = vld [vmem:[%s3380 + $0xb68] sm:$0xff]
        %v3747 = vld [vmem:[%s3380 + $0xb70] sm:$0xff]
        %v3748 = vld [vmem:[%s3380 + $0xb78] sm:$0xff]
        %v3749 = vld [vmem:[%s3380 + $0xb80] sm:$0xff]
        %v3750 = vld [vmem:[%s3380 + $0xb88] sm:$0xff]
        %v3751 = vld [vmem:[%s3380 + $0xb90] sm:$0xff]
        %v3752 = vld [vmem:[%s3380 + $0xb98] sm:$0xff]
        %v3753 = vld [vmem:[%s3380 + $0xba0] sm:$0xff]
        %v3754 = vld [vmem:[%s3380 + $0xba8] sm:$0xff]
        %v3755 = vld [vmem:[%s3380 + $0xbb0] sm:$0xff]
        %v3756 = vld [vmem:[%s3380 + $0xbb8] sm:$0xff]
        %v3757 = vld [vmem:[%s3380 + $0xbc0] sm:$0xff]
        %v3758 = vld [vmem:[%s3380 + $0xbc8] sm:$0xff]
        %v3759 = vld [vmem:[%s3380 + $0xbd0] sm:$0xff]
        %v3760 = vld [vmem:[%s3380 + $0xbd8] sm:$0xff]
        %v3761 = vld [vmem:[%s3380 + $0xbe0] sm:$0xff]
        %v3762 = vld [vmem:[%s3380 + $0xbe8] sm:$0xff]
        %v3763 = vld [vmem:[%s3380 + $0xbf0] sm:$0xff]
        %v3764 = vld [vmem:[%s3380 + $0xbf8] sm:$0xff]
        %v3765 = vld [vmem:[%s3380 + $0xc00] sm:$0xff]
        %v3766 = vld [vmem:[%s3380 + $0xc08] sm:$0xff]
        %v3767 = vld [vmem:[%s3380 + $0xc10] sm:$0xff]
        %v3768 = vld [vmem:[%s3380 + $0xc18] sm:$0xff]
        %v3769 = vld [vmem:[%s3380 + $0xc20] sm:$0xff]
        %v3770 = vld [vmem:[%s3380 + $0xc28] sm:$0xff]
        %v3771 = vld [vmem:[%s3380 + $0xc30] sm:$0xff]
        %v3772 = vld [vmem:[%s3380 + $0xc38] sm:$0xff]
        %v3773 = vld [vmem:[%s3380 + $0xc40] sm:$0xff]
        %v3774 = vld [vmem:[%s3380 + $0xc48] sm:$0xff]
        %v3775 = vld [vmem:[%s3380 + $0xc50] sm:$0xff]
        %v3776 = vld [vmem:[%s3380 + $0xc58] sm:$0xff]
        %v3777 = vld [vmem:[%s3380 + $0xc60] sm:$0xff]
        %v3778 = vld [vmem:[%s3380 + $0xc68] sm:$0xff]
        %v3779 = vld [vmem:[%s3380 + $0xc70] sm:$0xff]
        %v3780 = vld [vmem:[%s3380 + $0xc78] sm:$0xff]
        %v3781 = vld [vmem:[%s3380 + $0xc80] sm:$0xff]
        %v3782 = vld [vmem:[%s3380 + $0xc88] sm:$0xff]
        %v3783 = vld [vmem:[%s3380 + $0xc90] sm:$0xff]
        %v3784 = vld [vmem:[%s3380 + $0xc98] sm:$0xff]
        %v3785 = vld [vmem:[%s3380 + $0xca0] sm:$0xff]
        %v3786 = vld [vmem:[%s3380 + $0xca8] sm:$0xff]
        %v3787 = vld [vmem:[%s3380 + $0xcb0] sm:$0xff]
        %v3788 = vld [vmem:[%s3380 + $0xcb8] sm:$0xff]
        %v3789 = vld [vmem:[%s3380 + $0xcc0] sm:$0xff]
        %v3790 = vld [vmem:[%s3380 + $0xcc8] sm:$0xff]
        %v3791 = vld [vmem:[%s3380 + $0xcd0] sm:$0xff]
        %v3792 = vld [vmem:[%s3380 + $0xcd8] sm:$0xff]
        %v3793 = vld [vmem:[%s3380 + $0xce0] sm:$0xff]
        %v3794 = vld [vmem:[%s3380 + $0xce8] sm:$0xff]
        %v3795 = vld [vmem:[%s3380 + $0xcf0] sm:$0xff]
        %v3796 = vld [vmem:[%s3380 + $0xcf8] sm:$0xff]
        %v3797 = vld [vmem:[%s3380 + $0xd00] sm:$0xff]
        %v3798 = vld [vmem:[%s3380 + $0xd08] sm:$0xff]
        %v3799 = vld [vmem:[%s3380 + $0xd10] sm:$0xff]
        %v3800 = vld [vmem:[%s3380 + $0xd18] sm:$0xff]
        %v3801 = vld [vmem:[%s3380 + $0xd20] sm:$0xff]
        %v3802 = vld [vmem:[%s3380 + $0xd28] sm:$0xff]
        %v3803 = vld [vmem:[%s3380 + $0xd30] sm:$0xff]
        %v3804 = vld [vmem:[%s3380 + $0xd38] sm:$0xff]
        %v3805 = vld [vmem:[%s3380 + $0xd40] sm:$0xff]
        %v3806 = vld [vmem:[%s3380 + $0xd48] sm:$0xff]
        %v3807 = vld [vmem:[%s3380 + $0xd50] sm:$0xff]
        %v3808 = vld [vmem:[%s3380 + $0xd58] sm:$0xff]
        %v3809 = vld [vmem:[%s3380 + $0xd60] sm:$0xff]
        %v3810 = vld [vmem:[%s3380 + $0xd68] sm:$0xff]
        %v3811 = vld [vmem:[%s3380 + $0xd70] sm:$0xff]
        %v3812 = vld [vmem:[%s3380 + $0xd78] sm:$0xff]
        %v3813 = vld [vmem:[%s3380 + $0xd80] sm:$0xff]
        %v3814 = vld [vmem:[%s3380 + $0xd88] sm:$0xff]
        %v3815 = vld [vmem:[%s3380 + $0xd90] sm:$0xff]
        %v3816 = vld [vmem:[%s3380 + $0xd98] sm:$0xff]
        %v3817 = vld [vmem:[%s3380 + $0xda0] sm:$0xff]
        %v3818 = vld [vmem:[%s3380 + $0xda8] sm:$0xff]
        %v3819 = vld [vmem:[%s3380 + $0xdb0] sm:$0xff]
        %v3820 = vld [vmem:[%s3380 + $0xdb8] sm:$0xff]
        %v3821 = vld [vmem:[%s3380 + $0xdc0] sm:$0xff]
        %v3822 = vld [vmem:[%s3380 + $0xdc8] sm:$0xff]
        %v3823 = vld [vmem:[%s3380 + $0xdd0] sm:$0xff]
        %v3824 = vld [vmem:[%s3380 + $0xdd8] sm:$0xff]
        %v3825 = vld [vmem:[%s3380 + $0xde0] sm:$0xff]
        %v3826 = vld [vmem:[%s3380 + $0xde8] sm:$0xff]
        %v3827 = vld [vmem:[%s3380 + $0xdf0] sm:$0xff]
        %v3828 = vld [vmem:[%s3380 + $0xdf8] sm:$0xff]
        %v3829 = vld [vmem:[%s3380 + $0xe00] sm:$0xff]
        %v3830 = vld [vmem:[%s3380 + $0xe08] sm:$0xff]
        %v3831 = vld [vmem:[%s3380 + $0xe10] sm:$0xff]
        %v3832 = vld [vmem:[%s3380 + $0xe18] sm:$0xff]
        %v3833 = vld [vmem:[%s3380 + $0xe20] sm:$0xff]
        %v3834 = vld [vmem:[%s3380 + $0xe28] sm:$0xff]
        %v3835 = vld [vmem:[%s3380 + $0xe30] sm:$0xff]
        %v3836 = vld [vmem:[%s3380 + $0xe38] sm:$0xff]
        %v3837 = vld [vmem:[%s3380 + $0xe40] sm:$0xff]
        %v3838 = vld [vmem:[%s3380 + $0xe48] sm:$0xff]
        %v3839 = vld [vmem:[%s3380 + $0xe50] sm:$0xff]
        %v3840 = vld [vmem:[%s3380 + $0xe58] sm:$0xff]
        %v3841 = vld [vmem:[%s3380 + $0xe60] sm:$0xff]
        %v3842 = vld [vmem:[%s3380 + $0xe68] sm:$0xff]
        %v3843 = vld [vmem:[%s3380 + $0xe70] sm:$0xff]
        %v3844 = vld [vmem:[%s3380 + $0xe78] sm:$0xff]
        %v3845 = vld [vmem:[%s3380 + $0xe80] sm:$0xff]
        %v3846 = vld [vmem:[%s3380 + $0xe88] sm:$0xff]
        %v3847 = vld [vmem:[%s3380 + $0xe90] sm:$0xff]
        %v3848 = vld [vmem:[%s3380 + $0xe98] sm:$0xff]
        %v3849 = vld [vmem:[%s3380 + $0xea0] sm:$0xff]
        %v3850 = vld [vmem:[%s3380 + $0xea8] sm:$0xff]
        %v3851 = vld [vmem:[%s3380 + $0xeb0] sm:$0xff]
        %v3852 = vld [vmem:[%s3380 + $0xeb8] sm:$0xff]
        %v3853 = vld [vmem:[%s3380 + $0xec0] sm:$0xff]
        %v3854 = vld [vmem:[%s3380 + $0xec8] sm:$0xff]
        %v3855 = vld [vmem:[%s3380 + $0xed0] sm:$0xff]
        %v3856 = vld [vmem:[%s3380 + $0xed8] sm:$0xff]
        %v3857 = vld [vmem:[%s3380 + $0xee0] sm:$0xff]
        %v3858 = vld [vmem:[%s3380 + $0xee8] sm:$0xff]
        %v3859 = vld [vmem:[%s3380 + $0xef0] sm:$0xff]
        %v3860 = vld [vmem:[%s3380 + $0xef8] sm:$0xff]
        %v3861 = vld [vmem:[%s3380 + $0xf00] sm:$0xff]
        %v3862 = vld [vmem:[%s3380 + $0xf08] sm:$0xff]
        %v3863 = vld [vmem:[%s3380 + $0xf10] sm:$0xff]
        %v3864 = vld [vmem:[%s3380 + $0xf18] sm:$0xff]
        %v3865 = vld [vmem:[%s3380 + $0xf20] sm:$0xff]
        %v3866 = vld [vmem:[%s3380 + $0xf28] sm:$0xff]
        %v3867 = vld [vmem:[%s3380 + $0xf30] sm:$0xff]
        %v3868 = vld [vmem:[%s3380 + $0xf38] sm:$0xff]
        %v3869 = vld [vmem:[%s3380 + $0xf40] sm:$0xff]
        %v3870 = vld [vmem:[%s3380 + $0xf48] sm:$0xff]
        %v3871 = vld [vmem:[%s3380 + $0xf50] sm:$0xff]
        %v3872 = vld [vmem:[%s3380 + $0xf58] sm:$0xff]
        %v3873 = vld [vmem:[%s3380 + $0xf60] sm:$0xff]
        %v3874 = vld [vmem:[%s3380 + $0xf68] sm:$0xff]
        %v3875 = vld [vmem:[%s3380 + $0xf70] sm:$0xff]
        %v3876 = vld [vmem:[%s3380 + $0xf78] sm:$0xff]
        %v3877 = vld [vmem:[%s3380 + $0xf80] sm:$0xff]
        %v3878 = vld [vmem:[%s3380 + $0xf88] sm:$0xff]
        %v3879 = vld [vmem:[%s3380 + $0xf90] sm:$0xff]
        %v3880 = vld [vmem:[%s3380 + $0xf98] sm:$0xff]
        %v3881 = vld [vmem:[%s3380 + $0xfa0] sm:$0xff]
        %v3882 = vld [vmem:[%s3380 + $0xfa8] sm:$0xff]
        %v3883 = vld [vmem:[%s3380 + $0xfb0] sm:$0xff]
        %v3884 = vld [vmem:[%s3380 + $0xfb8] sm:$0xff]
        %v3885 = vld [vmem:[%s3380 + $0xfc0] sm:$0xff]
        %v3886 = vld [vmem:[%s3380 + $0xfc8] sm:$0xff]
        %v3887 = vld [vmem:[%s3380 + $0xfd0] sm:$0xff]
        %v3888 = vld [vmem:[%s3380 + $0xfd8] sm:$0xff]
        %v3889 = vld [vmem:[%s3380 + $0xfe0] sm:$0xff]
        %v3890 = vld [vmem:[%s3380 + $0xfe8] sm:$0xff]
        %v3891 = vld [vmem:[%s3380 + $0xff0] sm:$0xff]
        %v3892 = vld [vmem:[%s3380 + $0xff8] sm:$0xff]
        %v3893 = vld [vmem:[%s3380 + $0x1000] sm:$0xff]
        %v3894 = vld [vmem:[%s3380 + $0x1008] sm:$0xff]
        %v3895 = vld [vmem:[%s3380 + $0x1010] sm:$0xff]
        %v3896 = vld [vmem:[%s3380 + $0x1018] sm:$0xff]
        %v3897 = vld [vmem:[%s3380 + $0x1020] sm:$0xff]
        %v3898 = vld [vmem:[%s3380 + $0x1028] sm:$0xff]
        %v3899 = vld [vmem:[%s3380 + $0x1030] sm:$0xff]
        %v3900 = vld [vmem:[%s3380 + $0x1038] sm:$0xff]
        %v3901 = vld [vmem:[%s3380 + $0x1040] sm:$0xff]
        %v3902 = vld [vmem:[%s3380 + $0x1048] sm:$0xff]
        %v3903 = vld [vmem:[%s3380 + $0x1050] sm:$0xff]
        %v3904 = vld [vmem:[%s3380 + $0x1058] sm:$0xff]
        %v3905 = vld [vmem:[%s3380 + $0x1060] sm:$0xff]
        %v3906 = vld [vmem:[%s3380 + $0x1068] sm:$0xff]
        %v3907 = vld [vmem:[%s3380 + $0x1070] sm:$0xff]
        %v3908 = vld [vmem:[%s3380 + $0x1078] sm:$0xff]
        %v3909 = vld [vmem:[%s3380 + $0x1080] sm:$0xff]
        %v3910 = vld [vmem:[%s3380 + $0x1088] sm:$0xff]
        %v3911 = vld [vmem:[%s3380 + $0x1090] sm:$0xff]
        %v3912 = vld [vmem:[%s3380 + $0x1098] sm:$0xff]
        %v3913 = vld [vmem:[%s3380 + $0x10a0] sm:$0xff]
        %v3914 = vld [vmem:[%s3380 + $0x10a8] sm:$0xff]
        %v3915 = vld [vmem:[%s3380 + $0x10b0] sm:$0xff]
        %v3916 = vld [vmem:[%s3380 + $0x10b8] sm:$0xff]
        %v3917 = vld [vmem:[%s3380 + $0x10c0] sm:$0xff]
        %v3918 = vld [vmem:[%s3380 + $0x10c8] sm:$0xff]
        %v3919 = vld [vmem:[%s3380 + $0x10d0] sm:$0xff]
        %v3920 = vld [vmem:[%s3380 + $0x10d8] sm:$0xff]
        %v3921 = vld [vmem:[%s3380 + $0x10e0] sm:$0xff]
        %v3922 = vld [vmem:[%s3380 + $0x10e8] sm:$0xff]
        %v3923 = vld [vmem:[%s3380 + $0x10f0] sm:$0xff]
        %v3924 = vld [vmem:[%s3380 + $0x10f8] sm:$0xff]
        %v3925 = vld [vmem:[%s3380 + $0x1100] sm:$0xff]
        %v3926 = vld [vmem:[%s3380 + $0x1108] sm:$0xff]
        %v3927 = vld [vmem:[%s3380 + $0x1110] sm:$0xff]
        %v3928 = vld [vmem:[%s3380 + $0x1118] sm:$0xff]
        %v3929 = vld [vmem:[%s3380 + $0x1120] sm:$0xff]
        %v3930 = vld [vmem:[%s3380 + $0x1128] sm:$0xff]
        %v3931 = vld [vmem:[%s3380 + $0x1130] sm:$0xff]
        %v3932 = vld [vmem:[%s3380 + $0x1138] sm:$0xff]
        %v3933 = vld [vmem:[%s3380 + $0x1140] sm:$0xff]
        %v3934 = vld [vmem:[%s3380 + $0x1148] sm:$0xff]
        %v3935 = vld [vmem:[%s3380 + $0x1150] sm:$0xff]
        %v3936 = vld [vmem:[%s3380 + $0x1158] sm:$0xff]
        %v3937 = vld [vmem:[%s3380 + $0x1160] sm:$0xff]
        %v3938 = vld [vmem:[%s3380 + $0x1168] sm:$0xff]
        %v3939 = vld [vmem:[%s3380 + $0x1170] sm:$0xff]
        %v3940 = vld [vmem:[%s3380 + $0x1178] sm:$0xff]
        %v3941 = vld [vmem:[%s3380 + $0x1180] sm:$0xff]
        %v3942 = vld [vmem:[%s3380 + $0x1188] sm:$0xff]
        %v3943 = vld [vmem:[%s3380 + $0x1190] sm:$0xff]
        %v3944 = vld [vmem:[%s3380 + $0x1198] sm:$0xff]
        %v3945 = vld [vmem:[%s3380 + $0x11a0] sm:$0xff]
        %v3946 = vld [vmem:[%s3380 + $0x11a8] sm:$0xff]
        %v3947 = vld [vmem:[%s3380 + $0x11b0] sm:$0xff]
        %v3948 = vld [vmem:[%s3380 + $0x11b8] sm:$0xff]
        %v3949 = vld [vmem:[%s3380 + $0x11c0] sm:$0xff]
        %v3950 = vld [vmem:[%s3380 + $0x11c8] sm:$0xff]
        %v3951 = vld [vmem:[%s3380 + $0x11d0] sm:$0xff]
        %v3952 = vld [vmem:[%s3380 + $0x11d8] sm:$0xff]
        %v3953 = vld [vmem:[%s3380 + $0x11e0] sm:$0xff]
        %v3954 = vld [vmem:[%s3380 + $0x11e8] sm:$0xff]
        %v3955 = vld [vmem:[%s3380 + $0x11f0] sm:$0xff]
        %v3956 = vld [vmem:[%s3380 + $0x11f8] sm:$0xff]
        %vm3972 = vcmask 1045504
        %v3973 = vrot.slane %v3365, 2
        %v3974 = vrot.slane %v3370, 2
        %v3975 = vsel %vm3972, %v3973, %v3974
        %v3976 = vrot.slane %v3366, 2
        %v3977 = vrot.slane %v3371, 2
        %v3978 = vsel %vm3972, %v3976, %v3977
        %v3979 = vrot.slane %v3367, 2
        %v3980 = vrot.slane %v3372, 2
        %v3981 = vsel %vm3972, %v3979, %v3980
        %v3982 = vrot.slane %v3368, 2
        %v3983 = vrot.slane %v3373, 2
        %v3984 = vsel %vm3972, %v3982, %v3983
        %v3985 = vrot.slane %v3369, 2
        %v3986 = vrot.slane %v3374, 2
        %v3987 = vsel %vm3972, %v3985, %v3986
        %v3988 = vrot.slane %v3375, 2
        %v3989 = vsel %vm3972, %v3974, %v3988
        %v3990 = vrot.slane %v3376, 2
        %v3991 = vsel %vm3972, %v3977, %v3990
        %v3992 = vrot.slane %v3377, 2
        %v3993 = vsel %vm3972, %v3980, %v3992
        %v3994 = vrot.slane %v3378, 2
        %v3995 = vsel %vm3972, %v3983, %v3994
        %v3996 = vrot.slane %v3379, 2
        %v3997 = vsel %vm3972, %v3986, %v3996
        %v4006 = vsel %vm785, %v3987, 0
        %v4008 = vsel %vm785, %v3997, 0
        %4010 = vmatprep.subr.mxu0 %v3502
        %4011 = vmatpush1.msra.mxu0 %v3501
        %4012 = vmatprep.subr.mxu0 %v3494
        %4013 = vmatpush1.msra.mxu0 %v3493
        %4014 = vmatprep.subr.mxu0 %v3486
        %4015 = vmatpush1.msra.mxu0 %v3485
        %4016 = vmatprep.subr.mxu0 %v3478
        %4017 = vmatpush1.msra.mxu0 %v3477
        %4018 = vmatprep.subr.mxu0 %v3470
        %4019 = vmatpush1.msra.mxu0 %v3469
        %4020 = vmatprep.subr.mxu0 %v3462
        %4021 = vmatpush1.msra.mxu0 %v3461
        %4022 = vmatprep.subr.mxu0 %v3454
        %4023 = vmatpush1.msra.mxu0 %v3453
        %4024 = vmatprep.subr.mxu0 %v3446
        %4025 = vmatpush1.msra.mxu0 %v3445
        %4026 = vmatprep.subr.mxu0 %v3438
        %4027 = vmatpush1.msra.mxu0 %v3437
        %4028 = vmatprep.subr.mxu0 %v3430
        %4029 = vmatpush1.msra.mxu0 %v3429
        %4030 = vmatprep.subr.mxu0 %v3422
        %4031 = vmatpush1.msra.mxu0 %v3421
        %4032 = vmatprep.subr.mxu0 %v3414
        %4033 = vmatpush1.msra.mxu0 %v3413
        %4034 = vmatprep.subr.mxu0 %v3406
        %4035 = vmatpush1.msra.mxu0 %v3405
        %4036 = vmatprep.subr.mxu0 %v3398
        %4037 = vmatpush1.msra.mxu0 %v3397
        %4038 = vmatprep.subr.mxu0 %v3390
        %4039 = vmatpush1.msra.mxu0 %v3389
        %4040 = vmatprep.subr.mxu0 %v3382
        %4041 = vmatpush1.msra.mxu0 %v3381
        %4042 = vmatprep.subr.mxu0 %v3630
        %4043 = vmatpush2.msra.mxu0 %v3629
        %4044 = vmatprep.subr.mxu0 %v3622
        %4045 = vmatpush2.msra.mxu0 %v3621
        %4046 = vmatprep.subr.mxu0 %v3614
        %4047 = vmatpush2.msra.mxu0 %v3613
        %4048 = vmatprep.subr.mxu0 %v3606
        %4049 = vmatpush2.msra.mxu0 %v3605
        %4050 = vmatprep.subr.mxu0 %v3598
        %4051 = vmatpush2.msra.mxu0 %v3597
        %4052 = vmatprep.subr.mxu0 %v3590
        %4053 = vmatpush2.msra.mxu0 %v3589
        %4054 = vmatprep.subr.mxu0 %v3582
        %4055 = vmatpush2.msra.mxu0 %v3581
        %4056 = vmatprep.subr.mxu0 %v3574
        %4057 = vmatpush2.msra.mxu0 %v3573
        %4058 = vmatprep.subr.mxu0 %v3566
        %4059 = vmatpush2.msra.mxu0 %v3565
        %4060 = vmatprep.subr.mxu0 %v3558
        %4061 = vmatpush2.msra.mxu0 %v3557
        %4062 = vmatprep.subr.mxu0 %v3550
        %4063 = vmatpush2.msra.mxu0 %v3549
        %4064 = vmatprep.subr.mxu0 %v3542
        %4065 = vmatpush2.msra.mxu0 %v3541
        %4066 = vmatprep.subr.mxu0 %v3534
        %4067 = vmatpush2.msra.mxu0 %v3533
        %4068 = vmatprep.subr.mxu0 %v3526
        %4069 = vmatpush2.msra.mxu0 %v3525
        %4070 = vmatprep.subr.mxu0 %v3518
        %4071 = vmatpush2.msra.mxu0 %v3517
        %4072 = vmatprep.subr.mxu0 %v3510
        %4073 = vmatpush2.msra.mxu0 %v3509
        %4074 = vmatprep.mubr.f32.mxu0 %v3978
        %4075 = vmatmul.mubr.f32.gmra.mxu0 %v3975
        %v4076 = vpop.f32.mrf.mxu0
        %v4077 = vadd.f32 0.0, %v4076
        %v4078 = vpop.f32.mrf.mxu0
        %v4079 = vadd.f32 0.0, %v4078
        %4080 = vmatprep.mubr.f32.mxu0 %v3991
        %4081 = vmatmul.mubr.f32.gmra.mxu0 %v3989
        %v4082 = vpop.f32.mrf.mxu0
        %v4083 = vadd.f32 0.0, %v4082
        %v4084 = vpop.f32.mrf.mxu0
        %v4085 = vadd.f32 0.0, %v4084
        %4086 = vdwg.mxu0
        %4087 = vmatprep.subr.mxu0 %v3758
        %4088 = vmatpush1.msra.mxu0 %v3757
        %4089 = vmatprep.subr.mxu0 %v3750
        %4090 = vmatpush1.msra.mxu0 %v3749
        %4091 = vmatprep.subr.mxu0 %v3742
        %4092 = vmatpush1.msra.mxu0 %v3741
        %4093 = vmatprep.subr.mxu0 %v3734
        %4094 = vmatpush1.msra.mxu0 %v3733
        %4095 = vmatprep.subr.mxu0 %v3726
        %4096 = vmatpush1.msra.mxu0 %v3725
        %4097 = vmatprep.subr.mxu0 %v3718
        %4098 = vmatpush1.msra.mxu0 %v3717
        %4099 = vmatprep.subr.mxu0 %v3710
        %4100 = vmatpush1.msra.mxu0 %v3709
        %4101 = vmatprep.subr.mxu0 %v3702
        %4102 = vmatpush1.msra.mxu0 %v3701
        %4103 = vmatprep.subr.mxu0 %v3694
        %4104 = vmatpush1.msra.mxu0 %v3693
        %4105 = vmatprep.subr.mxu0 %v3686
        %4106 = vmatpush1.msra.mxu0 %v3685
        %4107 = vmatprep.subr.mxu0 %v3678
        %4108 = vmatpush1.msra.mxu0 %v3677
        %4109 = vmatprep.subr.mxu0 %v3670
        %4110 = vmatpush1.msra.mxu0 %v3669
        %4111 = vmatprep.subr.mxu0 %v3662
        %4112 = vmatpush1.msra.mxu0 %v3661
        %4113 = vmatprep.subr.mxu0 %v3654
        %4114 = vmatpush1.msra.mxu0 %v3653
        %4115 = vmatprep.subr.mxu0 %v3646
        %4116 = vmatpush1.msra.mxu0 %v3645
        %4117 = vmatprep.subr.mxu0 %v3638
        %4118 = vmatpush1.msra.mxu0 %v3637
        %4119 = vmatprep.subr.mxu0 %v3886
        %4120 = vmatpush2.msra.mxu0 %v3885
        %4121 = vmatprep.subr.mxu0 %v3878
        %4122 = vmatpush2.msra.mxu0 %v3877
        %4123 = vmatprep.subr.mxu0 %v3870
        %4124 = vmatpush2.msra.mxu0 %v3869
        %4125 = vmatprep.subr.mxu0 %v3862
        %4126 = vmatpush2.msra.mxu0 %v3861
        %4127 = vmatprep.subr.mxu0 %v3854
        %4128 = vmatpush2.msra.mxu0 %v3853
        %4129 = vmatprep.subr.mxu0 %v3846
        %4130 = vmatpush2.msra.mxu0 %v3845
        %4131 = vmatprep.subr.mxu0 %v3838
        %4132 = vmatpush2.msra.mxu0 %v3837
        %4133 = vmatprep.subr.mxu0 %v3830
        %4134 = vmatpush2.msra.mxu0 %v3829
        %4135 = vmatprep.subr.mxu0 %v3822
        %4136 = vmatpush2.msra.mxu0 %v3821
        %4137 = vmatprep.subr.mxu0 %v3814
        %4138 = vmatpush2.msra.mxu0 %v3813
        %4139 = vmatprep.subr.mxu0 %v3806
        %4140 = vmatpush2.msra.mxu0 %v3805
        %4141 = vmatprep.subr.mxu0 %v3798
        %4142 = vmatpush2.msra.mxu0 %v3797
        %4143 = vmatprep.subr.mxu0 %v3790
        %4144 = vmatpush2.msra.mxu0 %v3789
        %4145 = vmatprep.subr.mxu0 %v3782
        %4146 = vmatpush2.msra.mxu0 %v3781
        %4147 = vmatprep.subr.mxu0 %v3774
        %4148 = vmatpush2.msra.mxu0 %v3773
        %4149 = vmatprep.subr.mxu0 %v3766
        %4150 = vmatpush2.msra.mxu0 %v3765
        %4151 = vmatprep.mubr.f32.mxu0 %v3984
        %4152 = vmatmul.mubr.f32.gmra.mxu0 %v3981
        %v4153 = vpop.f32.mrf.mxu0
        %v4154 = vadd.f32 %v4077, %v4153
        %v4155 = vpop.f32.mrf.mxu0
        %v4156 = vadd.f32 %v4079, %v4155
        %4157 = vmatprep.mubr.f32.mxu0 %v3995
        %4158 = vmatmul.mubr.f32.gmra.mxu0 %v3993
        %v4159 = vpop.f32.mrf.mxu0
        %v4160 = vadd.f32 %v4083, %v4159
        %v4161 = vpop.f32.mrf.mxu0
        %v4162 = vadd.f32 %v4085, %v4161
        %4163 = vdwg.mxu0
        %4164 = vmatprep.subr.mxu0 0.0
        %4165 = vmatpush1.msra.mxu0 0.0
        %4166 = vmatprep.subr.mxu0 0.0
        %4167 = vmatpush1.msra.mxu0 0.0
        %4168 = vmatprep.subr.mxu0 0.0
        %4169 = vmatpush1.msra.mxu0 0.0
        %4170 = vmatprep.subr.mxu0 0.0
        %4171 = vmatpush1.msra.mxu0 0.0
        %4172 = vmatprep.subr.mxu0 0.0
        %4173 = vmatpush1.msra.mxu0 0.0
        %4174 = vmatprep.subr.mxu0 0.0
        %4175 = vmatpush1.msra.mxu0 0.0
        %4176 = vmatprep.subr.mxu0 0.0
        %4177 = vmatpush1.msra.mxu0 0.0
        %4178 = vmatprep.subr.mxu0 0.0
        %4179 = vmatpush1.msra.mxu0 0.0
        %4180 = vmatprep.subr.mxu0 %v3950
        %4181 = vmatpush1.msra.mxu0 %v3949
        %4182 = vmatprep.subr.mxu0 %v3942
        %4183 = vmatpush1.msra.mxu0 %v3941
        %4184 = vmatprep.subr.mxu0 %v3934
        %4185 = vmatpush1.msra.mxu0 %v3933
        %4186 = vmatprep.subr.mxu0 %v3926
        %4187 = vmatpush1.msra.mxu0 %v3925
        %4188 = vmatprep.subr.mxu0 %v3918
        %4189 = vmatpush1.msra.mxu0 %v3917
        %4190 = vmatprep.subr.mxu0 %v3910
        %4191 = vmatpush1.msra.mxu0 %v3909
        %4192 = vmatprep.subr.mxu0 %v3902
        %4193 = vmatpush1.msra.mxu0 %v3901
        %4194 = vmatprep.subr.mxu0 %v3894
        %4195 = vmatpush1.msra.mxu0 %v3893
        %4196 = vmatprep.subr.mxu0 0.0
        %4197 = vmatpush2.msra.mxu0 0.0
        %4198 = vmatprep.subr.mxu0 0.0
        %4199 = vmatpush2.msra.mxu0 0.0
        %4200 = vmatprep.subr.mxu0 0.0
        %4201 = vmatpush2.msra.mxu0 0.0
        %4202 = vmatprep.subr.mxu0 0.0
        %4203 = vmatpush2.msra.mxu0 0.0
        %4204 = vmatprep.subr.mxu0 0.0
        %4205 = vmatpush2.msra.mxu0 0.0
        %4206 = vmatprep.subr.mxu0 0.0
        %4207 = vmatpush2.msra.mxu0 0.0
        %4208 = vmatprep.subr.mxu0 0.0
        %4209 = vmatpush2.msra.mxu0 0.0
        %4210 = vmatprep.subr.mxu0 0.0
        %4211 = vmatpush2.msra.mxu0 0.0
        %4212 = vmatprep.subr.mxu0 0.0
        %4213 = vmatpush2.msra.mxu0 0.0
        %4214 = vmatprep.subr.mxu0 0.0
        %4215 = vmatpush2.msra.mxu0 0.0
        %4216 = vmatprep.subr.mxu0 0.0
        %4217 = vmatpush2.msra.mxu0 0.0
        %4218 = vmatprep.subr.mxu0 0.0
        %4219 = vmatpush2.msra.mxu0 0.0
        %4220 = vmatprep.subr.mxu0 0.0
        %4221 = vmatpush2.msra.mxu0 0.0
        %4222 = vmatprep.subr.mxu0 0.0
        %4223 = vmatpush2.msra.mxu0 0.0
        %4224 = vmatprep.subr.mxu0 0.0
        %4225 = vmatpush2.msra.mxu0 0.0
        %4226 = vmatprep.subr.mxu0 0.0
        %4227 = vmatpush2.msra.mxu0 0.0
        %4228 = vmatprep.mubr.f32.mxu0 0.0
        %4229 = vmatmul.mubr.f32.gmra.mxu0 %v4006
        %v4230 = vpop.f32.mrf.mxu0
        %v4231 = vadd.f32 %v4154, %v4230
        %v4232 = vpop.f32.mrf.mxu0
        %v4233 = vadd.f32 %v4156, %v4232
        %4234 = vmatprep.mubr.f32.mxu0 0.0
        %4235 = vmatmul.mubr.f32.gmra.mxu0 %v4008
        %v4236 = vpop.f32.mrf.mxu0
        %v4237 = vadd.f32 %v4160, %v4236
        %v4238 = vpop.f32.mrf.mxu0
        %v4239 = vadd.f32 %v4162, %v4238
        %4240 = vdwg.mxu0
        %4241 = vmatprep.subr.mxu0 %v3504
        %4242 = vmatpush1.msra.mxu0 %v3503
        %4243 = vmatprep.subr.mxu0 %v3496
        %4244 = vmatpush1.msra.mxu0 %v3495
        %4245 = vmatprep.subr.mxu0 %v3488
        %4246 = vmatpush1.msra.mxu0 %v3487
        %4247 = vmatprep.subr.mxu0 %v3480
        %4248 = vmatpush1.msra.mxu0 %v3479
        %4249 = vmatprep.subr.mxu0 %v3472
        %4250 = vmatpush1.msra.mxu0 %v3471
        %4251 = vmatprep.subr.mxu0 %v3464
        %4252 = vmatpush1.msra.mxu0 %v3463
        %4253 = vmatprep.subr.mxu0 %v3456
        %4254 = vmatpush1.msra.mxu0 %v3455
        %4255 = vmatprep.subr.mxu0 %v3448
        %4256 = vmatpush1.msra.mxu0 %v3447
        %4257 = vmatprep.subr.mxu0 %v3440
        %4258 = vmatpush1.msra.mxu0 %v3439
        %4259 = vmatprep.subr.mxu0 %v3432
        %4260 = vmatpush1.msra.mxu0 %v3431
        %4261 = vmatprep.subr.mxu0 %v3424
        %4262 = vmatpush1.msra.mxu0 %v3423
        %4263 = vmatprep.subr.mxu0 %v3416
        %4264 = vmatpush1.msra.mxu0 %v3415
        %4265 = vmatprep.subr.mxu0 %v3408
        %4266 = vmatpush1.msra.mxu0 %v3407
        %4267 = vmatprep.subr.mxu0 %v3400
        %4268 = vmatpush1.msra.mxu0 %v3399
        %4269 = vmatprep.subr.mxu0 %v3392
        %4270 = vmatpush1.msra.mxu0 %v3391
        %4271 = vmatprep.subr.mxu0 %v3384
        %4272 = vmatpush1.msra.mxu0 %v3383
        %4273 = vmatprep.subr.mxu0 %v3632
        %4274 = vmatpush2.msra.mxu0 %v3631
        %4275 = vmatprep.subr.mxu0 %v3624
        %4276 = vmatpush2.msra.mxu0 %v3623
        %4277 = vmatprep.subr.mxu0 %v3616
        %4278 = vmatpush2.msra.mxu0 %v3615
        %4279 = vmatprep.subr.mxu0 %v3608
        %4280 = vmatpush2.msra.mxu0 %v3607
        %4281 = vmatprep.subr.mxu0 %v3600
        %4282 = vmatpush2.msra.mxu0 %v3599
        %4283 = vmatprep.subr.mxu0 %v3592
        %4284 = vmatpush2.msra.mxu0 %v3591
        %4285 = vmatprep.subr.mxu0 %v3584
        %4286 = vmatpush2.msra.mxu0 %v3583
        %4287 = vmatprep.subr.mxu0 %v3576
        %4288 = vmatpush2.msra.mxu0 %v3575
        %4289 = vmatprep.subr.mxu0 %v3568
        %4290 = vmatpush2.msra.mxu0 %v3567
        %4291 = vmatprep.subr.mxu0 %v3560
        %4292 = vmatpush2.msra.mxu0 %v3559
        %4293 = vmatprep.subr.mxu0 %v3552
        %4294 = vmatpush2.msra.mxu0 %v3551
        %4295 = vmatprep.subr.mxu0 %v3544
        %4296 = vmatpush2.msra.mxu0 %v3543
        %4297 = vmatprep.subr.mxu0 %v3536
        %4298 = vmatpush2.msra.mxu0 %v3535
        %4299 = vmatprep.subr.mxu0 %v3528
        %4300 = vmatpush2.msra.mxu0 %v3527
        %4301 = vmatprep.subr.mxu0 %v3520
        %4302 = vmatpush2.msra.mxu0 %v3519
        %4303 = vmatprep.subr.mxu0 %v3512
        %4304 = vmatpush2.msra.mxu0 %v3511
        %4305 = vmatprep.mubr.f32.mxu0 %v3978
        %4306 = vmatmul.mubr.f32.gmra.mxu0 %v3975
        %v4307 = vpop.f32.mrf.mxu0
        %v4308 = vadd.f32 0.0, %v4307
        %v4309 = vpop.f32.mrf.mxu0
        %v4310 = vadd.f32 0.0, %v4309
        %4311 = vmatprep.mubr.f32.mxu0 %v3991
        %4312 = vmatmul.mubr.f32.gmra.mxu0 %v3989
        %v4313 = vpop.f32.mrf.mxu0
        %v4314 = vadd.f32 0.0, %v4313
        %v4315 = vpop.f32.mrf.mxu0
        %v4316 = vadd.f32 0.0, %v4315
        %4317 = vdwg.mxu0
        %4318 = vmatprep.subr.mxu0 %v3760
        %4319 = vmatpush1.msra.mxu0 %v3759
        %4320 = vmatprep.subr.mxu0 %v3752
        %4321 = vmatpush1.msra.mxu0 %v3751
        %4322 = vmatprep.subr.mxu0 %v3744
        %4323 = vmatpush1.msra.mxu0 %v3743
        %4324 = vmatprep.subr.mxu0 %v3736
        %4325 = vmatpush1.msra.mxu0 %v3735
        %4326 = vmatprep.subr.mxu0 %v3728
        %4327 = vmatpush1.msra.mxu0 %v3727
        %4328 = vmatprep.subr.mxu0 %v3720
        %4329 = vmatpush1.msra.mxu0 %v3719
        %4330 = vmatprep.subr.mxu0 %v3712
        %4331 = vmatpush1.msra.mxu0 %v3711
        %4332 = vmatprep.subr.mxu0 %v3704
        %4333 = vmatpush1.msra.mxu0 %v3703
        %4334 = vmatprep.subr.mxu0 %v3696
        %4335 = vmatpush1.msra.mxu0 %v3695
        %4336 = vmatprep.subr.mxu0 %v3688
        %4337 = vmatpush1.msra.mxu0 %v3687
        %4338 = vmatprep.subr.mxu0 %v3680
        %4339 = vmatpush1.msra.mxu0 %v3679
        %4340 = vmatprep.subr.mxu0 %v3672
        %4341 = vmatpush1.msra.mxu0 %v3671
        %4342 = vmatprep.subr.mxu0 %v3664
        %4343 = vmatpush1.msra.mxu0 %v3663
        %4344 = vmatprep.subr.mxu0 %v3656
        %4345 = vmatpush1.msra.mxu0 %v3655
        %4346 = vmatprep.subr.mxu0 %v3648
        %4347 = vmatpush1.msra.mxu0 %v3647
        %4348 = vmatprep.subr.mxu0 %v3640
        %4349 = vmatpush1.msra.mxu0 %v3639
        %4350 = vmatprep.subr.mxu0 %v3888
        %4351 = vmatpush2.msra.mxu0 %v3887
        %4352 = vmatprep.subr.mxu0 %v3880
        %4353 = vmatpush2.msra.mxu0 %v3879
        %4354 = vmatprep.subr.mxu0 %v3872
        %4355 = vmatpush2.msra.mxu0 %v3871
        %4356 = vmatprep.subr.mxu0 %v3864
        %4357 = vmatpush2.msra.mxu0 %v3863
        %4358 = vmatprep.subr.mxu0 %v3856
        %4359 = vmatpush2.msra.mxu0 %v3855
        %4360 = vmatprep.subr.mxu0 %v3848
        %4361 = vmatpush2.msra.mxu0 %v3847
        %4362 = vmatprep.subr.mxu0 %v3840
        %4363 = vmatpush2.msra.mxu0 %v3839
        %4364 = vmatprep.subr.mxu0 %v3832
        %4365 = vmatpush2.msra.mxu0 %v3831
        %4366 = vmatprep.subr.mxu0 %v3824
        %4367 = vmatpush2.msra.mxu0 %v3823
        %4368 = vmatprep.subr.mxu0 %v3816
        %4369 = vmatpush2.msra.mxu0 %v3815
        %4370 = vmatprep.subr.mxu0 %v3808
        %4371 = vmatpush2.msra.mxu0 %v3807
        %4372 = vmatprep.subr.mxu0 %v3800
        %4373 = vmatpush2.msra.mxu0 %v3799
        %4374 = vmatprep.subr.mxu0 %v3792
        %4375 = vmatpush2.msra.mxu0 %v3791
        %4376 = vmatprep.subr.mxu0 %v3784
        %4377 = vmatpush2.msra.mxu0 %v3783
        %4378 = vmatprep.subr.mxu0 %v3776
        %4379 = vmatpush2.msra.mxu0 %v3775
        %4380 = vmatprep.subr.mxu0 %v3768
        %4381 = vmatpush2.msra.mxu0 %v3767
        %4382 = vmatprep.mubr.f32.mxu0 %v3984
        %4383 = vmatmul.mubr.f32.gmra.mxu0 %v3981
        %v4384 = vpop.f32.mrf.mxu0
        %v4385 = vadd.f32 %v4308, %v4384
        %v4386 = vpop.f32.mrf.mxu0
        %v4387 = vadd.f32 %v4310, %v4386
        %4388 = vmatprep.mubr.f32.mxu0 %v3995
        %4389 = vmatmul.mubr.f32.gmra.mxu0 %v3993
        %v4390 = vpop.f32.mrf.mxu0
        %v4391 = vadd.f32 %v4314, %v4390
        %v4392 = vpop.f32.mrf.mxu0
        %v4393 = vadd.f32 %v4316, %v4392
        %4394 = vdwg.mxu0
        %4395 = vmatprep.subr.mxu0 0.0
        %4396 = vmatpush1.msra.mxu0 0.0
        %4397 = vmatprep.subr.mxu0 0.0
        %4398 = vmatpush1.msra.mxu0 0.0
        %4399 = vmatprep.subr.mxu0 0.0
        %4400 = vmatpush1.msra.mxu0 0.0
        %4401 = vmatprep.subr.mxu0 0.0
        %4402 = vmatpush1.msra.mxu0 0.0
        %4403 = vmatprep.subr.mxu0 0.0
        %4404 = vmatpush1.msra.mxu0 0.0
        %4405 = vmatprep.subr.mxu0 0.0
        %4406 = vmatpush1.msra.mxu0 0.0
        %4407 = vmatprep.subr.mxu0 0.0
        %4408 = vmatpush1.msra.mxu0 0.0
        %4409 = vmatprep.subr.mxu0 0.0
        %4410 = vmatpush1.msra.mxu0 0.0
        %4411 = vmatprep.subr.mxu0 %v3952
        %4412 = vmatpush1.msra.mxu0 %v3951
        %4413 = vmatprep.subr.mxu0 %v3944
        %4414 = vmatpush1.msra.mxu0 %v3943
        %4415 = vmatprep.subr.mxu0 %v3936
        %4416 = vmatpush1.msra.mxu0 %v3935
        %4417 = vmatprep.subr.mxu0 %v3928
        %4418 = vmatpush1.msra.mxu0 %v3927
        %4419 = vmatprep.subr.mxu0 %v3920
        %4420 = vmatpush1.msra.mxu0 %v3919
        %4421 = vmatprep.subr.mxu0 %v3912
        %4422 = vmatpush1.msra.mxu0 %v3911
        %4423 = vmatprep.subr.mxu0 %v3904
        %4424 = vmatpush1.msra.mxu0 %v3903
        %4425 = vmatprep.subr.mxu0 %v3896
        %4426 = vmatpush1.msra.mxu0 %v3895
        %4427 = vmatprep.subr.mxu0 0.0
        %4428 = vmatpush2.msra.mxu0 0.0
        %4429 = vmatprep.subr.mxu0 0.0
        %4430 = vmatpush2.msra.mxu0 0.0
        %4431 = vmatprep.subr.mxu0 0.0
        %4432 = vmatpush2.msra.mxu0 0.0
        %4433 = vmatprep.subr.mxu0 0.0
        %4434 = vmatpush2.msra.mxu0 0.0
        %4435 = vmatprep.subr.mxu0 0.0
        %4436 = vmatpush2.msra.mxu0 0.0
        %4437 = vmatprep.subr.mxu0 0.0
        %4438 = vmatpush2.msra.mxu0 0.0
        %4439 = vmatprep.subr.mxu0 0.0
        %4440 = vmatpush2.msra.mxu0 0.0
        %4441 = vmatprep.subr.mxu0 0.0
        %4442 = vmatpush2.msra.mxu0 0.0
        %4443 = vmatprep.subr.mxu0 0.0
        %4444 = vmatpush2.msra.mxu0 0.0
        %4445 = vmatprep.subr.mxu0 0.0
        %4446 = vmatpush2.msra.mxu0 0.0
        %4447 = vmatprep.subr.mxu0 0.0
        %4448 = vmatpush2.msra.mxu0 0.0
        %4449 = vmatprep.subr.mxu0 0.0
        %4450 = vmatpush2.msra.mxu0 0.0
        %4451 = vmatprep.subr.mxu0 0.0
        %4452 = vmatpush2.msra.mxu0 0.0
        %4453 = vmatprep.subr.mxu0 0.0
        %4454 = vmatpush2.msra.mxu0 0.0
        %4455 = vmatprep.subr.mxu0 0.0
        %4456 = vmatpush2.msra.mxu0 0.0
        %4457 = vmatprep.subr.mxu0 0.0
        %4458 = vmatpush2.msra.mxu0 0.0
        %4459 = vmatprep.mubr.f32.mxu0 0.0
        %4460 = vmatmul.mubr.f32.gmra.mxu0 %v4006
        %v4461 = vpop.f32.mrf.mxu0
        %v4462 = vadd.f32 %v4385, %v4461
        %v4463 = vpop.f32.mrf.mxu0
        %v4464 = vadd.f32 %v4387, %v4463
        %4465 = vmatprep.mubr.f32.mxu0 0.0
        %4466 = vmatmul.mubr.f32.gmra.mxu0 %v4008
        %v4467 = vpop.f32.mrf.mxu0
        %v4468 = vadd.f32 %v4391, %v4467
        %v4469 = vpop.f32.mrf.mxu0
        %v4470 = vadd.f32 %v4393, %v4469
        %4471 = vdwg.mxu0
        %4472 = vmatprep.subr.mxu0 %v3506
        %4473 = vmatpush1.msra.mxu0 %v3505
        %4474 = vmatprep.subr.mxu0 %v3498
        %4475 = vmatpush1.msra.mxu0 %v3497
        %4476 = vmatprep.subr.mxu0 %v3490
        %4477 = vmatpush1.msra.mxu0 %v3489
        %4478 = vmatprep.subr.mxu0 %v3482
        %4479 = vmatpush1.msra.mxu0 %v3481
        %4480 = vmatprep.subr.mxu0 %v3474
        %4481 = vmatpush1.msra.mxu0 %v3473
        %4482 = vmatprep.subr.mxu0 %v3466
        %4483 = vmatpush1.msra.mxu0 %v3465
        %4484 = vmatprep.subr.mxu0 %v3458
        %4485 = vmatpush1.msra.mxu0 %v3457
        %4486 = vmatprep.subr.mxu0 %v3450
        %4487 = vmatpush1.msra.mxu0 %v3449
        %4488 = vmatprep.subr.mxu0 %v3442
        %4489 = vmatpush1.msra.mxu0 %v3441
        %4490 = vmatprep.subr.mxu0 %v3434
        %4491 = vmatpush1.msra.mxu0 %v3433
        %4492 = vmatprep.subr.mxu0 %v3426
        %4493 = vmatpush1.msra.mxu0 %v3425
        %4494 = vmatprep.subr.mxu0 %v3418
        %4495 = vmatpush1.msra.mxu0 %v3417
        %4496 = vmatprep.subr.mxu0 %v3410
        %4497 = vmatpush1.msra.mxu0 %v3409
        %4498 = vmatprep.subr.mxu0 %v3402
        %4499 = vmatpush1.msra.mxu0 %v3401
        %4500 = vmatprep.subr.mxu0 %v3394
        %4501 = vmatpush1.msra.mxu0 %v3393
        %4502 = vmatprep.subr.mxu0 %v3386
        %4503 = vmatpush1.msra.mxu0 %v3385
        %4504 = vmatprep.subr.mxu0 %v3634
        %4505 = vmatpush2.msra.mxu0 %v3633
        %4506 = vmatprep.subr.mxu0 %v3626
        %4507 = vmatpush2.msra.mxu0 %v3625
        %4508 = vmatprep.subr.mxu0 %v3618
        %4509 = vmatpush2.msra.mxu0 %v3617
        %4510 = vmatprep.subr.mxu0 %v3610
        %4511 = vmatpush2.msra.mxu0 %v3609
        %4512 = vmatprep.subr.mxu0 %v3602
        %4513 = vmatpush2.msra.mxu0 %v3601
        %4514 = vmatprep.subr.mxu0 %v3594
        %4515 = vmatpush2.msra.mxu0 %v3593
        %4516 = vmatprep.subr.mxu0 %v3586
        %4517 = vmatpush2.msra.mxu0 %v3585
        %4518 = vmatprep.subr.mxu0 %v3578
        %4519 = vmatpush2.msra.mxu0 %v3577
        %4520 = vmatprep.subr.mxu0 %v3570
        %4521 = vmatpush2.msra.mxu0 %v3569
        %4522 = vmatprep.subr.mxu0 %v3562
        %4523 = vmatpush2.msra.mxu0 %v3561
        %4524 = vmatprep.subr.mxu0 %v3554
        %4525 = vmatpush2.msra.mxu0 %v3553
        %4526 = vmatprep.subr.mxu0 %v3546
        %4527 = vmatpush2.msra.mxu0 %v3545
        %4528 = vmatprep.subr.mxu0 %v3538
        %4529 = vmatpush2.msra.mxu0 %v3537
        %4530 = vmatprep.subr.mxu0 %v3530
        %4531 = vmatpush2.msra.mxu0 %v3529
        %4532 = vmatprep.subr.mxu0 %v3522
        %4533 = vmatpush2.msra.mxu0 %v3521
        %4534 = vmatprep.subr.mxu0 %v3514
        %4535 = vmatpush2.msra.mxu0 %v3513
        %4536 = vmatprep.mubr.f32.mxu0 %v3978
        %4537 = vmatmul.mubr.f32.gmra.mxu0 %v3975
        %v4538 = vpop.f32.mrf.mxu0
        %v4539 = vadd.f32 0.0, %v4538
        %v4540 = vpop.f32.mrf.mxu0
        %v4541 = vadd.f32 0.0, %v4540
        %4542 = vmatprep.mubr.f32.mxu0 %v3991
        %4543 = vmatmul.mubr.f32.gmra.mxu0 %v3989
        %v4544 = vpop.f32.mrf.mxu0
        %v4545 = vadd.f32 0.0, %v4544
        %v4546 = vpop.f32.mrf.mxu0
        %v4547 = vadd.f32 0.0, %v4546
        %4548 = vdwg.mxu0
        %4549 = vmatprep.subr.mxu0 %v3762
        %4550 = vmatpush1.msra.mxu0 %v3761
        %4551 = vmatprep.subr.mxu0 %v3754
        %4552 = vmatpush1.msra.mxu0 %v3753
        %4553 = vmatprep.subr.mxu0 %v3746
        %4554 = vmatpush1.msra.mxu0 %v3745
        %4555 = vmatprep.subr.mxu0 %v3738
        %4556 = vmatpush1.msra.mxu0 %v3737
        %4557 = vmatprep.subr.mxu0 %v3730
        %4558 = vmatpush1.msra.mxu0 %v3729
        %4559 = vmatprep.subr.mxu0 %v3722
        %4560 = vmatpush1.msra.mxu0 %v3721
        %4561 = vmatprep.subr.mxu0 %v3714
        %4562 = vmatpush1.msra.mxu0 %v3713
        %4563 = vmatprep.subr.mxu0 %v3706
        %4564 = vmatpush1.msra.mxu0 %v3705
        %4565 = vmatprep.subr.mxu0 %v3698
        %4566 = vmatpush1.msra.mxu0 %v3697
        %4567 = vmatprep.subr.mxu0 %v3690
        %4568 = vmatpush1.msra.mxu0 %v3689
        %4569 = vmatprep.subr.mxu0 %v3682
        %4570 = vmatpush1.msra.mxu0 %v3681
        %4571 = vmatprep.subr.mxu0 %v3674
        %4572 = vmatpush1.msra.mxu0 %v3673
        %4573 = vmatprep.subr.mxu0 %v3666
        %4574 = vmatpush1.msra.mxu0 %v3665
        %4575 = vmatprep.subr.mxu0 %v3658
        %4576 = vmatpush1.msra.mxu0 %v3657
        %4577 = vmatprep.subr.mxu0 %v3650
        %4578 = vmatpush1.msra.mxu0 %v3649
        %4579 = vmatprep.subr.mxu0 %v3642
        %4580 = vmatpush1.msra.mxu0 %v3641
        %4581 = vmatprep.subr.mxu0 %v3890
        %4582 = vmatpush2.msra.mxu0 %v3889
        %4583 = vmatprep.subr.mxu0 %v3882
        %4584 = vmatpush2.msra.mxu0 %v3881
        %4585 = vmatprep.subr.mxu0 %v3874
        %4586 = vmatpush2.msra.mxu0 %v3873
        %4587 = vmatprep.subr.mxu0 %v3866
        %4588 = vmatpush2.msra.mxu0 %v3865
        %4589 = vmatprep.subr.mxu0 %v3858
        %4590 = vmatpush2.msra.mxu0 %v3857
        %4591 = vmatprep.subr.mxu0 %v3850
        %4592 = vmatpush2.msra.mxu0 %v3849
        %4593 = vmatprep.subr.mxu0 %v3842
        %4594 = vmatpush2.msra.mxu0 %v3841
        %4595 = vmatprep.subr.mxu0 %v3834
        %4596 = vmatpush2.msra.mxu0 %v3833
        %4597 = vmatprep.subr.mxu0 %v3826
        %4598 = vmatpush2.msra.mxu0 %v3825
        %4599 = vmatprep.subr.mxu0 %v3818
        %4600 = vmatpush2.msra.mxu0 %v3817
        %4601 = vmatprep.subr.mxu0 %v3810
        %4602 = vmatpush2.msra.mxu0 %v3809
        %4603 = vmatprep.subr.mxu0 %v3802
        %4604 = vmatpush2.msra.mxu0 %v3801
        %4605 = vmatprep.subr.mxu0 %v3794
        %4606 = vmatpush2.msra.mxu0 %v3793
        %4607 = vmatprep.subr.mxu0 %v3786
        %4608 = vmatpush2.msra.mxu0 %v3785
        %4609 = vmatprep.subr.mxu0 %v3778
        %4610 = vmatpush2.msra.mxu0 %v3777
        %4611 = vmatprep.subr.mxu0 %v3770
        %4612 = vmatpush2.msra.mxu0 %v3769
        %4613 = vmatprep.mubr.f32.mxu0 %v3984
        %4614 = vmatmul.mubr.f32.gmra.mxu0 %v3981
        %v4615 = vpop.f32.mrf.mxu0
        %v4616 = vadd.f32 %v4539, %v4615
        %v4617 = vpop.f32.mrf.mxu0
        %v4618 = vadd.f32 %v4541, %v4617
        %4619 = vmatprep.mubr.f32.mxu0 %v3995
        %4620 = vmatmul.mubr.f32.gmra.mxu0 %v3993
        %v4621 = vpop.f32.mrf.mxu0
        %v4622 = vadd.f32 %v4545, %v4621
        %v4623 = vpop.f32.mrf.mxu0
        %v4624 = vadd.f32 %v4547, %v4623
        %4625 = vdwg.mxu0
        %4626 = vmatprep.subr.mxu0 0.0
        %4627 = vmatpush1.msra.mxu0 0.0
        %4628 = vmatprep.subr.mxu0 0.0
        %4629 = vmatpush1.msra.mxu0 0.0
        %4630 = vmatprep.subr.mxu0 0.0
        %4631 = vmatpush1.msra.mxu0 0.0
        %4632 = vmatprep.subr.mxu0 0.0
        %4633 = vmatpush1.msra.mxu0 0.0
        %4634 = vmatprep.subr.mxu0 0.0
        %4635 = vmatpush1.msra.mxu0 0.0
        %4636 = vmatprep.subr.mxu0 0.0
        %4637 = vmatpush1.msra.mxu0 0.0
        %4638 = vmatprep.subr.mxu0 0.0
        %4639 = vmatpush1.msra.mxu0 0.0
        %4640 = vmatprep.subr.mxu0 0.0
        %4641 = vmatpush1.msra.mxu0 0.0
        %4642 = vmatprep.subr.mxu0 %v3954
        %4643 = vmatpush1.msra.mxu0 %v3953
        %4644 = vmatprep.subr.mxu0 %v3946
        %4645 = vmatpush1.msra.mxu0 %v3945
        %4646 = vmatprep.subr.mxu0 %v3938
        %4647 = vmatpush1.msra.mxu0 %v3937
        %4648 = vmatprep.subr.mxu0 %v3930
        %4649 = vmatpush1.msra.mxu0 %v3929
        %4650 = vmatprep.subr.mxu0 %v3922
        %4651 = vmatpush1.msra.mxu0 %v3921
        %4652 = vmatprep.subr.mxu0 %v3914
        %4653 = vmatpush1.msra.mxu0 %v3913
        %4654 = vmatprep.subr.mxu0 %v3906
        %4655 = vmatpush1.msra.mxu0 %v3905
        %4656 = vmatprep.subr.mxu0 %v3898
        %4657 = vmatpush1.msra.mxu0 %v3897
        %4658 = vmatprep.subr.mxu0 0.0
        %4659 = vmatpush2.msra.mxu0 0.0
        %4660 = vmatprep.subr.mxu0 0.0
        %4661 = vmatpush2.msra.mxu0 0.0
        %4662 = vmatprep.subr.mxu0 0.0
        %4663 = vmatpush2.msra.mxu0 0.0
        %4664 = vmatprep.subr.mxu0 0.0
        %4665 = vmatpush2.msra.mxu0 0.0
        %4666 = vmatprep.subr.mxu0 0.0
        %4667 = vmatpush2.msra.mxu0 0.0
        %4668 = vmatprep.subr.mxu0 0.0
        %4669 = vmatpush2.msra.mxu0 0.0
        %4670 = vmatprep.subr.mxu0 0.0
        %4671 = vmatpush2.msra.mxu0 0.0
        %4672 = vmatprep.subr.mxu0 0.0
        %4673 = vmatpush2.msra.mxu0 0.0
        %4674 = vmatprep.subr.mxu0 0.0
        %4675 = vmatpush2.msra.mxu0 0.0
        %4676 = vmatprep.subr.mxu0 0.0
        %4677 = vmatpush2.msra.mxu0 0.0
        %4678 = vmatprep.subr.mxu0 0.0
        %4679 = vmatpush2.msra.mxu0 0.0
        %4680 = vmatprep.subr.mxu0 0.0
        %4681 = vmatpush2.msra.mxu0 0.0
        %4682 = vmatprep.subr.mxu0 0.0
        %4683 = vmatpush2.msra.mxu0 0.0
        %4684 = vmatprep.subr.mxu0 0.0
        %4685 = vmatpush2.msra.mxu0 0.0
        %4686 = vmatprep.subr.mxu0 0.0
        %4687 = vmatpush2.msra.mxu0 0.0
        %4688 = vmatprep.subr.mxu0 0.0
        %4689 = vmatpush2.msra.mxu0 0.0
        %4690 = vmatprep.mubr.f32.mxu0 0.0
        %4691 = vmatmul.mubr.f32.gmra.mxu0 %v4006
        %v4692 = vpop.f32.mrf.mxu0
        %v4693 = vadd.f32 %v4616, %v4692
        %v4694 = vpop.f32.mrf.mxu0
        %v4695 = vadd.f32 %v4618, %v4694
        %4696 = vmatprep.mubr.f32.mxu0 0.0
        %4697 = vmatmul.mubr.f32.gmra.mxu0 %v4008
        %v4698 = vpop.f32.mrf.mxu0
        %v4699 = vadd.f32 %v4622, %v4698
        %v4700 = vpop.f32.mrf.mxu0
        %v4701 = vadd.f32 %v4624, %v4700
        %4702 = vdwg.mxu0
        %4703 = vmatprep.subr.mxu0 %v3508
        %4704 = vmatpush1.msra.mxu0 %v3507
        %4705 = vmatprep.subr.mxu0 %v3500
        %4706 = vmatpush1.msra.mxu0 %v3499
        %4707 = vmatprep.subr.mxu0 %v3492
        %4708 = vmatpush1.msra.mxu0 %v3491
        %4709 = vmatprep.subr.mxu0 %v3484
        %4710 = vmatpush1.msra.mxu0 %v3483
        %4711 = vmatprep.subr.mxu0 %v3476
        %4712 = vmatpush1.msra.mxu0 %v3475
        %4713 = vmatprep.subr.mxu0 %v3468
        %4714 = vmatpush1.msra.mxu0 %v3467
        %4715 = vmatprep.subr.mxu0 %v3460
        %4716 = vmatpush1.msra.mxu0 %v3459
        %4717 = vmatprep.subr.mxu0 %v3452
        %4718 = vmatpush1.msra.mxu0 %v3451
        %4719 = vmatprep.subr.mxu0 %v3444
        %4720 = vmatpush1.msra.mxu0 %v3443
        %4721 = vmatprep.subr.mxu0 %v3436
        %4722 = vmatpush1.msra.mxu0 %v3435
        %4723 = vmatprep.subr.mxu0 %v3428
        %4724 = vmatpush1.msra.mxu0 %v3427
        %4725 = vmatprep.subr.mxu0 %v3420
        %4726 = vmatpush1.msra.mxu0 %v3419
        %4727 = vmatprep.subr.mxu0 %v3412
        %4728 = vmatpush1.msra.mxu0 %v3411
        %4729 = vmatprep.subr.mxu0 %v3404
        %4730 = vmatpush1.msra.mxu0 %v3403
        %4731 = vmatprep.subr.mxu0 %v3396
        %4732 = vmatpush1.msra.mxu0 %v3395
        %4733 = vmatprep.subr.mxu0 %v3388
        %4734 = vmatpush1.msra.mxu0 %v3387
        %4735 = vmatprep.subr.mxu0 %v3636
        %4736 = vmatpush2.msra.mxu0 %v3635
        %4737 = vmatprep.subr.mxu0 %v3628
        %4738 = vmatpush2.msra.mxu0 %v3627
        %4739 = vmatprep.subr.mxu0 %v3620
        %4740 = vmatpush2.msra.mxu0 %v3619
        %4741 = vmatprep.subr.mxu0 %v3612
        %4742 = vmatpush2.msra.mxu0 %v3611
        %4743 = vmatprep.subr.mxu0 %v3604
        %4744 = vmatpush2.msra.mxu0 %v3603
        %4745 = vmatprep.subr.mxu0 %v3596
        %4746 = vmatpush2.msra.mxu0 %v3595
        %4747 = vmatprep.subr.mxu0 %v3588
        %4748 = vmatpush2.msra.mxu0 %v3587
        %4749 = vmatprep.subr.mxu0 %v3580
        %4750 = vmatpush2.msra.mxu0 %v3579
        %4751 = vmatprep.subr.mxu0 %v3572
        %4752 = vmatpush2.msra.mxu0 %v3571
        %4753 = vmatprep.subr.mxu0 %v3564
        %4754 = vmatpush2.msra.mxu0 %v3563
        %4755 = vmatprep.subr.mxu0 %v3556
        %4756 = vmatpush2.msra.mxu0 %v3555
        %4757 = vmatprep.subr.mxu0 %v3548
        %4758 = vmatpush2.msra.mxu0 %v3547
        %4759 = vmatprep.subr.mxu0 %v3540
        %4760 = vmatpush2.msra.mxu0 %v3539
        %4761 = vmatprep.subr.mxu0 %v3532
        %4762 = vmatpush2.msra.mxu0 %v3531
        %4763 = vmatprep.subr.mxu0 %v3524
        %4764 = vmatpush2.msra.mxu0 %v3523
        %4765 = vmatprep.subr.mxu0 %v3516
        %4766 = vmatpush2.msra.mxu0 %v3515
        %4767 = vmatprep.mubr.f32.mxu0 %v3978
        %4768 = vmatmul.mubr.f32.gmra.mxu0 %v3975
        %v4769 = vpop.f32.mrf.mxu0
        %v4770 = vadd.f32 0.0, %v4769
        %v4771 = vpop.f32.mrf.mxu0
        %v4772 = vadd.f32 0.0, %v4771
        %4773 = vmatprep.mubr.f32.mxu0 %v3991
        %4774 = vmatmul.mubr.f32.gmra.mxu0 %v3989
        %v4775 = vpop.f32.mrf.mxu0
        %v4776 = vadd.f32 0.0, %v4775
        %v4777 = vpop.f32.mrf.mxu0
        %v4778 = vadd.f32 0.0, %v4777
        %4779 = vdwg.mxu0
        %4780 = vmatprep.subr.mxu0 %v3764
        %4781 = vmatpush1.msra.mxu0 %v3763
        %4782 = vmatprep.subr.mxu0 %v3756
        %4783 = vmatpush1.msra.mxu0 %v3755
        %4784 = vmatprep.subr.mxu0 %v3748
        %4785 = vmatpush1.msra.mxu0 %v3747
        %4786 = vmatprep.subr.mxu0 %v3740
        %4787 = vmatpush1.msra.mxu0 %v3739
        %4788 = vmatprep.subr.mxu0 %v3732
        %4789 = vmatpush1.msra.mxu0 %v3731
        %4790 = vmatprep.subr.mxu0 %v3724
        %4791 = vmatpush1.msra.mxu0 %v3723
        %4792 = vmatprep.subr.mxu0 %v3716
        %4793 = vmatpush1.msra.mxu0 %v3715
        %4794 = vmatprep.subr.mxu0 %v3708
        %4795 = vmatpush1.msra.mxu0 %v3707
        %4796 = vmatprep.subr.mxu0 %v3700
        %4797 = vmatpush1.msra.mxu0 %v3699
        %4798 = vmatprep.subr.mxu0 %v3692
        %4799 = vmatpush1.msra.mxu0 %v3691
        %4800 = vmatprep.subr.mxu0 %v3684
        %4801 = vmatpush1.msra.mxu0 %v3683
        %4802 = vmatprep.subr.mxu0 %v3676
        %4803 = vmatpush1.msra.mxu0 %v3675
        %4804 = vmatprep.subr.mxu0 %v3668
        %4805 = vmatpush1.msra.mxu0 %v3667
        %4806 = vmatprep.subr.mxu0 %v3660
        %4807 = vmatpush1.msra.mxu0 %v3659
        %4808 = vmatprep.subr.mxu0 %v3652
        %4809 = vmatpush1.msra.mxu0 %v3651
        %4810 = vmatprep.subr.mxu0 %v3644
        %4811 = vmatpush1.msra.mxu0 %v3643
        %4812 = vmatprep.subr.mxu0 %v3892
        %4813 = vmatpush2.msra.mxu0 %v3891
        %4814 = vmatprep.subr.mxu0 %v3884
        %4815 = vmatpush2.msra.mxu0 %v3883
        %4816 = vmatprep.subr.mxu0 %v3876
        %4817 = vmatpush2.msra.mxu0 %v3875
        %4818 = vmatprep.subr.mxu0 %v3868
        %4819 = vmatpush2.msra.mxu0 %v3867
        %4820 = vmatprep.subr.mxu0 %v3860
        %4821 = vmatpush2.msra.mxu0 %v3859
        %4822 = vmatprep.subr.mxu0 %v3852
        %4823 = vmatpush2.msra.mxu0 %v3851
        %4824 = vmatprep.subr.mxu0 %v3844
        %4825 = vmatpush2.msra.mxu0 %v3843
        %4826 = vmatprep.subr.mxu0 %v3836
        %4827 = vmatpush2.msra.mxu0 %v3835
        %4828 = vmatprep.subr.mxu0 %v3828
        %4829 = vmatpush2.msra.mxu0 %v3827
        %4830 = vmatprep.subr.mxu0 %v3820
        %4831 = vmatpush2.msra.mxu0 %v3819
        %4832 = vmatprep.subr.mxu0 %v3812
        %4833 = vmatpush2.msra.mxu0 %v3811
        %4834 = vmatprep.subr.mxu0 %v3804
        %4835 = vmatpush2.msra.mxu0 %v3803
        %4836 = vmatprep.subr.mxu0 %v3796
        %4837 = vmatpush2.msra.mxu0 %v3795
        %4838 = vmatprep.subr.mxu0 %v3788
        %4839 = vmatpush2.msra.mxu0 %v3787
        %4840 = vmatprep.subr.mxu0 %v3780
        %4841 = vmatpush2.msra.mxu0 %v3779
        %4842 = vmatprep.subr.mxu0 %v3772
        %4843 = vmatpush2.msra.mxu0 %v3771
        %4844 = vmatprep.mubr.f32.mxu0 %v3984
        %4845 = vmatmul.mubr.f32.gmra.mxu0 %v3981
        %v4846 = vpop.f32.mrf.mxu0
        %v4847 = vadd.f32 %v4770, %v4846
        %v4848 = vpop.f32.mrf.mxu0
        %v4849 = vadd.f32 %v4772, %v4848
        %4850 = vmatprep.mubr.f32.mxu0 %v3995
        %4851 = vmatmul.mubr.f32.gmra.mxu0 %v3993
        %v4852 = vpop.f32.mrf.mxu0
        %v4853 = vadd.f32 %v4776, %v4852
        %v4854 = vpop.f32.mrf.mxu0
        %v4855 = vadd.f32 %v4778, %v4854
        %4856 = vdwg.mxu0
        %4857 = vmatprep.subr.mxu0 0.0
        %4858 = vmatpush1.msra.mxu0 0.0
        %4859 = vmatprep.subr.mxu0 0.0
        %4860 = vmatpush1.msra.mxu0 0.0
        %4861 = vmatprep.subr.mxu0 0.0
        %4862 = vmatpush1.msra.mxu0 0.0
        %4863 = vmatprep.subr.mxu0 0.0
        %4864 = vmatpush1.msra.mxu0 0.0
        %4865 = vmatprep.subr.mxu0 0.0
        %4866 = vmatpush1.msra.mxu0 0.0
        %4867 = vmatprep.subr.mxu0 0.0
        %4868 = vmatpush1.msra.mxu0 0.0
        %4869 = vmatprep.subr.mxu0 0.0
        %4870 = vmatpush1.msra.mxu0 0.0
        %4871 = vmatprep.subr.mxu0 0.0
        %4872 = vmatpush1.msra.mxu0 0.0
        %4873 = vmatprep.subr.mxu0 %v3956
        %4874 = vmatpush1.msra.mxu0 %v3955
        %4875 = vmatprep.subr.mxu0 %v3948
        %4876 = vmatpush1.msra.mxu0 %v3947
        %4877 = vmatprep.subr.mxu0 %v3940
        %4878 = vmatpush1.msra.mxu0 %v3939
        %4879 = vmatprep.subr.mxu0 %v3932
        %4880 = vmatpush1.msra.mxu0 %v3931
        %4881 = vmatprep.subr.mxu0 %v3924
        %4882 = vmatpush1.msra.mxu0 %v3923
        %4883 = vmatprep.subr.mxu0 %v3916
        %4884 = vmatpush1.msra.mxu0 %v3915
        %4885 = vmatprep.subr.mxu0 %v3908
        %4886 = vmatpush1.msra.mxu0 %v3907
        %4887 = vmatprep.subr.mxu0 %v3900
        %4888 = vmatpush1.msra.mxu0 %v3899
        %4889 = vmatprep.subr.mxu0 0.0
        %4890 = vmatpush2.msra.mxu0 0.0
        %4891 = vmatprep.subr.mxu0 0.0
        %4892 = vmatpush2.msra.mxu0 0.0
        %4893 = vmatprep.subr.mxu0 0.0
        %4894 = vmatpush2.msra.mxu0 0.0
        %4895 = vmatprep.subr.mxu0 0.0
        %4896 = vmatpush2.msra.mxu0 0.0
        %4897 = vmatprep.subr.mxu0 0.0
        %4898 = vmatpush2.msra.mxu0 0.0
        %4899 = vmatprep.subr.mxu0 0.0
        %4900 = vmatpush2.msra.mxu0 0.0
        %4901 = vmatprep.subr.mxu0 0.0
        %4902 = vmatpush2.msra.mxu0 0.0
        %4903 = vmatprep.subr.mxu0 0.0
        %4904 = vmatpush2.msra.mxu0 0.0
        %4905 = vmatprep.subr.mxu0 0.0
        %4906 = vmatpush2.msra.mxu0 0.0
        %4907 = vmatprep.subr.mxu0 0.0
        %4908 = vmatpush2.msra.mxu0 0.0
        %4909 = vmatprep.subr.mxu0 0.0
        %4910 = vmatpush2.msra.mxu0 0.0
        %4911 = vmatprep.subr.mxu0 0.0
        %4912 = vmatpush2.msra.mxu0 0.0
        %4913 = vmatprep.subr.mxu0 0.0
        %4914 = vmatpush2.msra.mxu0 0.0
        %4915 = vmatprep.subr.mxu0 0.0
        %4916 = vmatpush2.msra.mxu0 0.0
        %4917 = vmatprep.subr.mxu0 0.0
        %4918 = vmatpush2.msra.mxu0 0.0
        %4919 = vmatprep.subr.mxu0 0.0
        %4920 = vmatpush2.msra.mxu0 0.0
        %4921 = vmatprep.mubr.f32.mxu0 0.0
        %4922 = vmatmul.mubr.f32.gmra.mxu0 %v4006
        %v4923 = vpop.f32.mrf.mxu0
        %v4924 = vadd.f32 %v4847, %v4923
        %v4925 = vpop.f32.mrf.mxu0
        %v4926 = vadd.f32 %v4849, %v4925
        %4927 = vmatprep.mubr.f32.mxu0 0.0
        %4928 = vmatmul.mubr.f32.gmra.mxu0 %v4008
        %v4929 = vpop.f32.mrf.mxu0
        %v4930 = vadd.f32 %v4853, %v4929
        %v4931 = vpop.f32.mrf.mxu0
        %v4932 = vadd.f32 %v4855, %v4931
        %4933 = vdwg.mxu0
        %v4934 = vadd.f32 %v3349, %v4231
        %v4935 = vadd.f32 %v3350, %v4233
        %v4936 = vadd.f32 %v3351, %v4462
        %v4937 = vadd.f32 %v3352, %v4464
        %v4938 = vadd.f32 %v3353, %v4693
        %v4939 = vadd.f32 %v3354, %v4695
        %v4940 = vadd.f32 %v3355, %v4924
        %v4941 = vadd.f32 %v3356, %v4926
        %v4942 = vadd.f32 %v3357, %v4237
        %v4943 = vadd.f32 %v3358, %v4239
        %v4944 = vadd.f32 %v3359, %v4468
        %v4945 = vadd.f32 %v3360, %v4470
        %v4946 = vadd.f32 %v3361, %v4699
        %v4947 = vadd.f32 %v3362, %v4701
        %v4948 = vadd.f32 %v3363, %v4930
        %v4949 = vadd.f32 %v3364, %v4932
        %4950 = vst [vmem:[#allocation2] sm:$0xff] %v4934
        %4951 = vst [vmem:[#allocation2 + $0x8] sm:$0xff] %v4935
        %4952 = vst [vmem:[#allocation2 + $0x10] sm:$0xff] %v4936
        %4953 = vst [vmem:[#allocation2 + $0x18] sm:$0xff] %v4937
        %4954 = vst [vmem:[#allocation2 + $0x20] sm:$0xff] %v4938
        %4955 = vst [vmem:[#allocation2 + $0x28] sm:$0xff] %v4939
        %4956 = vst [vmem:[#allocation2 + $0x30] sm:$0xff] %v4940
        %4957 = vst [vmem:[#allocation2 + $0x38] sm:$0xff] %v4941
        %4958 = vst [vmem:[#allocation2 + $0x40] sm:$0xff] %v4942
        %4959 = vst [vmem:[#allocation2 + $0x48] sm:$0xff] %v4943
        %4960 = vst [vmem:[#allocation2 + $0x50] sm:$0xff] %v4944
        %4961 = vst [vmem:[#allocation2 + $0x58] sm:$0xff] %v4945
        %4962 = vst [vmem:[#allocation2 + $0x60] sm:$0xff] %v4946
        %4963 = vst [vmem:[#allocation2 + $0x68] sm:$0xff] %v4947
        %4964 = vst [vmem:[#allocation2 + $0x70] sm:$0xff] %v4948
        %4965 = vst [vmem:[#allocation2 + $0x78] sm:$0xff] %v4949
        %v4966 = vld [vmem:[#allocation2] sm:$0xff]
        %v4967 = vld [vmem:[#allocation2 + $0x8] sm:$0xff]
        %v4968 = vld [vmem:[#allocation2 + $0x10] sm:$0xff]
        %v4969 = vld [vmem:[#allocation2 + $0x18] sm:$0xff]
        %v4970 = vld [vmem:[#allocation2 + $0x20] sm:$0xff]
        %v4971 = vld [vmem:[#allocation2 + $0x28] sm:$0xff]
        %v4972 = vld [vmem:[#allocation2 + $0x30] sm:$0xff]
        %v4973 = vld [vmem:[#allocation2 + $0x38] sm:$0xff]
        %v4974 = vld [vmem:[#allocation2 + $0x40] sm:$0xff]
        %v4975 = vld [vmem:[#allocation2 + $0x48] sm:$0xff]
        %v4976 = vld [vmem:[#allocation2 + $0x50] sm:$0xff]
        %v4977 = vld [vmem:[#allocation2 + $0x58] sm:$0xff]
        %v4978 = vld [vmem:[#allocation2 + $0x60] sm:$0xff]
        %v4979 = vld [vmem:[#allocation2 + $0x68] sm:$0xff]
        %v4980 = vld [vmem:[#allocation2 + $0x70] sm:$0xff]
        %v4981 = vld [vmem:[#allocation2 + $0x78] sm:$0xff]
        %v4982 = vld [vmem:[#allocation6] sm:$0xff]
        %v4984 = vlaneseq
        %v4985 = vshrl.u32 %v4984, 7
        %v4986 = vsub.s32 0, %v4985
        %v4987 = vrot.slane %v4982, %v4986
        %v4988 = vlaneseq
        %v4989 = vshrl.u32 %v4988, 7
        %v4990 = vsub.s32 1, %v4989
        %v4991 = vrot.slane %v4982, %v4990
        %v4992 = vlaneseq
        %v4993 = vshrl.u32 %v4992, 7
        %v4994 = vsub.s32 2, %v4993
        %v4995 = vrot.slane %v4982, %v4994
        %v4996 = vlaneseq
        %v4997 = vshrl.u32 %v4996, 7
        %v4998 = vsub.s32 3, %v4997
        %v4999 = vrot.slane %v4982, %v4998
        %v5000 = vlaneseq
        %v5001 = vshrl.u32 %v5000, 7
        %v5002 = vsub.s32 4, %v5001
        %v5003 = vrot.slane %v4982, %v5002
        %v5004 = vlaneseq
        %v5005 = vshrl.u32 %v5004, 7
        %v5006 = vsub.s32 5, %v5005
        %v5007 = vrot.slane %v4982, %v5006
        %v5008 = vlaneseq
        %v5009 = vshrl.u32 %v5008, 7
        %v5010 = vsub.s32 6, %v5009
        %v5011 = vrot.slane %v4982, %v5010
        %v5012 = vlaneseq
        %v5013 = vshrl.u32 %v5012, 7
        %v5014 = vsub.s32 7, %v5013
        %v5015 = vrot.slane %v4982, %v5014
        %v5024 = vadd.f32 %v4966, %v4987
        %v5025 = vadd.f32 %v4967, %v4991
        %v5026 = vadd.f32 %v4968, %v4995
        %v5027 = vadd.f32 %v4969, %v4999
        %v5028 = vadd.f32 %v4970, %v5003
        %v5029 = vadd.f32 %v4971, %v5007
        %v5030 = vadd.f32 %v4972, %v5011
        %v5031 = vadd.f32 %v4973, %v5015
        %v5032 = vadd.f32 %v4974, %v4987
        %v5033 = vadd.f32 %v4975, %v4991
        %v5034 = vadd.f32 %v4976, %v4995
        %v5035 = vadd.f32 %v4977, %v4999
        %v5036 = vadd.f32 %v4978, %v5003
        %v5037 = vadd.f32 %v4979, %v5007
        %v5038 = vadd.f32 %v4980, %v5011
        %v5039 = vadd.f32 %v4981, %v5015
        %v5040 = vmax.f32 %v5024, 0.0
        %v5041 = vmax.f32 %v5025, 0.0
        %v5042 = vmax.f32 %v5026, 0.0
        %v5043 = vmax.f32 %v5027, 0.0
        %v5044 = vmax.f32 %v5028, 0.0
        %v5045 = vmax.f32 %v5029, 0.0
        %v5046 = vmax.f32 %v5030, 0.0
        %v5047 = vmax.f32 %v5031, 0.0
        %v5048 = vmax.f32 %v5032, 0.0
        %v5049 = vmax.f32 %v5033, 0.0
        %v5050 = vmax.f32 %v5034, 0.0
        %v5051 = vmax.f32 %v5035, 0.0
        %v5052 = vmax.f32 %v5036, 0.0
        %v5053 = vmax.f32 %v5037, 0.0
        %v5054 = vmax.f32 %v5038, 0.0
        %v5055 = vmax.f32 %v5039, 0.0
        %v5056 = vmax.f32 %v5040, %v5044
        %v5057 = vmax.f32 %v5041, %v5045
        %v5058 = vmax.f32 %v5042, %v5046
        %v5059 = vmax.f32 %v5043, %v5047
        %v5060 = vmax.f32 %v5048, %v5052
        %v5061 = vmax.f32 %v5049, %v5053
        %v5062 = vmax.f32 %v5050, %v5054
        %v5063 = vmax.f32 %v5051, %v5055
        %5064 = vst [vmem:[#allocation3] sm:$0xff] %v5056
        %5065 = vst [vmem:[#allocation3 + $0x8] sm:$0xff] %v5057
        %5066 = vst [vmem:[#allocation3 + $0x10] sm:$0xff] %v5058
        %5067 = vst [vmem:[#allocation3 + $0x18] sm:$0xff] %v5059
        %5068 = vst [vmem:[#allocation3 + $0x20] sm:$0xff] %v5060
        %5069 = vst [vmem:[#allocation3 + $0x28] sm:$0xff] %v5061
        %5070 = vst [vmem:[#allocation3 + $0x30] sm:$0xff] %v5062
        %5071 = vst [vmem:[#allocation3 + $0x38] sm:$0xff] %v5063
        %v5072 = vld [vmem:[#allocation3] ss:$8 sm:$0xf]
        %s5073 = scalar_lea.vmem [#allocation3], 1
        %v5074 = vld [vmem:[%s5073] ss:$8 sm:$0xf]
        %v5075 = vmax.f32 %v5072, %v5074
        %v5076 = vlaneseq
        %vm5077 = vcmp.ge.s32.totalorder %v5076, 0
        %vm5078 = vcmp.lt.s32.totalorder %v5076, 512
        %vm5079 = vmand %vm5077, %vm5078
        %5080 = vst.msk [vmem:[%s198] ss:$8 sm:$0xf] %vm5079, %v5075
        %5081 = vst.msk [vmem:[%s198] ss:$8 sm:$0x0] %vm5079, %v5075
        %s5082 = scalar_lea.vmem [#allocation3], 2
        %v5083 = vld [vmem:[%s5082] ss:$8 sm:$0xf]
        %s5084 = scalar_lea.vmem [#allocation3], 3
        %v5085 = vld [vmem:[%s5084] ss:$8 sm:$0xf]
        %v5086 = vmax.f32 %v5083, %v5085
        %s5087 = scalar_lea.vmem %s198, 1
        %5088 = vst.msk [vmem:[%s5087] ss:$8 sm:$0xf] %vm5079, %v5086
        %5089 = vst.msk [vmem:[%s5087] ss:$8 sm:$0x0] %vm5079, %v5086
        %s5090 = scalar_lea.vmem [#allocation3], 4
        %v5091 = vld [vmem:[%s5090] ss:$8 sm:$0xf]
        %s5092 = scalar_lea.vmem [#allocation3], 5
        %v5093 = vld [vmem:[%s5092] ss:$8 sm:$0xf]
        %v5094 = vmax.f32 %v5091, %v5093
        %s5095 = scalar_lea.vmem %s198, 2
        %5096 = vst.msk [vmem:[%s5095] ss:$8 sm:$0xf] %vm5079, %v5094
        %5097 = vst.msk [vmem:[%s5095] ss:$8 sm:$0x0] %vm5079, %v5094
        %s5098 = scalar_lea.vmem [#allocation3], 6
        %v5099 = vld [vmem:[%s5098] ss:$8 sm:$0xf]
        %s5100 = scalar_lea.vmem [#allocation3], 7
        %v5101 = vld [vmem:[%s5100] ss:$8 sm:$0xf]
        %v5102 = vmax.f32 %v5099, %v5101
        %s5103 = scalar_lea.vmem %s198, 3
        %5104 = vst.msk [vmem:[%s5103] ss:$8 sm:$0xf] %vm5079, %v5102
        %5105 = vst.msk [vmem:[%s5103] ss:$8 sm:$0x0] %vm5079, %v5102
        %s5106 = scalar_lea.vmem [#allocation3], 32
        %v5107 = vld [vmem:[%s5106] ss:$8 sm:$0xf]
        %s5108 = scalar_lea.vmem [#allocation3], 33
        %v5109 = vld [vmem:[%s5108] ss:$8 sm:$0xf]
        %v5110 = vmax.f32 %v5107, %v5109
        %s5111 = scalar_lea.vmem %s198, 4
        %5112 = vst.msk [vmem:[%s5111] ss:$8 sm:$0xf] %vm5079, %v5110
        %5113 = vst.msk [vmem:[%s5111] ss:$8 sm:$0x0] %vm5079, %v5110
        %s5114 = scalar_lea.vmem [#allocation3], 34
        %v5115 = vld [vmem:[%s5114] ss:$8 sm:$0xf]
        %s5116 = scalar_lea.vmem [#allocation3], 35
        %v5117 = vld [vmem:[%s5116] ss:$8 sm:$0xf]
        %v5118 = vmax.f32 %v5115, %v5117
        %s5119 = scalar_lea.vmem %s198, 5
        %5120 = vst.msk [vmem:[%s5119] ss:$8 sm:$0xf] %vm5079, %v5118
        %5121 = vst.msk [vmem:[%s5119] ss:$8 sm:$0x0] %vm5079, %v5118
        %s5122 = scalar_lea.vmem [#allocation3], 36
        %v5123 = vld [vmem:[%s5122] ss:$8 sm:$0xf]
        %s5124 = scalar_lea.vmem [#allocation3], 37
        %v5125 = vld [vmem:[%s5124] ss:$8 sm:$0xf]
        %v5126 = vmax.f32 %v5123, %v5125
        %s5127 = scalar_lea.vmem %s198, 6
        %5128 = vst.msk [vmem:[%s5127] ss:$8 sm:$0xf] %vm5079, %v5126
        %5129 = vst.msk [vmem:[%s5127] ss:$8 sm:$0x0] %vm5079, %v5126
        %s5130 = scalar_lea.vmem [#allocation3], 38
        %v5131 = vld [vmem:[%s5130] ss:$8 sm:$0xf]
        %s5132 = scalar_lea.vmem [#allocation3], 39
        %v5133 = vld [vmem:[%s5132] ss:$8 sm:$0xf]
        %v5134 = vmax.f32 %v5131, %v5133
        %s5135 = scalar_lea.vmem %s198, 7
        %5136 = vst.msk [vmem:[%s5135] ss:$8 sm:$0xf] %vm5079, %v5134
        %5137 = vst.msk [vmem:[%s5135] ss:$8 sm:$0x0] %vm5079, %v5134
        %p5138 = scmp.lt.s32.totalorder %s16, 1
        %s5139 = scalar_select %p5138, %s16, 1
        %s5140 = smul.addr %s5139, 4
        %s5141 = smul.addr %s5140, 8
        %s5142 = scalar_lea.vmem %s3, %s5141
        // Predicated region
        $region41: #{cnn_forward.4} parent=31 // pred_check
          %p5143 = pneg %p102
        $region42: #{cnn_forward.4} parent=31 // pred_check_branch
          %5145 = sbr.rel (%p5143) target = $region44
        $region43: #{cnn_forward.4} parent=31 // pred_region
          _
        $region44: #{cnn_forward.4} parent=31 // pred_fallthru
          _
      $region32: #{cnn_forward.4} parent=5 // pred_fallthru
        _
      %p5146 = scmp.le.s32.totalorder 2, %s11
      // Predicated region
      $region45: #{cnn_forward.4} parent=5 // pred_check
        %p5147 = pneg %p5146
      $region46: #{cnn_forward.4} parent=5 // pred_check_branch
        %5149 = sbr.rel (%p5147) target = $region48
      $region47: #{cnn_forward.4} parent=5 // pred_region
        %s5150 = ssub.s32 %s11, 2
        // Predicated region
        $region49: #{cnn_forward.4} parent=47 // pred_check
          %p5151 = pneg %p108
        $region50: #{cnn_forward.4} parent=47 // pred_check_branch
          %5153 = sbr.rel (%p5151) target = $region52
        $region51: #{cnn_forward.4} parent=47 // pred_region
          %p5154 = scmp.lt.s32.totalorder %s17, 1
          %s5155 = scalar_select %p5154, %s17, 1
          %s5156 = smul.addr %s5155, 4
          %s5157 = smul.addr %s5156, 8
          %s5158 = scalar_lea.vmem %s3, %s5157
        $region52: #{cnn_forward.4} parent=47 // pred_fallthru
          _
      $region48: #{cnn_forward.4} parent=5 // pred_fallthru
        _
    $region6: #{cnn_forward.4} parent=1 // loop_footer
      %s15 = sadd.s32 1, %s11
    $region7: #{cnn_forward.4} parent=1 // loop_footer_branch
      %10 = sbr.rel target = $region3
    $region8: #{cnn_forward.4} parent=1 // loop_exit
      _
    %5159 = vsyncpa [#allocation5], 1
    %s5160 = scalar_lea.sflag [#allocation5], 1
    %5161 = vsyncpa %s5160, 1
    %5162 = vsyncpa [#allocation7], 1

</llo_original>
